<compile_context>
chip_gen: v7x
topology: tpu7x:2x2x1
jax: 0.10.0
libtpu: 0.0.40
codegen_flags: <defaults>
</compile_context>

<pallas_src>
import functools
import math

import jax
import jax.numpy as jnp
from jax import lax
from jax.experimental import pallas as pl
from jax.experimental.pallas import tpu as pltpu

LN_EPS = 1e-12                      # BERT LayerNorm eps
VMEM_LIMIT = 48 * 1024 * 1024       # explicit scoped-VMEM limit (safe on v5e/v6e/v7x)
ROW_TILE_CAP = 512                  # matmul row-tile target
LSTM_TIME_BLOCK = 16                # timesteps per LSTM grid step (S padded to this)
# TODO(synk): for contraction dims K > ~4096 a K-tiled accumulate path would be needed;
# every matmul in this model has K <= 3072 so K is always kept whole per tile.


# --------------------------------------------------------------------------------------
# static shape helpers (trace-time only)
# --------------------------------------------------------------------------------------
def _round_up(x, m):
    return (x + m - 1) // m * m


def _row_tile(m):
    """Largest row tile <= ROW_TILE_CAP: full M when small, else a divisor of M that is a
    multiple of 8 (our row counts are always B*Sp with Sp a multiple of 16)."""
    if m <= ROW_TILE_CAP:
        return m
    for t in range(ROW_TILE_CAP, 7, -1):
        if m % t == 0 and t % 8 == 0:
            return t
    return m


def _col_tile(n):
    """Keep N whole unless very wide; then use a 128-multiple divisor (lane-dense)."""
    if n <= 2048:
        return n
    for t in range(1024, 0, -128):
        if n % t == 0:
            return t
    return n


# --------------------------------------------------------------------------------------
# Kernel 1: linear (bf16 MXU inputs, f32 math, K kept whole -> no K grid axis)
# --------------------------------------------------------------------------------------
def _apply_act(y, act):
    if act == "relu":
        return jnp.maximum(y, 0.0)
    if act == "gelu":
        # TODO(synk): HF BERT default is erf-GELU; tanh approximation used here.
        return jax.nn.gelu(y, approximate=True)
    if act == "tanh":
        return jnp.tanh(y)
    return y


def _linear_kernel(x_ref, w_ref, b_ref, o_ref, *, act):
    y = jnp.dot(x_ref[...], w_ref[...], preferred_element_type=jnp.float32) + b_ref[...]
    o_ref[...] = _apply_act(y, act).astype(o_ref.dtype)


def linear(x, w, b, act="none", out_dtype=jnp.bfloat16):
    """(M,K)@(K,N)+b. Grid over (M, N) blocks; K whole per tile (no padding, no acc)."""
    M, K = x.shape
    N = w.shape[1]
    tm = _row_tile(M)
    tn = _col_tile(N)
    return pl.pallas_call(
        functools.partial(_linear_kernel, act=act),
        out_shape=jax.ShapeDtypeStruct((M, N), out_dtype),
        grid=(M // tm, N // tn),
        in_specs=[pl.BlockSpec((tm, K), lambda i, j: (i, 0)),
                  pl.BlockSpec((K, tn), lambda i, j: (0, j)),
                  pl.BlockSpec((1, tn), lambda i, j: (0, j))],
        out_specs=pl.BlockSpec((tm, tn), lambda i, j: (i, j)),
        compiler_params=pltpu.CompilerParams(
            dimension_semantics=("parallel", "parallel"),
            vmem_limit_bytes=VMEM_LIMIT),
    )(x.astype(jnp.bfloat16), w.astype(jnp.bfloat16),
      b.astype(jnp.float32).reshape(1, N))


# --------------------------------------------------------------------------------------
# Kernel 2: linear + residual add + LayerNorm fused epilogue (hidden dim whole)
# --------------------------------------------------------------------------------------
def _linear_res_ln_kernel(x_ref, w_ref, b_ref, r_ref, g_ref, be_ref, o_ref):
    y = (jnp.dot(x_ref[...], w_ref[...], preferred_element_type=jnp.float32)
         + b_ref[...] + r_ref[...].astype(jnp.float32))
    mu = jnp.mean(y, axis=-1, keepdims=True)
    var = jnp.mean(jnp.square(y - mu), axis=-1, keepdims=True)
    yn = (y - mu) * lax.rsqrt(var + LN_EPS)
    o_ref[...] = (yn * g_ref[...] + be_ref[...]).astype(o_ref.dtype)


def linear_residual_layernorm(x, w, b, res, gamma, beta, out_dtype=jnp.bfloat16):
    """LayerNorm(x @ w + b + res). Grid over rows only; K and N (hidden) stay whole."""
    M, K = x.shape
    N = w.shape[1]
    tm = _row_tile(M)
    return pl.pallas_call(
        _linear_res_ln_kernel,
        out_shape=jax.ShapeDtypeStruct((M, N), out_dtype),
        grid=(M // tm,),
        in_specs=[pl.BlockSpec((tm, K), lambda i: (i, 0)),
                  pl.BlockSpec((K, N), lambda i: (0, 0)),
                  pl.BlockSpec((1, N), lambda i: (0, 0)),
                  pl.BlockSpec((tm, N), lambda i: (i, 0)),
                  pl.BlockSpec((1, N), lambda i: (0, 0)),
                  pl.BlockSpec((1, N), lambda i: (0, 0))],
        out_specs=pl.BlockSpec((tm, N), lambda i: (i, 0)),
        compiler_params=pltpu.CompilerParams(
            dimension_semantics=("parallel",),
            vmem_limit_bytes=VMEM_LIMIT),
    )(x.astype(jnp.bfloat16), w.astype(jnp.bfloat16),
      b.astype(jnp.float32).reshape(1, N),
      res.astype(jnp.bfloat16),
      gamma.astype(jnp.float32).reshape(1, N),
      beta.astype(jnp.float32).reshape(1, N))


# --------------------------------------------------------------------------------------
# Kernel 3: standalone LayerNorm (embeddings)
# --------------------------------------------------------------------------------------
def _layernorm_kernel(x_ref, g_ref, b_ref, o_ref):
    x = x_ref[...].astype(jnp.float32)
    mu = jnp.mean(x, axis=-1, keepdims=True)
    var = jnp.mean(jnp.square(x - mu), axis=-1, keepdims=True)
    y = (x - mu) * lax.rsqrt(var + LN_EPS)
    o_ref[...] = (y * g_ref[...] + b_ref[...]).astype(o_ref.dtype)


def layernorm(x, gamma, beta, out_dtype=jnp.bfloat16):
    M, H = x.shape
    tm = _row_tile(M)
    return pl.pallas_call(
        _layernorm_kernel,
        out_shape=jax.ShapeDtypeStruct((M, H), out_dtype),
        grid=(M // tm,),
        in_specs=[pl.BlockSpec((tm, H), lambda i: (i, 0)),
                  pl.BlockSpec((1, H), lambda i: (0, 0)),
                  pl.BlockSpec((1, H), lambda i: (0, 0))],
        out_specs=pl.BlockSpec((tm, H), lambda i: (i, 0)),
        compiler_params=pltpu.CompilerParams(
            dimension_semantics=("parallel",),
            vmem_limit_bytes=VMEM_LIMIT),
    )(x, gamma.astype(jnp.float32).reshape(1, H), beta.astype(jnp.float32).reshape(1, H))


# --------------------------------------------------------------------------------------
# Kernel 4: attention — consumes fused QKV as (1,S,3H) blocks, writes (1,S,H) blocks.
# Grid over batch only; all heads of one batch element are processed per step (static
# per-head loop -> no head split/merge transposes in XLA, step overhead amortized).
# --------------------------------------------------------------------------------------
def _attention_kernel(qkv_ref, bias_ref, o_ref, *, nh, hd, scale):
    # TODO(synk): fully-masked (padding) query rows produce bounded garbage; ignored
    # downstream by the CRF mask (matches the PyTorch reference behaviour).
    # TODO(synk): for very long S (>= ~1024) add flash-style q-block tiling of the scores.
    H = nh * hd
    bias = bias_ref[0]                                       # (1, S) additive key mask
    for h in range(nh):                                      # static unroll over heads
        q = qkv_ref[0, :, h * hd:(h + 1) * hd]               # (S, hd) bf16
        k = qkv_ref[0, :, H + h * hd:H + (h + 1) * hd]
        v = qkv_ref[0, :, 2 * H + h * hd:2 * H + (h + 1) * hd]
        s = jnp.einsum("qd,kd->qk", q, k,
                       preferred_element_type=jnp.float32) * scale
        s = s + bias                                         # broadcast over query rows
        s = s - jnp.max(s, axis=-1, keepdims=True)
        p = jnp.exp(s)
        p = p * pl.reciprocal(jnp.sum(p, axis=-1, keepdims=True), approx=True)
        ctx = jnp.einsum("qk,kd->qd", p.astype(v.dtype), v,
                         preferred_element_type=jnp.float32)
        o_ref[0, :, h * hd:(h + 1) * hd] = ctx.astype(o_ref.dtype)


def attention(qkv, mask_bias, num_heads, head_dim):
    """qkv: (B, S, 3H) bf16 fused Q|K|V; mask_bias: (B, 1, S) f32 additive key mask."""
    B, S, H3 = qkv.shape
    H = num_heads * head_dim
    scale = 1.0 / math.sqrt(head_dim)
    return pl.pallas_call(
        functools.partial(_attention_kernel, nh=num_heads, hd=head_dim, scale=scale),
        out_shape=jax.ShapeDtypeStruct((B, S, H), jnp.bfloat16),
        grid=(B,),
        in_specs=[pl.BlockSpec((1, S, H3), lambda i: (i, 0, 0)),
                  pl.BlockSpec((1, 1, S), lambda i: (i, 0, 0))],
        out_specs=pl.BlockSpec((1, S, H), lambda i: (i, 0, 0)),
        compiler_params=pltpu.CompilerParams(
            dimension_semantics=("parallel",),
            vmem_limit_bytes=VMEM_LIMIT),
    )(qkv, mask_bias)


# --------------------------------------------------------------------------------------
# Kernel 5: LSTM recurrence. Grid = (direction, time-blocks); direction is a *parallel*
# axis (two TensorCores on v7x). The reverse direction's blocks arrive time-reversed via
# the index_map and are walked backwards inside the block; timesteps past the real
# sequence length are zeroed so they leave the (zero) reverse state untouched.
# --------------------------------------------------------------------------------------
def _lstm_kernel(xg_ref, whh_ref, o_ref, h_scr, c_scr, *, hidden, tb, seq_len):
    t = pl.program_id(1)
    n_t = pl.num_programs(1)

    @pl.when(t == 0)
    def _():
        h_scr[...] = jnp.zeros_like(h_scr)
        c_scr[...] = jnp.zeros_like(c_scr)

    whh = whh_ref[0]                                          # (H, 4H) bf16, this dir

    def run(reverse):
        t_blk = (n_t - 1 - t) if reverse else t

        def step(i, carry):
            row = (tb - 1 - i) if reverse else i
            abs_t = t_blk * tb + row
            valid = (abs_t < seq_len).astype(jnp.float32)     # neutralize extra time pad
            # PyTorch LSTM gate order i,f,g,o; h @ W_hh on the MXU in bf16, gates in f32.
            # TODO(synk): on v5e, staging W_hh via matmul_push_rhs would avoid re-pushing
            # the weight into the MXU every timestep.
            gates = (xg_ref[row].astype(jnp.float32) * valid
                     + jnp.dot(h_scr[...].astype(jnp.bfloat16), whh,
                               preferred_element_type=jnp.float32))
            ig = jax.nn.sigmoid(gates[:, 0 * hidden:1 * hidden])
            fg = jax.nn.sigmoid(gates[:, 1 * hidden:2 * hidden])
            gg = jnp.tanh(gates[:, 2 * hidden:3 * hidden])
            og = jax.nn.sigmoid(gates[:, 3 * hidden:4 * hidden])
            c = fg * c_scr[...] + ig * gg
            h = og * jnp.tanh(c)
            c_scr[...] = c
            h_scr[...] = h
            o_ref[0, row] = h.astype(o_ref.dtype)
            return carry

        lax.fori_loop(0, tb, step, 0, unroll=True)

    @pl.when(pl.program_id(0) == 0)
    def _():
        run(False)

    @pl.when(pl.program_id(0) == 1)
    def _():
        run(True)


def lstm_bidirectional_layer(x_tm, w_ih, b_ih, w_hh_stacked, seq_len):
    """One bidirectional LSTM layer, time-major.
    x_tm: (Sp, B, In) bf16; w_ih: (In, 8H) = [fwd 4H | rev 4H] bf16 (b_ih+b_hh folded
    into b_ih); w_hh_stacked: (2, H, 4H) bf16.  Returns (Sp, B, 2H) bf16 time-major."""
    Sp, B, In = x_tm.shape
    H = w_hh_stacked.shape[1]
    # one fused matmul -> input-gate projections of BOTH directions, emitted in bf16
    xg = linear(x_tm.reshape(Sp * B, In), w_ih, b_ih, out_dtype=jnp.bfloat16)
    xg = xg.reshape(Sp, B, 8 * H)
    Bp = max(8, _round_up(B, 8))                              # sublane-dense batch
    if Bp != B:
        xg = jnp.pad(xg, ((0, 0), (0, Bp - B), (0, 0)))
    tb = LSTM_TIME_BLOCK
    assert Sp % tb == 0
    n_t = Sp // tb

    out = pl.pallas_call(
        functools.partial(_lstm_kernel, hidden=H, tb=tb, seq_len=seq_len),
        out_shape=jax.ShapeDtypeStruct((2, Sp, Bp, H), jnp.bfloat16),
        grid=(2, n_t),
        in_specs=[
            # time-block index walks backwards for the reverse direction (d=1);
            # the last-dim block index d selects the fwd / rev gate half (4H each).
            pl.BlockSpec((tb, Bp, 4 * H),
                         lambda d, t: (t + d * (n_t - 1 - 2 * t), 0, d)),
            pl.BlockSpec((1, H, 4 * H), lambda d, t: (d, 0, 0)),
        ],
        out_specs=pl.BlockSpec((1, tb, Bp, H),
                               lambda d, t: (d, t + d * (n_t - 1 - 2 * t), 0, 0)),
        scratch_shapes=[pltpu.VMEM((Bp, H), jnp.float32),
                        pltpu.VMEM((Bp, H), jnp.float32)],
        compiler_params=pltpu.CompilerParams(
            dimension_semantics=("parallel", "arbitrary"),
            vmem_limit_bytes=VMEM_LIMIT),
    )(xg, w_hh_stacked)

    h_fwd = out[0, :, :B, :]
    h_rev = out[1, :, :B, :]
    return jnp.concatenate([h_fwd, h_rev], axis=-1)           # (Sp, B, 2H) time-major


# --------------------------------------------------------------------------------------
# Kernel 6: mid_linear (ReLU) fused with the classifier; tags padded to 128 lanes
# --------------------------------------------------------------------------------------
def _mid_cls_kernel(x_ref, mw_ref, mb_ref, cw_ref, cb_ref, o_ref):
    mid = jnp.dot(x_ref[...], mw_ref[...], preferred_element_type=jnp.float32)
    mid = jnp.maximum(mid + mb_ref[...], 0.0)
    y = jnp.dot(mid.astype(jnp.bfloat16), cw_ref[...], preferred_element_type=jnp.float32)
    o_ref[...] = (y + cb_ref[...]).astype(o_ref.dtype)


def mid_classifier(x, mid_w, mid_b, cls_w_pad, cls_b_pad):
    M, K = x.shape
    Dm = mid_w.shape[1]
    Np = cls_w_pad.shape[1]
    tm = _row_tile(M)
    return pl.pallas_call(
        _mid_cls_kernel,
        out_shape=jax.ShapeDtypeStruct((M, Np), jnp.float32),
        grid=(M // tm,),
        in_specs=[pl.BlockSpec((tm, K), lambda i: (i, 0)),
                  pl.BlockSpec((K, Dm), lambda i: (0, 0)),
                  pl.BlockSpec((1, Dm), lambda i: (0, 0)),
                  pl.BlockSpec((Dm, Np), lambda i: (0, 0)),
                  pl.BlockSpec((1, Np), lambda i: (0, 0))],
        out_specs=pl.BlockSpec((tm, Np), lambda i: (i, 0)),
        compiler_params=pltpu.CompilerParams(
            dimension_semantics=("parallel",),
            vmem_limit_bytes=VMEM_LIMIT),
    )(x.astype(jnp.bfloat16), mid_w.astype(jnp.bfloat16),
      mid_b.astype(jnp.float32).reshape(1, Dm),
      cls_w_pad.astype(jnp.bfloat16), cls_b_pad.astype(jnp.float32).reshape(1, Np))


# --------------------------------------------------------------------------------------
# Model glue
# --------------------------------------------------------------------------------------
def bert_encoder(p, cfg, token_ids, attention_masks, token_type_ids):
    """Runs at the (already padded) sequence length; returns flat (B*Sp, H) bf16."""
    B, Sp = token_ids.shape
    H, nh = cfg["hidden"], cfg["heads"]
    hd = H // nh

    # embeddings (gather is JAX glue); dropout is identity at inference
    emb = (jnp.take(p["word_emb"], token_ids, axis=0)
           + p["pos_emb"][None, :Sp, :]
           + jnp.take(p["type_emb"], token_type_ids, axis=0))
    x = layernorm(emb.reshape(B * Sp, H), p["emb_ln_g"], p["emb_ln_b"])    # bf16

    # additive key mask, kept as (B,1,Sp) — broadcast inside the attention kernel
    mask_bias = ((1.0 - attention_masks.astype(jnp.float32)) * -10000.0).reshape(B, 1, Sp)

    for lp in p["layers"]:
        qkv = linear(x, lp["qkv_w"], lp["qkv_b"])                          # (B*Sp, 3H)
        ctx = attention(qkv.reshape(B, Sp, 3 * H), mask_bias, nh, hd)      # (B, Sp, H)
        # attention output projection + residual + LayerNorm fused
        x = linear_residual_layernorm(ctx.reshape(B * Sp, H), lp["ao_w"], lp["ao_b"], x,
                                      lp["ln1_g"], lp["ln1_b"])
        inter = linear(x, lp["i_w"], lp["i_b"], act="gelu")
        # FFN output projection + residual + LayerNorm fused
        x = linear_residual_layernorm(inter, lp["o_w"], lp["o_b"], x,
                                      lp["ln2_g"], lp["ln2_b"])
    # pooler (dense+tanh on [CLS]) intentionally dropped: pooled_out is unused by this head
    return x


def crf_viterbi_decode(emissions_tm, mask, start_trans, end_trans, trans):
    """torchcrf.CRF.decode (batch_first) semantics.  Plain JAX (tiny, data-dependent).
    emissions_tm: (S, B, T) time-major; mask: (B, S).  Returns (B, S) int32; positions
    beyond each sequence length hold padding values."""
    S, B, T = emissions_tm.shape
    em = emissions_tm.astype(jnp.float32)
    msk = jnp.transpose(mask, (1, 0)).astype(bool)                         # (S, B)

    score0 = start_trans[None, :] + em[0]                                  # (B, T)

    def fwd(score, inp):
        e_i, m_i = inp
        nxt = score[:, :, None] + trans[None, :, :] + e_i[:, None, :]      # (B, T, T)
        best = jnp.max(nxt, axis=1)
        idx = jnp.argmax(nxt, axis=1)
        new_score = jnp.where(m_i[:, None], best, score)
        return new_score, idx

    score, history = lax.scan(fwd, score0, (em[1:], msk[1:]))
    score = score + end_trans[None, :]
    last_tag = jnp.argmax(score, axis=-1).astype(jnp.int32)

    def bwd(cur, inp):
        hist_i, m_next = inp
        prev = jnp.take_along_axis(hist_i, cur[:, None], axis=1)[:, 0].astype(jnp.int32)
        new = jnp.where(m_next, prev, cur)
        return new, new

    _, tags_rev = lax.scan(bwd, last_tag, (history[::-1], msk[1:][::-1]))
    tags = jnp.concatenate([tags_rev[::-1], last_tag[None, :]], axis=0)    # (S, B)
    return jnp.transpose(tags, (1, 0))


def bert_country_forward(p, token_ids, attention_masks, token_type_ids, *, cfg):
    B, S = token_ids.shape
    H = cfg["hidden"]

    # pad the sequence length once (LSTM time-blocking + encoder row tiling); the padded
    # positions are masked as attention keys and neutralized inside the LSTM recurrence.
    Sp = _round_up(S, LSTM_TIME_BLOCK)
    if Sp != S:
        pad = ((0, 0), (0, Sp - S))
        token_ids = jnp.pad(token_ids, pad)
        token_type_ids = jnp.pad(token_type_ids, pad)
        attention_masks = jnp.pad(attention_masks, pad)

    seq_out = bert_encoder(p, cfg, token_ids, attention_masks, token_type_ids)  # (B*Sp,H)

    # single small transpose to time-major; the LSTM stack stays time-major throughout
    x_tm = seq_out.reshape(B, Sp, H).transpose(1, 0, 2)                    # (Sp, B, H)
    for lp in p["lstm"]:
        x_tm = lstm_bidirectional_layer(x_tm, lp["w_ih"], lp["b"], lp["w_hh"], seq_len=S)

    emis_pad = mid_classifier(x_tm.reshape(Sp * B, 2 * H),
                              p["mid_w"], p["mid_b"],
                              p["cls_w_pad"], p["cls_b_pad"])              # (Sp*B, 128)
    emissions_tm = emis_pad[:, :cfg["tags"]].reshape(Sp, B, cfg["tags"])   # time-major
    tokens_out = crf_viterbi_decode(emissions_tm, attention_masks,
                                    p["crf_start"], p["crf_end"], p["crf_trans"])
    return (tokens_out[:, :S],)


# --------------------------------------------------------------------------------------
# Deterministic synthetic parameter init (shapes implied by the PyTorch module);
# matmul weights cast to bf16 once here, QKV / LSTM projections pre-fused.
# --------------------------------------------------------------------------------------
def init_params(key, cfg):
    keys = iter(jax.random.split(key, 512))
    bf = jnp.bfloat16

    def nrm(shape, std=0.02, dtype=jnp.float32):
        return (std * jax.random.normal(next(keys), shape, jnp.float32)).astype(dtype)

    H, I, V, P = cfg["hidden"], cfg["inter"], cfg["vocab"], cfg["max_pos"]
    p = {
        "word_emb": nrm((V, H)),
        "pos_emb": nrm((P, H)),
        "type_emb": nrm((2, H)),
        "emb_ln_g": jnp.ones((H,), jnp.float32),
        "emb_ln_b": jnp.zeros((H,), jnp.float32),
        "layers": [],
    }
    for _ in range(cfg["layers"]):
        p["layers"].append({
            "qkv_w": nrm((H, 3 * H), dtype=bf),              # fused Q | K | V
            "qkv_b": jnp.zeros((3 * H,), jnp.float32),
            "ao_w": nrm((H, H), dtype=bf), "ao_b": jnp.zeros((H,), jnp.float32),
            "ln1_g": jnp.ones((H,), jnp.float32), "ln1_b": jnp.zeros((H,), jnp.float32),
            "i_w": nrm((H, I), dtype=bf), "i_b": jnp.zeros((I,), jnp.float32),
            "o_w": nrm((I, H), dtype=bf), "o_b": jnp.zeros((H,), jnp.float32),
            "ln2_g": jnp.ones((H,), jnp.float32), "ln2_b": jnp.zeros((H,), jnp.float32),
        })
    # 2-layer bidirectional LSTM, hidden size H per direction (gate order i,f,g,o)
    lstm = []
    for layer in range(2):
        In = H if layer == 0 else 2 * H
        lstm.append({
            "w_ih": nrm((In, 8 * H), 0.1, dtype=bf),         # [fwd 4H | rev 4H] fused
            "b": nrm((8 * H,), 0.1),                         # b_ih + b_hh folded
            "w_hh": nrm((2, H, 4 * H), 0.1, dtype=bf),       # stacked [fwd, rev]
        })
    p["lstm"] = lstm
    # mid_linear / classifier (biases zeroed, matching BaseModel._init_weights);
    # classifier weight lane-padded to 128 once so emission stores are lane-dense.
    p["mid_w"] = nrm((2 * H, cfg["mid"]), dtype=bf)
    p["mid_b"] = jnp.zeros((cfg["mid"],), jnp.float32)
    tags_pad = _round_up(cfg["tags"], 128)
    cls_w = nrm((cfg["mid"], cfg["tags"]))
    p["cls_w_pad"] = jnp.pad(cls_w, ((0, 0), (0, tags_pad - cfg["tags"]))).astype(bf)
    p["cls_b_pad"] = jnp.zeros((tags_pad,), jnp.float32)
    # CRF params (torchcrf: uniform(-0.1, 0.1))
    p["crf_start"] = jax.random.uniform(next(keys), (cfg["tags"],), jnp.float32, -0.1, 0.1)
    p["crf_end"] = jax.random.uniform(next(keys), (cfg["tags"],), jnp.float32, -0.1, 0.1)
    p["crf_trans"] = jax.random.uniform(next(keys), (cfg["tags"], cfg["tags"]),
                                        jnp.float32, -0.1, 0.1)
    return p


if __name__ == "__main__":
    cfg = dict(vocab=100, hidden=32, heads=4, layers=2, inter=64,
               max_pos=64, mid=128, tags=6)
    B, S = 2, 8

    key = jax.random.PRNGKey(0)
    kp, kt = jax.random.split(key)
    params = init_params(kp, cfg)

    token_ids = jax.random.randint(kt, (B, S), 0, cfg["vocab"], dtype=jnp.int32)
    token_type_ids = jnp.zeros((B, S), dtype=jnp.int32)
    lengths = jnp.array([S, 5], dtype=jnp.int32)
    attention_masks = (jnp.arange(S)[None, :] < lengths[:, None]).astype(jnp.int32)

    fwd = jax.jit(functools.partial(bert_country_forward, cfg=cfg))
    out = fwd(params, token_ids, attention_masks, token_type_ids)
    jax.block_until_ready(out[0])
    assert out[0].shape == (B, S)
    print("KERNEL_OK")
</pallas_src>

<mosaic_0001>
module attributes {stable_mosaic.version = 11 : i64} {
  func.func @_linear_kernel(%arg0: i32, %arg1: i32, %arg2: memref<32x32xbf16, #tpu.memory_space<vmem>>, %arg3: memref<32x96xbf16, #tpu.memory_space<vmem>>, %arg4: memref<1x96xf32, #tpu.memory_space<vmem>>, %arg5: memref<32x96xbf16, #tpu.memory_space<vmem>>) attributes {dimension_semantics = [#tpu.dimension_semantics<parallel>, #tpu.dimension_semantics<parallel>], iteration_bounds = array<i64: 1, 1>, scalar_prefetch = 0 : i64, scratch_operands = 0 : i64, tpu.core_type = #tpu.core_type<tc>, window_params = [{transform_indices = @transform_0, window_bounds = array<i64: 32, 32>}, {transform_indices = @transform_1, window_bounds = array<i64: 32, 96>}, {transform_indices = @transform_2, window_bounds = array<i64: 1, 96>}, {transform_indices = @transform_3, window_bounds = array<i64: 32, 96>}]} {
    %c0 = arith.constant 0 : index
    %c0_0 = arith.constant 0 : index
    %0 = vector.load %arg2[%c0, %c0_0] : memref<32x32xbf16, #tpu.memory_space<vmem>>, vector<32x32xbf16>
    %c0_1 = arith.constant 0 : index
    %c0_2 = arith.constant 0 : index
    %1 = vector.load %arg3[%c0_1, %c0_2] : memref<32x96xbf16, #tpu.memory_space<vmem>>, vector<32x96xbf16>
    %cst = arith.constant dense<0.000000e+00> : vector<32x96xf32>
    %2 = tpu.matmul %0, %1, %cst {dimension_numbers = #tpu.dot_dimension_numbers<[1], [0], [0], [1], [0, 0, 1, 1], [], []>} : vector<32x32xbf16>, vector<32x96xbf16>, vector<32x96xf32> -> vector<32x96xf32>
    %c0_3 = arith.constant 0 : index
    %c0_4 = arith.constant 0 : index
    %3 = vector.load %arg4[%c0_3, %c0_4] : memref<1x96xf32, #tpu.memory_space<vmem>>, vector<1x96xf32>
    %4 = vector.broadcast %3 : vector<1x96xf32> to vector<32x96xf32>
    %5 = arith.addf %2, %4 : vector<32x96xf32>
    %6 = arith.truncf %5 : vector<32x96xf32> to vector<32x96xbf16>
    %c0_5 = arith.constant 0 : index
    %c0_6 = arith.constant 0 : index
    %7 = vector.load %arg5[%c0_5, %c0_6] : memref<32x96xbf16, #tpu.memory_space<vmem>>, vector<32x96xbf16>
    tpu.vector_store %arg5[%c0_5, %c0_6], %6 {strides = array<i32>} : memref<32x96xbf16, #tpu.memory_space<vmem>>, vector<32x96xbf16>,
    return
  }
  func.func @transform_0(%arg0: i32, %arg1: i32) -> (i32, i32) {
    %c0_i32 = arith.constant 0 : i32
    %c0_i32_0 = arith.constant 0 : i32
    return %arg0, %c0_i32 : i32, i32
  }
  func.func @transform_1(%arg0: i32, %arg1: i32) -> (i32, i32) {
    %c0_i32 = arith.constant 0 : i32
    %c0_i32_0 = arith.constant 0 : i32
    return %c0_i32, %arg1 : i32, i32
  }
  func.func @transform_2(%arg0: i32, %arg1: i32) -> (i32, i32) {
    %c0_i32 = arith.constant 0 : i32
    %c0_i32_0 = arith.constant 0 : i32
    return %c0_i32, %arg1 : i32, i32
  }
  func.func @transform_3(%arg0: i32, %arg1: i32) -> (i32, i32) {
    %c0_i32 = arith.constant 0 : i32
    return %arg0, %arg1 : i32, i32
  }
}

module attributes {stable_mosaic.version = 11 : i64} {
  func.func @_layernorm_kernel(%arg0: i32, %arg1: memref<32x32xf32, #tpu.memory_space<vmem>>, %arg2: memref<1x32xf32, #tpu.memory_space<vmem>>, %arg3: memref<1x32xf32, #tpu.memory_space<vmem>>, %arg4: memref<32x32xbf16, #tpu.memory_space<vmem>>) attributes {dimension_semantics = [#tpu.dimension_semantics<parallel>], iteration_bounds = array<i64: 1>, scalar_prefetch = 0 : i64, scratch_operands = 0 : i64, tpu.core_type = #tpu.core_type<tc>, window_params = [{transform_indices = @transform_0, window_bounds = array<i64: 32, 32>}, {pipeline_mode = #tpu.pipeline_mode<synchronous>, transform_indices = @transform_1, window_bounds = array<i64: 1, 32>}, {pipeline_mode = #tpu.pipeline_mode<synchronous>, transform_indices = @transform_2, window_bounds = array<i64: 1, 32>}, {transform_indices = @transform_3, window_bounds = array<i64: 32, 32>}]} {
    %c0 = arith.constant 0 : index
    %c0_0 = arith.constant 0 : index
    %0 = vector.load %arg1[%c0, %c0_0] : memref<32x32xf32, #tpu.memory_space<vmem>>, vector<32x32xf32>
    %cst = arith.constant dense<0.000000e+00> : vector<32xf32>
    %1 = vector.multi_reduction <add>, %0, %cst [1] : vector<32x32xf32> to vector<32xf32>
    %2 = vector.shape_cast %1 : vector<32xf32> to vector<32x1xf32>
    %cst_1 = arith.constant 3.200000e+01 : f32
    %3 = vector.broadcast %cst_1 : f32 to vector<32x1xf32>
    %4 = arith.divf %2, %3 : vector<32x1xf32>
    %5 = vector.broadcast %4 : vector<32x1xf32> to vector<32x32xf32>
    %6 = arith.subf %0, %5 : vector<32x32xf32>
    %7 = arith.mulf %6, %6 : vector<32x32xf32>
    %cst_2 = arith.constant dense<0.000000e+00> : vector<32xf32>
    %8 = vector.multi_reduction <add>, %7, %cst_2 [1] : vector<32x32xf32> to vector<32xf32>
    %9 = vector.shape_cast %8 : vector<32xf32> to vector<32x1xf32>
    %cst_3 = arith.constant 3.200000e+01 : f32
    %10 = vector.broadcast %cst_3 : f32 to vector<32x1xf32>
    %11 = arith.divf %9, %10 : vector<32x1xf32>
    %12 = vector.broadcast %4 : vector<32x1xf32> to vector<32x32xf32>
    %13 = arith.subf %0, %12 : vector<32x32xf32>
    %cst_4 = arith.constant 9.99999996E-13 : f32
    %14 = vector.broadcast %cst_4 : f32 to vector<32x1xf32>
    %15 = arith.addf %11, %14 : vector<32x1xf32>
    %16 = math.rsqrt %15 : vector<32x1xf32>
    %17 = vector.broadcast %16 : vector<32x1xf32> to vector<32x32xf32>
    %18 = arith.mulf %13, %17 : vector<32x32xf32>
    %c0_5 = arith.constant 0 : index
    %c0_6 = arith.constant 0 : index
    %19 = vector.load %arg2[%c0_5, %c0_6] : memref<1x32xf32, #tpu.memory_space<vmem>>, vector<1x32xf32>
    %20 = vector.broadcast %19 : vector<1x32xf32> to vector<32x32xf32>
    %21 = arith.mulf %18, %20 : vector<32x32xf32>
    %c0_7 = arith.constant 0 : index
    %c0_8 = arith.constant 0 : index
    %22 = vector.load %arg3[%c0_7, %c0_8] : memref<1x32xf32, #tpu.memory_space<vmem>>, vector<1x32xf32>
    %23 = vector.broadcast %22 : vector<1x32xf32> to vector<32x32xf32>
    %24 = arith.addf %21, %23 : vector<32x32xf32>
    %25 = arith.truncf %24 : vector<32x32xf32> to vector<32x32xbf16>
    %c0_9 = arith.constant 0 : index
    %c0_10 = arith.constant 0 : index
    %26 = vector.load %arg4[%c0_9, %c0_10] : memref<32x32xbf16, #tpu.memory_space<vmem>>, vector<32x32xbf16>
    tpu.vector_store %arg4[%c0_9, %c0_10], %25 {strides = array<i32>} : memref<32x32xbf16, #tpu.memory_space<vmem>>, vector<32x32xbf16>,
    return
  }
  func.func @transform_0(%arg0: i32) -> (i32, i32) {
    %c0_i32 = arith.constant 0 : i32
    %c0_i32_0 = arith.constant 0 : i32
    return %arg0, %c0_i32 : i32, i32
  }
  func.func @transform_1(%arg0: i32) -> (i32, i32) {
    %c0_i32 = arith.constant 0 : i32
    %c0_i32_0 = arith.constant 0 : i32
    %c0_i32_1 = arith.constant 0 : i32
    return %c0_i32, %c0_i32_0 : i32, i32
  }
  func.func @transform_2(%arg0: i32) -> (i32, i32) {
    %c0_i32 = arith.constant 0 : i32
    %c0_i32_0 = arith.constant 0 : i32
    %c0_i32_1 = arith.constant 0 : i32
    return %c0_i32, %c0_i32_0 : i32, i32
  }
  func.func @transform_3(%arg0: i32) -> (i32, i32) {
    %c0_i32 = arith.constant 0 : i32
    %c0_i32_0 = arith.constant 0 : i32
    return %arg0, %c0_i32 : i32, i32
  }
}

module attributes {stable_mosaic.version = 11 : i64} {
  func.func @_linear_res_ln_kernel(%arg0: i32, %arg1: memref<32x32xbf16, #tpu.memory_space<vmem>>, %arg2: memref<32x32xbf16, #tpu.memory_space<vmem>>, %arg3: memref<1x32xf32, #tpu.memory_space<vmem>>, %arg4: memref<32x32xbf16, #tpu.memory_space<vmem>>, %arg5: memref<1x32xf32, #tpu.memory_space<vmem>>, %arg6: memref<1x32xf32, #tpu.memory_space<vmem>>, %arg7: memref<32x32xbf16, #tpu.memory_space<vmem>>) attributes {dimension_semantics = [#tpu.dimension_semantics<parallel>], iteration_bounds = array<i64: 1>, scalar_prefetch = 0 : i64, scratch_operands = 0 : i64, tpu.core_type = #tpu.core_type<tc>, window_params = [{transform_indices = @transform_0, window_bounds = array<i64: 32, 32>}, {pipeline_mode = #tpu.pipeline_mode<synchronous>, transform_indices = @transform_1, window_bounds = array<i64: 32, 32>}, {pipeline_mode = #tpu.pipeline_mode<synchronous>, transform_indices = @transform_2, window_bounds = array<i64: 1, 32>}, {transform_indices = @transform_3, window_bounds = array<i64: 32, 32>}, {pipeline_mode = #tpu.pipeline_mode<synchronous>, transform_indices = @transform_4, window_bounds = array<i64: 1, 32>}, {pipeline_mode = #tpu.pipeline_mode<synchronous>, transform_indices = @transform_5, window_bounds = array<i64: 1, 32>}, {transform_indices = @transform_6, window_bounds = array<i64: 32, 32>}]} {
    %c0 = arith.constant 0 : index
    %c0_0 = arith.constant 0 : index
    %0 = vector.load %arg1[%c0, %c0_0] : memref<32x32xbf16, #tpu.memory_space<vmem>>, vector<32x32xbf16>
    %c0_1 = arith.constant 0 : index
    %c0_2 = arith.constant 0 : index
    %1 = vector.load %arg2[%c0_1, %c0_2] : memref<32x32xbf16, #tpu.memory_space<vmem>>, vector<32x32xbf16>
    %cst = arith.constant dense<0.000000e+00> : vector<32x32xf32>
    %2 = tpu.matmul %0, %1, %cst {dimension_numbers = #tpu.dot_dimension_numbers<[1], [0], [0], [1], [0, 0, 1, 1], [], []>} : vector<32x32xbf16>, vector<32x32xbf16>, vector<32x32xf32> -> vector<32x32xf32>
    %c0_3 = arith.constant 0 : index
    %c0_4 = arith.constant 0 : index
    %3 = vector.load %arg3[%c0_3, %c0_4] : memref<1x32xf32, #tpu.memory_space<vmem>>, vector<1x32xf32>
    %4 = vector.broadcast %3 : vector<1x32xf32> to vector<32x32xf32>
    %5 = arith.addf %2, %4 : vector<32x32xf32>
    %c0_5 = arith.constant 0 : index
    %c0_6 = arith.constant 0 : index
    %6 = vector.load %arg4[%c0_5, %c0_6] : memref<32x32xbf16, #tpu.memory_space<vmem>>, vector<32x32xbf16>
    %7 = arith.extf %6 : vector<32x32xbf16> to vector<32x32xf32>
    %8 = arith.addf %5, %7 : vector<32x32xf32>
    %cst_7 = arith.constant dense<0.000000e+00> : vector<32xf32>
    %9 = vector.multi_reduction <add>, %8, %cst_7 [1] : vector<32x32xf32> to vector<32xf32>
    %10 = vector.shape_cast %9 : vector<32xf32> to vector<32x1xf32>
    %cst_8 = arith.constant 3.200000e+01 : f32
    %11 = vector.broadcast %cst_8 : f32 to vector<32x1xf32>
    %12 = arith.divf %10, %11 : vector<32x1xf32>
    %13 = vector.broadcast %12 : vector<32x1xf32> to vector<32x32xf32>
    %14 = arith.subf %8, %13 : vector<32x32xf32>
    %15 = arith.mulf %14, %14 : vector<32x32xf32>
    %cst_9 = arith.constant dense<0.000000e+00> : vector<32xf32>
    %16 = vector.multi_reduction <add>, %15, %cst_9 [1] : vector<32x32xf32> to vector<32xf32>
    %17 = vector.shape_cast %16 : vector<32xf32> to vector<32x1xf32>
    %cst_10 = arith.constant 3.200000e+01 : f32
    %18 = vector.broadcast %cst_10 : f32 to vector<32x1xf32>
    %19 = arith.divf %17, %18 : vector<32x1xf32>
    %20 = vector.broadcast %12 : vector<32x1xf32> to vector<32x32xf32>
    %21 = arith.subf %8, %20 : vector<32x32xf32>
    %cst_11 = arith.constant 9.99999996E-13 : f32
    %22 = vector.broadcast %cst_11 : f32 to vector<32x1xf32>
    %23 = arith.addf %19, %22 : vector<32x1xf32>
    %24 = math.rsqrt %23 : vector<32x1xf32>
    %25 = vector.broadcast %24 : vector<32x1xf32> to vector<32x32xf32>
    %26 = arith.mulf %21, %25 : vector<32x32xf32>
    %c0_12 = arith.constant 0 : index
    %c0_13 = arith.constant 0 : index
    %27 = vector.load %arg5[%c0_12, %c0_13] : memref<1x32xf32, #tpu.memory_space<vmem>>, vector<1x32xf32>
    %28 = vector.broadcast %27 : vector<1x32xf32> to vector<32x32xf32>
    %29 = arith.mulf %26, %28 : vector<32x32xf32>
    %c0_14 = arith.constant 0 : index
    %c0_15 = arith.constant 0 : index
    %30 = vector.load %arg6[%c0_14, %c0_15] : memref<1x32xf32, #tpu.memory_space<vmem>>, vector<1x32xf32>
    %31 = vector.broadcast %30 : vector<1x32xf32> to vector<32x32xf32>
    %32 = arith.addf %29, %31 : vector<32x32xf32>
    %33 = arith.truncf %32 : vector<32x32xf32> to vector<32x32xbf16>
    %c0_16 = arith.constant 0 : index
    %c0_17 = arith.constant 0 : index
    %34 = vector.load %arg7[%c0_16, %c0_17] : memref<32x32xbf16, #tpu.memory_space<vmem>>, vector<32x32xbf16>
    tpu.vector_store %arg7[%c0_16, %c0_17], %33 {strides = array<i32>} : memref<32x32xbf16, #tpu.memory_space<vmem>>, vector<32x32xbf16>,
    return
  }
  func.func @transform_0(%arg0: i32) -> (i32, i32) {
    %c0_i32 = arith.constant 0 : i32
    %c0_i32_0 = arith.constant 0 : i32
    return %arg0, %c0_i32 : i32, i32
  }
  func.func @transform_1(%arg0: i32) -> (i32, i32) {
    %c0_i32 = arith.constant 0 : i32
    %c0_i32_0 = arith.constant 0 : i32
    %c0_i32_1 = arith.constant 0 : i32
    return %c0_i32, %c0_i32_0 : i32, i32
  }
  func.func @transform_2(%arg0: i32) -> (i32, i32) {
    %c0_i32 = arith.constant 0 : i32
    %c0_i32_0 = arith.constant 0 : i32
    %c0_i32_1 = arith.constant 0 : i32
    return %c0_i32, %c0_i32_0 : i32, i32
  }
  func.func @transform_3(%arg0: i32) -> (i32, i32) {
    %c0_i32 = arith.constant 0 : i32
    %c0_i32_0 = arith.constant 0 : i32
    return %arg0, %c0_i32 : i32, i32
  }
  func.func @transform_4(%arg0: i32) -> (i32, i32) {
    %c0_i32 = arith.constant 0 : i32
    %c0_i32_0 = arith.constant 0 : i32
    %c0_i32_1 = arith.constant 0 : i32
    return %c0_i32, %c0_i32_0 : i32, i32
  }
  func.func @transform_5(%arg0: i32) -> (i32, i32) {
    %c0_i32 = arith.constant 0 : i32
    %c0_i32_0 = arith.constant 0 : i32
    %c0_i32_1 = arith.constant 0 : i32
    return %c0_i32, %c0_i32_0 : i32, i32
  }
  func.func @transform_6(%arg0: i32) -> (i32, i32) {
    %c0_i32 = arith.constant 0 : i32
    %c0_i32_0 = arith.constant 0 : i32
    return %arg0, %c0_i32 : i32, i32
  }
}

module attributes {stable_mosaic.version = 11 : i64} {
  func.func @_attention_kernel(%arg0: i32, %arg1: memref<1x16x96xbf16, #tpu.memory_space<vmem>>, %arg2: memref<1x1x16xf32, #tpu.memory_space<vmem>>, %arg3: memref<1x16x32xbf16, #tpu.memory_space<vmem>>) attributes {dimension_semantics = [#tpu.dimension_semantics<parallel>], iteration_bounds = array<i64: 2>, scalar_prefetch = 0 : i64, scratch_operands = 0 : i64, tpu.core_type = #tpu.core_type<tc>, window_params = [{transform_indices = @transform_0, window_bounds = array<i64: 1, 16, 96>}, {transform_indices = @transform_1, window_bounds = array<i64: 1, 1, 16>}, {transform_indices = @transform_2, window_bounds = array<i64: 1, 16, 32>}]} {
    %c0 = arith.constant 0 : index
    %c0_0 = arith.constant 0 : index
    %c0_1 = arith.constant 0 : index
    %0 = vector.load %arg2[%c0, %c0_0, %c0_1] : memref<1x1x16xf32, #tpu.memory_space<vmem>>, vector<1x1x16xf32>
    %1 = vector.shape_cast %0 : vector<1x1x16xf32> to vector<1x16xf32>
    %c0_2 = arith.constant 0 : index
    %c0_3 = arith.constant 0 : index
    %c0_4 = arith.constant 0 : index
    %2 = vector.load %arg1[%c0_2, %c0_3, %c0_4] : memref<1x16x96xbf16, #tpu.memory_space<vmem>>, vector<1x16x8xbf16>
    %3 = vector.shape_cast %2 : vector<1x16x8xbf16> to vector<16x8xbf16>
    %c0_5 = arith.constant 0 : index
    %c0_6 = arith.constant 0 : index
    %c32 = arith.constant 32 : index
    %4 = vector.load %arg1[%c0_5, %c0_6, %c32] : memref<1x16x96xbf16, #tpu.memory_space<vmem>>, vector<1x16x8xbf16>
    %5 = vector.shape_cast %4 : vector<1x16x8xbf16> to vector<16x8xbf16>
    %c0_7 = arith.constant 0 : index
    %c0_8 = arith.constant 0 : index
    %c64 = arith.constant 64 : index
    %6 = vector.load %arg1[%c0_7, %c0_8, %c64] : memref<1x16x96xbf16, #tpu.memory_space<vmem>>, vector<1x16x8xbf16>
    %7 = vector.shape_cast %6 : vector<1x16x8xbf16> to vector<16x8xbf16>
    "tpu.trace_start"() <{level = 10 : i32, message = "qd,kd->qk"}> : () -> ()
    %cst = arith.constant dense<0.000000e+00> : vector<16x16xf32>
    %8 = tpu.matmul %3, %5, %cst {dimension_numbers = #tpu.dot_dimension_numbers<[1], [1], [0], [0], [0, 0, 1, 0], [], []>} : vector<16x8xbf16>, vector<16x8xbf16>, vector<16x16xf32> -> vector<16x16xf32>
    "tpu.trace_stop"() : () -> ()
    %cst_9 = arith.constant 0.353553385 : f32
    %9 = vector.broadcast %cst_9 : f32 to vector<16x16xf32>
    %10 = arith.mulf %8, %9 : vector<16x16xf32>
    %11 = vector.broadcast %1 : vector<1x16xf32> to vector<16x16xf32>
    %12 = arith.addf %10, %11 : vector<16x16xf32>
    %cst_10 = arith.constant dense<0xFF800000> : vector<16xf32>
    %13 = vector.multi_reduction <maximumf>, %12, %cst_10 [1] : vector<16x16xf32> to vector<16xf32>
    %14 = vector.shape_cast %13 : vector<16xf32> to vector<16x1xf32>
    %15 = vector.broadcast %14 : vector<16x1xf32> to vector<16x16xf32>
    %16 = arith.subf %12, %15 : vector<16x16xf32>
    %17 = math.exp %16 : vector<16x16xf32>
    %cst_11 = arith.constant dense<0.000000e+00> : vector<16xf32>
    %18 = vector.multi_reduction <add>, %17, %cst_11 [1] : vector<16x16xf32> to vector<16xf32>
    %19 = vector.shape_cast %18 : vector<16xf32> to vector<16x1xf32>
    %20 = tpu.reciprocal %19 {approx = true} : vector<16x1xf32> -> vector<16x1xf32>
    %21 = vector.broadcast %20 : vector<16x1xf32> to vector<16x16xf32>
    %22 = arith.mulf %17, %21 : vector<16x16xf32>
    %23 = arith.truncf %22 : vector<16x16xf32> to vector<16x16xbf16>
    "tpu.trace_start"() <{level = 10 : i32, message = "qk,kd->qd"}> : () -> ()
    %cst_12 = arith.constant dense<0.000000e+00> : vector<16x8xf32>
    %24 = tpu.matmul %23, %7, %cst_12 {dimension_numbers = #tpu.dot_dimension_numbers<[1], [0], [0], [1], [0, 0, 1, 1], [], []>} : vector<16x16xbf16>, vector<16x8xbf16>, vector<16x8xf32> -> vector<16x8xf32>
    "tpu.trace_stop"() : () -> ()
    %25 = arith.truncf %24 : vector<16x8xf32> to vector<16x8xbf16>
    %c0_13 = arith.constant 0 : index
    %c0_14 = arith.constant 0 : index
    %c0_15 = arith.constant 0 : index
    %26 = vector.load %arg3[%c0_13, %c0_14, %c0_15] : memref<1x16x32xbf16, #tpu.memory_space<vmem>>, vector<1x16x8xbf16>
    %27 = vector.shape_cast %26 : vector<1x16x8xbf16> to vector<16x8xbf16>
    %28 = vector.shape_cast %25 : vector<16x8xbf16> to vector<1x16x8xbf16>
    tpu.vector_store %arg3[%c0_13, %c0_14, %c0_15], %28 {strides = array<i32>} : memref<1x16x32xbf16, #tpu.memory_space<vmem>>, vector<1x16x8xbf16>,
    %c0_16 = arith.constant 0 : index
    %c0_17 = arith.constant 0 : index
    %c8 = arith.constant 8 : index
    %29 = vector.load %arg1[%c0_16, %c0_17, %c8] : memref<1x16x96xbf16, #tpu.memory_space<vmem>>, vector<1x16x8xbf16>
    %30 = vector.shape_cast %29 : vector<1x16x8xbf16> to vector<16x8xbf16>
    %c0_18 = arith.constant 0 : index
    %c0_19 = arith.constant 0 : index
    %c40 = arith.constant 40 : index
    %31 = vector.load %arg1[%c0_18, %c0_19, %c40] : memref<1x16x96xbf16, #tpu.memory_space<vmem>>, vector<1x16x8xbf16>
    %32 = vector.shape_cast %31 : vector<1x16x8xbf16> to vector<16x8xbf16>
    %c0_20 = arith.constant 0 : index
    %c0_21 = arith.constant 0 : index
    %c72 = arith.constant 72 : index
    %33 = vector.load %arg1[%c0_20, %c0_21, %c72] : memref<1x16x96xbf16, #tpu.memory_space<vmem>>, vector<1x16x8xbf16>
    %34 = vector.shape_cast %33 : vector<1x16x8xbf16> to vector<16x8xbf16>
    "tpu.trace_start"() <{level = 10 : i32, message = "qd,kd->qk"}> : () -> ()
    %cst_22 = arith.constant dense<0.000000e+00> : vector<16x16xf32>
    %35 = tpu.matmul %30, %32, %cst_22 {dimension_numbers = #tpu.dot_dimension_numbers<[1], [1], [0], [0], [0, 0, 1, 0], [], []>} : vector<16x8xbf16>, vector<16x8xbf16>, vector<16x16xf32> -> vector<16x16xf32>
    "tpu.trace_stop"() : () -> ()
    %cst_23 = arith.constant 0.353553385 : f32
    %36 = vector.broadcast %cst_23 : f32 to vector<16x16xf32>
    %37 = arith.mulf %35, %36 : vector<16x16xf32>
    %38 = vector.broadcast %1 : vector<1x16xf32> to vector<16x16xf32>
    %39 = arith.addf %37, %38 : vector<16x16xf32>
    %cst_24 = arith.constant dense<0xFF800000> : vector<16xf32>
    %40 = vector.multi_reduction <maximumf>, %39, %cst_24 [1] : vector<16x16xf32> to vector<16xf32>
    %41 = vector.shape_cast %40 : vector<16xf32> to vector<16x1xf32>
    %42 = vector.broadcast %41 : vector<16x1xf32> to vector<16x16xf32>
    %43 = arith.subf %39, %42 : vector<16x16xf32>
    %44 = math.exp %43 : vector<16x16xf32>
    %cst_25 = arith.constant dense<0.000000e+00> : vector<16xf32>
    %45 = vector.multi_reduction <add>, %44, %cst_25 [1] : vector<16x16xf32> to vector<16xf32>
    %46 = vector.shape_cast %45 : vector<16xf32> to vector<16x1xf32>
    %47 = tpu.reciprocal %46 {approx = true} : vector<16x1xf32> -> vector<16x1xf32>
    %48 = vector.broadcast %47 : vector<16x1xf32> to vector<16x16xf32>
    %49 = arith.mulf %44, %48 : vector<16x16xf32>
    %50 = arith.truncf %49 : vector<16x16xf32> to vector<16x16xbf16>
    "tpu.trace_start"() <{level = 10 : i32, message = "qk,kd->qd"}> : () -> ()
    %cst_26 = arith.constant dense<0.000000e+00> : vector<16x8xf32>
    %51 = tpu.matmul %50, %34, %cst_26 {dimension_numbers = #tpu.dot_dimension_numbers<[1], [0], [0], [1], [0, 0, 1, 1], [], []>} : vector<16x16xbf16>, vector<16x8xbf16>, vector<16x8xf32> -> vector<16x8xf32>
    "tpu.trace_stop"() : () -> ()
    %52 = arith.truncf %51 : vector<16x8xf32> to vector<16x8xbf16>
    %c0_27 = arith.constant 0 : index
    %c0_28 = arith.constant 0 : index
    %c8_29 = arith.constant 8 : index
    %53 = vector.load %arg3[%c0_27, %c0_28, %c8_29] : memref<1x16x32xbf16, #tpu.memory_space<vmem>>, vector<1x16x8xbf16>
    %54 = vector.shape_cast %53 : vector<1x16x8xbf16> to vector<16x8xbf16>
    %55 = vector.shape_cast %52 : vector<16x8xbf16> to vector<1x16x8xbf16>
    tpu.vector_store %arg3[%c0_27, %c0_28, %c8_29], %55 {strides = array<i32>} : memref<1x16x32xbf16, #tpu.memory_space<vmem>>, vector<1x16x8xbf16>,
    %c0_30 = arith.constant 0 : index
    %c0_31 = arith.constant 0 : index
    %c16 = arith.constant 16 : index
    %56 = vector.load %arg1[%c0_30, %c0_31, %c16] : memref<1x16x96xbf16, #tpu.memory_space<vmem>>, vector<1x16x8xbf16>
    %57 = vector.shape_cast %56 : vector<1x16x8xbf16> to vector<16x8xbf16>
    %c0_32 = arith.constant 0 : index
    %c0_33 = arith.constant 0 : index
    %c48 = arith.constant 48 : index
    %58 = vector.load %arg1[%c0_32, %c0_33, %c48] : memref<1x16x96xbf16, #tpu.memory_space<vmem>>, vector<1x16x8xbf16>
    %59 = vector.shape_cast %58 : vector<1x16x8xbf16> to vector<16x8xbf16>
    %c0_34 = arith.constant 0 : index
    %c0_35 = arith.constant 0 : index
    %c80 = arith.constant 80 : index
    %60 = vector.load %arg1[%c0_34, %c0_35, %c80] : memref<1x16x96xbf16, #tpu.memory_space<vmem>>, vector<1x16x8xbf16>
    %61 = vector.shape_cast %60 : vector<1x16x8xbf16> to vector<16x8xbf16>
    "tpu.trace_start"() <{level = 10 : i32, message = "qd,kd->qk"}> : () -> ()
    %cst_36 = arith.constant dense<0.000000e+00> : vector<16x16xf32>
    %62 = tpu.matmul %57, %59, %cst_36 {dimension_numbers = #tpu.dot_dimension_numbers<[1], [1], [0], [0], [0, 0, 1, 0], [], []>} : vector<16x8xbf16>, vector<16x8xbf16>, vector<16x16xf32> -> vector<16x16xf32>
    "tpu.trace_stop"() : () -> ()
    %cst_37 = arith.constant 0.353553385 : f32
    %63 = vector.broadcast %cst_37 : f32 to vector<16x16xf32>
    %64 = arith.mulf %62, %63 : vector<16x16xf32>
    %65 = vector.broadcast %1 : vector<1x16xf32> to vector<16x16xf32>
    %66 = arith.addf %64, %65 : vector<16x16xf32>
    %cst_38 = arith.constant dense<0xFF800000> : vector<16xf32>
    %67 = vector.multi_reduction <maximumf>, %66, %cst_38 [1] : vector<16x16xf32> to vector<16xf32>
    %68 = vector.shape_cast %67 : vector<16xf32> to vector<16x1xf32>
    %69 = vector.broadcast %68 : vector<16x1xf32> to vector<16x16xf32>
    %70 = arith.subf %66, %69 : vector<16x16xf32>
    %71 = math.exp %70 : vector<16x16xf32>
    %cst_39 = arith.constant dense<0.000000e+00> : vector<16xf32>
    %72 = vector.multi_reduction <add>, %71, %cst_39 [1] : vector<16x16xf32> to vector<16xf32>
    %73 = vector.shape_cast %72 : vector<16xf32> to vector<16x1xf32>
    %74 = tpu.reciprocal %73 {approx = true} : vector<16x1xf32> -> vector<16x1xf32>
    %75 = vector.broadcast %74 : vector<16x1xf32> to vector<16x16xf32>
    %76 = arith.mulf %71, %75 : vector<16x16xf32>
    %77 = arith.truncf %76 : vector<16x16xf32> to vector<16x16xbf16>
    "tpu.trace_start"() <{level = 10 : i32, message = "qk,kd->qd"}> : () -> ()
    %cst_40 = arith.constant dense<0.000000e+00> : vector<16x8xf32>
    %78 = tpu.matmul %77, %61, %cst_40 {dimension_numbers = #tpu.dot_dimension_numbers<[1], [0], [0], [1], [0, 0, 1, 1], [], []>} : vector<16x16xbf16>, vector<16x8xbf16>, vector<16x8xf32> -> vector<16x8xf32>
    "tpu.trace_stop"() : () -> ()
    %79 = arith.truncf %78 : vector<16x8xf32> to vector<16x8xbf16>
    %c0_41 = arith.constant 0 : index
    %c0_42 = arith.constant 0 : index
    %c16_43 = arith.constant 16 : index
    %80 = vector.load %arg3[%c0_41, %c0_42, %c16_43] : memref<1x16x32xbf16, #tpu.memory_space<vmem>>, vector<1x16x8xbf16>
    %81 = vector.shape_cast %80 : vector<1x16x8xbf16> to vector<16x8xbf16>
    %82 = vector.shape_cast %79 : vector<16x8xbf16> to vector<1x16x8xbf16>
    tpu.vector_store %arg3[%c0_41, %c0_42, %c16_43], %82 {strides = array<i32>} : memref<1x16x32xbf16, #tpu.memory_space<vmem>>, vector<1x16x8xbf16>,
    %c0_44 = arith.constant 0 : index
    %c0_45 = arith.constant 0 : index
    %c24 = arith.constant 24 : index
    %83 = vector.load %arg1[%c0_44, %c0_45, %c24] : memref<1x16x96xbf16, #tpu.memory_space<vmem>>, vector<1x16x8xbf16>
    %84 = vector.shape_cast %83 : vector<1x16x8xbf16> to vector<16x8xbf16>
    %c0_46 = arith.constant 0 : index
    %c0_47 = arith.constant 0 : index
    %c56 = arith.constant 56 : index
    %85 = vector.load %arg1[%c0_46, %c0_47, %c56] : memref<1x16x96xbf16, #tpu.memory_space<vmem>>, vector<1x16x8xbf16>
    %86 = vector.shape_cast %85 : vector<1x16x8xbf16> to vector<16x8xbf16>
    %c0_48 = arith.constant 0 : index
    %c0_49 = arith.constant 0 : index
    %c88 = arith.constant 88 : index
    %87 = vector.load %arg1[%c0_48, %c0_49, %c88] : memref<1x16x96xbf16, #tpu.memory_space<vmem>>, vector<1x16x8xbf16>
    %88 = vector.shape_cast %87 : vector<1x16x8xbf16> to vector<16x8xbf16>
    "tpu.trace_start"() <{level = 10 : i32, message = "qd,kd->qk"}> : () -> ()
    %cst_50 = arith.constant dense<0.000000e+00> : vector<16x16xf32>
    %89 = tpu.matmul %84, %86, %cst_50 {dimension_numbers = #tpu.dot_dimension_numbers<[1], [1], [0], [0], [0, 0, 1, 0], [], []>} : vector<16x8xbf16>, vector<16x8xbf16>, vector<16x16xf32> -> vector<16x16xf32>
    "tpu.trace_stop"() : () -> ()
    %cst_51 = arith.constant 0.353553385 : f32
    %90 = vector.broadcast %cst_51 : f32 to vector<16x16xf32>
    %91 = arith.mulf %89, %90 : vector<16x16xf32>
    %92 = vector.broadcast %1 : vector<1x16xf32> to vector<16x16xf32>
    %93 = arith.addf %91, %92 : vector<16x16xf32>
    %cst_52 = arith.constant dense<0xFF800000> : vector<16xf32>
    %94 = vector.multi_reduction <maximumf>, %93, %cst_52 [1] : vector<16x16xf32> to vector<16xf32>
    %95 = vector.shape_cast %94 : vector<16xf32> to vector<16x1xf32>
    %96 = vector.broadcast %95 : vector<16x1xf32> to vector<16x16xf32>
    %97 = arith.subf %93, %96 : vector<16x16xf32>
    %98 = math.exp %97 : vector<16x16xf32>
    %cst_53 = arith.constant dense<0.000000e+00> : vector<16xf32>
    %99 = vector.multi_reduction <add>, %98, %cst_53 [1] : vector<16x16xf32> to vector<16xf32>
    %100 = vector.shape_cast %99 : vector<16xf32> to vector<16x1xf32>
    %101 = tpu.reciprocal %100 {approx = true} : vector<16x1xf32> -> vector<16x1xf32>
    %102 = vector.broadcast %101 : vector<16x1xf32> to vector<16x16xf32>
    %103 = arith.mulf %98, %102 : vector<16x16xf32>
    %104 = arith.truncf %103 : vector<16x16xf32> to vector<16x16xbf16>
    "tpu.trace_start"() <{level = 10 : i32, message = "qk,kd->qd"}> : () -> ()
    %cst_54 = arith.constant dense<0.000000e+00> : vector<16x8xf32>
    %105 = tpu.matmul %104, %88, %cst_54 {dimension_numbers = #tpu.dot_dimension_numbers<[1], [0], [0], [1], [0, 0, 1, 1], [], []>} : vector<16x16xbf16>, vector<16x8xbf16>, vector<16x8xf32> -> vector<16x8xf32>
    "tpu.trace_stop"() : () -> ()
    %106 = arith.truncf %105 : vector<16x8xf32> to vector<16x8xbf16>
    %c0_55 = arith.constant 0 : index
    %c0_56 = arith.constant 0 : index
    %c24_57 = arith.constant 24 : index
    %107 = vector.load %arg3[%c0_55, %c0_56, %c24_57] : memref<1x16x32xbf16, #tpu.memory_space<vmem>>, vector<1x16x8xbf16>
    %108 = vector.shape_cast %107 : vector<1x16x8xbf16> to vector<16x8xbf16>
    %109 = vector.shape_cast %106 : vector<16x8xbf16> to vector<1x16x8xbf16>
    tpu.vector_store %arg3[%c0_55, %c0_56, %c24_57], %109 {strides = array<i32>} : memref<1x16x32xbf16, #tpu.memory_space<vmem>>, vector<1x16x8xbf16>,
    return
  }
  func.func @transform_0(%arg0: i32) -> (i32, i32, i32) {
    %c0_i32 = arith.constant 0 : i32
    %c0_i32_0 = arith.constant 0 : i32
    %c0_i32_1 = arith.constant 0 : i32
    return %arg0, %c0_i32, %c0_i32_0 : i32, i32, i32
  }
  func.func @transform_1(%arg0: i32) -> (i32, i32, i32) {
    %c0_i32 = arith.constant 0 : i32
    %c0_i32_0 = arith.constant 0 : i32
    %c0_i32_1 = arith.constant 0 : i32
    return %arg0, %c0_i32, %c0_i32_0 : i32, i32, i32
  }
  func.func @transform_2(%arg0: i32) -> (i32, i32, i32) {
    %c0_i32 = arith.constant 0 : i32
    %c0_i32_0 = arith.constant 0 : i32
    %c0_i32_1 = arith.constant 0 : i32
    return %arg0, %c0_i32, %c0_i32_0 : i32, i32, i32
  }
}

module attributes {stable_mosaic.version = 11 : i64} {
  func.func @_linear_kernel(%arg0: i32, %arg1: i32, %arg2: memref<32x32xbf16, #tpu.memory_space<vmem>>, %arg3: memref<32x64xbf16, #tpu.memory_space<vmem>>, %arg4: memref<1x64xf32, #tpu.memory_space<vmem>>, %arg5: memref<32x64xbf16, #tpu.memory_space<vmem>>) attributes {dimension_semantics = [#tpu.dimension_semantics<parallel>, #tpu.dimension_semantics<parallel>], iteration_bounds = array<i64: 1, 1>, scalar_prefetch = 0 : i64, scratch_operands = 0 : i64, tpu.core_type = #tpu.core_type<tc>, window_params = [{transform_indices = @transform_0, window_bounds = array<i64: 32, 32>}, {transform_indices = @transform_1, window_bounds = array<i64: 32, 64>}, {transform_indices = @transform_2, window_bounds = array<i64: 1, 64>}, {transform_indices = @transform_3, window_bounds = array<i64: 32, 64>}]} {
    %c0 = arith.constant 0 : index
    %c0_0 = arith.constant 0 : index
    %0 = vector.load %arg2[%c0, %c0_0] : memref<32x32xbf16, #tpu.memory_space<vmem>>, vector<32x32xbf16>
    %c0_1 = arith.constant 0 : index
    %c0_2 = arith.constant 0 : index
    %1 = vector.load %arg3[%c0_1, %c0_2] : memref<32x64xbf16, #tpu.memory_space<vmem>>, vector<32x64xbf16>
    %cst = arith.constant dense<0.000000e+00> : vector<32x64xf32>
    %2 = tpu.matmul %0, %1, %cst {dimension_numbers = #tpu.dot_dimension_numbers<[1], [0], [0], [1], [0, 0, 1, 1], [], []>} : vector<32x32xbf16>, vector<32x64xbf16>, vector<32x64xf32> -> vector<32x64xf32>
    %c0_3 = arith.constant 0 : index
    %c0_4 = arith.constant 0 : index
    %3 = vector.load %arg4[%c0_3, %c0_4] : memref<1x64xf32, #tpu.memory_space<vmem>>, vector<1x64xf32>
    %4 = vector.broadcast %3 : vector<1x64xf32> to vector<32x64xf32>
    %5 = arith.addf %2, %4 : vector<32x64xf32>
    %6 = arith.mulf %5, %5 : vector<32x64xf32>
    %7 = arith.mulf %5, %6 : vector<32x64xf32>
    %cst_5 = arith.constant 4.471500e-02 : f32
    %8 = vector.broadcast %cst_5 : f32 to vector<32x64xf32>
    %9 = arith.mulf %8, %7 : vector<32x64xf32>
    %10 = arith.addf %5, %9 : vector<32x64xf32>
    %cst_6 = arith.constant 0.797884583 : f32
    %11 = vector.broadcast %cst_6 : f32 to vector<32x64xf32>
    %12 = arith.mulf %11, %10 : vector<32x64xf32>
    %13 = math.tanh %12 : vector<32x64xf32>
    %cst_7 = arith.constant 1.000000e+00 : f32
    %14 = vector.broadcast %cst_7 : f32 to vector<32x64xf32>
    %15 = arith.addf %14, %13 : vector<32x64xf32>
    %cst_8 = arith.constant 5.000000e-01 : f32
    %16 = vector.broadcast %cst_8 : f32 to vector<32x64xf32>
    %17 = arith.mulf %16, %15 : vector<32x64xf32>
    %18 = arith.mulf %5, %17 : vector<32x64xf32>
    %19 = arith.truncf %18 : vector<32x64xf32> to vector<32x64xbf16>
    %c0_9 = arith.constant 0 : index
    %c0_10 = arith.constant 0 : index
    %20 = vector.load %arg5[%c0_9, %c0_10] : memref<32x64xbf16, #tpu.memory_space<vmem>>, vector<32x64xbf16>
    tpu.vector_store %arg5[%c0_9, %c0_10], %19 {strides = array<i32>} : memref<32x64xbf16, #tpu.memory_space<vmem>>, vector<32x64xbf16>,
    return
  }
  func.func @transform_0(%arg0: i32, %arg1: i32) -> (i32, i32) {
    %c0_i32 = arith.constant 0 : i32
    %c0_i32_0 = arith.constant 0 : i32
    return %arg0, %c0_i32 : i32, i32
  }
  func.func @transform_1(%arg0: i32, %arg1: i32) -> (i32, i32) {
    %c0_i32 = arith.constant 0 : i32
    %c0_i32_0 = arith.constant 0 : i32
    return %c0_i32, %arg1 : i32, i32
  }
  func.func @transform_2(%arg0: i32, %arg1: i32) -> (i32, i32) {
    %c0_i32 = arith.constant 0 : i32
    %c0_i32_0 = arith.constant 0 : i32
    return %c0_i32, %arg1 : i32, i32
  }
  func.func @transform_3(%arg0: i32, %arg1: i32) -> (i32, i32) {
    %c0_i32 = arith.constant 0 : i32
    return %arg0, %arg1 : i32, i32
  }
}

module attributes {stable_mosaic.version = 11 : i64} {
  func.func @_linear_res_ln_kernel(%arg0: i32, %arg1: memref<32x64xbf16, #tpu.memory_space<vmem>>, %arg2: memref<64x32xbf16, #tpu.memory_space<vmem>>, %arg3: memref<1x32xf32, #tpu.memory_space<vmem>>, %arg4: memref<32x32xbf16, #tpu.memory_space<vmem>>, %arg5: memref<1x32xf32, #tpu.memory_space<vmem>>, %arg6: memref<1x32xf32, #tpu.memory_space<vmem>>, %arg7: memref<32x32xbf16, #tpu.memory_space<vmem>>) attributes {dimension_semantics = [#tpu.dimension_semantics<parallel>], iteration_bounds = array<i64: 1>, scalar_prefetch = 0 : i64, scratch_operands = 0 : i64, tpu.core_type = #tpu.core_type<tc>, window_params = [{transform_indices = @transform_0, window_bounds = array<i64: 32, 64>}, {pipeline_mode = #tpu.pipeline_mode<synchronous>, transform_indices = @transform_1, window_bounds = array<i64: 64, 32>}, {pipeline_mode = #tpu.pipeline_mode<synchronous>, transform_indices = @transform_2, window_bounds = array<i64: 1, 32>}, {transform_indices = @transform_3, window_bounds = array<i64: 32, 32>}, {pipeline_mode = #tpu.pipeline_mode<synchronous>, transform_indices = @transform_4, window_bounds = array<i64: 1, 32>}, {pipeline_mode = #tpu.pipeline_mode<synchronous>, transform_indices = @transform_5, window_bounds = array<i64: 1, 32>}, {transform_indices = @transform_6, window_bounds = array<i64: 32, 32>}]} {
    %c0 = arith.constant 0 : index
    %c0_0 = arith.constant 0 : index
    %0 = vector.load %arg1[%c0, %c0_0] : memref<32x64xbf16, #tpu.memory_space<vmem>>, vector<32x64xbf16>
    %c0_1 = arith.constant 0 : index
    %c0_2 = arith.constant 0 : index
    %1 = vector.load %arg2[%c0_1, %c0_2] : memref<64x32xbf16, #tpu.memory_space<vmem>>, vector<64x32xbf16>
    %cst = arith.constant dense<0.000000e+00> : vector<32x32xf32>
    %2 = tpu.matmul %0, %1, %cst {dimension_numbers = #tpu.dot_dimension_numbers<[1], [0], [0], [1], [0, 0, 1, 1], [], []>} : vector<32x64xbf16>, vector<64x32xbf16>, vector<32x32xf32> -> vector<32x32xf32>
    %c0_3 = arith.constant 0 : index
    %c0_4 = arith.constant 0 : index
    %3 = vector.load %arg3[%c0_3, %c0_4] : memref<1x32xf32, #tpu.memory_space<vmem>>, vector<1x32xf32>
    %4 = vector.broadcast %3 : vector<1x32xf32> to vector<32x32xf32>
    %5 = arith.addf %2, %4 : vector<32x32xf32>
    %c0_5 = arith.constant 0 : index
    %c0_6 = arith.constant 0 : index
    %6 = vector.load %arg4[%c0_5, %c0_6] : memref<32x32xbf16, #tpu.memory_space<vmem>>, vector<32x32xbf16>
    %7 = arith.extf %6 : vector<32x32xbf16> to vector<32x32xf32>
    %8 = arith.addf %5, %7 : vector<32x32xf32>
    %cst_7 = arith.constant dense<0.000000e+00> : vector<32xf32>
    %9 = vector.multi_reduction <add>, %8, %cst_7 [1] : vector<32x32xf32> to vector<32xf32>
    %10 = vector.shape_cast %9 : vector<32xf32> to vector<32x1xf32>
    %cst_8 = arith.constant 3.200000e+01 : f32
    %11 = vector.broadcast %cst_8 : f32 to vector<32x1xf32>
    %12 = arith.divf %10, %11 : vector<32x1xf32>
    %13 = vector.broadcast %12 : vector<32x1xf32> to vector<32x32xf32>
    %14 = arith.subf %8, %13 : vector<32x32xf32>
    %15 = arith.mulf %14, %14 : vector<32x32xf32>
    %cst_9 = arith.constant dense<0.000000e+00> : vector<32xf32>
    %16 = vector.multi_reduction <add>, %15, %cst_9 [1] : vector<32x32xf32> to vector<32xf32>
    %17 = vector.shape_cast %16 : vector<32xf32> to vector<32x1xf32>
    %cst_10 = arith.constant 3.200000e+01 : f32
    %18 = vector.broadcast %cst_10 : f32 to vector<32x1xf32>
    %19 = arith.divf %17, %18 : vector<32x1xf32>
    %20 = vector.broadcast %12 : vector<32x1xf32> to vector<32x32xf32>
    %21 = arith.subf %8, %20 : vector<32x32xf32>
    %cst_11 = arith.constant 9.99999996E-13 : f32
    %22 = vector.broadcast %cst_11 : f32 to vector<32x1xf32>
    %23 = arith.addf %19, %22 : vector<32x1xf32>
    %24 = math.rsqrt %23 : vector<32x1xf32>
    %25 = vector.broadcast %24 : vector<32x1xf32> to vector<32x32xf32>
    %26 = arith.mulf %21, %25 : vector<32x32xf32>
    %c0_12 = arith.constant 0 : index
    %c0_13 = arith.constant 0 : index
    %27 = vector.load %arg5[%c0_12, %c0_13] : memref<1x32xf32, #tpu.memory_space<vmem>>, vector<1x32xf32>
    %28 = vector.broadcast %27 : vector<1x32xf32> to vector<32x32xf32>
    %29 = arith.mulf %26, %28 : vector<32x32xf32>
    %c0_14 = arith.constant 0 : index
    %c0_15 = arith.constant 0 : index
    %30 = vector.load %arg6[%c0_14, %c0_15] : memref<1x32xf32, #tpu.memory_space<vmem>>, vector<1x32xf32>
    %31 = vector.broadcast %30 : vector<1x32xf32> to vector<32x32xf32>
    %32 = arith.addf %29, %31 : vector<32x32xf32>
    %33 = arith.truncf %32 : vector<32x32xf32> to vector<32x32xbf16>
    %c0_16 = arith.constant 0 : index
    %c0_17 = arith.constant 0 : index
    %34 = vector.load %arg7[%c0_16, %c0_17] : memref<32x32xbf16, #tpu.memory_space<vmem>>, vector<32x32xbf16>
    tpu.vector_store %arg7[%c0_16, %c0_17], %33 {strides = array<i32>} : memref<32x32xbf16, #tpu.memory_space<vmem>>, vector<32x32xbf16>,
    return
  }
  func.func @transform_0(%arg0: i32) -> (i32, i32) {
    %c0_i32 = arith.constant 0 : i32
    %c0_i32_0 = arith.constant 0 : i32
    return %arg0, %c0_i32 : i32, i32
  }
  func.func @transform_1(%arg0: i32) -> (i32, i32) {
    %c0_i32 = arith.constant 0 : i32
    %c0_i32_0 = arith.constant 0 : i32
    %c0_i32_1 = arith.constant 0 : i32
    return %c0_i32, %c0_i32_0 : i32, i32
  }
  func.func @transform_2(%arg0: i32) -> (i32, i32) {
    %c0_i32 = arith.constant 0 : i32
    %c0_i32_0 = arith.constant 0 : i32
    %c0_i32_1 = arith.constant 0 : i32
    return %c0_i32, %c0_i32_0 : i32, i32
  }
  func.func @transform_3(%arg0: i32) -> (i32, i32) {
    %c0_i32 = arith.constant 0 : i32
    %c0_i32_0 = arith.constant 0 : i32
    return %arg0, %c0_i32 : i32, i32
  }
  func.func @transform_4(%arg0: i32) -> (i32, i32) {
    %c0_i32 = arith.constant 0 : i32
    %c0_i32_0 = arith.constant 0 : i32
    %c0_i32_1 = arith.constant 0 : i32
    return %c0_i32, %c0_i32_0 : i32, i32
  }
  func.func @transform_5(%arg0: i32) -> (i32, i32) {
    %c0_i32 = arith.constant 0 : i32
    %c0_i32_0 = arith.constant 0 : i32
    %c0_i32_1 = arith.constant 0 : i32
    return %c0_i32, %c0_i32_0 : i32, i32
  }
  func.func @transform_6(%arg0: i32) -> (i32, i32) {
    %c0_i32 = arith.constant 0 : i32
    %c0_i32_0 = arith.constant 0 : i32
    return %arg0, %c0_i32 : i32, i32
  }
}

module attributes {stable_mosaic.version = 11 : i64} {
  func.func @_linear_kernel(%arg0: i32, %arg1: i32, %arg2: memref<32x32xbf16, #tpu.memory_space<vmem>>, %arg3: memref<32x256xbf16, #tpu.memory_space<vmem>>, %arg4: memref<1x256xf32, #tpu.memory_space<vmem>>, %arg5: memref<32x256xbf16, #tpu.memory_space<vmem>>) attributes {dimension_semantics = [#tpu.dimension_semantics<parallel>, #tpu.dimension_semantics<parallel>], iteration_bounds = array<i64: 1, 1>, scalar_prefetch = 0 : i64, scratch_operands = 0 : i64, tpu.core_type = #tpu.core_type<tc>, window_params = [{transform_indices = @transform_0, window_bounds = array<i64: 32, 32>}, {transform_indices = @transform_1, window_bounds = array<i64: 32, 256>}, {transform_indices = @transform_2, window_bounds = array<i64: 1, 256>}, {transform_indices = @transform_3, window_bounds = array<i64: 32, 256>}]} {
    %c0 = arith.constant 0 : index
    %c0_0 = arith.constant 0 : index
    %0 = vector.load %arg2[%c0, %c0_0] : memref<32x32xbf16, #tpu.memory_space<vmem>>, vector<32x32xbf16>
    %c0_1 = arith.constant 0 : index
    %c0_2 = arith.constant 0 : index
    %1 = vector.load %arg3[%c0_1, %c0_2] : memref<32x256xbf16, #tpu.memory_space<vmem>>, vector<32x256xbf16>
    %cst = arith.constant dense<0.000000e+00> : vector<32x256xf32>
    %2 = tpu.matmul %0, %1, %cst {dimension_numbers = #tpu.dot_dimension_numbers<[1], [0], [0], [1], [0, 0, 1, 1], [], []>} : vector<32x32xbf16>, vector<32x256xbf16>, vector<32x256xf32> -> vector<32x256xf32>
    %c0_3 = arith.constant 0 : index
    %c0_4 = arith.constant 0 : index
    %3 = vector.load %arg4[%c0_3, %c0_4] : memref<1x256xf32, #tpu.memory_space<vmem>>, vector<1x256xf32>
    %4 = vector.broadcast %3 : vector<1x256xf32> to vector<32x256xf32>
    %5 = arith.addf %2, %4 : vector<32x256xf32>
    %6 = arith.truncf %5 : vector<32x256xf32> to vector<32x256xbf16>
    %c0_5 = arith.constant 0 : index
    %c0_6 = arith.constant 0 : index
    %7 = vector.load %arg5[%c0_5, %c0_6] : memref<32x256xbf16, #tpu.memory_space<vmem>>, vector<32x256xbf16>
    tpu.vector_store %arg5[%c0_5, %c0_6], %6 {strides = array<i32>} : memref<32x256xbf16, #tpu.memory_space<vmem>>, vector<32x256xbf16>,
    return
  }
  func.func @transform_0(%arg0: i32, %arg1: i32) -> (i32, i32) {
    %c0_i32 = arith.constant 0 : i32
    %c0_i32_0 = arith.constant 0 : i32
    return %arg0, %c0_i32 : i32, i32
  }
  func.func @transform_1(%arg0: i32, %arg1: i32) -> (i32, i32) {
    %c0_i32 = arith.constant 0 : i32
    %c0_i32_0 = arith.constant 0 : i32
    return %c0_i32, %arg1 : i32, i32
  }
  func.func @transform_2(%arg0: i32, %arg1: i32) -> (i32, i32) {
    %c0_i32 = arith.constant 0 : i32
    %c0_i32_0 = arith.constant 0 : i32
    return %c0_i32, %arg1 : i32, i32
  }
  func.func @transform_3(%arg0: i32, %arg1: i32) -> (i32, i32) {
    %c0_i32 = arith.constant 0 : i32
    return %arg0, %arg1 : i32, i32
  }
}

module attributes {stable_mosaic.version = 11 : i64} {
  func.func @_linear_kernel(%arg0: i32, %arg1: i32, %arg2: memref<32x64xbf16, #tpu.memory_space<vmem>>, %arg3: memref<64x256xbf16, #tpu.memory_space<vmem>>, %arg4: memref<1x256xf32, #tpu.memory_space<vmem>>, %arg5: memref<32x256xbf16, #tpu.memory_space<vmem>>) attributes {dimension_semantics = [#tpu.dimension_semantics<parallel>, #tpu.dimension_semantics<parallel>], iteration_bounds = array<i64: 1, 1>, scalar_prefetch = 0 : i64, scratch_operands = 0 : i64, tpu.core_type = #tpu.core_type<tc>, window_params = [{transform_indices = @transform_0, window_bounds = array<i64: 32, 64>}, {transform_indices = @transform_1, window_bounds = array<i64: 64, 256>}, {transform_indices = @transform_2, window_bounds = array<i64: 1, 256>}, {transform_indices = @transform_3, window_bounds = array<i64: 32, 256>}]} {
    %c0 = arith.constant 0 : index
    %c0_0 = arith.constant 0 : index
    %0 = vector.load %arg2[%c0, %c0_0] : memref<32x64xbf16, #tpu.memory_space<vmem>>, vector<32x64xbf16>
    %c0_1 = arith.constant 0 : index
    %c0_2 = arith.constant 0 : index
    %1 = vector.load %arg3[%c0_1, %c0_2] : memref<64x256xbf16, #tpu.memory_space<vmem>>, vector<64x256xbf16>
    %cst = arith.constant dense<0.000000e+00> : vector<32x256xf32>
    %2 = tpu.matmul %0, %1, %cst {dimension_numbers = #tpu.dot_dimension_numbers<[1], [0], [0], [1], [0, 0, 1, 1], [], []>} : vector<32x64xbf16>, vector<64x256xbf16>, vector<32x256xf32> -> vector<32x256xf32>
    %c0_3 = arith.constant 0 : index
    %c0_4 = arith.constant 0 : index
    %3 = vector.load %arg4[%c0_3, %c0_4] : memref<1x256xf32, #tpu.memory_space<vmem>>, vector<1x256xf32>
    %4 = vector.broadcast %3 : vector<1x256xf32> to vector<32x256xf32>
    %5 = arith.addf %2, %4 : vector<32x256xf32>
    %6 = arith.truncf %5 : vector<32x256xf32> to vector<32x256xbf16>
    %c0_5 = arith.constant 0 : index
    %c0_6 = arith.constant 0 : index
    %7 = vector.load %arg5[%c0_5, %c0_6] : memref<32x256xbf16, #tpu.memory_space<vmem>>, vector<32x256xbf16>
    tpu.vector_store %arg5[%c0_5, %c0_6], %6 {strides = array<i32>} : memref<32x256xbf16, #tpu.memory_space<vmem>>, vector<32x256xbf16>,
    return
  }
  func.func @transform_0(%arg0: i32, %arg1: i32) -> (i32, i32) {
    %c0_i32 = arith.constant 0 : i32
    %c0_i32_0 = arith.constant 0 : i32
    return %arg0, %c0_i32 : i32, i32
  }
  func.func @transform_1(%arg0: i32, %arg1: i32) -> (i32, i32) {
    %c0_i32 = arith.constant 0 : i32
    %c0_i32_0 = arith.constant 0 : i32
    return %c0_i32, %arg1 : i32, i32
  }
  func.func @transform_2(%arg0: i32, %arg1: i32) -> (i32, i32) {
    %c0_i32 = arith.constant 0 : i32
    %c0_i32_0 = arith.constant 0 : i32
    return %c0_i32, %arg1 : i32, i32
  }
  func.func @transform_3(%arg0: i32, %arg1: i32) -> (i32, i32) {
    %c0_i32 = arith.constant 0 : i32
    return %arg0, %arg1 : i32, i32
  }
}

module attributes {stable_mosaic.version = 11 : i64} {
  func.func @_mid_cls_kernel(%arg0: i32, %arg1: memref<32x64xbf16, #tpu.memory_space<vmem>>, %arg2: memref<64x128xbf16, #tpu.memory_space<vmem>>, %arg3: memref<1x128xf32, #tpu.memory_space<vmem>>, %arg4: memref<128x128xbf16, #tpu.memory_space<vmem>>, %arg5: memref<1x128xf32, #tpu.memory_space<vmem>>, %arg6: memref<32x128xf32, #tpu.memory_space<vmem>>) attributes {dimension_semantics = [#tpu.dimension_semantics<parallel>], iteration_bounds = array<i64: 1>, scalar_prefetch = 0 : i64, scratch_operands = 0 : i64, tpu.core_type = #tpu.core_type<tc>, window_params = [{transform_indices = @transform_0, window_bounds = array<i64: 32, 64>}, {pipeline_mode = #tpu.pipeline_mode<synchronous>, transform_indices = @transform_1, window_bounds = array<i64: 64, 128>}, {pipeline_mode = #tpu.pipeline_mode<synchronous>, transform_indices = @transform_2, window_bounds = array<i64: 1, 128>}, {pipeline_mode = #tpu.pipeline_mode<synchronous>, transform_indices = @transform_3, window_bounds = array<i64: 128, 128>}, {pipeline_mode = #tpu.pipeline_mode<synchronous>, transform_indices = @transform_4, window_bounds = array<i64: 1, 128>}, {transform_indices = @transform_5, window_bounds = array<i64: 32, 128>}]} {
    %c0 = arith.constant 0 : index
    %c0_0 = arith.constant 0 : index
    %0 = vector.load %arg1[%c0, %c0_0] : memref<32x64xbf16, #tpu.memory_space<vmem>>, vector<32x64xbf16>
    %c0_1 = arith.constant 0 : index
    %c0_2 = arith.constant 0 : index
    %1 = vector.load %arg2[%c0_1, %c0_2] : memref<64x128xbf16, #tpu.memory_space<vmem>>, vector<64x128xbf16>
    %cst = arith.constant dense<0.000000e+00> : vector<32x128xf32>
    %2 = tpu.matmul %0, %1, %cst {dimension_numbers = #tpu.dot_dimension_numbers<[1], [0], [0], [1], [0, 0, 1, 1], [], []>} : vector<32x64xbf16>, vector<64x128xbf16>, vector<32x128xf32> -> vector<32x128xf32>
    %c0_3 = arith.constant 0 : index
    %c0_4 = arith.constant 0 : index
    %3 = vector.load %arg3[%c0_3, %c0_4] : memref<1x128xf32, #tpu.memory_space<vmem>>, vector<1x128xf32>
    %4 = vector.broadcast %3 : vector<1x128xf32> to vector<32x128xf32>
    %5 = arith.addf %2, %4 : vector<32x128xf32>
    %cst_5 = arith.constant 0.000000e+00 : f32
    %6 = vector.broadcast %cst_5 : f32 to vector<32x128xf32>
    %7 = arith.maximumf %5, %6 : vector<32x128xf32>
    %8 = arith.truncf %7 : vector<32x128xf32> to vector<32x128xbf16>
    %c0_6 = arith.constant 0 : index
    %c0_7 = arith.constant 0 : index
    %9 = vector.load %arg4[%c0_6, %c0_7] : memref<128x128xbf16, #tpu.memory_space<vmem>>, vector<128x128xbf16>
    %cst_8 = arith.constant dense<0.000000e+00> : vector<32x128xf32>
    %10 = tpu.matmul %8, %9, %cst_8 {dimension_numbers = #tpu.dot_dimension_numbers<[1], [0], [0], [1], [0, 0, 1, 1], [], []>} : vector<32x128xbf16>, vector<128x128xbf16>, vector<32x128xf32> -> vector<32x128xf32>
    %c0_9 = arith.constant 0 : index
    %c0_10 = arith.constant 0 : index
    %11 = vector.load %arg5[%c0_9, %c0_10] : memref<1x128xf32, #tpu.memory_space<vmem>>, vector<1x128xf32>
    %12 = vector.broadcast %11 : vector<1x128xf32> to vector<32x128xf32>
    %13 = arith.addf %10, %12 : vector<32x128xf32>
    %c0_11 = arith.constant 0 : index
    %c0_12 = arith.constant 0 : index
    %14 = vector.load %arg6[%c0_11, %c0_12] : memref<32x128xf32, #tpu.memory_space<vmem>>, vector<32x128xf32>
    tpu.vector_store %arg6[%c0_11, %c0_12], %13 {strides = array<i32>} : memref<32x128xf32, #tpu.memory_space<vmem>>, vector<32x128xf32>,
    return
  }
  func.func @transform_0(%arg0: i32) -> (i32, i32) {
    %c0_i32 = arith.constant 0 : i32
    %c0_i32_0 = arith.constant 0 : i32
    return %arg0, %c0_i32 : i32, i32
  }
  func.func @transform_1(%arg0: i32) -> (i32, i32) {
    %c0_i32 = arith.constant 0 : i32
    %c0_i32_0 = arith.constant 0 : i32
    %c0_i32_1 = arith.constant 0 : i32
    return %c0_i32, %c0_i32_0 : i32, i32
  }
  func.func @transform_2(%arg0: i32) -> (i32, i32) {
    %c0_i32 = arith.constant 0 : i32
    %c0_i32_0 = arith.constant 0 : i32
    %c0_i32_1 = arith.constant 0 : i32
    return %c0_i32, %c0_i32_0 : i32, i32
  }
  func.func @transform_3(%arg0: i32) -> (i32, i32) {
    %c0_i32 = arith.constant 0 : i32
    %c0_i32_0 = arith.constant 0 : i32
    %c0_i32_1 = arith.constant 0 : i32
    return %c0_i32, %c0_i32_0 : i32, i32
  }
  func.func @transform_4(%arg0: i32) -> (i32, i32) {
    %c0_i32 = arith.constant 0 : i32
    %c0_i32_0 = arith.constant 0 : i32
    %c0_i32_1 = arith.constant 0 : i32
    return %c0_i32, %c0_i32_0 : i32, i32
  }
  func.func @transform_5(%arg0: i32) -> (i32, i32) {
    %c0_i32 = arith.constant 0 : i32
    %c0_i32_0 = arith.constant 0 : i32
    return %arg0, %c0_i32 : i32, i32
  }
}

module attributes {stable_mosaic.version = 11 : i64} {
  func.func @_lstm_kernel(%arg0: i32, %arg1: i32, %arg2: memref<16x8x128xbf16, #tpu.memory_space<vmem>>, %arg3: memref<1x32x128xbf16, #tpu.memory_space<vmem>>, %arg4: memref<1x16x8x32xbf16, #tpu.memory_space<vmem>>, %arg5: memref<8x32xf32, #tpu.memory_space<vmem>>, %arg6: memref<8x32xf32, #tpu.memory_space<vmem>>) attributes {dimension_semantics = [#tpu.dimension_semantics<parallel>, #tpu.dimension_semantics<arbitrary>], iteration_bounds = array<i64: 2, 1>, scalar_prefetch = 0 : i64, scratch_operands = 2 : i64, tpu.core_type = #tpu.core_type<tc>, window_params = [{transform_indices = @transform_0, window_bounds = array<i64: 16, 8, 128>}, {transform_indices = @transform_1, window_bounds = array<i64: 1, 32, 128>}, {transform_indices = @transform_2, window_bounds = array<i64: 1, 16, 8, 32>}]} {
    %c0_i32 = arith.constant 0 : i32
    %0 = arith.cmpi eq, %arg1, %c0_i32 : i32
    %1 = arith.extui %0 : i1 to i32
    %c0_i32_0 = arith.constant 0 : i32
    %2 = arith.cmpi ne, %1, %c0_i32_0 : i32
    scf.if %2 {
      %cst = arith.constant 0.000000e+00 : f32
      %11 = vector.broadcast %cst : f32 to vector<8x32xf32>
      %c0_6 = arith.constant 0 : index
      %c0_7 = arith.constant 0 : index
      %12 = vector.load %arg5[%c0_6, %c0_7] : memref<8x32xf32, #tpu.memory_space<vmem>>, vector<8x32xf32>
      tpu.vector_store %arg5[%c0_6, %c0_7], %11 {strides = array<i32>} : memref<8x32xf32, #tpu.memory_space<vmem>>, vector<8x32xf32>,
      %cst_8 = arith.constant 0.000000e+00 : f32
      %13 = vector.broadcast %cst_8 : f32 to vector<8x32xf32>
      %c0_9 = arith.constant 0 : index
      %c0_10 = arith.constant 0 : index
      %14 = vector.load %arg6[%c0_9, %c0_10] : memref<8x32xf32, #tpu.memory_space<vmem>>, vector<8x32xf32>
      tpu.vector_store %arg6[%c0_9, %c0_10], %13 {strides = array<i32>} : memref<8x32xf32, #tpu.memory_space<vmem>>, vector<8x32xf32>,
    } else {
    }
    %c0 = arith.constant 0 : index
    %c0_1 = arith.constant 0 : index
    %c0_2 = arith.constant 0 : index
    %3 = vector.load %arg3[%c0, %c0_1, %c0_2] : memref<1x32x128xbf16, #tpu.memory_space<vmem>>, vector<1x32x128xbf16>
    %4 = vector.shape_cast %3 : vector<1x32x128xbf16> to vector<32x128xbf16>
    %c0_i32_3 = arith.constant 0 : i32
    %5 = arith.cmpi eq, %arg0, %c0_i32_3 : i32
    %6 = arith.extui %5 : i1 to i32
    %c0_i32_4 = arith.constant 0 : i32
    %7 = arith.cmpi ne, %6, %c0_i32_4 : i32
    scf.if %7 {
      %c0_i32_6 = arith.constant 0 : i32
      %c16_i32 = arith.constant 16 : i32
      %11 = arith.muli %arg1, %c16_i32 : i32
      %12 = arith.addi %11, %c0_i32_6 : i32
      %c8_i32 = arith.constant 8 : i32
      %13 = arith.cmpi slt, %12, %c8_i32 : i32
      %14 = arith.extui %13 : i1 to i32
      %15 = arith.sitofp %14 : i32 to f32
      %16 = arith.index_cast %c0_i32_6 : i32 to index
      %c0_7 = arith.constant 0 : index
      %c0_8 = arith.constant 0 : index
      %17 = vector.load %arg2[%16, %c0_7, %c0_8] : memref<16x8x128xbf16, #tpu.memory_space<vmem>>, vector<1x8x128xbf16>
      %18 = vector.shape_cast %17 : vector<1x8x128xbf16> to vector<8x128xbf16>
      %19 = arith.extf %18 : vector<8x128xbf16> to vector<8x128xf32>
      %20 = vector.broadcast %15 : f32 to vector<8x128xf32>
      %21 = arith.mulf %19, %20 : vector<8x128xf32>
      %c0_9 = arith.constant 0 : index
      %c0_10 = arith.constant 0 : index
      %22 = vector.load %arg5[%c0_9, %c0_10] : memref<8x32xf32, #tpu.memory_space<vmem>>, vector<8x32xf32>
      %23 = arith.truncf %22 : vector<8x32xf32> to vector<8x32xbf16>
      %cst = arith.constant dense<0.000000e+00> : vector<8x128xf32>
      %24 = tpu.matmul %23, %4, %cst {dimension_numbers = #tpu.dot_dimension_numbers<[1], [0], [0], [1], [0, 0, 1, 1], [], []>} : vector<8x32xbf16>, vector<32x128xbf16>, vector<8x128xf32> -> vector<8x128xf32>
      %25 = arith.addf %21, %24 : vector<8x128xf32>
      %26 = vector.extract_strided_slice %25 {offsets = [0, 0], sizes = [8, 32], strides = [1, 1]} : vector<8x128xf32> to vector<8x32xf32>
      %27 = arith.negf %26 : vector<8x32xf32>
      %28 = math.exp %27 : vector<8x32xf32>
      %cst_11 = arith.constant 1.000000e+00 : f32
      %29 = vector.broadcast %cst_11 : f32 to vector<8x32xf32>
      %30 = arith.addf %29, %28 : vector<8x32xf32>
      %31 = arith.divf %29, %30 : vector<8x32xf32>
      %32 = vector.extract_strided_slice %25 {offsets = [0, 32], sizes = [8, 32], strides = [1, 1]} : vector<8x128xf32> to vector<8x32xf32>
      %33 = arith.negf %32 : vector<8x32xf32>
      %34 = math.exp %33 : vector<8x32xf32>
      %cst_12 = arith.constant 1.000000e+00 : f32
      %35 = vector.broadcast %cst_12 : f32 to vector<8x32xf32>
      %36 = arith.addf %35, %34 : vector<8x32xf32>
      %37 = arith.divf %35, %36 : vector<8x32xf32>
      %38 = vector.extract_strided_slice %25 {offsets = [0, 64], sizes = [8, 32], strides = [1, 1]} : vector<8x128xf32> to vector<8x32xf32>
      %39 = math.tanh %38 : vector<8x32xf32>
      %40 = vector.extract_strided_slice %25 {offsets = [0, 96], sizes = [8, 32], strides = [1, 1]} : vector<8x128xf32> to vector<8x32xf32>
      %41 = arith.negf %40 : vector<8x32xf32>
      %42 = math.exp %41 : vector<8x32xf32>
      %cst_13 = arith.constant 1.000000e+00 : f32
      %43 = vector.broadcast %cst_13 : f32 to vector<8x32xf32>
      %44 = arith.addf %43, %42 : vector<8x32xf32>
      %45 = arith.divf %43, %44 : vector<8x32xf32>
      %c0_14 = arith.constant 0 : index
      %c0_15 = arith.constant 0 : index
      %46 = vector.load %arg6[%c0_14, %c0_15] : memref<8x32xf32, #tpu.memory_space<vmem>>, vector<8x32xf32>
      %47 = arith.mulf %37, %46 : vector<8x32xf32>
      %48 = arith.mulf %31, %39 : vector<8x32xf32>
      %49 = arith.addf %47, %48 : vector<8x32xf32>
      %50 = math.tanh %49 : vector<8x32xf32>
      %51 = arith.mulf %45, %50 : vector<8x32xf32>
      %c0_16 = arith.constant 0 : index
      %c0_17 = arith.constant 0 : index
      %52 = vector.load %arg6[%c0_16, %c0_17] : memref<8x32xf32, #tpu.memory_space<vmem>>, vector<8x32xf32>
      tpu.vector_store %arg6[%c0_16, %c0_17], %49 {strides = array<i32>} : memref<8x32xf32, #tpu.memory_space<vmem>>, vector<8x32xf32>,
      %c0_18 = arith.constant 0 : index
      %c0_19 = arith.constant 0 : index
      %53 = vector.load %arg5[%c0_18, %c0_19] : memref<8x32xf32, #tpu.memory_space<vmem>>, vector<8x32xf32>
      tpu.vector_store %arg5[%c0_18, %c0_19], %51 {strides = array<i32>} : memref<8x32xf32, #tpu.memory_space<vmem>>, vector<8x32xf32>,
      %54 = arith.truncf %51 : vector<8x32xf32> to vector<8x32xbf16>
      %c0_20 = arith.constant 0 : index
      %55 = arith.index_cast %c0_i32_6 : i32 to index
      %c0_21 = arith.constant 0 : index
      %c0_22 = arith.constant 0 : index
      %56 = vector.load %arg4[%c0_20, %55, %c0_21, %c0_22] : memref<1x16x8x32xbf16, #tpu.memory_space<vmem>>, vector<1x1x8x32xbf16>
      %57 = vector.shape_cast %56 : vector<1x1x8x32xbf16> to vector<8x32xbf16>
      %58 = vector.shape_cast %54 : vector<8x32xbf16> to vector<1x1x8x32xbf16>
      tpu.vector_store %arg4[%c0_20, %55, %c0_21, %c0_22], %58 {strides = array<i32>} : memref<1x16x8x32xbf16, #tpu.memory_space<vmem>>, vector<1x1x8x32xbf16>,
      %c1_i32_23 = arith.constant 1 : i32
      %c16_i32_24 = arith.constant 16 : i32
      %59 = arith.muli %arg1, %c16_i32_24 : i32
      %60 = arith.addi %59, %c1_i32_23 : i32
      %c8_i32_25 = arith.constant 8 : i32
      %61 = arith.cmpi slt, %60, %c8_i32_25 : i32
      %62 = arith.extui %61 : i1 to i32
      %63 = arith.sitofp %62 : i32 to f32
      %64 = arith.index_cast %c1_i32_23 : i32 to index
      %c0_26 = arith.constant 0 : index
      %c0_27 = arith.constant 0 : index
      %65 = vector.load %arg2[%64, %c0_26, %c0_27] : memref<16x8x128xbf16, #tpu.memory_space<vmem>>, vector<1x8x128xbf16>
      %66 = vector.shape_cast %65 : vector<1x8x128xbf16> to vector<8x128xbf16>
      %67 = arith.extf %66 : vector<8x128xbf16> to vector<8x128xf32>
      %68 = vector.broadcast %63 : f32 to vector<8x128xf32>
      %69 = arith.mulf %67, %68 : vector<8x128xf32>
      %c0_28 = arith.constant 0 : index
      %c0_29 = arith.constant 0 : index
      %70 = vector.load %arg5[%c0_28, %c0_29] : memref<8x32xf32, #tpu.memory_space<vmem>>, vector<8x32xf32>
      %71 = arith.truncf %70 : vector<8x32xf32> to vector<8x32xbf16>
      %cst_30 = arith.constant dense<0.000000e+00> : vector<8x128xf32>
      %72 = tpu.matmul %71, %4, %cst_30 {dimension_numbers = #tpu.dot_dimension_numbers<[1], [0], [0], [1], [0, 0, 1, 1], [], []>} : vector<8x32xbf16>, vector<32x128xbf16>, vector<8x128xf32> -> vector<8x128xf32>
      %73 = arith.addf %69, %72 : vector<8x128xf32>
      %74 = vector.extract_strided_slice %73 {offsets = [0, 0], sizes = [8, 32], strides = [1, 1]} : vector<8x128xf32> to vector<8x32xf32>
      %75 = arith.negf %74 : vector<8x32xf32>
      %76 = math.exp %75 : vector<8x32xf32>
      %cst_31 = arith.constant 1.000000e+00 : f32
      %77 = vector.broadcast %cst_31 : f32 to vector<8x32xf32>
      %78 = arith.addf %77, %76 : vector<8x32xf32>
      %79 = arith.divf %77, %78 : vector<8x32xf32>
      %80 = vector.extract_strided_slice %73 {offsets = [0, 32], sizes = [8, 32], strides = [1, 1]} : vector<8x128xf32> to vector<8x32xf32>
      %81 = arith.negf %80 : vector<8x32xf32>
      %82 = math.exp %81 : vector<8x32xf32>
      %cst_32 = arith.constant 1.000000e+00 : f32
      %83 = vector.broadcast %cst_32 : f32 to vector<8x32xf32>
      %84 = arith.addf %83, %82 : vector<8x32xf32>
      %85 = arith.divf %83, %84 : vector<8x32xf32>
      %86 = vector.extract_strided_slice %73 {offsets = [0, 64], sizes = [8, 32], strides = [1, 1]} : vector<8x128xf32> to vector<8x32xf32>
      %87 = math.tanh %86 : vector<8x32xf32>
      %88 = vector.extract_strided_slice %73 {offsets = [0, 96], sizes = [8, 32], strides = [1, 1]} : vector<8x128xf32> to vector<8x32xf32>
      %89 = arith.negf %88 : vector<8x32xf32>
      %90 = math.exp %89 : vector<8x32xf32>
      %cst_33 = arith.constant 1.000000e+00 : f32
      %91 = vector.broadcast %cst_33 : f32 to vector<8x32xf32>
      %92 = arith.addf %91, %90 : vector<8x32xf32>
      %93 = arith.divf %91, %92 : vector<8x32xf32>
      %c0_34 = arith.constant 0 : index
      %c0_35 = arith.constant 0 : index
      %94 = vector.load %arg6[%c0_34, %c0_35] : memref<8x32xf32, #tpu.memory_space<vmem>>, vector<8x32xf32>
      %95 = arith.mulf %85, %94 : vector<8x32xf32>
      %96 = arith.mulf %79, %87 : vector<8x32xf32>
      %97 = arith.addf %95, %96 : vector<8x32xf32>
      %98 = math.tanh %97 : vector<8x32xf32>
      %99 = arith.mulf %93, %98 : vector<8x32xf32>
      %c0_36 = arith.constant 0 : index
      %c0_37 = arith.constant 0 : index
      %100 = vector.load %arg6[%c0_36, %c0_37] : memref<8x32xf32, #tpu.memory_space<vmem>>, vector<8x32xf32>
      tpu.vector_store %arg6[%c0_36, %c0_37], %97 {strides = array<i32>} : memref<8x32xf32, #tpu.memory_space<vmem>>, vector<8x32xf32>,
      %c0_38 = arith.constant 0 : index
      %c0_39 = arith.constant 0 : index
      %101 = vector.load %arg5[%c0_38, %c0_39] : memref<8x32xf32, #tpu.memory_space<vmem>>, vector<8x32xf32>
      tpu.vector_store %arg5[%c0_38, %c0_39], %99 {strides = array<i32>} : memref<8x32xf32, #tpu.memory_space<vmem>>, vector<8x32xf32>,
      %102 = arith.truncf %99 : vector<8x32xf32> to vector<8x32xbf16>
      %c0_40 = arith.constant 0 : index
      %103 = arith.index_cast %c1_i32_23 : i32 to index
      %c0_41 = arith.constant 0 : index
      %c0_42 = arith.constant 0 : index
      %104 = vector.load %arg4[%c0_40, %103, %c0_41, %c0_42] : memref<1x16x8x32xbf16, #tpu.memory_space<vmem>>, vector<1x1x8x32xbf16>
      %105 = vector.shape_cast %104 : vector<1x1x8x32xbf16> to vector<8x32xbf16>
      %106 = vector.shape_cast %102 : vector<8x32xbf16> to vector<1x1x8x32xbf16>
      tpu.vector_store %arg4[%c0_40, %103, %c0_41, %c0_42], %106 {strides = array<i32>} : memref<1x16x8x32xbf16, #tpu.memory_space<vmem>>, vector<1x1x8x32xbf16>,
      %c2_i32 = arith.constant 2 : i32
      %c16_i32_43 = arith.constant 16 : i32
      %107 = arith.muli %arg1, %c16_i32_43 : i32
      %108 = arith.addi %107, %c2_i32 : i32
      %c8_i32_44 = arith.constant 8 : i32
      %109 = arith.cmpi slt, %108, %c8_i32_44 : i32
      %110 = arith.extui %109 : i1 to i32
      %111 = arith.sitofp %110 : i32 to f32
      %112 = arith.index_cast %c2_i32 : i32 to index
      %c0_45 = arith.constant 0 : index
      %c0_46 = arith.constant 0 : index
      %113 = vector.load %arg2[%112, %c0_45, %c0_46] : memref<16x8x128xbf16, #tpu.memory_space<vmem>>, vector<1x8x128xbf16>
      %114 = vector.shape_cast %113 : vector<1x8x128xbf16> to vector<8x128xbf16>
      %115 = arith.extf %114 : vector<8x128xbf16> to vector<8x128xf32>
      %116 = vector.broadcast %111 : f32 to vector<8x128xf32>
      %117 = arith.mulf %115, %116 : vector<8x128xf32>
      %c0_47 = arith.constant 0 : index
      %c0_48 = arith.constant 0 : index
      %118 = vector.load %arg5[%c0_47, %c0_48] : memref<8x32xf32, #tpu.memory_space<vmem>>, vector<8x32xf32>
      %119 = arith.truncf %118 : vector<8x32xf32> to vector<8x32xbf16>
      %cst_49 = arith.constant dense<0.000000e+00> : vector<8x128xf32>
      %120 = tpu.matmul %119, %4, %cst_49 {dimension_numbers = #tpu.dot_dimension_numbers<[1], [0], [0], [1], [0, 0, 1, 1], [], []>} : vector<8x32xbf16>, vector<32x128xbf16>, vector<8x128xf32> -> vector<8x128xf32>
      %121 = arith.addf %117, %120 : vector<8x128xf32>
      %122 = vector.extract_strided_slice %121 {offsets = [0, 0], sizes = [8, 32], strides = [1, 1]} : vector<8x128xf32> to vector<8x32xf32>
      %123 = arith.negf %122 : vector<8x32xf32>
      %124 = math.exp %123 : vector<8x32xf32>
      %cst_50 = arith.constant 1.000000e+00 : f32
      %125 = vector.broadcast %cst_50 : f32 to vector<8x32xf32>
      %126 = arith.addf %125, %124 : vector<8x32xf32>
      %127 = arith.divf %125, %126 : vector<8x32xf32>
      %128 = vector.extract_strided_slice %121 {offsets = [0, 32], sizes = [8, 32], strides = [1, 1]} : vector<8x128xf32> to vector<8x32xf32>
      %129 = arith.negf %128 : vector<8x32xf32>
      %130 = math.exp %129 : vector<8x32xf32>
      %cst_51 = arith.constant 1.000000e+00 : f32
      %131 = vector.broadcast %cst_51 : f32 to vector<8x32xf32>
      %132 = arith.addf %131, %130 : vector<8x32xf32>
      %133 = arith.divf %131, %132 : vector<8x32xf32>
      %134 = vector.extract_strided_slice %121 {offsets = [0, 64], sizes = [8, 32], strides = [1, 1]} : vector<8x128xf32> to vector<8x32xf32>
      %135 = math.tanh %134 : vector<8x32xf32>
      %136 = vector.extract_strided_slice %121 {offsets = [0, 96], sizes = [8, 32], strides = [1, 1]} : vector<8x128xf32> to vector<8x32xf32>
      %137 = arith.negf %136 : vector<8x32xf32>
      %138 = math.exp %137 : vector<8x32xf32>
      %cst_52 = arith.constant 1.000000e+00 : f32
      %139 = vector.broadcast %cst_52 : f32 to vector<8x32xf32>
      %140 = arith.addf %139, %138 : vector<8x32xf32>
      %141 = arith.divf %139, %140 : vector<8x32xf32>
      %c0_53 = arith.constant 0 : index
      %c0_54 = arith.constant 0 : index
      %142 = vector.load %arg6[%c0_53, %c0_54] : memref<8x32xf32, #tpu.memory_space<vmem>>, vector<8x32xf32>
      %143 = arith.mulf %133, %142 : vector<8x32xf32>
      %144 = arith.mulf %127, %135 : vector<8x32xf32>
      %145 = arith.addf %143, %144 : vector<8x32xf32>
      %146 = math.tanh %145 : vector<8x32xf32>
      %147 = arith.mulf %141, %146 : vector<8x32xf32>
      %c0_55 = arith.constant 0 : index
      %c0_56 = arith.constant 0 : index
      %148 = vector.load %arg6[%c0_55, %c0_56] : memref<8x32xf32, #tpu.memory_space<vmem>>, vector<8x32xf32>
      tpu.vector_store %arg6[%c0_55, %c0_56], %145 {strides = array<i32>} : memref<8x32xf32, #tpu.memory_space<vmem>>, vector<8x32xf32>,
      %c0_57 = arith.constant 0 : index
      %c0_58 = arith.constant 0 : index
      %149 = vector.load %arg5[%c0_57, %c0_58] : memref<8x32xf32, #tpu.memory_space<vmem>>, vector<8x32xf32>
      tpu.vector_store %arg5[%c0_57, %c0_58], %147 {strides = array<i32>} : memref<8x32xf32, #tpu.memory_space<vmem>>, vector<8x32xf32>,
      %150 = arith.truncf %147 : vector<8x32xf32> to vector<8x32xbf16>
      %c0_59 = arith.constant 0 : index
      %151 = arith.index_cast %c2_i32 : i32 to index
      %c0_60 = arith.constant 0 : index
      %c0_61 = arith.constant 0 : index
      %152 = vector.load %arg4[%c0_59, %151, %c0_60, %c0_61] : memref<1x16x8x32xbf16, #tpu.memory_space<vmem>>, vector<1x1x8x32xbf16>
      %153 = vector.shape_cast %152 : vector<1x1x8x32xbf16> to vector<8x32xbf16>
      %154 = vector.shape_cast %150 : vector<8x32xbf16> to vector<1x1x8x32xbf16>
      tpu.vector_store %arg4[%c0_59, %151, %c0_60, %c0_61], %154 {strides = array<i32>} : memref<1x16x8x32xbf16, #tpu.memory_space<vmem>>, vector<1x1x8x32xbf16>,
      %c3_i32 = arith.constant 3 : i32
      %c16_i32_62 = arith.constant 16 : i32
      %155 = arith.muli %arg1, %c16_i32_62 : i32
      %156 = arith.addi %155, %c3_i32 : i32
      %c8_i32_63 = arith.constant 8 : i32
      %157 = arith.cmpi slt, %156, %c8_i32_63 : i32
      %158 = arith.extui %157 : i1 to i32
      %159 = arith.sitofp %158 : i32 to f32
      %160 = arith.index_cast %c3_i32 : i32 to index
      %c0_64 = arith.constant 0 : index
      %c0_65 = arith.constant 0 : index
      %161 = vector.load %arg2[%160, %c0_64, %c0_65] : memref<16x8x128xbf16, #tpu.memory_space<vmem>>, vector<1x8x128xbf16>
      %162 = vector.shape_cast %161 : vector<1x8x128xbf16> to vector<8x128xbf16>
      %163 = arith.extf %162 : vector<8x128xbf16> to vector<8x128xf32>
      %164 = vector.broadcast %159 : f32 to vector<8x128xf32>
      %165 = arith.mulf %163, %164 : vector<8x128xf32>
      %c0_66 = arith.constant 0 : index
      %c0_67 = arith.constant 0 : index
      %166 = vector.load %arg5[%c0_66, %c0_67] : memref<8x32xf32, #tpu.memory_space<vmem>>, vector<8x32xf32>
      %167 = arith.truncf %166 : vector<8x32xf32> to vector<8x32xbf16>
      %cst_68 = arith.constant dense<0.000000e+00> : vector<8x128xf32>
      %168 = tpu.matmul %167, %4, %cst_68 {dimension_numbers = #tpu.dot_dimension_numbers<[1], [0], [0], [1], [0, 0, 1, 1], [], []>} : vector<8x32xbf16>, vector<32x128xbf16>, vector<8x128xf32> -> vector<8x128xf32>
      %169 = arith.addf %165, %168 : vector<8x128xf32>
      %170 = vector.extract_strided_slice %169 {offsets = [0, 0], sizes = [8, 32], strides = [1, 1]} : vector<8x128xf32> to vector<8x32xf32>
      %171 = arith.negf %170 : vector<8x32xf32>
      %172 = math.exp %171 : vector<8x32xf32>
      %cst_69 = arith.constant 1.000000e+00 : f32
      %173 = vector.broadcast %cst_69 : f32 to vector<8x32xf32>
      %174 = arith.addf %173, %172 : vector<8x32xf32>
      %175 = arith.divf %173, %174 : vector<8x32xf32>
      %176 = vector.extract_strided_slice %169 {offsets = [0, 32], sizes = [8, 32], strides = [1, 1]} : vector<8x128xf32> to vector<8x32xf32>
      %177 = arith.negf %176 : vector<8x32xf32>
      %178 = math.exp %177 : vector<8x32xf32>
      %cst_70 = arith.constant 1.000000e+00 : f32
      %179 = vector.broadcast %cst_70 : f32 to vector<8x32xf32>
      %180 = arith.addf %179, %178 : vector<8x32xf32>
      %181 = arith.divf %179, %180 : vector<8x32xf32>
      %182 = vector.extract_strided_slice %169 {offsets = [0, 64], sizes = [8, 32], strides = [1, 1]} : vector<8x128xf32> to vector<8x32xf32>
      %183 = math.tanh %182 : vector<8x32xf32>
      %184 = vector.extract_strided_slice %169 {offsets = [0, 96], sizes = [8, 32], strides = [1, 1]} : vector<8x128xf32> to vector<8x32xf32>
      %185 = arith.negf %184 : vector<8x32xf32>
      %186 = math.exp %185 : vector<8x32xf32>
      %cst_71 = arith.constant 1.000000e+00 : f32
      %187 = vector.broadcast %cst_71 : f32 to vector<8x32xf32>
      %188 = arith.addf %187, %186 : vector<8x32xf32>
      %189 = arith.divf %187, %188 : vector<8x32xf32>
      %c0_72 = arith.constant 0 : index
      %c0_73 = arith.constant 0 : index
      %190 = vector.load %arg6[%c0_72, %c0_73] : memref<8x32xf32, #tpu.memory_space<vmem>>, vector<8x32xf32>
      %191 = arith.mulf %181, %190 : vector<8x32xf32>
      %192 = arith.mulf %175, %183 : vector<8x32xf32>
      %193 = arith.addf %191, %192 : vector<8x32xf32>
      %194 = math.tanh %193 : vector<8x32xf32>
      %195 = arith.mulf %189, %194 : vector<8x32xf32>
      %c0_74 = arith.constant 0 : index
      %c0_75 = arith.constant 0 : index
      %196 = vector.load %arg6[%c0_74, %c0_75] : memref<8x32xf32, #tpu.memory_space<vmem>>, vector<8x32xf32>
      tpu.vector_store %arg6[%c0_74, %c0_75], %193 {strides = array<i32>} : memref<8x32xf32, #tpu.memory_space<vmem>>, vector<8x32xf32>,
      %c0_76 = arith.constant 0 : index
      %c0_77 = arith.constant 0 : index
      %197 = vector.load %arg5[%c0_76, %c0_77] : memref<8x32xf32, #tpu.memory_space<vmem>>, vector<8x32xf32>
      tpu.vector_store %arg5[%c0_76, %c0_77], %195 {strides = array<i32>} : memref<8x32xf32, #tpu.memory_space<vmem>>, vector<8x32xf32>,
      %198 = arith.truncf %195 : vector<8x32xf32> to vector<8x32xbf16>
      %c0_78 = arith.constant 0 : index
      %199 = arith.index_cast %c3_i32 : i32 to index
      %c0_79 = arith.constant 0 : index
      %c0_80 = arith.constant 0 : index
      %200 = vector.load %arg4[%c0_78, %199, %c0_79, %c0_80] : memref<1x16x8x32xbf16, #tpu.memory_space<vmem>>, vector<1x1x8x32xbf16>
      %201 = vector.shape_cast %200 : vector<1x1x8x32xbf16> to vector<8x32xbf16>
      %202 = vector.shape_cast %198 : vector<8x32xbf16> to vector<1x1x8x32xbf16>
      tpu.vector_store %arg4[%c0_78, %199, %c0_79, %c0_80], %202 {strides = array<i32>} : memref<1x16x8x32xbf16, #tpu.memory_space<vmem>>, vector<1x1x8x32xbf16>,
      %c4_i32 = arith.constant 4 : i32
      %c16_i32_81 = arith.constant 16 : i32
      %203 = arith.muli %arg1, %c16_i32_81 : i32
      %204 = arith.addi %203, %c4_i32 : i32
      %c8_i32_82 = arith.constant 8 : i32
      %205 = arith.cmpi slt, %204, %c8_i32_82 : i32
      %206 = arith.extui %205 : i1 to i32
      %207 = arith.sitofp %206 : i32 to f32
      %208 = arith.index_cast %c4_i32 : i32 to index
      %c0_83 = arith.constant 0 : index
      %c0_84 = arith.constant 0 : index
      %209 = vector.load %arg2[%208, %c0_83, %c0_84] : memref<16x8x128xbf16, #tpu.memory_space<vmem>>, vector<1x8x128xbf16>
      %210 = vector.shape_cast %209 : vector<1x8x128xbf16> to vector<8x128xbf16>
      %211 = arith.extf %210 : vector<8x128xbf16> to vector<8x128xf32>
      %212 = vector.broadcast %207 : f32 to vector<8x128xf32>
      %213 = arith.mulf %211, %212 : vector<8x128xf32>
      %c0_85 = arith.constant 0 : index
      %c0_86 = arith.constant 0 : index
      %214 = vector.load %arg5[%c0_85, %c0_86] : memref<8x32xf32, #tpu.memory_space<vmem>>, vector<8x32xf32>
      %215 = arith.truncf %214 : vector<8x32xf32> to vector<8x32xbf16>
      %cst_87 = arith.constant dense<0.000000e+00> : vector<8x128xf32>
      %216 = tpu.matmul %215, %4, %cst_87 {dimension_numbers = #tpu.dot_dimension_numbers<[1], [0], [0], [1], [0, 0, 1, 1], [], []>} : vector<8x32xbf16>, vector<32x128xbf16>, vector<8x128xf32> -> vector<8x128xf32>
      %217 = arith.addf %213, %216 : vector<8x128xf32>
      %218 = vector.extract_strided_slice %217 {offsets = [0, 0], sizes = [8, 32], strides = [1, 1]} : vector<8x128xf32> to vector<8x32xf32>
      %219 = arith.negf %218 : vector<8x32xf32>
      %220 = math.exp %219 : vector<8x32xf32>
      %cst_88 = arith.constant 1.000000e+00 : f32
      %221 = vector.broadcast %cst_88 : f32 to vector<8x32xf32>
      %222 = arith.addf %221, %220 : vector<8x32xf32>
      %223 = arith.divf %221, %222 : vector<8x32xf32>
      %224 = vector.extract_strided_slice %217 {offsets = [0, 32], sizes = [8, 32], strides = [1, 1]} : vector<8x128xf32> to vector<8x32xf32>
      %225 = arith.negf %224 : vector<8x32xf32>
      %226 = math.exp %225 : vector<8x32xf32>
      %cst_89 = arith.constant 1.000000e+00 : f32
      %227 = vector.broadcast %cst_89 : f32 to vector<8x32xf32>
      %228 = arith.addf %227, %226 : vector<8x32xf32>
      %229 = arith.divf %227, %228 : vector<8x32xf32>
      %230 = vector.extract_strided_slice %217 {offsets = [0, 64], sizes = [8, 32], strides = [1, 1]} : vector<8x128xf32> to vector<8x32xf32>
      %231 = math.tanh %230 : vector<8x32xf32>
      %232 = vector.extract_strided_slice %217 {offsets = [0, 96], sizes = [8, 32], strides = [1, 1]} : vector<8x128xf32> to vector<8x32xf32>
      %233 = arith.negf %232 : vector<8x32xf32>
      %234 = math.exp %233 : vector<8x32xf32>
      %cst_90 = arith.constant 1.000000e+00 : f32
      %235 = vector.broadcast %cst_90 : f32 to vector<8x32xf32>
      %236 = arith.addf %235, %234 : vector<8x32xf32>
      %237 = arith.divf %235, %236 : vector<8x32xf32>
      %c0_91 = arith.constant 0 : index
      %c0_92 = arith.constant 0 : index
      %238 = vector.load %arg6[%c0_91, %c0_92] : memref<8x32xf32, #tpu.memory_space<vmem>>, vector<8x32xf32>
      %239 = arith.mulf %229, %238 : vector<8x32xf32>
      %240 = arith.mulf %223, %231 : vector<8x32xf32>
      %241 = arith.addf %239, %240 : vector<8x32xf32>
      %242 = math.tanh %241 : vector<8x32xf32>
      %243 = arith.mulf %237, %242 : vector<8x32xf32>
      %c0_93 = arith.constant 0 : index
      %c0_94 = arith.constant 0 : index
      %244 = vector.load %arg6[%c0_93, %c0_94] : memref<8x32xf32, #tpu.memory_space<vmem>>, vector<8x32xf32>
      tpu.vector_store %arg6[%c0_93, %c0_94], %241 {strides = array<i32>} : memref<8x32xf32, #tpu.memory_space<vmem>>, vector<8x32xf32>,
      %c0_95 = arith.constant 0 : index
      %c0_96 = arith.constant 0 : index
      %245 = vector.load %arg5[%c0_95, %c0_96] : memref<8x32xf32, #tpu.memory_space<vmem>>, vector<8x32xf32>
      tpu.vector_store %arg5[%c0_95, %c0_96], %243 {strides = array<i32>} : memref<8x32xf32, #tpu.memory_space<vmem>>, vector<8x32xf32>,
      %246 = arith.truncf %243 : vector<8x32xf32> to vector<8x32xbf16>
      %c0_97 = arith.constant 0 : index
      %247 = arith.index_cast %c4_i32 : i32 to index
      %c0_98 = arith.constant 0 : index
      %c0_99 = arith.constant 0 : index
      %248 = vector.load %arg4[%c0_97, %247, %c0_98, %c0_99] : memref<1x16x8x32xbf16, #tpu.memory_space<vmem>>, vector<1x1x8x32xbf16>
      %249 = vector.shape_cast %248 : vector<1x1x8x32xbf16> to vector<8x32xbf16>
      %250 = vector.shape_cast %246 : vector<8x32xbf16> to vector<1x1x8x32xbf16>
      tpu.vector_store %arg4[%c0_97, %247, %c0_98, %c0_99], %250 {strides = array<i32>} : memref<1x16x8x32xbf16, #tpu.memory_space<vmem>>, vector<1x1x8x32xbf16>,
      %c5_i32 = arith.constant 5 : i32
      %c16_i32_100 = arith.constant 16 : i32
      %251 = arith.muli %arg1, %c16_i32_100 : i32
      %252 = arith.addi %251, %c5_i32 : i32
      %c8_i32_101 = arith.constant 8 : i32
      %253 = arith.cmpi slt, %252, %c8_i32_101 : i32
      %254 = arith.extui %253 : i1 to i32
      %255 = arith.sitofp %254 : i32 to f32
      %256 = arith.index_cast %c5_i32 : i32 to index
      %c0_102 = arith.constant 0 : index
      %c0_103 = arith.constant 0 : index
      %257 = vector.load %arg2[%256, %c0_102, %c0_103] : memref<16x8x128xbf16, #tpu.memory_space<vmem>>, vector<1x8x128xbf16>
      %258 = vector.shape_cast %257 : vector<1x8x128xbf16> to vector<8x128xbf16>
      %259 = arith.extf %258 : vector<8x128xbf16> to vector<8x128xf32>
      %260 = vector.broadcast %255 : f32 to vector<8x128xf32>
      %261 = arith.mulf %259, %260 : vector<8x128xf32>
      %c0_104 = arith.constant 0 : index
      %c0_105 = arith.constant 0 : index
      %262 = vector.load %arg5[%c0_104, %c0_105] : memref<8x32xf32, #tpu.memory_space<vmem>>, vector<8x32xf32>
      %263 = arith.truncf %262 : vector<8x32xf32> to vector<8x32xbf16>
      %cst_106 = arith.constant dense<0.000000e+00> : vector<8x128xf32>
      %264 = tpu.matmul %263, %4, %cst_106 {dimension_numbers = #tpu.dot_dimension_numbers<[1], [0], [0], [1], [0, 0, 1, 1], [], []>} : vector<8x32xbf16>, vector<32x128xbf16>, vector<8x128xf32> -> vector<8x128xf32>
      %265 = arith.addf %261, %264 : vector<8x128xf32>
      %266 = vector.extract_strided_slice %265 {offsets = [0, 0], sizes = [8, 32], strides = [1, 1]} : vector<8x128xf32> to vector<8x32xf32>
      %267 = arith.negf %266 : vector<8x32xf32>
      %268 = math.exp %267 : vector<8x32xf32>
      %cst_107 = arith.constant 1.000000e+00 : f32
      %269 = vector.broadcast %cst_107 : f32 to vector<8x32xf32>
      %270 = arith.addf %269, %268 : vector<8x32xf32>
      %271 = arith.divf %269, %270 : vector<8x32xf32>
      %272 = vector.extract_strided_slice %265 {offsets = [0, 32], sizes = [8, 32], strides = [1, 1]} : vector<8x128xf32> to vector<8x32xf32>
      %273 = arith.negf %272 : vector<8x32xf32>
      %274 = math.exp %273 : vector<8x32xf32>
      %cst_108 = arith.constant 1.000000e+00 : f32
      %275 = vector.broadcast %cst_108 : f32 to vector<8x32xf32>
      %276 = arith.addf %275, %274 : vector<8x32xf32>
      %277 = arith.divf %275, %276 : vector<8x32xf32>
      %278 = vector.extract_strided_slice %265 {offsets = [0, 64], sizes = [8, 32], strides = [1, 1]} : vector<8x128xf32> to vector<8x32xf32>
      %279 = math.tanh %278 : vector<8x32xf32>
      %280 = vector.extract_strided_slice %265 {offsets = [0, 96], sizes = [8, 32], strides = [1, 1]} : vector<8x128xf32> to vector<8x32xf32>
      %281 = arith.negf %280 : vector<8x32xf32>
      %282 = math.exp %281 : vector<8x32xf32>
      %cst_109 = arith.constant 1.000000e+00 : f32
      %283 = vector.broadcast %cst_109 : f32 to vector<8x32xf32>
      %284 = arith.addf %283, %282 : vector<8x32xf32>
      %285 = arith.divf %283, %284 : vector<8x32xf32>
      %c0_110 = arith.constant 0 : index
      %c0_111 = arith.constant 0 : index
      %286 = vector.load %arg6[%c0_110, %c0_111] : memref<8x32xf32, #tpu.memory_space<vmem>>, vector<8x32xf32>
      %287 = arith.mulf %277, %286 : vector<8x32xf32>
      %288 = arith.mulf %271, %279 : vector<8x32xf32>
      %289 = arith.addf %287, %288 : vector<8x32xf32>
      %290 = math.tanh %289 : vector<8x32xf32>
      %291 = arith.mulf %285, %290 : vector<8x32xf32>
      %c0_112 = arith.constant 0 : index
      %c0_113 = arith.constant 0 : index
      %292 = vector.load %arg6[%c0_112, %c0_113] : memref<8x32xf32, #tpu.memory_space<vmem>>, vector<8x32xf32>
      tpu.vector_store %arg6[%c0_112, %c0_113], %289 {strides = array<i32>} : memref<8x32xf32, #tpu.memory_space<vmem>>, vector<8x32xf32>,
      %c0_114 = arith.constant 0 : index
      %c0_115 = arith.constant 0 : index
      %293 = vector.load %arg5[%c0_114, %c0_115] : memref<8x32xf32, #tpu.memory_space<vmem>>, vector<8x32xf32>
      tpu.vector_store %arg5[%c0_114, %c0_115], %291 {strides = array<i32>} : memref<8x32xf32, #tpu.memory_space<vmem>>, vector<8x32xf32>,
      %294 = arith.truncf %291 : vector<8x32xf32> to vector<8x32xbf16>
      %c0_116 = arith.constant 0 : index
      %295 = arith.index_cast %c5_i32 : i32 to index
      %c0_117 = arith.constant 0 : index
      %c0_118 = arith.constant 0 : index
      %296 = vector.load %arg4[%c0_116, %295, %c0_117, %c0_118] : memref<1x16x8x32xbf16, #tpu.memory_space<vmem>>, vector<1x1x8x32xbf16>
      %297 = vector.shape_cast %296 : vector<1x1x8x32xbf16> to vector<8x32xbf16>
      %298 = vector.shape_cast %294 : vector<8x32xbf16> to vector<1x1x8x32xbf16>
      tpu.vector_store %arg4[%c0_116, %295, %c0_117, %c0_118], %298 {strides = array<i32>} : memref<1x16x8x32xbf16, #tpu.memory_space<vmem>>, vector<1x1x8x32xbf16>,
      %c6_i32 = arith.constant 6 : i32
      %c16_i32_119 = arith.constant 16 : i32
      %299 = arith.muli %arg1, %c16_i32_119 : i32
      %300 = arith.addi %299, %c6_i32 : i32
      %c8_i32_120 = arith.constant 8 : i32
      %301 = arith.cmpi slt, %300, %c8_i32_120 : i32
      %302 = arith.extui %301 : i1 to i32
      %303 = arith.sitofp %302 : i32 to f32
      %304 = arith.index_cast %c6_i32 : i32 to index
      %c0_121 = arith.constant 0 : index
      %c0_122 = arith.constant 0 : index
      %305 = vector.load %arg2[%304, %c0_121, %c0_122] : memref<16x8x128xbf16, #tpu.memory_space<vmem>>, vector<1x8x128xbf16>
      %306 = vector.shape_cast %305 : vector<1x8x128xbf16> to vector<8x128xbf16>
      %307 = arith.extf %306 : vector<8x128xbf16> to vector<8x128xf32>
      %308 = vector.broadcast %303 : f32 to vector<8x128xf32>
      %309 = arith.mulf %307, %308 : vector<8x128xf32>
      %c0_123 = arith.constant 0 : index
      %c0_124 = arith.constant 0 : index
      %310 = vector.load %arg5[%c0_123, %c0_124] : memref<8x32xf32, #tpu.memory_space<vmem>>, vector<8x32xf32>
      %311 = arith.truncf %310 : vector<8x32xf32> to vector<8x32xbf16>
      %cst_125 = arith.constant dense<0.000000e+00> : vector<8x128xf32>
      %312 = tpu.matmul %311, %4, %cst_125 {dimension_numbers = #tpu.dot_dimension_numbers<[1], [0], [0], [1], [0, 0, 1, 1], [], []>} : vector<8x32xbf16>, vector<32x128xbf16>, vector<8x128xf32> -> vector<8x128xf32>
      %313 = arith.addf %309, %312 : vector<8x128xf32>
      %314 = vector.extract_strided_slice %313 {offsets = [0, 0], sizes = [8, 32], strides = [1, 1]} : vector<8x128xf32> to vector<8x32xf32>
      %315 = arith.negf %314 : vector<8x32xf32>
      %316 = math.exp %315 : vector<8x32xf32>
      %cst_126 = arith.constant 1.000000e+00 : f32
      %317 = vector.broadcast %cst_126 : f32 to vector<8x32xf32>
      %318 = arith.addf %317, %316 : vector<8x32xf32>
      %319 = arith.divf %317, %318 : vector<8x32xf32>
      %320 = vector.extract_strided_slice %313 {offsets = [0, 32], sizes = [8, 32], strides = [1, 1]} : vector<8x128xf32> to vector<8x32xf32>
      %321 = arith.negf %320 : vector<8x32xf32>
      %322 = math.exp %321 : vector<8x32xf32>
      %cst_127 = arith.constant 1.000000e+00 : f32
      %323 = vector.broadcast %cst_127 : f32 to vector<8x32xf32>
      %324 = arith.addf %323, %322 : vector<8x32xf32>
      %325 = arith.divf %323, %324 : vector<8x32xf32>
      %326 = vector.extract_strided_slice %313 {offsets = [0, 64], sizes = [8, 32], strides = [1, 1]} : vector<8x128xf32> to vector<8x32xf32>
      %327 = math.tanh %326 : vector<8x32xf32>
      %328 = vector.extract_strided_slice %313 {offsets = [0, 96], sizes = [8, 32], strides = [1, 1]} : vector<8x128xf32> to vector<8x32xf32>
      %329 = arith.negf %328 : vector<8x32xf32>
      %330 = math.exp %329 : vector<8x32xf32>
      %cst_128 = arith.constant 1.000000e+00 : f32
      %331 = vector.broadcast %cst_128 : f32 to vector<8x32xf32>
      %332 = arith.addf %331, %330 : vector<8x32xf32>
      %333 = arith.divf %331, %332 : vector<8x32xf32>
      %c0_129 = arith.constant 0 : index
      %c0_130 = arith.constant 0 : index
      %334 = vector.load %arg6[%c0_129, %c0_130] : memref<8x32xf32, #tpu.memory_space<vmem>>, vector<8x32xf32>
      %335 = arith.mulf %325, %334 : vector<8x32xf32>
      %336 = arith.mulf %319, %327 : vector<8x32xf32>
      %337 = arith.addf %335, %336 : vector<8x32xf32>
      %338 = math.tanh %337 : vector<8x32xf32>
      %339 = arith.mulf %333, %338 : vector<8x32xf32>
      %c0_131 = arith.constant 0 : index
      %c0_132 = arith.constant 0 : index
      %340 = vector.load %arg6[%c0_131, %c0_132] : memref<8x32xf32, #tpu.memory_space<vmem>>, vector<8x32xf32>
      tpu.vector_store %arg6[%c0_131, %c0_132], %337 {strides = array<i32>} : memref<8x32xf32, #tpu.memory_space<vmem>>, vector<8x32xf32>,
      %c0_133 = arith.constant 0 : index
      %c0_134 = arith.constant 0 : index
      %341 = vector.load %arg5[%c0_133, %c0_134] : memref<8x32xf32, #tpu.memory_space<vmem>>, vector<8x32xf32>
      tpu.vector_store %arg5[%c0_133, %c0_134], %339 {strides = array<i32>} : memref<8x32xf32, #tpu.memory_space<vmem>>, vector<8x32xf32>,
      %342 = arith.truncf %339 : vector<8x32xf32> to vector<8x32xbf16>
      %c0_135 = arith.constant 0 : index
      %343 = arith.index_cast %c6_i32 : i32 to index
      %c0_136 = arith.constant 0 : index
      %c0_137 = arith.constant 0 : index
      %344 = vector.load %arg4[%c0_135, %343, %c0_136, %c0_137] : memref<1x16x8x32xbf16, #tpu.memory_space<vmem>>, vector<1x1x8x32xbf16>
      %345 = vector.shape_cast %344 : vector<1x1x8x32xbf16> to vector<8x32xbf16>
      %346 = vector.shape_cast %342 : vector<8x32xbf16> to vector<1x1x8x32xbf16>
      tpu.vector_store %arg4[%c0_135, %343, %c0_136, %c0_137], %346 {strides = array<i32>} : memref<1x16x8x32xbf16, #tpu.memory_space<vmem>>, vector<1x1x8x32xbf16>,
      %c7_i32 = arith.constant 7 : i32
      %c16_i32_138 = arith.constant 16 : i32
      %347 = arith.muli %arg1, %c16_i32_138 : i32
      %348 = arith.addi %347, %c7_i32 : i32
      %c8_i32_139 = arith.constant 8 : i32
      %349 = arith.cmpi slt, %348, %c8_i32_139 : i32
      %350 = arith.extui %349 : i1 to i32
      %351 = arith.sitofp %350 : i32 to f32
      %352 = arith.index_cast %c7_i32 : i32 to index
      %c0_140 = arith.constant 0 : index
      %c0_141 = arith.constant 0 : index
      %353 = vector.load %arg2[%352, %c0_140, %c0_141] : memref<16x8x128xbf16, #tpu.memory_space<vmem>>, vector<1x8x128xbf16>
      %354 = vector.shape_cast %353 : vector<1x8x128xbf16> to vector<8x128xbf16>
      %355 = arith.extf %354 : vector<8x128xbf16> to vector<8x128xf32>
      %356 = vector.broadcast %351 : f32 to vector<8x128xf32>
      %357 = arith.mulf %355, %356 : vector<8x128xf32>
      %c0_142 = arith.constant 0 : index
      %c0_143 = arith.constant 0 : index
      %358 = vector.load %arg5[%c0_142, %c0_143] : memref<8x32xf32, #tpu.memory_space<vmem>>, vector<8x32xf32>
      %359 = arith.truncf %358 : vector<8x32xf32> to vector<8x32xbf16>
      %cst_144 = arith.constant dense<0.000000e+00> : vector<8x128xf32>
      %360 = tpu.matmul %359, %4, %cst_144 {dimension_numbers = #tpu.dot_dimension_numbers<[1], [0], [0], [1], [0, 0, 1, 1], [], []>} : vector<8x32xbf16>, vector<32x128xbf16>, vector<8x128xf32> -> vector<8x128xf32>
      %361 = arith.addf %357, %360 : vector<8x128xf32>
      %362 = vector.extract_strided_slice %361 {offsets = [0, 0], sizes = [8, 32], strides = [1, 1]} : vector<8x128xf32> to vector<8x32xf32>
      %363 = arith.negf %362 : vector<8x32xf32>
      %364 = math.exp %363 : vector<8x32xf32>
      %cst_145 = arith.constant 1.000000e+00 : f32
      %365 = vector.broadcast %cst_145 : f32 to vector<8x32xf32>
      %366 = arith.addf %365, %364 : vector<8x32xf32>
      %367 = arith.divf %365, %366 : vector<8x32xf32>
      %368 = vector.extract_strided_slice %361 {offsets = [0, 32], sizes = [8, 32], strides = [1, 1]} : vector<8x128xf32> to vector<8x32xf32>
      %369 = arith.negf %368 : vector<8x32xf32>
      %370 = math.exp %369 : vector<8x32xf32>
      %cst_146 = arith.constant 1.000000e+00 : f32
      %371 = vector.broadcast %cst_146 : f32 to vector<8x32xf32>
      %372 = arith.addf %371, %370 : vector<8x32xf32>
      %373 = arith.divf %371, %372 : vector<8x32xf32>
      %374 = vector.extract_strided_slice %361 {offsets = [0, 64], sizes = [8, 32], strides = [1, 1]} : vector<8x128xf32> to vector<8x32xf32>
      %375 = math.tanh %374 : vector<8x32xf32>
      %376 = vector.extract_strided_slice %361 {offsets = [0, 96], sizes = [8, 32], strides = [1, 1]} : vector<8x128xf32> to vector<8x32xf32>
      %377 = arith.negf %376 : vector<8x32xf32>
      %378 = math.exp %377 : vector<8x32xf32>
      %cst_147 = arith.constant 1.000000e+00 : f32
      %379 = vector.broadcast %cst_147 : f32 to vector<8x32xf32>
      %380 = arith.addf %379, %378 : vector<8x32xf32>
      %381 = arith.divf %379, %380 : vector<8x32xf32>
      %c0_148 = arith.constant 0 : index
      %c0_149 = arith.constant 0 : index
      %382 = vector.load %arg6[%c0_148, %c0_149] : memref<8x32xf32, #tpu.memory_space<vmem>>, vector<8x32xf32>
      %383 = arith.mulf %373, %382 : vector<8x32xf32>
      %384 = arith.mulf %367, %375 : vector<8x32xf32>
      %385 = arith.addf %383, %384 : vector<8x32xf32>
      %386 = math.tanh %385 : vector<8x32xf32>
      %387 = arith.mulf %381, %386 : vector<8x32xf32>
      %c0_150 = arith.constant 0 : index
      %c0_151 = arith.constant 0 : index
      %388 = vector.load %arg6[%c0_150, %c0_151] : memref<8x32xf32, #tpu.memory_space<vmem>>, vector<8x32xf32>
      tpu.vector_store %arg6[%c0_150, %c0_151], %385 {strides = array<i32>} : memref<8x32xf32, #tpu.memory_space<vmem>>, vector<8x32xf32>,
      %c0_152 = arith.constant 0 : index
      %c0_153 = arith.constant 0 : index
      %389 = vector.load %arg5[%c0_152, %c0_153] : memref<8x32xf32, #tpu.memory_space<vmem>>, vector<8x32xf32>
      tpu.vector_store %arg5[%c0_152, %c0_153], %387 {strides = array<i32>} : memref<8x32xf32, #tpu.memory_space<vmem>>, vector<8x32xf32>,
      %390 = arith.truncf %387 : vector<8x32xf32> to vector<8x32xbf16>
      %c0_154 = arith.constant 0 : index
      %391 = arith.index_cast %c7_i32 : i32 to index
      %c0_155 = arith.constant 0 : index
      %c0_156 = arith.constant 0 : index
      %392 = vector.load %arg4[%c0_154, %391, %c0_155, %c0_156] : memref<1x16x8x32xbf16, #tpu.memory_space<vmem>>, vector<1x1x8x32xbf16>
      %393 = vector.shape_cast %392 : vector<1x1x8x32xbf16> to vector<8x32xbf16>
      %394 = vector.shape_cast %390 : vector<8x32xbf16> to vector<1x1x8x32xbf16>
      tpu.vector_store %arg4[%c0_154, %391, %c0_155, %c0_156], %394 {strides = array<i32>} : memref<1x16x8x32xbf16, #tpu.memory_space<vmem>>, vector<1x1x8x32xbf16>,
      %c8_i32_157 = arith.constant 8 : i32
      %c16_i32_158 = arith.constant 16 : i32
      %395 = arith.muli %arg1, %c16_i32_158 : i32
      %396 = arith.addi %395, %c8_i32_157 : i32
      %c8_i32_159 = arith.constant 8 : i32
      %397 = arith.cmpi slt, %396, %c8_i32_159 : i32
      %398 = arith.extui %397 : i1 to i32
      %399 = arith.sitofp %398 : i32 to f32
      %400 = arith.index_cast %c8_i32_157 : i32 to index
      %c0_160 = arith.constant 0 : index
      %c0_161 = arith.constant 0 : index
      %401 = vector.load %arg2[%400, %c0_160, %c0_161] : memref<16x8x128xbf16, #tpu.memory_space<vmem>>, vector<1x8x128xbf16>
      %402 = vector.shape_cast %401 : vector<1x8x128xbf16> to vector<8x128xbf16>
      %403 = arith.extf %402 : vector<8x128xbf16> to vector<8x128xf32>
      %404 = vector.broadcast %399 : f32 to vector<8x128xf32>
      %405 = arith.mulf %403, %404 : vector<8x128xf32>
      %c0_162 = arith.constant 0 : index
      %c0_163 = arith.constant 0 : index
      %406 = vector.load %arg5[%c0_162, %c0_163] : memref<8x32xf32, #tpu.memory_space<vmem>>, vector<8x32xf32>
      %407 = arith.truncf %406 : vector<8x32xf32> to vector<8x32xbf16>
      %cst_164 = arith.constant dense<0.000000e+00> : vector<8x128xf32>
      %408 = tpu.matmul %407, %4, %cst_164 {dimension_numbers = #tpu.dot_dimension_numbers<[1], [0], [0], [1], [0, 0, 1, 1], [], []>} : vector<8x32xbf16>, vector<32x128xbf16>, vector<8x128xf32> -> vector<8x128xf32>
      %409 = arith.addf %405, %408 : vector<8x128xf32>
      %410 = vector.extract_strided_slice %409 {offsets = [0, 0], sizes = [8, 32], strides = [1, 1]} : vector<8x128xf32> to vector<8x32xf32>
      %411 = arith.negf %410 : vector<8x32xf32>
      %412 = math.exp %411 : vector<8x32xf32>
      %cst_165 = arith.constant 1.000000e+00 : f32
      %413 = vector.broadcast %cst_165 : f32 to vector<8x32xf32>
      %414 = arith.addf %413, %412 : vector<8x32xf32>
      %415 = arith.divf %413, %414 : vector<8x32xf32>
      %416 = vector.extract_strided_slice %409 {offsets = [0, 32], sizes = [8, 32], strides = [1, 1]} : vector<8x128xf32> to vector<8x32xf32>
      %417 = arith.negf %416 : vector<8x32xf32>
      %418 = math.exp %417 : vector<8x32xf32>
      %cst_166 = arith.constant 1.000000e+00 : f32
      %419 = vector.broadcast %cst_166 : f32 to vector<8x32xf32>
      %420 = arith.addf %419, %418 : vector<8x32xf32>
      %421 = arith.divf %419, %420 : vector<8x32xf32>
      %422 = vector.extract_strided_slice %409 {offsets = [0, 64], sizes = [8, 32], strides = [1, 1]} : vector<8x128xf32> to vector<8x32xf32>
      %423 = math.tanh %422 : vector<8x32xf32>
      %424 = vector.extract_strided_slice %409 {offsets = [0, 96], sizes = [8, 32], strides = [1, 1]} : vector<8x128xf32> to vector<8x32xf32>
      %425 = arith.negf %424 : vector<8x32xf32>
      %426 = math.exp %425 : vector<8x32xf32>
      %cst_167 = arith.constant 1.000000e+00 : f32
      %427 = vector.broadcast %cst_167 : f32 to vector<8x32xf32>
      %428 = arith.addf %427, %426 : vector<8x32xf32>
      %429 = arith.divf %427, %428 : vector<8x32xf32>
      %c0_168 = arith.constant 0 : index
      %c0_169 = arith.constant 0 : index
      %430 = vector.load %arg6[%c0_168, %c0_169] : memref<8x32xf32, #tpu.memory_space<vmem>>, vector<8x32xf32>
      %431 = arith.mulf %421, %430 : vector<8x32xf32>
      %432 = arith.mulf %415, %423 : vector<8x32xf32>
      %433 = arith.addf %431, %432 : vector<8x32xf32>
      %434 = math.tanh %433 : vector<8x32xf32>
      %435 = arith.mulf %429, %434 : vector<8x32xf32>
      %c0_170 = arith.constant 0 : index
      %c0_171 = arith.constant 0 : index
      %436 = vector.load %arg6[%c0_170, %c0_171] : memref<8x32xf32, #tpu.memory_space<vmem>>, vector<8x32xf32>
      tpu.vector_store %arg6[%c0_170, %c0_171], %433 {strides = array<i32>} : memref<8x32xf32, #tpu.memory_space<vmem>>, vector<8x32xf32>,
      %c0_172 = arith.constant 0 : index
      %c0_173 = arith.constant 0 : index
      %437 = vector.load %arg5[%c0_172, %c0_173] : memref<8x32xf32, #tpu.memory_space<vmem>>, vector<8x32xf32>
      tpu.vector_store %arg5[%c0_172, %c0_173], %435 {strides = array<i32>} : memref<8x32xf32, #tpu.memory_space<vmem>>, vector<8x32xf32>,
      %438 = arith.truncf %435 : vector<8x32xf32> to vector<8x32xbf16>
      %c0_174 = arith.constant 0 : index
      %439 = arith.index_cast %c8_i32_157 : i32 to index
      %c0_175 = arith.constant 0 : index
      %c0_176 = arith.constant 0 : index
      %440 = vector.load %arg4[%c0_174, %439, %c0_175, %c0_176] : memref<1x16x8x32xbf16, #tpu.memory_space<vmem>>, vector<1x1x8x32xbf16>
      %441 = vector.shape_cast %440 : vector<1x1x8x32xbf16> to vector<8x32xbf16>
      %442 = vector.shape_cast %438 : vector<8x32xbf16> to vector<1x1x8x32xbf16>
      tpu.vector_store %arg4[%c0_174, %439, %c0_175, %c0_176], %442 {strides = array<i32>} : memref<1x16x8x32xbf16, #tpu.memory_space<vmem>>, vector<1x1x8x32xbf16>,
      %c9_i32 = arith.constant 9 : i32
      %c16_i32_177 = arith.constant 16 : i32
      %443 = arith.muli %arg1, %c16_i32_177 : i32
      %444 = arith.addi %443, %c9_i32 : i32
      %c8_i32_178 = arith.constant 8 : i32
      %445 = arith.cmpi slt, %444, %c8_i32_178 : i32
      %446 = arith.extui %445 : i1 to i32
      %447 = arith.sitofp %446 : i32 to f32
      %448 = arith.index_cast %c9_i32 : i32 to index
      %c0_179 = arith.constant 0 : index
      %c0_180 = arith.constant 0 : index
      %449 = vector.load %arg2[%448, %c0_179, %c0_180] : memref<16x8x128xbf16, #tpu.memory_space<vmem>>, vector<1x8x128xbf16>
      %450 = vector.shape_cast %449 : vector<1x8x128xbf16> to vector<8x128xbf16>
      %451 = arith.extf %450 : vector<8x128xbf16> to vector<8x128xf32>
      %452 = vector.broadcast %447 : f32 to vector<8x128xf32>
      %453 = arith.mulf %451, %452 : vector<8x128xf32>
      %c0_181 = arith.constant 0 : index
      %c0_182 = arith.constant 0 : index
      %454 = vector.load %arg5[%c0_181, %c0_182] : memref<8x32xf32, #tpu.memory_space<vmem>>, vector<8x32xf32>
      %455 = arith.truncf %454 : vector<8x32xf32> to vector<8x32xbf16>
      %cst_183 = arith.constant dense<0.000000e+00> : vector<8x128xf32>
      %456 = tpu.matmul %455, %4, %cst_183 {dimension_numbers = #tpu.dot_dimension_numbers<[1], [0], [0], [1], [0, 0, 1, 1], [], []>} : vector<8x32xbf16>, vector<32x128xbf16>, vector<8x128xf32> -> vector<8x128xf32>
      %457 = arith.addf %453, %456 : vector<8x128xf32>
      %458 = vector.extract_strided_slice %457 {offsets = [0, 0], sizes = [8, 32], strides = [1, 1]} : vector<8x128xf32> to vector<8x32xf32>
      %459 = arith.negf %458 : vector<8x32xf32>
      %460 = math.exp %459 : vector<8x32xf32>
      %cst_184 = arith.constant 1.000000e+00 : f32
      %461 = vector.broadcast %cst_184 : f32 to vector<8x32xf32>
      %462 = arith.addf %461, %460 : vector<8x32xf32>
      %463 = arith.divf %461, %462 : vector<8x32xf32>
      %464 = vector.extract_strided_slice %457 {offsets = [0, 32], sizes = [8, 32], strides = [1, 1]} : vector<8x128xf32> to vector<8x32xf32>
      %465 = arith.negf %464 : vector<8x32xf32>
      %466 = math.exp %465 : vector<8x32xf32>
      %cst_185 = arith.constant 1.000000e+00 : f32
      %467 = vector.broadcast %cst_185 : f32 to vector<8x32xf32>
      %468 = arith.addf %467, %466 : vector<8x32xf32>
      %469 = arith.divf %467, %468 : vector<8x32xf32>
      %470 = vector.extract_strided_slice %457 {offsets = [0, 64], sizes = [8, 32], strides = [1, 1]} : vector<8x128xf32> to vector<8x32xf32>
      %471 = math.tanh %470 : vector<8x32xf32>
      %472 = vector.extract_strided_slice %457 {offsets = [0, 96], sizes = [8, 32], strides = [1, 1]} : vector<8x128xf32> to vector<8x32xf32>
      %473 = arith.negf %472 : vector<8x32xf32>
      %474 = math.exp %473 : vector<8x32xf32>
      %cst_186 = arith.constant 1.000000e+00 : f32
      %475 = vector.broadcast %cst_186 : f32 to vector<8x32xf32>
      %476 = arith.addf %475, %474 : vector<8x32xf32>
      %477 = arith.divf %475, %476 : vector<8x32xf32>
      %c0_187 = arith.constant 0 : index
      %c0_188 = arith.constant 0 : index
      %478 = vector.load %arg6[%c0_187, %c0_188] : memref<8x32xf32, #tpu.memory_space<vmem>>, vector<8x32xf32>
      %479 = arith.mulf %469, %478 : vector<8x32xf32>
      %480 = arith.mulf %463, %471 : vector<8x32xf32>
      %481 = arith.addf %479, %480 : vector<8x32xf32>
      %482 = math.tanh %481 : vector<8x32xf32>
      %483 = arith.mulf %477, %482 : vector<8x32xf32>
      %c0_189 = arith.constant 0 : index
      %c0_190 = arith.constant 0 : index
      %484 = vector.load %arg6[%c0_189, %c0_190] : memref<8x32xf32, #tpu.memory_space<vmem>>, vector<8x32xf32>
      tpu.vector_store %arg6[%c0_189, %c0_190], %481 {strides = array<i32>} : memref<8x32xf32, #tpu.memory_space<vmem>>, vector<8x32xf32>,
      %c0_191 = arith.constant 0 : index
      %c0_192 = arith.constant 0 : index
      %485 = vector.load %arg5[%c0_191, %c0_192] : memref<8x32xf32, #tpu.memory_space<vmem>>, vector<8x32xf32>
      tpu.vector_store %arg5[%c0_191, %c0_192], %483 {strides = array<i32>} : memref<8x32xf32, #tpu.memory_space<vmem>>, vector<8x32xf32>,
      %486 = arith.truncf %483 : vector<8x32xf32> to vector<8x32xbf16>
      %c0_193 = arith.constant 0 : index
      %487 = arith.index_cast %c9_i32 : i32 to index
      %c0_194 = arith.constant 0 : index
      %c0_195 = arith.constant 0 : index
      %488 = vector.load %arg4[%c0_193, %487, %c0_194, %c0_195] : memref<1x16x8x32xbf16, #tpu.memory_space<vmem>>, vector<1x1x8x32xbf16>
      %489 = vector.shape_cast %488 : vector<1x1x8x32xbf16> to vector<8x32xbf16>
      %490 = vector.shape_cast %486 : vector<8x32xbf16> to vector<1x1x8x32xbf16>
      tpu.vector_store %arg4[%c0_193, %487, %c0_194, %c0_195], %490 {strides = array<i32>} : memref<1x16x8x32xbf16, #tpu.memory_space<vmem>>, vector<1x1x8x32xbf16>,
      %c10_i32 = arith.constant 10 : i32
      %c16_i32_196 = arith.constant 16 : i32
      %491 = arith.muli %arg1, %c16_i32_196 : i32
      %492 = arith.addi %491, %c10_i32 : i32
      %c8_i32_197 = arith.constant 8 : i32
      %493 = arith.cmpi slt, %492, %c8_i32_197 : i32
      %494 = arith.extui %493 : i1 to i32
      %495 = arith.sitofp %494 : i32 to f32
      %496 = arith.index_cast %c10_i32 : i32 to index
      %c0_198 = arith.constant 0 : index
      %c0_199 = arith.constant 0 : index
      %497 = vector.load %arg2[%496, %c0_198, %c0_199] : memref<16x8x128xbf16, #tpu.memory_space<vmem>>, vector<1x8x128xbf16>
      %498 = vector.shape_cast %497 : vector<1x8x128xbf16> to vector<8x128xbf16>
      %499 = arith.extf %498 : vector<8x128xbf16> to vector<8x128xf32>
      %500 = vector.broadcast %495 : f32 to vector<8x128xf32>
      %501 = arith.mulf %499, %500 : vector<8x128xf32>
      %c0_200 = arith.constant 0 : index
      %c0_201 = arith.constant 0 : index
      %502 = vector.load %arg5[%c0_200, %c0_201] : memref<8x32xf32, #tpu.memory_space<vmem>>, vector<8x32xf32>
      %503 = arith.truncf %502 : vector<8x32xf32> to vector<8x32xbf16>
      %cst_202 = arith.constant dense<0.000000e+00> : vector<8x128xf32>
      %504 = tpu.matmul %503, %4, %cst_202 {dimension_numbers = #tpu.dot_dimension_numbers<[1], [0], [0], [1], [0, 0, 1, 1], [], []>} : vector<8x32xbf16>, vector<32x128xbf16>, vector<8x128xf32> -> vector<8x128xf32>
      %505 = arith.addf %501, %504 : vector<8x128xf32>
      %506 = vector.extract_strided_slice %505 {offsets = [0, 0], sizes = [8, 32], strides = [1, 1]} : vector<8x128xf32> to vector<8x32xf32>
      %507 = arith.negf %506 : vector<8x32xf32>
      %508 = math.exp %507 : vector<8x32xf32>
      %cst_203 = arith.constant 1.000000e+00 : f32
      %509 = vector.broadcast %cst_203 : f32 to vector<8x32xf32>
      %510 = arith.addf %509, %508 : vector<8x32xf32>
      %511 = arith.divf %509, %510 : vector<8x32xf32>
      %512 = vector.extract_strided_slice %505 {offsets = [0, 32], sizes = [8, 32], strides = [1, 1]} : vector<8x128xf32> to vector<8x32xf32>
      %513 = arith.negf %512 : vector<8x32xf32>
      %514 = math.exp %513 : vector<8x32xf32>
      %cst_204 = arith.constant 1.000000e+00 : f32
      %515 = vector.broadcast %cst_204 : f32 to vector<8x32xf32>
      %516 = arith.addf %515, %514 : vector<8x32xf32>
      %517 = arith.divf %515, %516 : vector<8x32xf32>
      %518 = vector.extract_strided_slice %505 {offsets = [0, 64], sizes = [8, 32], strides = [1, 1]} : vector<8x128xf32> to vector<8x32xf32>
      %519 = math.tanh %518 : vector<8x32xf32>
      %520 = vector.extract_strided_slice %505 {offsets = [0, 96], sizes = [8, 32], strides = [1, 1]} : vector<8x128xf32> to vector<8x32xf32>
      %521 = arith.negf %520 : vector<8x32xf32>
      %522 = math.exp %521 : vector<8x32xf32>
      %cst_205 = arith.constant 1.000000e+00 : f32
      %523 = vector.broadcast %cst_205 : f32 to vector<8x32xf32>
      %524 = arith.addf %523, %522 : vector<8x32xf32>
      %525 = arith.divf %523, %524 : vector<8x32xf32>
      %c0_206 = arith.constant 0 : index
      %c0_207 = arith.constant 0 : index
      %526 = vector.load %arg6[%c0_206, %c0_207] : memref<8x32xf32, #tpu.memory_space<vmem>>, vector<8x32xf32>
      %527 = arith.mulf %517, %526 : vector<8x32xf32>
      %528 = arith.mulf %511, %519 : vector<8x32xf32>
      %529 = arith.addf %527, %528 : vector<8x32xf32>
      %530 = math.tanh %529 : vector<8x32xf32>
      %531 = arith.mulf %525, %530 : vector<8x32xf32>
      %c0_208 = arith.constant 0 : index
      %c0_209 = arith.constant 0 : index
      %532 = vector.load %arg6[%c0_208, %c0_209] : memref<8x32xf32, #tpu.memory_space<vmem>>, vector<8x32xf32>
      tpu.vector_store %arg6[%c0_208, %c0_209], %529 {strides = array<i32>} : memref<8x32xf32, #tpu.memory_space<vmem>>, vector<8x32xf32>,
      %c0_210 = arith.constant 0 : index
      %c0_211 = arith.constant 0 : index
      %533 = vector.load %arg5[%c0_210, %c0_211] : memref<8x32xf32, #tpu.memory_space<vmem>>, vector<8x32xf32>
      tpu.vector_store %arg5[%c0_210, %c0_211], %531 {strides = array<i32>} : memref<8x32xf32, #tpu.memory_space<vmem>>, vector<8x32xf32>,
      %534 = arith.truncf %531 : vector<8x32xf32> to vector<8x32xbf16>
      %c0_212 = arith.constant 0 : index
      %535 = arith.index_cast %c10_i32 : i32 to index
      %c0_213 = arith.constant 0 : index
      %c0_214 = arith.constant 0 : index
      %536 = vector.load %arg4[%c0_212, %535, %c0_213, %c0_214] : memref<1x16x8x32xbf16, #tpu.memory_space<vmem>>, vector<1x1x8x32xbf16>
      %537 = vector.shape_cast %536 : vector<1x1x8x32xbf16> to vector<8x32xbf16>
      %538 = vector.shape_cast %534 : vector<8x32xbf16> to vector<1x1x8x32xbf16>
      tpu.vector_store %arg4[%c0_212, %535, %c0_213, %c0_214], %538 {strides = array<i32>} : memref<1x16x8x32xbf16, #tpu.memory_space<vmem>>, vector<1x1x8x32xbf16>,
      %c11_i32 = arith.constant 11 : i32
      %c16_i32_215 = arith.constant 16 : i32
      %539 = arith.muli %arg1, %c16_i32_215 : i32
      %540 = arith.addi %539, %c11_i32 : i32
      %c8_i32_216 = arith.constant 8 : i32
      %541 = arith.cmpi slt, %540, %c8_i32_216 : i32
      %542 = arith.extui %541 : i1 to i32
      %543 = arith.sitofp %542 : i32 to f32
      %544 = arith.index_cast %c11_i32 : i32 to index
      %c0_217 = arith.constant 0 : index
      %c0_218 = arith.constant 0 : index
      %545 = vector.load %arg2[%544, %c0_217, %c0_218] : memref<16x8x128xbf16, #tpu.memory_space<vmem>>, vector<1x8x128xbf16>
      %546 = vector.shape_cast %545 : vector<1x8x128xbf16> to vector<8x128xbf16>
      %547 = arith.extf %546 : vector<8x128xbf16> to vector<8x128xf32>
      %548 = vector.broadcast %543 : f32 to vector<8x128xf32>
      %549 = arith.mulf %547, %548 : vector<8x128xf32>
      %c0_219 = arith.constant 0 : index
      %c0_220 = arith.constant 0 : index
      %550 = vector.load %arg5[%c0_219, %c0_220] : memref<8x32xf32, #tpu.memory_space<vmem>>, vector<8x32xf32>
      %551 = arith.truncf %550 : vector<8x32xf32> to vector<8x32xbf16>
      %cst_221 = arith.constant dense<0.000000e+00> : vector<8x128xf32>
      %552 = tpu.matmul %551, %4, %cst_221 {dimension_numbers = #tpu.dot_dimension_numbers<[1], [0], [0], [1], [0, 0, 1, 1], [], []>} : vector<8x32xbf16>, vector<32x128xbf16>, vector<8x128xf32> -> vector<8x128xf32>
      %553 = arith.addf %549, %552 : vector<8x128xf32>
      %554 = vector.extract_strided_slice %553 {offsets = [0, 0], sizes = [8, 32], strides = [1, 1]} : vector<8x128xf32> to vector<8x32xf32>
      %555 = arith.negf %554 : vector<8x32xf32>
      %556 = math.exp %555 : vector<8x32xf32>
      %cst_222 = arith.constant 1.000000e+00 : f32
      %557 = vector.broadcast %cst_222 : f32 to vector<8x32xf32>
      %558 = arith.addf %557, %556 : vector<8x32xf32>
      %559 = arith.divf %557, %558 : vector<8x32xf32>
      %560 = vector.extract_strided_slice %553 {offsets = [0, 32], sizes = [8, 32], strides = [1, 1]} : vector<8x128xf32> to vector<8x32xf32>
      %561 = arith.negf %560 : vector<8x32xf32>
      %562 = math.exp %561 : vector<8x32xf32>
      %cst_223 = arith.constant 1.000000e+00 : f32
      %563 = vector.broadcast %cst_223 : f32 to vector<8x32xf32>
      %564 = arith.addf %563, %562 : vector<8x32xf32>
      %565 = arith.divf %563, %564 : vector<8x32xf32>
      %566 = vector.extract_strided_slice %553 {offsets = [0, 64], sizes = [8, 32], strides = [1, 1]} : vector<8x128xf32> to vector<8x32xf32>
      %567 = math.tanh %566 : vector<8x32xf32>
      %568 = vector.extract_strided_slice %553 {offsets = [0, 96], sizes = [8, 32], strides = [1, 1]} : vector<8x128xf32> to vector<8x32xf32>
      %569 = arith.negf %568 : vector<8x32xf32>
      %570 = math.exp %569 : vector<8x32xf32>
      %cst_224 = arith.constant 1.000000e+00 : f32
      %571 = vector.broadcast %cst_224 : f32 to vector<8x32xf32>
      %572 = arith.addf %571, %570 : vector<8x32xf32>
      %573 = arith.divf %571, %572 : vector<8x32xf32>
      %c0_225 = arith.constant 0 : index
      %c0_226 = arith.constant 0 : index
      %574 = vector.load %arg6[%c0_225, %c0_226] : memref<8x32xf32, #tpu.memory_space<vmem>>, vector<8x32xf32>
      %575 = arith.mulf %565, %574 : vector<8x32xf32>
      %576 = arith.mulf %559, %567 : vector<8x32xf32>
      %577 = arith.addf %575, %576 : vector<8x32xf32>
      %578 = math.tanh %577 : vector<8x32xf32>
      %579 = arith.mulf %573, %578 : vector<8x32xf32>
      %c0_227 = arith.constant 0 : index
      %c0_228 = arith.constant 0 : index
      %580 = vector.load %arg6[%c0_227, %c0_228] : memref<8x32xf32, #tpu.memory_space<vmem>>, vector<8x32xf32>
      tpu.vector_store %arg6[%c0_227, %c0_228], %577 {strides = array<i32>} : memref<8x32xf32, #tpu.memory_space<vmem>>, vector<8x32xf32>,
      %c0_229 = arith.constant 0 : index
      %c0_230 = arith.constant 0 : index
      %581 = vector.load %arg5[%c0_229, %c0_230] : memref<8x32xf32, #tpu.memory_space<vmem>>, vector<8x32xf32>
      tpu.vector_store %arg5[%c0_229, %c0_230], %579 {strides = array<i32>} : memref<8x32xf32, #tpu.memory_space<vmem>>, vector<8x32xf32>,
      %582 = arith.truncf %579 : vector<8x32xf32> to vector<8x32xbf16>
      %c0_231 = arith.constant 0 : index
      %583 = arith.index_cast %c11_i32 : i32 to index
      %c0_232 = arith.constant 0 : index
      %c0_233 = arith.constant 0 : index
      %584 = vector.load %arg4[%c0_231, %583, %c0_232, %c0_233] : memref<1x16x8x32xbf16, #tpu.memory_space<vmem>>, vector<1x1x8x32xbf16>
      %585 = vector.shape_cast %584 : vector<1x1x8x32xbf16> to vector<8x32xbf16>
      %586 = vector.shape_cast %582 : vector<8x32xbf16> to vector<1x1x8x32xbf16>
      tpu.vector_store %arg4[%c0_231, %583, %c0_232, %c0_233], %586 {strides = array<i32>} : memref<1x16x8x32xbf16, #tpu.memory_space<vmem>>, vector<1x1x8x32xbf16>,
      %c12_i32 = arith.constant 12 : i32
      %c16_i32_234 = arith.constant 16 : i32
      %587 = arith.muli %arg1, %c16_i32_234 : i32
      %588 = arith.addi %587, %c12_i32 : i32
      %c8_i32_235 = arith.constant 8 : i32
      %589 = arith.cmpi slt, %588, %c8_i32_235 : i32
      %590 = arith.extui %589 : i1 to i32
      %591 = arith.sitofp %590 : i32 to f32
      %592 = arith.index_cast %c12_i32 : i32 to index
      %c0_236 = arith.constant 0 : index
      %c0_237 = arith.constant 0 : index
      %593 = vector.load %arg2[%592, %c0_236, %c0_237] : memref<16x8x128xbf16, #tpu.memory_space<vmem>>, vector<1x8x128xbf16>
      %594 = vector.shape_cast %593 : vector<1x8x128xbf16> to vector<8x128xbf16>
      %595 = arith.extf %594 : vector<8x128xbf16> to vector<8x128xf32>
      %596 = vector.broadcast %591 : f32 to vector<8x128xf32>
      %597 = arith.mulf %595, %596 : vector<8x128xf32>
      %c0_238 = arith.constant 0 : index
      %c0_239 = arith.constant 0 : index
      %598 = vector.load %arg5[%c0_238, %c0_239] : memref<8x32xf32, #tpu.memory_space<vmem>>, vector<8x32xf32>
      %599 = arith.truncf %598 : vector<8x32xf32> to vector<8x32xbf16>
      %cst_240 = arith.constant dense<0.000000e+00> : vector<8x128xf32>
      %600 = tpu.matmul %599, %4, %cst_240 {dimension_numbers = #tpu.dot_dimension_numbers<[1], [0], [0], [1], [0, 0, 1, 1], [], []>} : vector<8x32xbf16>, vector<32x128xbf16>, vector<8x128xf32> -> vector<8x128xf32>
      %601 = arith.addf %597, %600 : vector<8x128xf32>
      %602 = vector.extract_strided_slice %601 {offsets = [0, 0], sizes = [8, 32], strides = [1, 1]} : vector<8x128xf32> to vector<8x32xf32>
      %603 = arith.negf %602 : vector<8x32xf32>
      %604 = math.exp %603 : vector<8x32xf32>
      %cst_241 = arith.constant 1.000000e+00 : f32
      %605 = vector.broadcast %cst_241 : f32 to vector<8x32xf32>
      %606 = arith.addf %605, %604 : vector<8x32xf32>
      %607 = arith.divf %605, %606 : vector<8x32xf32>
      %608 = vector.extract_strided_slice %601 {offsets = [0, 32], sizes = [8, 32], strides = [1, 1]} : vector<8x128xf32> to vector<8x32xf32>
      %609 = arith.negf %608 : vector<8x32xf32>
      %610 = math.exp %609 : vector<8x32xf32>
      %cst_242 = arith.constant 1.000000e+00 : f32
      %611 = vector.broadcast %cst_242 : f32 to vector<8x32xf32>
      %612 = arith.addf %611, %610 : vector<8x32xf32>
      %613 = arith.divf %611, %612 : vector<8x32xf32>
      %614 = vector.extract_strided_slice %601 {offsets = [0, 64], sizes = [8, 32], strides = [1, 1]} : vector<8x128xf32> to vector<8x32xf32>
      %615 = math.tanh %614 : vector<8x32xf32>
      %616 = vector.extract_strided_slice %601 {offsets = [0, 96], sizes = [8, 32], strides = [1, 1]} : vector<8x128xf32> to vector<8x32xf32>
      %617 = arith.negf %616 : vector<8x32xf32>
      %618 = math.exp %617 : vector<8x32xf32>
      %cst_243 = arith.constant 1.000000e+00 : f32
      %619 = vector.broadcast %cst_243 : f32 to vector<8x32xf32>
      %620 = arith.addf %619, %618 : vector<8x32xf32>
      %621 = arith.divf %619, %620 : vector<8x32xf32>
      %c0_244 = arith.constant 0 : index
      %c0_245 = arith.constant 0 : index
      %622 = vector.load %arg6[%c0_244, %c0_245] : memref<8x32xf32, #tpu.memory_space<vmem>>, vector<8x32xf32>
      %623 = arith.mulf %613, %622 : vector<8x32xf32>
      %624 = arith.mulf %607, %615 : vector<8x32xf32>
      %625 = arith.addf %623, %624 : vector<8x32xf32>
      %626 = math.tanh %625 : vector<8x32xf32>
      %627 = arith.mulf %621, %626 : vector<8x32xf32>
      %c0_246 = arith.constant 0 : index
      %c0_247 = arith.constant 0 : index
      %628 = vector.load %arg6[%c0_246, %c0_247] : memref<8x32xf32, #tpu.memory_space<vmem>>, vector<8x32xf32>
      tpu.vector_store %arg6[%c0_246, %c0_247], %625 {strides = array<i32>} : memref<8x32xf32, #tpu.memory_space<vmem>>, vector<8x32xf32>,
      %c0_248 = arith.constant 0 : index
      %c0_249 = arith.constant 0 : index
      %629 = vector.load %arg5[%c0_248, %c0_249] : memref<8x32xf32, #tpu.memory_space<vmem>>, vector<8x32xf32>
      tpu.vector_store %arg5[%c0_248, %c0_249], %627 {strides = array<i32>} : memref<8x32xf32, #tpu.memory_space<vmem>>, vector<8x32xf32>,
      %630 = arith.truncf %627 : vector<8x32xf32> to vector<8x32xbf16>
      %c0_250 = arith.constant 0 : index
      %631 = arith.index_cast %c12_i32 : i32 to index
      %c0_251 = arith.constant 0 : index
      %c0_252 = arith.constant 0 : index
      %632 = vector.load %arg4[%c0_250, %631, %c0_251, %c0_252] : memref<1x16x8x32xbf16, #tpu.memory_space<vmem>>, vector<1x1x8x32xbf16>
      %633 = vector.shape_cast %632 : vector<1x1x8x32xbf16> to vector<8x32xbf16>
      %634 = vector.shape_cast %630 : vector<8x32xbf16> to vector<1x1x8x32xbf16>
      tpu.vector_store %arg4[%c0_250, %631, %c0_251, %c0_252], %634 {strides = array<i32>} : memref<1x16x8x32xbf16, #tpu.memory_space<vmem>>, vector<1x1x8x32xbf16>,
      %c13_i32 = arith.constant 13 : i32
      %c16_i32_253 = arith.constant 16 : i32
      %635 = arith.muli %arg1, %c16_i32_253 : i32
      %636 = arith.addi %635, %c13_i32 : i32
      %c8_i32_254 = arith.constant 8 : i32
      %637 = arith.cmpi slt, %636, %c8_i32_254 : i32
      %638 = arith.extui %637 : i1 to i32
      %639 = arith.sitofp %638 : i32 to f32
      %640 = arith.index_cast %c13_i32 : i32 to index
      %c0_255 = arith.constant 0 : index
      %c0_256 = arith.constant 0 : index
      %641 = vector.load %arg2[%640, %c0_255, %c0_256] : memref<16x8x128xbf16, #tpu.memory_space<vmem>>, vector<1x8x128xbf16>
      %642 = vector.shape_cast %641 : vector<1x8x128xbf16> to vector<8x128xbf16>
      %643 = arith.extf %642 : vector<8x128xbf16> to vector<8x128xf32>
      %644 = vector.broadcast %639 : f32 to vector<8x128xf32>
      %645 = arith.mulf %643, %644 : vector<8x128xf32>
      %c0_257 = arith.constant 0 : index
      %c0_258 = arith.constant 0 : index
      %646 = vector.load %arg5[%c0_257, %c0_258] : memref<8x32xf32, #tpu.memory_space<vmem>>, vector<8x32xf32>
      %647 = arith.truncf %646 : vector<8x32xf32> to vector<8x32xbf16>
      %cst_259 = arith.constant dense<0.000000e+00> : vector<8x128xf32>
      %648 = tpu.matmul %647, %4, %cst_259 {dimension_numbers = #tpu.dot_dimension_numbers<[1], [0], [0], [1], [0, 0, 1, 1], [], []>} : vector<8x32xbf16>, vector<32x128xbf16>, vector<8x128xf32> -> vector<8x128xf32>
      %649 = arith.addf %645, %648 : vector<8x128xf32>
      %650 = vector.extract_strided_slice %649 {offsets = [0, 0], sizes = [8, 32], strides = [1, 1]} : vector<8x128xf32> to vector<8x32xf32>
      %651 = arith.negf %650 : vector<8x32xf32>
      %652 = math.exp %651 : vector<8x32xf32>
      %cst_260 = arith.constant 1.000000e+00 : f32
      %653 = vector.broadcast %cst_260 : f32 to vector<8x32xf32>
      %654 = arith.addf %653, %652 : vector<8x32xf32>
      %655 = arith.divf %653, %654 : vector<8x32xf32>
      %656 = vector.extract_strided_slice %649 {offsets = [0, 32], sizes = [8, 32], strides = [1, 1]} : vector<8x128xf32> to vector<8x32xf32>
      %657 = arith.negf %656 : vector<8x32xf32>
      %658 = math.exp %657 : vector<8x32xf32>
      %cst_261 = arith.constant 1.000000e+00 : f32
      %659 = vector.broadcast %cst_261 : f32 to vector<8x32xf32>
      %660 = arith.addf %659, %658 : vector<8x32xf32>
      %661 = arith.divf %659, %660 : vector<8x32xf32>
      %662 = vector.extract_strided_slice %649 {offsets = [0, 64], sizes = [8, 32], strides = [1, 1]} : vector<8x128xf32> to vector<8x32xf32>
      %663 = math.tanh %662 : vector<8x32xf32>
      %664 = vector.extract_strided_slice %649 {offsets = [0, 96], sizes = [8, 32], strides = [1, 1]} : vector<8x128xf32> to vector<8x32xf32>
      %665 = arith.negf %664 : vector<8x32xf32>
      %666 = math.exp %665 : vector<8x32xf32>
      %cst_262 = arith.constant 1.000000e+00 : f32
      %667 = vector.broadcast %cst_262 : f32 to vector<8x32xf32>
      %668 = arith.addf %667, %666 : vector<8x32xf32>
      %669 = arith.divf %667, %668 : vector<8x32xf32>
      %c0_263 = arith.constant 0 : index
      %c0_264 = arith.constant 0 : index
      %670 = vector.load %arg6[%c0_263, %c0_264] : memref<8x32xf32, #tpu.memory_space<vmem>>, vector<8x32xf32>
      %671 = arith.mulf %661, %670 : vector<8x32xf32>
      %672 = arith.mulf %655, %663 : vector<8x32xf32>
      %673 = arith.addf %671, %672 : vector<8x32xf32>
      %674 = math.tanh %673 : vector<8x32xf32>
      %675 = arith.mulf %669, %674 : vector<8x32xf32>
      %c0_265 = arith.constant 0 : index
      %c0_266 = arith.constant 0 : index
      %676 = vector.load %arg6[%c0_265, %c0_266] : memref<8x32xf32, #tpu.memory_space<vmem>>, vector<8x32xf32>
      tpu.vector_store %arg6[%c0_265, %c0_266], %673 {strides = array<i32>} : memref<8x32xf32, #tpu.memory_space<vmem>>, vector<8x32xf32>,
      %c0_267 = arith.constant 0 : index
      %c0_268 = arith.constant 0 : index
      %677 = vector.load %arg5[%c0_267, %c0_268] : memref<8x32xf32, #tpu.memory_space<vmem>>, vector<8x32xf32>
      tpu.vector_store %arg5[%c0_267, %c0_268], %675 {strides = array<i32>} : memref<8x32xf32, #tpu.memory_space<vmem>>, vector<8x32xf32>,
      %678 = arith.truncf %675 : vector<8x32xf32> to vector<8x32xbf16>
      %c0_269 = arith.constant 0 : index
      %679 = arith.index_cast %c13_i32 : i32 to index
      %c0_270 = arith.constant 0 : index
      %c0_271 = arith.constant 0 : index
      %680 = vector.load %arg4[%c0_269, %679, %c0_270, %c0_271] : memref<1x16x8x32xbf16, #tpu.memory_space<vmem>>, vector<1x1x8x32xbf16>
      %681 = vector.shape_cast %680 : vector<1x1x8x32xbf16> to vector<8x32xbf16>
      %682 = vector.shape_cast %678 : vector<8x32xbf16> to vector<1x1x8x32xbf16>
      tpu.vector_store %arg4[%c0_269, %679, %c0_270, %c0_271], %682 {strides = array<i32>} : memref<1x16x8x32xbf16, #tpu.memory_space<vmem>>, vector<1x1x8x32xbf16>,
      %c14_i32 = arith.constant 14 : i32
      %c16_i32_272 = arith.constant 16 : i32
      %683 = arith.muli %arg1, %c16_i32_272 : i32
      %684 = arith.addi %683, %c14_i32 : i32
      %c8_i32_273 = arith.constant 8 : i32
      %685 = arith.cmpi slt, %684, %c8_i32_273 : i32
      %686 = arith.extui %685 : i1 to i32
      %687 = arith.sitofp %686 : i32 to f32
      %688 = arith.index_cast %c14_i32 : i32 to index
      %c0_274 = arith.constant 0 : index
      %c0_275 = arith.constant 0 : index
      %689 = vector.load %arg2[%688, %c0_274, %c0_275] : memref<16x8x128xbf16, #tpu.memory_space<vmem>>, vector<1x8x128xbf16>
      %690 = vector.shape_cast %689 : vector<1x8x128xbf16> to vector<8x128xbf16>
      %691 = arith.extf %690 : vector<8x128xbf16> to vector<8x128xf32>
      %692 = vector.broadcast %687 : f32 to vector<8x128xf32>
      %693 = arith.mulf %691, %692 : vector<8x128xf32>
      %c0_276 = arith.constant 0 : index
      %c0_277 = arith.constant 0 : index
      %694 = vector.load %arg5[%c0_276, %c0_277] : memref<8x32xf32, #tpu.memory_space<vmem>>, vector<8x32xf32>
      %695 = arith.truncf %694 : vector<8x32xf32> to vector<8x32xbf16>
      %cst_278 = arith.constant dense<0.000000e+00> : vector<8x128xf32>
      %696 = tpu.matmul %695, %4, %cst_278 {dimension_numbers = #tpu.dot_dimension_numbers<[1], [0], [0], [1], [0, 0, 1, 1], [], []>} : vector<8x32xbf16>, vector<32x128xbf16>, vector<8x128xf32> -> vector<8x128xf32>
      %697 = arith.addf %693, %696 : vector<8x128xf32>
      %698 = vector.extract_strided_slice %697 {offsets = [0, 0], sizes = [8, 32], strides = [1, 1]} : vector<8x128xf32> to vector<8x32xf32>
      %699 = arith.negf %698 : vector<8x32xf32>
      %700 = math.exp %699 : vector<8x32xf32>
      %cst_279 = arith.constant 1.000000e+00 : f32
      %701 = vector.broadcast %cst_279 : f32 to vector<8x32xf32>
      %702 = arith.addf %701, %700 : vector<8x32xf32>
      %703 = arith.divf %701, %702 : vector<8x32xf32>
      %704 = vector.extract_strided_slice %697 {offsets = [0, 32], sizes = [8, 32], strides = [1, 1]} : vector<8x128xf32> to vector<8x32xf32>
      %705 = arith.negf %704 : vector<8x32xf32>
      %706 = math.exp %705 : vector<8x32xf32>
      %cst_280 = arith.constant 1.000000e+00 : f32
      %707 = vector.broadcast %cst_280 : f32 to vector<8x32xf32>
      %708 = arith.addf %707, %706 : vector<8x32xf32>
      %709 = arith.divf %707, %708 : vector<8x32xf32>
      %710 = vector.extract_strided_slice %697 {offsets = [0, 64], sizes = [8, 32], strides = [1, 1]} : vector<8x128xf32> to vector<8x32xf32>
      %711 = math.tanh %710 : vector<8x32xf32>
      %712 = vector.extract_strided_slice %697 {offsets = [0, 96], sizes = [8, 32], strides = [1, 1]} : vector<8x128xf32> to vector<8x32xf32>
      %713 = arith.negf %712 : vector<8x32xf32>
      %714 = math.exp %713 : vector<8x32xf32>
      %cst_281 = arith.constant 1.000000e+00 : f32
      %715 = vector.broadcast %cst_281 : f32 to vector<8x32xf32>
      %716 = arith.addf %715, %714 : vector<8x32xf32>
      %717 = arith.divf %715, %716 : vector<8x32xf32>
      %c0_282 = arith.constant 0 : index
      %c0_283 = arith.constant 0 : index
      %718 = vector.load %arg6[%c0_282, %c0_283] : memref<8x32xf32, #tpu.memory_space<vmem>>, vector<8x32xf32>
      %719 = arith.mulf %709, %718 : vector<8x32xf32>
      %720 = arith.mulf %703, %711 : vector<8x32xf32>
      %721 = arith.addf %719, %720 : vector<8x32xf32>
      %722 = math.tanh %721 : vector<8x32xf32>
      %723 = arith.mulf %717, %722 : vector<8x32xf32>
      %c0_284 = arith.constant 0 : index
      %c0_285 = arith.constant 0 : index
      %724 = vector.load %arg6[%c0_284, %c0_285] : memref<8x32xf32, #tpu.memory_space<vmem>>, vector<8x32xf32>
      tpu.vector_store %arg6[%c0_284, %c0_285], %721 {strides = array<i32>} : memref<8x32xf32, #tpu.memory_space<vmem>>, vector<8x32xf32>,
      %c0_286 = arith.constant 0 : index
      %c0_287 = arith.constant 0 : index
      %725 = vector.load %arg5[%c0_286, %c0_287] : memref<8x32xf32, #tpu.memory_space<vmem>>, vector<8x32xf32>
      tpu.vector_store %arg5[%c0_286, %c0_287], %723 {strides = array<i32>} : memref<8x32xf32, #tpu.memory_space<vmem>>, vector<8x32xf32>,
      %726 = arith.truncf %723 : vector<8x32xf32> to vector<8x32xbf16>
      %c0_288 = arith.constant 0 : index
      %727 = arith.index_cast %c14_i32 : i32 to index
      %c0_289 = arith.constant 0 : index
      %c0_290 = arith.constant 0 : index
      %728 = vector.load %arg4[%c0_288, %727, %c0_289, %c0_290] : memref<1x16x8x32xbf16, #tpu.memory_space<vmem>>, vector<1x1x8x32xbf16>
      %729 = vector.shape_cast %728 : vector<1x1x8x32xbf16> to vector<8x32xbf16>
      %730 = vector.shape_cast %726 : vector<8x32xbf16> to vector<1x1x8x32xbf16>
      tpu.vector_store %arg4[%c0_288, %727, %c0_289, %c0_290], %730 {strides = array<i32>} : memref<1x16x8x32xbf16, #tpu.memory_space<vmem>>, vector<1x1x8x32xbf16>,
      %c15_i32 = arith.constant 15 : i32
      %c16_i32_291 = arith.constant 16 : i32
      %731 = arith.muli %arg1, %c16_i32_291 : i32
      %732 = arith.addi %731, %c15_i32 : i32
      %c8_i32_292 = arith.constant 8 : i32
      %733 = arith.cmpi slt, %732, %c8_i32_292 : i32
      %734 = arith.extui %733 : i1 to i32
      %735 = arith.sitofp %734 : i32 to f32
      %736 = arith.index_cast %c15_i32 : i32 to index
      %c0_293 = arith.constant 0 : index
      %c0_294 = arith.constant 0 : index
      %737 = vector.load %arg2[%736, %c0_293, %c0_294] : memref<16x8x128xbf16, #tpu.memory_space<vmem>>, vector<1x8x128xbf16>
      %738 = vector.shape_cast %737 : vector<1x8x128xbf16> to vector<8x128xbf16>
      %739 = arith.extf %738 : vector<8x128xbf16> to vector<8x128xf32>
      %740 = vector.broadcast %735 : f32 to vector<8x128xf32>
      %741 = arith.mulf %739, %740 : vector<8x128xf32>
      %c0_295 = arith.constant 0 : index
      %c0_296 = arith.constant 0 : index
      %742 = vector.load %arg5[%c0_295, %c0_296] : memref<8x32xf32, #tpu.memory_space<vmem>>, vector<8x32xf32>
      %743 = arith.truncf %742 : vector<8x32xf32> to vector<8x32xbf16>
      %cst_297 = arith.constant dense<0.000000e+00> : vector<8x128xf32>
      %744 = tpu.matmul %743, %4, %cst_297 {dimension_numbers = #tpu.dot_dimension_numbers<[1], [0], [0], [1], [0, 0, 1, 1], [], []>} : vector<8x32xbf16>, vector<32x128xbf16>, vector<8x128xf32> -> vector<8x128xf32>
      %745 = arith.addf %741, %744 : vector<8x128xf32>
      %746 = vector.extract_strided_slice %745 {offsets = [0, 0], sizes = [8, 32], strides = [1, 1]} : vector<8x128xf32> to vector<8x32xf32>
      %747 = arith.negf %746 : vector<8x32xf32>
      %748 = math.exp %747 : vector<8x32xf32>
      %cst_298 = arith.constant 1.000000e+00 : f32
      %749 = vector.broadcast %cst_298 : f32 to vector<8x32xf32>
      %750 = arith.addf %749, %748 : vector<8x32xf32>
      %751 = arith.divf %749, %750 : vector<8x32xf32>
      %752 = vector.extract_strided_slice %745 {offsets = [0, 32], sizes = [8, 32], strides = [1, 1]} : vector<8x128xf32> to vector<8x32xf32>
      %753 = arith.negf %752 : vector<8x32xf32>
      %754 = math.exp %753 : vector<8x32xf32>
      %cst_299 = arith.constant 1.000000e+00 : f32
      %755 = vector.broadcast %cst_299 : f32 to vector<8x32xf32>
      %756 = arith.addf %755, %754 : vector<8x32xf32>
      %757 = arith.divf %755, %756 : vector<8x32xf32>
      %758 = vector.extract_strided_slice %745 {offsets = [0, 64], sizes = [8, 32], strides = [1, 1]} : vector<8x128xf32> to vector<8x32xf32>
      %759 = math.tanh %758 : vector<8x32xf32>
      %760 = vector.extract_strided_slice %745 {offsets = [0, 96], sizes = [8, 32], strides = [1, 1]} : vector<8x128xf32> to vector<8x32xf32>
      %761 = arith.negf %760 : vector<8x32xf32>
      %762 = math.exp %761 : vector<8x32xf32>
      %cst_300 = arith.constant 1.000000e+00 : f32
      %763 = vector.broadcast %cst_300 : f32 to vector<8x32xf32>
      %764 = arith.addf %763, %762 : vector<8x32xf32>
      %765 = arith.divf %763, %764 : vector<8x32xf32>
      %c0_301 = arith.constant 0 : index
      %c0_302 = arith.constant 0 : index
      %766 = vector.load %arg6[%c0_301, %c0_302] : memref<8x32xf32, #tpu.memory_space<vmem>>, vector<8x32xf32>
      %767 = arith.mulf %757, %766 : vector<8x32xf32>
      %768 = arith.mulf %751, %759 : vector<8x32xf32>
      %769 = arith.addf %767, %768 : vector<8x32xf32>
      %770 = math.tanh %769 : vector<8x32xf32>
      %771 = arith.mulf %765, %770 : vector<8x32xf32>
      %c0_303 = arith.constant 0 : index
      %c0_304 = arith.constant 0 : index
      %772 = vector.load %arg6[%c0_303, %c0_304] : memref<8x32xf32, #tpu.memory_space<vmem>>, vector<8x32xf32>
      tpu.vector_store %arg6[%c0_303, %c0_304], %769 {strides = array<i32>} : memref<8x32xf32, #tpu.memory_space<vmem>>, vector<8x32xf32>,
      %c0_305 = arith.constant 0 : index
      %c0_306 = arith.constant 0 : index
      %773 = vector.load %arg5[%c0_305, %c0_306] : memref<8x32xf32, #tpu.memory_space<vmem>>, vector<8x32xf32>
      tpu.vector_store %arg5[%c0_305, %c0_306], %771 {strides = array<i32>} : memref<8x32xf32, #tpu.memory_space<vmem>>, vector<8x32xf32>,
      %774 = arith.truncf %771 : vector<8x32xf32> to vector<8x32xbf16>
      %c0_307 = arith.constant 0 : index
      %775 = arith.index_cast %c15_i32 : i32 to index
      %c0_308 = arith.constant 0 : index
      %c0_309 = arith.constant 0 : index
      %776 = vector.load %arg4[%c0_307, %775, %c0_308, %c0_309] : memref<1x16x8x32xbf16, #tpu.memory_space<vmem>>, vector<1x1x8x32xbf16>
      %777 = vector.shape_cast %776 : vector<1x1x8x32xbf16> to vector<8x32xbf16>
      %778 = vector.shape_cast %774 : vector<8x32xbf16> to vector<1x1x8x32xbf16>
      tpu.vector_store %arg4[%c0_307, %775, %c0_308, %c0_309], %778 {strides = array<i32>} : memref<1x16x8x32xbf16, #tpu.memory_space<vmem>>, vector<1x1x8x32xbf16>,
      %c16_i32_310 = arith.constant 16 : i32
    } else {
    }
    %c1_i32 = arith.constant 1 : i32
    %8 = arith.cmpi eq, %arg0, %c1_i32 : i32
    %9 = arith.extui %8 : i1 to i32
    %c0_i32_5 = arith.constant 0 : i32
    %10 = arith.cmpi ne, %9, %c0_i32_5 : i32
    scf.if %10 {
      %c0_i32_6 = arith.constant 0 : i32
      %11 = arith.subi %c0_i32_6, %arg1 : i32
      %c0_i32_7 = arith.constant 0 : i32
      %c15_i32 = arith.constant 15 : i32
      %12 = arith.subi %c15_i32, %c0_i32_7 : i32
      %c16_i32 = arith.constant 16 : i32
      %13 = arith.muli %11, %c16_i32 : i32
      %14 = arith.addi %13, %12 : i32
      %c8_i32 = arith.constant 8 : i32
      %15 = arith.cmpi slt, %14, %c8_i32 : i32
      %16 = arith.extui %15 : i1 to i32
      %17 = arith.sitofp %16 : i32 to f32
      %18 = arith.index_cast %12 : i32 to index
      %c0_8 = arith.constant 0 : index
      %c0_9 = arith.constant 0 : index
      %19 = vector.load %arg2[%18, %c0_8, %c0_9] : memref<16x8x128xbf16, #tpu.memory_space<vmem>>, vector<1x8x128xbf16>
      %20 = vector.shape_cast %19 : vector<1x8x128xbf16> to vector<8x128xbf16>
      %21 = arith.extf %20 : vector<8x128xbf16> to vector<8x128xf32>
      %22 = vector.broadcast %17 : f32 to vector<8x128xf32>
      %23 = arith.mulf %21, %22 : vector<8x128xf32>
      %c0_10 = arith.constant 0 : index
      %c0_11 = arith.constant 0 : index
      %24 = vector.load %arg5[%c0_10, %c0_11] : memref<8x32xf32, #tpu.memory_space<vmem>>, vector<8x32xf32>
      %25 = arith.truncf %24 : vector<8x32xf32> to vector<8x32xbf16>
      %cst = arith.constant dense<0.000000e+00> : vector<8x128xf32>
      %26 = tpu.matmul %25, %4, %cst {dimension_numbers = #tpu.dot_dimension_numbers<[1], [0], [0], [1], [0, 0, 1, 1], [], []>} : vector<8x32xbf16>, vector<32x128xbf16>, vector<8x128xf32> -> vector<8x128xf32>
      %27 = arith.addf %23, %26 : vector<8x128xf32>
      %28 = vector.extract_strided_slice %27 {offsets = [0, 0], sizes = [8, 32], strides = [1, 1]} : vector<8x128xf32> to vector<8x32xf32>
      %29 = arith.negf %28 : vector<8x32xf32>
      %30 = math.exp %29 : vector<8x32xf32>
      %cst_12 = arith.constant 1.000000e+00 : f32
      %31 = vector.broadcast %cst_12 : f32 to vector<8x32xf32>
      %32 = arith.addf %31, %30 : vector<8x32xf32>
      %33 = arith.divf %31, %32 : vector<8x32xf32>
      %34 = vector.extract_strided_slice %27 {offsets = [0, 32], sizes = [8, 32], strides = [1, 1]} : vector<8x128xf32> to vector<8x32xf32>
      %35 = arith.negf %34 : vector<8x32xf32>
      %36 = math.exp %35 : vector<8x32xf32>
      %cst_13 = arith.constant 1.000000e+00 : f32
      %37 = vector.broadcast %cst_13 : f32 to vector<8x32xf32>
      %38 = arith.addf %37, %36 : vector<8x32xf32>
      %39 = arith.divf %37, %38 : vector<8x32xf32>
      %40 = vector.extract_strided_slice %27 {offsets = [0, 64], sizes = [8, 32], strides = [1, 1]} : vector<8x128xf32> to vector<8x32xf32>
      %41 = math.tanh %40 : vector<8x32xf32>
      %42 = vector.extract_strided_slice %27 {offsets = [0, 96], sizes = [8, 32], strides = [1, 1]} : vector<8x128xf32> to vector<8x32xf32>
      %43 = arith.negf %42 : vector<8x32xf32>
      %44 = math.exp %43 : vector<8x32xf32>
      %cst_14 = arith.constant 1.000000e+00 : f32
      %45 = vector.broadcast %cst_14 : f32 to vector<8x32xf32>
      %46 = arith.addf %45, %44 : vector<8x32xf32>
      %47 = arith.divf %45, %46 : vector<8x32xf32>
      %c0_15 = arith.constant 0 : index
      %c0_16 = arith.constant 0 : index
      %48 = vector.load %arg6[%c0_15, %c0_16] : memref<8x32xf32, #tpu.memory_space<vmem>>, vector<8x32xf32>
      %49 = arith.mulf %39, %48 : vector<8x32xf32>
      %50 = arith.mulf %33, %41 : vector<8x32xf32>
      %51 = arith.addf %49, %50 : vector<8x32xf32>
      %52 = math.tanh %51 : vector<8x32xf32>
      %53 = arith.mulf %47, %52 : vector<8x32xf32>
      %c0_17 = arith.constant 0 : index
      %c0_18 = arith.constant 0 : index
      %54 = vector.load %arg6[%c0_17, %c0_18] : memref<8x32xf32, #tpu.memory_space<vmem>>, vector<8x32xf32>
      tpu.vector_store %arg6[%c0_17, %c0_18], %51 {strides = array<i32>} : memref<8x32xf32, #tpu.memory_space<vmem>>, vector<8x32xf32>,
      %c0_19 = arith.constant 0 : index
      %c0_20 = arith.constant 0 : index
      %55 = vector.load %arg5[%c0_19, %c0_20] : memref<8x32xf32, #tpu.memory_space<vmem>>, vector<8x32xf32>
      tpu.vector_store %arg5[%c0_19, %c0_20], %53 {strides = array<i32>} : memref<8x32xf32, #tpu.memory_space<vmem>>, vector<8x32xf32>,
      %56 = arith.truncf %53 : vector<8x32xf32> to vector<8x32xbf16>
      %c0_21 = arith.constant 0 : index
      %57 = arith.index_cast %12 : i32 to index
      %c0_22 = arith.constant 0 : index
      %c0_23 = arith.constant 0 : index
      %58 = vector.load %arg4[%c0_21, %57, %c0_22, %c0_23] : memref<1x16x8x32xbf16, #tpu.memory_space<vmem>>, vector<1x1x8x32xbf16>
      %59 = vector.shape_cast %58 : vector<1x1x8x32xbf16> to vector<8x32xbf16>
      %60 = vector.shape_cast %56 : vector<8x32xbf16> to vector<1x1x8x32xbf16>
      tpu.vector_store %arg4[%c0_21, %57, %c0_22, %c0_23], %60 {strides = array<i32>} : memref<1x16x8x32xbf16, #tpu.memory_space<vmem>>, vector<1x1x8x32xbf16>,
      %c1_i32_24 = arith.constant 1 : i32
      %c15_i32_25 = arith.constant 15 : i32
      %61 = arith.subi %c15_i32_25, %c1_i32_24 : i32
      %c16_i32_26 = arith.constant 16 : i32
      %62 = arith.muli %11, %c16_i32_26 : i32
      %63 = arith.addi %62, %61 : i32
      %c8_i32_27 = arith.constant 8 : i32
      %64 = arith.cmpi slt, %63, %c8_i32_27 : i32
      %65 = arith.extui %64 : i1 to i32
      %66 = arith.sitofp %65 : i32 to f32
      %67 = arith.index_cast %61 : i32 to index
      %c0_28 = arith.constant 0 : index
      %c0_29 = arith.constant 0 : index
      %68 = vector.load %arg2[%67, %c0_28, %c0_29] : memref<16x8x128xbf16, #tpu.memory_space<vmem>>, vector<1x8x128xbf16>
      %69 = vector.shape_cast %68 : vector<1x8x128xbf16> to vector<8x128xbf16>
      %70 = arith.extf %69 : vector<8x128xbf16> to vector<8x128xf32>
      %71 = vector.broadcast %66 : f32 to vector<8x128xf32>
      %72 = arith.mulf %70, %71 : vector<8x128xf32>
      %c0_30 = arith.constant 0 : index
      %c0_31 = arith.constant 0 : index
      %73 = vector.load %arg5[%c0_30, %c0_31] : memref<8x32xf32, #tpu.memory_space<vmem>>, vector<8x32xf32>
      %74 = arith.truncf %73 : vector<8x32xf32> to vector<8x32xbf16>
      %cst_32 = arith.constant dense<0.000000e+00> : vector<8x128xf32>
      %75 = tpu.matmul %74, %4, %cst_32 {dimension_numbers = #tpu.dot_dimension_numbers<[1], [0], [0], [1], [0, 0, 1, 1], [], []>} : vector<8x32xbf16>, vector<32x128xbf16>, vector<8x128xf32> -> vector<8x128xf32>
      %76 = arith.addf %72, %75 : vector<8x128xf32>
      %77 = vector.extract_strided_slice %76 {offsets = [0, 0], sizes = [8, 32], strides = [1, 1]} : vector<8x128xf32> to vector<8x32xf32>
      %78 = arith.negf %77 : vector<8x32xf32>
      %79 = math.exp %78 : vector<8x32xf32>
      %cst_33 = arith.constant 1.000000e+00 : f32
      %80 = vector.broadcast %cst_33 : f32 to vector<8x32xf32>
      %81 = arith.addf %80, %79 : vector<8x32xf32>
      %82 = arith.divf %80, %81 : vector<8x32xf32>
      %83 = vector.extract_strided_slice %76 {offsets = [0, 32], sizes = [8, 32], strides = [1, 1]} : vector<8x128xf32> to vector<8x32xf32>
      %84 = arith.negf %83 : vector<8x32xf32>
      %85 = math.exp %84 : vector<8x32xf32>
      %cst_34 = arith.constant 1.000000e+00 : f32
      %86 = vector.broadcast %cst_34 : f32 to vector<8x32xf32>
      %87 = arith.addf %86, %85 : vector<8x32xf32>
      %88 = arith.divf %86, %87 : vector<8x32xf32>
      %89 = vector.extract_strided_slice %76 {offsets = [0, 64], sizes = [8, 32], strides = [1, 1]} : vector<8x128xf32> to vector<8x32xf32>
      %90 = math.tanh %89 : vector<8x32xf32>
      %91 = vector.extract_strided_slice %76 {offsets = [0, 96], sizes = [8, 32], strides = [1, 1]} : vector<8x128xf32> to vector<8x32xf32>
      %92 = arith.negf %91 : vector<8x32xf32>
      %93 = math.exp %92 : vector<8x32xf32>
      %cst_35 = arith.constant 1.000000e+00 : f32
      %94 = vector.broadcast %cst_35 : f32 to vector<8x32xf32>
      %95 = arith.addf %94, %93 : vector<8x32xf32>
      %96 = arith.divf %94, %95 : vector<8x32xf32>
      %c0_36 = arith.constant 0 : index
      %c0_37 = arith.constant 0 : index
      %97 = vector.load %arg6[%c0_36, %c0_37] : memref<8x32xf32, #tpu.memory_space<vmem>>, vector<8x32xf32>
      %98 = arith.mulf %88, %97 : vector<8x32xf32>
      %99 = arith.mulf %82, %90 : vector<8x32xf32>
      %100 = arith.addf %98, %99 : vector<8x32xf32>
      %101 = math.tanh %100 : vector<8x32xf32>
      %102 = arith.mulf %96, %101 : vector<8x32xf32>
      %c0_38 = arith.constant 0 : index
      %c0_39 = arith.constant 0 : index
      %103 = vector.load %arg6[%c0_38, %c0_39] : memref<8x32xf32, #tpu.memory_space<vmem>>, vector<8x32xf32>
      tpu.vector_store %arg6[%c0_38, %c0_39], %100 {strides = array<i32>} : memref<8x32xf32, #tpu.memory_space<vmem>>, vector<8x32xf32>,
      %c0_40 = arith.constant 0 : index
      %c0_41 = arith.constant 0 : index
      %104 = vector.load %arg5[%c0_40, %c0_41] : memref<8x32xf32, #tpu.memory_space<vmem>>, vector<8x32xf32>
      tpu.vector_store %arg5[%c0_40, %c0_41], %102 {strides = array<i32>} : memref<8x32xf32, #tpu.memory_space<vmem>>, vector<8x32xf32>,
      %105 = arith.truncf %102 : vector<8x32xf32> to vector<8x32xbf16>
      %c0_42 = arith.constant 0 : index
      %106 = arith.index_cast %61 : i32 to index
      %c0_43 = arith.constant 0 : index
      %c0_44 = arith.constant 0 : index
      %107 = vector.load %arg4[%c0_42, %106, %c0_43, %c0_44] : memref<1x16x8x32xbf16, #tpu.memory_space<vmem>>, vector<1x1x8x32xbf16>
      %108 = vector.shape_cast %107 : vector<1x1x8x32xbf16> to vector<8x32xbf16>
      %109 = vector.shape_cast %105 : vector<8x32xbf16> to vector<1x1x8x32xbf16>
      tpu.vector_store %arg4[%c0_42, %106, %c0_43, %c0_44], %109 {strides = array<i32>} : memref<1x16x8x32xbf16, #tpu.memory_space<vmem>>, vector<1x1x8x32xbf16>,
      %c2_i32 = arith.constant 2 : i32
      %c15_i32_45 = arith.constant 15 : i32
      %110 = arith.subi %c15_i32_45, %c2_i32 : i32
      %c16_i32_46 = arith.constant 16 : i32
      %111 = arith.muli %11, %c16_i32_46 : i32
      %112 = arith.addi %111, %110 : i32
      %c8_i32_47 = arith.constant 8 : i32
      %113 = arith.cmpi slt, %112, %c8_i32_47 : i32
      %114 = arith.extui %113 : i1 to i32
      %115 = arith.sitofp %114 : i32 to f32
      %116 = arith.index_cast %110 : i32 to index
      %c0_48 = arith.constant 0 : index
      %c0_49 = arith.constant 0 : index
      %117 = vector.load %arg2[%116, %c0_48, %c0_49] : memref<16x8x128xbf16, #tpu.memory_space<vmem>>, vector<1x8x128xbf16>
      %118 = vector.shape_cast %117 : vector<1x8x128xbf16> to vector<8x128xbf16>
      %119 = arith.extf %118 : vector<8x128xbf16> to vector<8x128xf32>
      %120 = vector.broadcast %115 : f32 to vector<8x128xf32>
      %121 = arith.mulf %119, %120 : vector<8x128xf32>
      %c0_50 = arith.constant 0 : index
      %c0_51 = arith.constant 0 : index
      %122 = vector.load %arg5[%c0_50, %c0_51] : memref<8x32xf32, #tpu.memory_space<vmem>>, vector<8x32xf32>
      %123 = arith.truncf %122 : vector<8x32xf32> to vector<8x32xbf16>
      %cst_52 = arith.constant dense<0.000000e+00> : vector<8x128xf32>
      %124 = tpu.matmul %123, %4, %cst_52 {dimension_numbers = #tpu.dot_dimension_numbers<[1], [0], [0], [1], [0, 0, 1, 1], [], []>} : vector<8x32xbf16>, vector<32x128xbf16>, vector<8x128xf32> -> vector<8x128xf32>
      %125 = arith.addf %121, %124 : vector<8x128xf32>
      %126 = vector.extract_strided_slice %125 {offsets = [0, 0], sizes = [8, 32], strides = [1, 1]} : vector<8x128xf32> to vector<8x32xf32>
      %127 = arith.negf %126 : vector<8x32xf32>
      %128 = math.exp %127 : vector<8x32xf32>
      %cst_53 = arith.constant 1.000000e+00 : f32
      %129 = vector.broadcast %cst_53 : f32 to vector<8x32xf32>
      %130 = arith.addf %129, %128 : vector<8x32xf32>
      %131 = arith.divf %129, %130 : vector<8x32xf32>
      %132 = vector.extract_strided_slice %125 {offsets = [0, 32], sizes = [8, 32], strides = [1, 1]} : vector<8x128xf32> to vector<8x32xf32>
      %133 = arith.negf %132 : vector<8x32xf32>
      %134 = math.exp %133 : vector<8x32xf32>
      %cst_54 = arith.constant 1.000000e+00 : f32
      %135 = vector.broadcast %cst_54 : f32 to vector<8x32xf32>
      %136 = arith.addf %135, %134 : vector<8x32xf32>
      %137 = arith.divf %135, %136 : vector<8x32xf32>
      %138 = vector.extract_strided_slice %125 {offsets = [0, 64], sizes = [8, 32], strides = [1, 1]} : vector<8x128xf32> to vector<8x32xf32>
      %139 = math.tanh %138 : vector<8x32xf32>
      %140 = vector.extract_strided_slice %125 {offsets = [0, 96], sizes = [8, 32], strides = [1, 1]} : vector<8x128xf32> to vector<8x32xf32>
      %141 = arith.negf %140 : vector<8x32xf32>
      %142 = math.exp %141 : vector<8x32xf32>
      %cst_55 = arith.constant 1.000000e+00 : f32
      %143 = vector.broadcast %cst_55 : f32 to vector<8x32xf32>
      %144 = arith.addf %143, %142 : vector<8x32xf32>
      %145 = arith.divf %143, %144 : vector<8x32xf32>
      %c0_56 = arith.constant 0 : index
      %c0_57 = arith.constant 0 : index
      %146 = vector.load %arg6[%c0_56, %c0_57] : memref<8x32xf32, #tpu.memory_space<vmem>>, vector<8x32xf32>
      %147 = arith.mulf %137, %146 : vector<8x32xf32>
      %148 = arith.mulf %131, %139 : vector<8x32xf32>
      %149 = arith.addf %147, %148 : vector<8x32xf32>
      %150 = math.tanh %149 : vector<8x32xf32>
      %151 = arith.mulf %145, %150 : vector<8x32xf32>
      %c0_58 = arith.constant 0 : index
      %c0_59 = arith.constant 0 : index
      %152 = vector.load %arg6[%c0_58, %c0_59] : memref<8x32xf32, #tpu.memory_space<vmem>>, vector<8x32xf32>
      tpu.vector_store %arg6[%c0_58, %c0_59], %149 {strides = array<i32>} : memref<8x32xf32, #tpu.memory_space<vmem>>, vector<8x32xf32>,
      %c0_60 = arith.constant 0 : index
      %c0_61 = arith.constant 0 : index
      %153 = vector.load %arg5[%c0_60, %c0_61] : memref<8x32xf32, #tpu.memory_space<vmem>>, vector<8x32xf32>
      tpu.vector_store %arg5[%c0_60, %c0_61], %151 {strides = array<i32>} : memref<8x32xf32, #tpu.memory_space<vmem>>, vector<8x32xf32>,
      %154 = arith.truncf %151 : vector<8x32xf32> to vector<8x32xbf16>
      %c0_62 = arith.constant 0 : index
      %155 = arith.index_cast %110 : i32 to index
      %c0_63 = arith.constant 0 : index
      %c0_64 = arith.constant 0 : index
      %156 = vector.load %arg4[%c0_62, %155, %c0_63, %c0_64] : memref<1x16x8x32xbf16, #tpu.memory_space<vmem>>, vector<1x1x8x32xbf16>
      %157 = vector.shape_cast %156 : vector<1x1x8x32xbf16> to vector<8x32xbf16>
      %158 = vector.shape_cast %154 : vector<8x32xbf16> to vector<1x1x8x32xbf16>
      tpu.vector_store %arg4[%c0_62, %155, %c0_63, %c0_64], %158 {strides = array<i32>} : memref<1x16x8x32xbf16, #tpu.memory_space<vmem>>, vector<1x1x8x32xbf16>,
      %c3_i32 = arith.constant 3 : i32
      %c15_i32_65 = arith.constant 15 : i32
      %159 = arith.subi %c15_i32_65, %c3_i32 : i32
      %c16_i32_66 = arith.constant 16 : i32
      %160 = arith.muli %11, %c16_i32_66 : i32
      %161 = arith.addi %160, %159 : i32
      %c8_i32_67 = arith.constant 8 : i32
      %162 = arith.cmpi slt, %161, %c8_i32_67 : i32
      %163 = arith.extui %162 : i1 to i32
      %164 = arith.sitofp %163 : i32 to f32
      %165 = arith.index_cast %159 : i32 to index
      %c0_68 = arith.constant 0 : index
      %c0_69 = arith.constant 0 : index
      %166 = vector.load %arg2[%165, %c0_68, %c0_69] : memref<16x8x128xbf16, #tpu.memory_space<vmem>>, vector<1x8x128xbf16>
      %167 = vector.shape_cast %166 : vector<1x8x128xbf16> to vector<8x128xbf16>
      %168 = arith.extf %167 : vector<8x128xbf16> to vector<8x128xf32>
      %169 = vector.broadcast %164 : f32 to vector<8x128xf32>
      %170 = arith.mulf %168, %169 : vector<8x128xf32>
      %c0_70 = arith.constant 0 : index
      %c0_71 = arith.constant 0 : index
      %171 = vector.load %arg5[%c0_70, %c0_71] : memref<8x32xf32, #tpu.memory_space<vmem>>, vector<8x32xf32>
      %172 = arith.truncf %171 : vector<8x32xf32> to vector<8x32xbf16>
      %cst_72 = arith.constant dense<0.000000e+00> : vector<8x128xf32>
      %173 = tpu.matmul %172, %4, %cst_72 {dimension_numbers = #tpu.dot_dimension_numbers<[1], [0], [0], [1], [0, 0, 1, 1], [], []>} : vector<8x32xbf16>, vector<32x128xbf16>, vector<8x128xf32> -> vector<8x128xf32>
      %174 = arith.addf %170, %173 : vector<8x128xf32>
      %175 = vector.extract_strided_slice %174 {offsets = [0, 0], sizes = [8, 32], strides = [1, 1]} : vector<8x128xf32> to vector<8x32xf32>
      %176 = arith.negf %175 : vector<8x32xf32>
      %177 = math.exp %176 : vector<8x32xf32>
      %cst_73 = arith.constant 1.000000e+00 : f32
      %178 = vector.broadcast %cst_73 : f32 to vector<8x32xf32>
      %179 = arith.addf %178, %177 : vector<8x32xf32>
      %180 = arith.divf %178, %179 : vector<8x32xf32>
      %181 = vector.extract_strided_slice %174 {offsets = [0, 32], sizes = [8, 32], strides = [1, 1]} : vector<8x128xf32> to vector<8x32xf32>
      %182 = arith.negf %181 : vector<8x32xf32>
      %183 = math.exp %182 : vector<8x32xf32>
      %cst_74 = arith.constant 1.000000e+00 : f32
      %184 = vector.broadcast %cst_74 : f32 to vector<8x32xf32>
      %185 = arith.addf %184, %183 : vector<8x32xf32>
      %186 = arith.divf %184, %185 : vector<8x32xf32>
      %187 = vector.extract_strided_slice %174 {offsets = [0, 64], sizes = [8, 32], strides = [1, 1]} : vector<8x128xf32> to vector<8x32xf32>
      %188 = math.tanh %187 : vector<8x32xf32>
      %189 = vector.extract_strided_slice %174 {offsets = [0, 96], sizes = [8, 32], strides = [1, 1]} : vector<8x128xf32> to vector<8x32xf32>
      %190 = arith.negf %189 : vector<8x32xf32>
      %191 = math.exp %190 : vector<8x32xf32>
      %cst_75 = arith.constant 1.000000e+00 : f32
      %192 = vector.broadcast %cst_75 : f32 to vector<8x32xf32>
      %193 = arith.addf %192, %191 : vector<8x32xf32>
      %194 = arith.divf %192, %193 : vector<8x32xf32>
      %c0_76 = arith.constant 0 : index
      %c0_77 = arith.constant 0 : index
      %195 = vector.load %arg6[%c0_76, %c0_77] : memref<8x32xf32, #tpu.memory_space<vmem>>, vector<8x32xf32>
      %196 = arith.mulf %186, %195 : vector<8x32xf32>
      %197 = arith.mulf %180, %188 : vector<8x32xf32>
      %198 = arith.addf %196, %197 : vector<8x32xf32>
      %199 = math.tanh %198 : vector<8x32xf32>
      %200 = arith.mulf %194, %199 : vector<8x32xf32>
      %c0_78 = arith.constant 0 : index
      %c0_79 = arith.constant 0 : index
      %201 = vector.load %arg6[%c0_78, %c0_79] : memref<8x32xf32, #tpu.memory_space<vmem>>, vector<8x32xf32>
      tpu.vector_store %arg6[%c0_78, %c0_79], %198 {strides = array<i32>} : memref<8x32xf32, #tpu.memory_space<vmem>>, vector<8x32xf32>,
      %c0_80 = arith.constant 0 : index
      %c0_81 = arith.constant 0 : index
      %202 = vector.load %arg5[%c0_80, %c0_81] : memref<8x32xf32, #tpu.memory_space<vmem>>, vector<8x32xf32>
      tpu.vector_store %arg5[%c0_80, %c0_81], %200 {strides = array<i32>} : memref<8x32xf32, #tpu.memory_space<vmem>>, vector<8x32xf32>,
      %203 = arith.truncf %200 : vector<8x32xf32> to vector<8x32xbf16>
      %c0_82 = arith.constant 0 : index
      %204 = arith.index_cast %159 : i32 to index
      %c0_83 = arith.constant 0 : index
      %c0_84 = arith.constant 0 : index
      %205 = vector.load %arg4[%c0_82, %204, %c0_83, %c0_84] : memref<1x16x8x32xbf16, #tpu.memory_space<vmem>>, vector<1x1x8x32xbf16>
      %206 = vector.shape_cast %205 : vector<1x1x8x32xbf16> to vector<8x32xbf16>
      %207 = vector.shape_cast %203 : vector<8x32xbf16> to vector<1x1x8x32xbf16>
      tpu.vector_store %arg4[%c0_82, %204, %c0_83, %c0_84], %207 {strides = array<i32>} : memref<1x16x8x32xbf16, #tpu.memory_space<vmem>>, vector<1x1x8x32xbf16>,
      %c4_i32 = arith.constant 4 : i32
      %c15_i32_85 = arith.constant 15 : i32
      %208 = arith.subi %c15_i32_85, %c4_i32 : i32
      %c16_i32_86 = arith.constant 16 : i32
      %209 = arith.muli %11, %c16_i32_86 : i32
      %210 = arith.addi %209, %208 : i32
      %c8_i32_87 = arith.constant 8 : i32
      %211 = arith.cmpi slt, %210, %c8_i32_87 : i32
      %212 = arith.extui %211 : i1 to i32
      %213 = arith.sitofp %212 : i32 to f32
      %214 = arith.index_cast %208 : i32 to index
      %c0_88 = arith.constant 0 : index
      %c0_89 = arith.constant 0 : index
      %215 = vector.load %arg2[%214, %c0_88, %c0_89] : memref<16x8x128xbf16, #tpu.memory_space<vmem>>, vector<1x8x128xbf16>
      %216 = vector.shape_cast %215 : vector<1x8x128xbf16> to vector<8x128xbf16>
      %217 = arith.extf %216 : vector<8x128xbf16> to vector<8x128xf32>
      %218 = vector.broadcast %213 : f32 to vector<8x128xf32>
      %219 = arith.mulf %217, %218 : vector<8x128xf32>
      %c0_90 = arith.constant 0 : index
      %c0_91 = arith.constant 0 : index
      %220 = vector.load %arg5[%c0_90, %c0_91] : memref<8x32xf32, #tpu.memory_space<vmem>>, vector<8x32xf32>
      %221 = arith.truncf %220 : vector<8x32xf32> to vector<8x32xbf16>
      %cst_92 = arith.constant dense<0.000000e+00> : vector<8x128xf32>
      %222 = tpu.matmul %221, %4, %cst_92 {dimension_numbers = #tpu.dot_dimension_numbers<[1], [0], [0], [1], [0, 0, 1, 1], [], []>} : vector<8x32xbf16>, vector<32x128xbf16>, vector<8x128xf32> -> vector<8x128xf32>
      %223 = arith.addf %219, %222 : vector<8x128xf32>
      %224 = vector.extract_strided_slice %223 {offsets = [0, 0], sizes = [8, 32], strides = [1, 1]} : vector<8x128xf32> to vector<8x32xf32>
      %225 = arith.negf %224 : vector<8x32xf32>
      %226 = math.exp %225 : vector<8x32xf32>
      %cst_93 = arith.constant 1.000000e+00 : f32
      %227 = vector.broadcast %cst_93 : f32 to vector<8x32xf32>
      %228 = arith.addf %227, %226 : vector<8x32xf32>
      %229 = arith.divf %227, %228 : vector<8x32xf32>
      %230 = vector.extract_strided_slice %223 {offsets = [0, 32], sizes = [8, 32], strides = [1, 1]} : vector<8x128xf32> to vector<8x32xf32>
      %231 = arith.negf %230 : vector<8x32xf32>
      %232 = math.exp %231 : vector<8x32xf32>
      %cst_94 = arith.constant 1.000000e+00 : f32
      %233 = vector.broadcast %cst_94 : f32 to vector<8x32xf32>
      %234 = arith.addf %233, %232 : vector<8x32xf32>
      %235 = arith.divf %233, %234 : vector<8x32xf32>
      %236 = vector.extract_strided_slice %223 {offsets = [0, 64], sizes = [8, 32], strides = [1, 1]} : vector<8x128xf32> to vector<8x32xf32>
      %237 = math.tanh %236 : vector<8x32xf32>
      %238 = vector.extract_strided_slice %223 {offsets = [0, 96], sizes = [8, 32], strides = [1, 1]} : vector<8x128xf32> to vector<8x32xf32>
      %239 = arith.negf %238 : vector<8x32xf32>
      %240 = math.exp %239 : vector<8x32xf32>
      %cst_95 = arith.constant 1.000000e+00 : f32
      %241 = vector.broadcast %cst_95 : f32 to vector<8x32xf32>
      %242 = arith.addf %241, %240 : vector<8x32xf32>
      %243 = arith.divf %241, %242 : vector<8x32xf32>
      %c0_96 = arith.constant 0 : index
      %c0_97 = arith.constant 0 : index
      %244 = vector.load %arg6[%c0_96, %c0_97] : memref<8x32xf32, #tpu.memory_space<vmem>>, vector<8x32xf32>
      %245 = arith.mulf %235, %244 : vector<8x32xf32>
      %246 = arith.mulf %229, %237 : vector<8x32xf32>
      %247 = arith.addf %245, %246 : vector<8x32xf32>
      %248 = math.tanh %247 : vector<8x32xf32>
      %249 = arith.mulf %243, %248 : vector<8x32xf32>
      %c0_98 = arith.constant 0 : index
      %c0_99 = arith.constant 0 : index
      %250 = vector.load %arg6[%c0_98, %c0_99] : memref<8x32xf32, #tpu.memory_space<vmem>>, vector<8x32xf32>
      tpu.vector_store %arg6[%c0_98, %c0_99], %247 {strides = array<i32>} : memref<8x32xf32, #tpu.memory_space<vmem>>, vector<8x32xf32>,
      %c0_100 = arith.constant 0 : index
      %c0_101 = arith.constant 0 : index
      %251 = vector.load %arg5[%c0_100, %c0_101] : memref<8x32xf32, #tpu.memory_space<vmem>>, vector<8x32xf32>
      tpu.vector_store %arg5[%c0_100, %c0_101], %249 {strides = array<i32>} : memref<8x32xf32, #tpu.memory_space<vmem>>, vector<8x32xf32>,
      %252 = arith.truncf %249 : vector<8x32xf32> to vector<8x32xbf16>
      %c0_102 = arith.constant 0 : index
      %253 = arith.index_cast %208 : i32 to index
      %c0_103 = arith.constant 0 : index
      %c0_104 = arith.constant 0 : index
      %254 = vector.load %arg4[%c0_102, %253, %c0_103, %c0_104] : memref<1x16x8x32xbf16, #tpu.memory_space<vmem>>, vector<1x1x8x32xbf16>
      %255 = vector.shape_cast %254 : vector<1x1x8x32xbf16> to vector<8x32xbf16>
      %256 = vector.shape_cast %252 : vector<8x32xbf16> to vector<1x1x8x32xbf16>
      tpu.vector_store %arg4[%c0_102, %253, %c0_103, %c0_104], %256 {strides = array<i32>} : memref<1x16x8x32xbf16, #tpu.memory_space<vmem>>, vector<1x1x8x32xbf16>,
      %c5_i32 = arith.constant 5 : i32
      %c15_i32_105 = arith.constant 15 : i32
      %257 = arith.subi %c15_i32_105, %c5_i32 : i32
      %c16_i32_106 = arith.constant 16 : i32
      %258 = arith.muli %11, %c16_i32_106 : i32
      %259 = arith.addi %258, %257 : i32
      %c8_i32_107 = arith.constant 8 : i32
      %260 = arith.cmpi slt, %259, %c8_i32_107 : i32
      %261 = arith.extui %260 : i1 to i32
      %262 = arith.sitofp %261 : i32 to f32
      %263 = arith.index_cast %257 : i32 to index
      %c0_108 = arith.constant 0 : index
      %c0_109 = arith.constant 0 : index
      %264 = vector.load %arg2[%263, %c0_108, %c0_109] : memref<16x8x128xbf16, #tpu.memory_space<vmem>>, vector<1x8x128xbf16>
      %265 = vector.shape_cast %264 : vector<1x8x128xbf16> to vector<8x128xbf16>
      %266 = arith.extf %265 : vector<8x128xbf16> to vector<8x128xf32>
      %267 = vector.broadcast %262 : f32 to vector<8x128xf32>
      %268 = arith.mulf %266, %267 : vector<8x128xf32>
      %c0_110 = arith.constant 0 : index
      %c0_111 = arith.constant 0 : index
      %269 = vector.load %arg5[%c0_110, %c0_111] : memref<8x32xf32, #tpu.memory_space<vmem>>, vector<8x32xf32>
      %270 = arith.truncf %269 : vector<8x32xf32> to vector<8x32xbf16>
      %cst_112 = arith.constant dense<0.000000e+00> : vector<8x128xf32>
      %271 = tpu.matmul %270, %4, %cst_112 {dimension_numbers = #tpu.dot_dimension_numbers<[1], [0], [0], [1], [0, 0, 1, 1], [], []>} : vector<8x32xbf16>, vector<32x128xbf16>, vector<8x128xf32> -> vector<8x128xf32>
      %272 = arith.addf %268, %271 : vector<8x128xf32>
      %273 = vector.extract_strided_slice %272 {offsets = [0, 0], sizes = [8, 32], strides = [1, 1]} : vector<8x128xf32> to vector<8x32xf32>
      %274 = arith.negf %273 : vector<8x32xf32>
      %275 = math.exp %274 : vector<8x32xf32>
      %cst_113 = arith.constant 1.000000e+00 : f32
      %276 = vector.broadcast %cst_113 : f32 to vector<8x32xf32>
      %277 = arith.addf %276, %275 : vector<8x32xf32>
      %278 = arith.divf %276, %277 : vector<8x32xf32>
      %279 = vector.extract_strided_slice %272 {offsets = [0, 32], sizes = [8, 32], strides = [1, 1]} : vector<8x128xf32> to vector<8x32xf32>
      %280 = arith.negf %279 : vector<8x32xf32>
      %281 = math.exp %280 : vector<8x32xf32>
      %cst_114 = arith.constant 1.000000e+00 : f32
      %282 = vector.broadcast %cst_114 : f32 to vector<8x32xf32>
      %283 = arith.addf %282, %281 : vector<8x32xf32>
      %284 = arith.divf %282, %283 : vector<8x32xf32>
      %285 = vector.extract_strided_slice %272 {offsets = [0, 64], sizes = [8, 32], strides = [1, 1]} : vector<8x128xf32> to vector<8x32xf32>
      %286 = math.tanh %285 : vector<8x32xf32>
      %287 = vector.extract_strided_slice %272 {offsets = [0, 96], sizes = [8, 32], strides = [1, 1]} : vector<8x128xf32> to vector<8x32xf32>
      %288 = arith.negf %287 : vector<8x32xf32>
      %289 = math.exp %288 : vector<8x32xf32>
      %cst_115 = arith.constant 1.000000e+00 : f32
      %290 = vector.broadcast %cst_115 : f32 to vector<8x32xf32>
      %291 = arith.addf %290, %289 : vector<8x32xf32>
      %292 = arith.divf %290, %291 : vector<8x32xf32>
      %c0_116 = arith.constant 0 : index
      %c0_117 = arith.constant 0 : index
      %293 = vector.load %arg6[%c0_116, %c0_117] : memref<8x32xf32, #tpu.memory_space<vmem>>, vector<8x32xf32>
      %294 = arith.mulf %284, %293 : vector<8x32xf32>
      %295 = arith.mulf %278, %286 : vector<8x32xf32>
      %296 = arith.addf %294, %295 : vector<8x32xf32>
      %297 = math.tanh %296 : vector<8x32xf32>
      %298 = arith.mulf %292, %297 : vector<8x32xf32>
      %c0_118 = arith.constant 0 : index
      %c0_119 = arith.constant 0 : index
      %299 = vector.load %arg6[%c0_118, %c0_119] : memref<8x32xf32, #tpu.memory_space<vmem>>, vector<8x32xf32>
      tpu.vector_store %arg6[%c0_118, %c0_119], %296 {strides = array<i32>} : memref<8x32xf32, #tpu.memory_space<vmem>>, vector<8x32xf32>,
      %c0_120 = arith.constant 0 : index
      %c0_121 = arith.constant 0 : index
      %300 = vector.load %arg5[%c0_120, %c0_121] : memref<8x32xf32, #tpu.memory_space<vmem>>, vector<8x32xf32>
      tpu.vector_store %arg5[%c0_120, %c0_121], %298 {strides = array<i32>} : memref<8x32xf32, #tpu.memory_space<vmem>>, vector<8x32xf32>,
      %301 = arith.truncf %298 : vector<8x32xf32> to vector<8x32xbf16>
      %c0_122 = arith.constant 0 : index
      %302 = arith.index_cast %257 : i32 to index
      %c0_123 = arith.constant 0 : index
      %c0_124 = arith.constant 0 : index
      %303 = vector.load %arg4[%c0_122, %302, %c0_123, %c0_124] : memref<1x16x8x32xbf16, #tpu.memory_space<vmem>>, vector<1x1x8x32xbf16>
      %304 = vector.shape_cast %303 : vector<1x1x8x32xbf16> to vector<8x32xbf16>
      %305 = vector.shape_cast %301 : vector<8x32xbf16> to vector<1x1x8x32xbf16>
      tpu.vector_store %arg4[%c0_122, %302, %c0_123, %c0_124], %305 {strides = array<i32>} : memref<1x16x8x32xbf16, #tpu.memory_space<vmem>>, vector<1x1x8x32xbf16>,
      %c6_i32 = arith.constant 6 : i32
      %c15_i32_125 = arith.constant 15 : i32
      %306 = arith.subi %c15_i32_125, %c6_i32 : i32
      %c16_i32_126 = arith.constant 16 : i32
      %307 = arith.muli %11, %c16_i32_126 : i32
      %308 = arith.addi %307, %306 : i32
      %c8_i32_127 = arith.constant 8 : i32
      %309 = arith.cmpi slt, %308, %c8_i32_127 : i32
      %310 = arith.extui %309 : i1 to i32
      %311 = arith.sitofp %310 : i32 to f32
      %312 = arith.index_cast %306 : i32 to index
      %c0_128 = arith.constant 0 : index
      %c0_129 = arith.constant 0 : index
      %313 = vector.load %arg2[%312, %c0_128, %c0_129] : memref<16x8x128xbf16, #tpu.memory_space<vmem>>, vector<1x8x128xbf16>
      %314 = vector.shape_cast %313 : vector<1x8x128xbf16> to vector<8x128xbf16>
      %315 = arith.extf %314 : vector<8x128xbf16> to vector<8x128xf32>
      %316 = vector.broadcast %311 : f32 to vector<8x128xf32>
      %317 = arith.mulf %315, %316 : vector<8x128xf32>
      %c0_130 = arith.constant 0 : index
      %c0_131 = arith.constant 0 : index
      %318 = vector.load %arg5[%c0_130, %c0_131] : memref<8x32xf32, #tpu.memory_space<vmem>>, vector<8x32xf32>
      %319 = arith.truncf %318 : vector<8x32xf32> to vector<8x32xbf16>
      %cst_132 = arith.constant dense<0.000000e+00> : vector<8x128xf32>
      %320 = tpu.matmul %319, %4, %cst_132 {dimension_numbers = #tpu.dot_dimension_numbers<[1], [0], [0], [1], [0, 0, 1, 1], [], []>} : vector<8x32xbf16>, vector<32x128xbf16>, vector<8x128xf32> -> vector<8x128xf32>
      %321 = arith.addf %317, %320 : vector<8x128xf32>
      %322 = vector.extract_strided_slice %321 {offsets = [0, 0], sizes = [8, 32], strides = [1, 1]} : vector<8x128xf32> to vector<8x32xf32>
      %323 = arith.negf %322 : vector<8x32xf32>
      %324 = math.exp %323 : vector<8x32xf32>
      %cst_133 = arith.constant 1.000000e+00 : f32
      %325 = vector.broadcast %cst_133 : f32 to vector<8x32xf32>
      %326 = arith.addf %325, %324 : vector<8x32xf32>
      %327 = arith.divf %325, %326 : vector<8x32xf32>
      %328 = vector.extract_strided_slice %321 {offsets = [0, 32], sizes = [8, 32], strides = [1, 1]} : vector<8x128xf32> to vector<8x32xf32>
      %329 = arith.negf %328 : vector<8x32xf32>
      %330 = math.exp %329 : vector<8x32xf32>
      %cst_134 = arith.constant 1.000000e+00 : f32
      %331 = vector.broadcast %cst_134 : f32 to vector<8x32xf32>
      %332 = arith.addf %331, %330 : vector<8x32xf32>
      %333 = arith.divf %331, %332 : vector<8x32xf32>
      %334 = vector.extract_strided_slice %321 {offsets = [0, 64], sizes = [8, 32], strides = [1, 1]} : vector<8x128xf32> to vector<8x32xf32>
      %335 = math.tanh %334 : vector<8x32xf32>
      %336 = vector.extract_strided_slice %321 {offsets = [0, 96], sizes = [8, 32], strides = [1, 1]} : vector<8x128xf32> to vector<8x32xf32>
      %337 = arith.negf %336 : vector<8x32xf32>
      %338 = math.exp %337 : vector<8x32xf32>
      %cst_135 = arith.constant 1.000000e+00 : f32
      %339 = vector.broadcast %cst_135 : f32 to vector<8x32xf32>
      %340 = arith.addf %339, %338 : vector<8x32xf32>
      %341 = arith.divf %339, %340 : vector<8x32xf32>
      %c0_136 = arith.constant 0 : index
      %c0_137 = arith.constant 0 : index
      %342 = vector.load %arg6[%c0_136, %c0_137] : memref<8x32xf32, #tpu.memory_space<vmem>>, vector<8x32xf32>
      %343 = arith.mulf %333, %342 : vector<8x32xf32>
      %344 = arith.mulf %327, %335 : vector<8x32xf32>
      %345 = arith.addf %343, %344 : vector<8x32xf32>
      %346 = math.tanh %345 : vector<8x32xf32>
      %347 = arith.mulf %341, %346 : vector<8x32xf32>
      %c0_138 = arith.constant 0 : index
      %c0_139 = arith.constant 0 : index
      %348 = vector.load %arg6[%c0_138, %c0_139] : memref<8x32xf32, #tpu.memory_space<vmem>>, vector<8x32xf32>
      tpu.vector_store %arg6[%c0_138, %c0_139], %345 {strides = array<i32>} : memref<8x32xf32, #tpu.memory_space<vmem>>, vector<8x32xf32>,
      %c0_140 = arith.constant 0 : index
      %c0_141 = arith.constant 0 : index
      %349 = vector.load %arg5[%c0_140, %c0_141] : memref<8x32xf32, #tpu.memory_space<vmem>>, vector<8x32xf32>
      tpu.vector_store %arg5[%c0_140, %c0_141], %347 {strides = array<i32>} : memref<8x32xf32, #tpu.memory_space<vmem>>, vector<8x32xf32>,
      %350 = arith.truncf %347 : vector<8x32xf32> to vector<8x32xbf16>
      %c0_142 = arith.constant 0 : index
      %351 = arith.index_cast %306 : i32 to index
      %c0_143 = arith.constant 0 : index
      %c0_144 = arith.constant 0 : index
      %352 = vector.load %arg4[%c0_142, %351, %c0_143, %c0_144] : memref<1x16x8x32xbf16, #tpu.memory_space<vmem>>, vector<1x1x8x32xbf16>
      %353 = vector.shape_cast %352 : vector<1x1x8x32xbf16> to vector<8x32xbf16>
      %354 = vector.shape_cast %350 : vector<8x32xbf16> to vector<1x1x8x32xbf16>
      tpu.vector_store %arg4[%c0_142, %351, %c0_143, %c0_144], %354 {strides = array<i32>} : memref<1x16x8x32xbf16, #tpu.memory_space<vmem>>, vector<1x1x8x32xbf16>,
      %c7_i32 = arith.constant 7 : i32
      %c15_i32_145 = arith.constant 15 : i32
      %355 = arith.subi %c15_i32_145, %c7_i32 : i32
      %c16_i32_146 = arith.constant 16 : i32
      %356 = arith.muli %11, %c16_i32_146 : i32
      %357 = arith.addi %356, %355 : i32
      %c8_i32_147 = arith.constant 8 : i32
      %358 = arith.cmpi slt, %357, %c8_i32_147 : i32
      %359 = arith.extui %358 : i1 to i32
      %360 = arith.sitofp %359 : i32 to f32
      %361 = arith.index_cast %355 : i32 to index
      %c0_148 = arith.constant 0 : index
      %c0_149 = arith.constant 0 : index
      %362 = vector.load %arg2[%361, %c0_148, %c0_149] : memref<16x8x128xbf16, #tpu.memory_space<vmem>>, vector<1x8x128xbf16>
      %363 = vector.shape_cast %362 : vector<1x8x128xbf16> to vector<8x128xbf16>
      %364 = arith.extf %363 : vector<8x128xbf16> to vector<8x128xf32>
      %365 = vector.broadcast %360 : f32 to vector<8x128xf32>
      %366 = arith.mulf %364, %365 : vector<8x128xf32>
      %c0_150 = arith.constant 0 : index
      %c0_151 = arith.constant 0 : index
      %367 = vector.load %arg5[%c0_150, %c0_151] : memref<8x32xf32, #tpu.memory_space<vmem>>, vector<8x32xf32>
      %368 = arith.truncf %367 : vector<8x32xf32> to vector<8x32xbf16>
      %cst_152 = arith.constant dense<0.000000e+00> : vector<8x128xf32>
      %369 = tpu.matmul %368, %4, %cst_152 {dimension_numbers = #tpu.dot_dimension_numbers<[1], [0], [0], [1], [0, 0, 1, 1], [], []>} : vector<8x32xbf16>, vector<32x128xbf16>, vector<8x128xf32> -> vector<8x128xf32>
      %370 = arith.addf %366, %369 : vector<8x128xf32>
      %371 = vector.extract_strided_slice %370 {offsets = [0, 0], sizes = [8, 32], strides = [1, 1]} : vector<8x128xf32> to vector<8x32xf32>
      %372 = arith.negf %371 : vector<8x32xf32>
      %373 = math.exp %372 : vector<8x32xf32>
      %cst_153 = arith.constant 1.000000e+00 : f32
      %374 = vector.broadcast %cst_153 : f32 to vector<8x32xf32>
      %375 = arith.addf %374, %373 : vector<8x32xf32>
      %376 = arith.divf %374, %375 : vector<8x32xf32>
      %377 = vector.extract_strided_slice %370 {offsets = [0, 32], sizes = [8, 32], strides = [1, 1]} : vector<8x128xf32> to vector<8x32xf32>
      %378 = arith.negf %377 : vector<8x32xf32>
      %379 = math.exp %378 : vector<8x32xf32>
      %cst_154 = arith.constant 1.000000e+00 : f32
      %380 = vector.broadcast %cst_154 : f32 to vector<8x32xf32>
      %381 = arith.addf %380, %379 : vector<8x32xf32>
      %382 = arith.divf %380, %381 : vector<8x32xf32>
      %383 = vector.extract_strided_slice %370 {offsets = [0, 64], sizes = [8, 32], strides = [1, 1]} : vector<8x128xf32> to vector<8x32xf32>
      %384 = math.tanh %383 : vector<8x32xf32>
      %385 = vector.extract_strided_slice %370 {offsets = [0, 96], sizes = [8, 32], strides = [1, 1]} : vector<8x128xf32> to vector<8x32xf32>
      %386 = arith.negf %385 : vector<8x32xf32>
      %387 = math.exp %386 : vector<8x32xf32>
      %cst_155 = arith.constant 1.000000e+00 : f32
      %388 = vector.broadcast %cst_155 : f32 to vector<8x32xf32>
      %389 = arith.addf %388, %387 : vector<8x32xf32>
      %390 = arith.divf %388, %389 : vector<8x32xf32>
      %c0_156 = arith.constant 0 : index
      %c0_157 = arith.constant 0 : index
      %391 = vector.load %arg6[%c0_156, %c0_157] : memref<8x32xf32, #tpu.memory_space<vmem>>, vector<8x32xf32>
      %392 = arith.mulf %382, %391 : vector<8x32xf32>
      %393 = arith.mulf %376, %384 : vector<8x32xf32>
      %394 = arith.addf %392, %393 : vector<8x32xf32>
      %395 = math.tanh %394 : vector<8x32xf32>
      %396 = arith.mulf %390, %395 : vector<8x32xf32>
      %c0_158 = arith.constant 0 : index
      %c0_159 = arith.constant 0 : index
      %397 = vector.load %arg6[%c0_158, %c0_159] : memref<8x32xf32, #tpu.memory_space<vmem>>, vector<8x32xf32>
      tpu.vector_store %arg6[%c0_158, %c0_159], %394 {strides = array<i32>} : memref<8x32xf32, #tpu.memory_space<vmem>>, vector<8x32xf32>,
      %c0_160 = arith.constant 0 : index
      %c0_161 = arith.constant 0 : index
      %398 = vector.load %arg5[%c0_160, %c0_161] : memref<8x32xf32, #tpu.memory_space<vmem>>, vector<8x32xf32>
      tpu.vector_store %arg5[%c0_160, %c0_161], %396 {strides = array<i32>} : memref<8x32xf32, #tpu.memory_space<vmem>>, vector<8x32xf32>,
      %399 = arith.truncf %396 : vector<8x32xf32> to vector<8x32xbf16>
      %c0_162 = arith.constant 0 : index
      %400 = arith.index_cast %355 : i32 to index
      %c0_163 = arith.constant 0 : index
      %c0_164 = arith.constant 0 : index
      %401 = vector.load %arg4[%c0_162, %400, %c0_163, %c0_164] : memref<1x16x8x32xbf16, #tpu.memory_space<vmem>>, vector<1x1x8x32xbf16>
      %402 = vector.shape_cast %401 : vector<1x1x8x32xbf16> to vector<8x32xbf16>
      %403 = vector.shape_cast %399 : vector<8x32xbf16> to vector<1x1x8x32xbf16>
      tpu.vector_store %arg4[%c0_162, %400, %c0_163, %c0_164], %403 {strides = array<i32>} : memref<1x16x8x32xbf16, #tpu.memory_space<vmem>>, vector<1x1x8x32xbf16>,
      %c8_i32_165 = arith.constant 8 : i32
      %c15_i32_166 = arith.constant 15 : i32
      %404 = arith.subi %c15_i32_166, %c8_i32_165 : i32
      %c16_i32_167 = arith.constant 16 : i32
      %405 = arith.muli %11, %c16_i32_167 : i32
      %406 = arith.addi %405, %404 : i32
      %c8_i32_168 = arith.constant 8 : i32
      %407 = arith.cmpi slt, %406, %c8_i32_168 : i32
      %408 = arith.extui %407 : i1 to i32
      %409 = arith.sitofp %408 : i32 to f32
      %410 = arith.index_cast %404 : i32 to index
      %c0_169 = arith.constant 0 : index
      %c0_170 = arith.constant 0 : index
      %411 = vector.load %arg2[%410, %c0_169, %c0_170] : memref<16x8x128xbf16, #tpu.memory_space<vmem>>, vector<1x8x128xbf16>
      %412 = vector.shape_cast %411 : vector<1x8x128xbf16> to vector<8x128xbf16>
      %413 = arith.extf %412 : vector<8x128xbf16> to vector<8x128xf32>
      %414 = vector.broadcast %409 : f32 to vector<8x128xf32>
      %415 = arith.mulf %413, %414 : vector<8x128xf32>
      %c0_171 = arith.constant 0 : index
      %c0_172 = arith.constant 0 : index
      %416 = vector.load %arg5[%c0_171, %c0_172] : memref<8x32xf32, #tpu.memory_space<vmem>>, vector<8x32xf32>
      %417 = arith.truncf %416 : vector<8x32xf32> to vector<8x32xbf16>
      %cst_173 = arith.constant dense<0.000000e+00> : vector<8x128xf32>
      %418 = tpu.matmul %417, %4, %cst_173 {dimension_numbers = #tpu.dot_dimension_numbers<[1], [0], [0], [1], [0, 0, 1, 1], [], []>} : vector<8x32xbf16>, vector<32x128xbf16>, vector<8x128xf32> -> vector<8x128xf32>
      %419 = arith.addf %415, %418 : vector<8x128xf32>
      %420 = vector.extract_strided_slice %419 {offsets = [0, 0], sizes = [8, 32], strides = [1, 1]} : vector<8x128xf32> to vector<8x32xf32>
      %421 = arith.negf %420 : vector<8x32xf32>
      %422 = math.exp %421 : vector<8x32xf32>
      %cst_174 = arith.constant 1.000000e+00 : f32
      %423 = vector.broadcast %cst_174 : f32 to vector<8x32xf32>
      %424 = arith.addf %423, %422 : vector<8x32xf32>
      %425 = arith.divf %423, %424 : vector<8x32xf32>
      %426 = vector.extract_strided_slice %419 {offsets = [0, 32], sizes = [8, 32], strides = [1, 1]} : vector<8x128xf32> to vector<8x32xf32>
      %427 = arith.negf %426 : vector<8x32xf32>
      %428 = math.exp %427 : vector<8x32xf32>
      %cst_175 = arith.constant 1.000000e+00 : f32
      %429 = vector.broadcast %cst_175 : f32 to vector<8x32xf32>
      %430 = arith.addf %429, %428 : vector<8x32xf32>
      %431 = arith.divf %429, %430 : vector<8x32xf32>
      %432 = vector.extract_strided_slice %419 {offsets = [0, 64], sizes = [8, 32], strides = [1, 1]} : vector<8x128xf32> to vector<8x32xf32>
      %433 = math.tanh %432 : vector<8x32xf32>
      %434 = vector.extract_strided_slice %419 {offsets = [0, 96], sizes = [8, 32], strides = [1, 1]} : vector<8x128xf32> to vector<8x32xf32>
      %435 = arith.negf %434 : vector<8x32xf32>
      %436 = math.exp %435 : vector<8x32xf32>
      %cst_176 = arith.constant 1.000000e+00 : f32
      %437 = vector.broadcast %cst_176 : f32 to vector<8x32xf32>
      %438 = arith.addf %437, %436 : vector<8x32xf32>
      %439 = arith.divf %437, %438 : vector<8x32xf32>
      %c0_177 = arith.constant 0 : index
      %c0_178 = arith.constant 0 : index
      %440 = vector.load %arg6[%c0_177, %c0_178] : memref<8x32xf32, #tpu.memory_space<vmem>>, vector<8x32xf32>
      %441 = arith.mulf %431, %440 : vector<8x32xf32>
      %442 = arith.mulf %425, %433 : vector<8x32xf32>
      %443 = arith.addf %441, %442 : vector<8x32xf32>
      %444 = math.tanh %443 : vector<8x32xf32>
      %445 = arith.mulf %439, %444 : vector<8x32xf32>
      %c0_179 = arith.constant 0 : index
      %c0_180 = arith.constant 0 : index
      %446 = vector.load %arg6[%c0_179, %c0_180] : memref<8x32xf32, #tpu.memory_space<vmem>>, vector<8x32xf32>
      tpu.vector_store %arg6[%c0_179, %c0_180], %443 {strides = array<i32>} : memref<8x32xf32, #tpu.memory_space<vmem>>, vector<8x32xf32>,
      %c0_181 = arith.constant 0 : index
      %c0_182 = arith.constant 0 : index
      %447 = vector.load %arg5[%c0_181, %c0_182] : memref<8x32xf32, #tpu.memory_space<vmem>>, vector<8x32xf32>
      tpu.vector_store %arg5[%c0_181, %c0_182], %445 {strides = array<i32>} : memref<8x32xf32, #tpu.memory_space<vmem>>, vector<8x32xf32>,
      %448 = arith.truncf %445 : vector<8x32xf32> to vector<8x32xbf16>
      %c0_183 = arith.constant 0 : index
      %449 = arith.index_cast %404 : i32 to index
      %c0_184 = arith.constant 0 : index
      %c0_185 = arith.constant 0 : index
      %450 = vector.load %arg4[%c0_183, %449, %c0_184, %c0_185] : memref<1x16x8x32xbf16, #tpu.memory_space<vmem>>, vector<1x1x8x32xbf16>
      %451 = vector.shape_cast %450 : vector<1x1x8x32xbf16> to vector<8x32xbf16>
      %452 = vector.shape_cast %448 : vector<8x32xbf16> to vector<1x1x8x32xbf16>
      tpu.vector_store %arg4[%c0_183, %449, %c0_184, %c0_185], %452 {strides = array<i32>} : memref<1x16x8x32xbf16, #tpu.memory_space<vmem>>, vector<1x1x8x32xbf16>,
      %c9_i32 = arith.constant 9 : i32
      %c15_i32_186 = arith.constant 15 : i32
      %453 = arith.subi %c15_i32_186, %c9_i32 : i32
      %c16_i32_187 = arith.constant 16 : i32
      %454 = arith.muli %11, %c16_i32_187 : i32
      %455 = arith.addi %454, %453 : i32
      %c8_i32_188 = arith.constant 8 : i32
      %456 = arith.cmpi slt, %455, %c8_i32_188 : i32
      %457 = arith.extui %456 : i1 to i32
      %458 = arith.sitofp %457 : i32 to f32
      %459 = arith.index_cast %453 : i32 to index
      %c0_189 = arith.constant 0 : index
      %c0_190 = arith.constant 0 : index
      %460 = vector.load %arg2[%459, %c0_189, %c0_190] : memref<16x8x128xbf16, #tpu.memory_space<vmem>>, vector<1x8x128xbf16>
      %461 = vector.shape_cast %460 : vector<1x8x128xbf16> to vector<8x128xbf16>
      %462 = arith.extf %461 : vector<8x128xbf16> to vector<8x128xf32>
      %463 = vector.broadcast %458 : f32 to vector<8x128xf32>
      %464 = arith.mulf %462, %463 : vector<8x128xf32>
      %c0_191 = arith.constant 0 : index
      %c0_192 = arith.constant 0 : index
      %465 = vector.load %arg5[%c0_191, %c0_192] : memref<8x32xf32, #tpu.memory_space<vmem>>, vector<8x32xf32>
      %466 = arith.truncf %465 : vector<8x32xf32> to vector<8x32xbf16>
      %cst_193 = arith.constant dense<0.000000e+00> : vector<8x128xf32>
      %467 = tpu.matmul %466, %4, %cst_193 {dimension_numbers = #tpu.dot_dimension_numbers<[1], [0], [0], [1], [0, 0, 1, 1], [], []>} : vector<8x32xbf16>, vector<32x128xbf16>, vector<8x128xf32> -> vector<8x128xf32>
      %468 = arith.addf %464, %467 : vector<8x128xf32>
      %469 = vector.extract_strided_slice %468 {offsets = [0, 0], sizes = [8, 32], strides = [1, 1]} : vector<8x128xf32> to vector<8x32xf32>
      %470 = arith.negf %469 : vector<8x32xf32>
      %471 = math.exp %470 : vector<8x32xf32>
      %cst_194 = arith.constant 1.000000e+00 : f32
      %472 = vector.broadcast %cst_194 : f32 to vector<8x32xf32>
      %473 = arith.addf %472, %471 : vector<8x32xf32>
      %474 = arith.divf %472, %473 : vector<8x32xf32>
      %475 = vector.extract_strided_slice %468 {offsets = [0, 32], sizes = [8, 32], strides = [1, 1]} : vector<8x128xf32> to vector<8x32xf32>
      %476 = arith.negf %475 : vector<8x32xf32>
      %477 = math.exp %476 : vector<8x32xf32>
      %cst_195 = arith.constant 1.000000e+00 : f32
      %478 = vector.broadcast %cst_195 : f32 to vector<8x32xf32>
      %479 = arith.addf %478, %477 : vector<8x32xf32>
      %480 = arith.divf %478, %479 : vector<8x32xf32>
      %481 = vector.extract_strided_slice %468 {offsets = [0, 64], sizes = [8, 32], strides = [1, 1]} : vector<8x128xf32> to vector<8x32xf32>
      %482 = math.tanh %481 : vector<8x32xf32>
      %483 = vector.extract_strided_slice %468 {offsets = [0, 96], sizes = [8, 32], strides = [1, 1]} : vector<8x128xf32> to vector<8x32xf32>
      %484 = arith.negf %483 : vector<8x32xf32>
      %485 = math.exp %484 : vector<8x32xf32>
      %cst_196 = arith.constant 1.000000e+00 : f32
      %486 = vector.broadcast %cst_196 : f32 to vector<8x32xf32>
      %487 = arith.addf %486, %485 : vector<8x32xf32>
      %488 = arith.divf %486, %487 : vector<8x32xf32>
      %c0_197 = arith.constant 0 : index
      %c0_198 = arith.constant 0 : index
      %489 = vector.load %arg6[%c0_197, %c0_198] : memref<8x32xf32, #tpu.memory_space<vmem>>, vector<8x32xf32>
      %490 = arith.mulf %480, %489 : vector<8x32xf32>
      %491 = arith.mulf %474, %482 : vector<8x32xf32>
      %492 = arith.addf %490, %491 : vector<8x32xf32>
      %493 = math.tanh %492 : vector<8x32xf32>
      %494 = arith.mulf %488, %493 : vector<8x32xf32>
      %c0_199 = arith.constant 0 : index
      %c0_200 = arith.constant 0 : index
      %495 = vector.load %arg6[%c0_199, %c0_200] : memref<8x32xf32, #tpu.memory_space<vmem>>, vector<8x32xf32>
      tpu.vector_store %arg6[%c0_199, %c0_200], %492 {strides = array<i32>} : memref<8x32xf32, #tpu.memory_space<vmem>>, vector<8x32xf32>,
      %c0_201 = arith.constant 0 : index
      %c0_202 = arith.constant 0 : index
      %496 = vector.load %arg5[%c0_201, %c0_202] : memref<8x32xf32, #tpu.memory_space<vmem>>, vector<8x32xf32>
      tpu.vector_store %arg5[%c0_201, %c0_202], %494 {strides = array<i32>} : memref<8x32xf32, #tpu.memory_space<vmem>>, vector<8x32xf32>,
      %497 = arith.truncf %494 : vector<8x32xf32> to vector<8x32xbf16>
      %c0_203 = arith.constant 0 : index
      %498 = arith.index_cast %453 : i32 to index
      %c0_204 = arith.constant 0 : index
      %c0_205 = arith.constant 0 : index
      %499 = vector.load %arg4[%c0_203, %498, %c0_204, %c0_205] : memref<1x16x8x32xbf16, #tpu.memory_space<vmem>>, vector<1x1x8x32xbf16>
      %500 = vector.shape_cast %499 : vector<1x1x8x32xbf16> to vector<8x32xbf16>
      %501 = vector.shape_cast %497 : vector<8x32xbf16> to vector<1x1x8x32xbf16>
      tpu.vector_store %arg4[%c0_203, %498, %c0_204, %c0_205], %501 {strides = array<i32>} : memref<1x16x8x32xbf16, #tpu.memory_space<vmem>>, vector<1x1x8x32xbf16>,
      %c10_i32 = arith.constant 10 : i32
      %c15_i32_206 = arith.constant 15 : i32
      %502 = arith.subi %c15_i32_206, %c10_i32 : i32
      %c16_i32_207 = arith.constant 16 : i32
      %503 = arith.muli %11, %c16_i32_207 : i32
      %504 = arith.addi %503, %502 : i32
      %c8_i32_208 = arith.constant 8 : i32
      %505 = arith.cmpi slt, %504, %c8_i32_208 : i32
      %506 = arith.extui %505 : i1 to i32
      %507 = arith.sitofp %506 : i32 to f32
      %508 = arith.index_cast %502 : i32 to index
      %c0_209 = arith.constant 0 : index
      %c0_210 = arith.constant 0 : index
      %509 = vector.load %arg2[%508, %c0_209, %c0_210] : memref<16x8x128xbf16, #tpu.memory_space<vmem>>, vector<1x8x128xbf16>
      %510 = vector.shape_cast %509 : vector<1x8x128xbf16> to vector<8x128xbf16>
      %511 = arith.extf %510 : vector<8x128xbf16> to vector<8x128xf32>
      %512 = vector.broadcast %507 : f32 to vector<8x128xf32>
      %513 = arith.mulf %511, %512 : vector<8x128xf32>
      %c0_211 = arith.constant 0 : index
      %c0_212 = arith.constant 0 : index
      %514 = vector.load %arg5[%c0_211, %c0_212] : memref<8x32xf32, #tpu.memory_space<vmem>>, vector<8x32xf32>
      %515 = arith.truncf %514 : vector<8x32xf32> to vector<8x32xbf16>
      %cst_213 = arith.constant dense<0.000000e+00> : vector<8x128xf32>
      %516 = tpu.matmul %515, %4, %cst_213 {dimension_numbers = #tpu.dot_dimension_numbers<[1], [0], [0], [1], [0, 0, 1, 1], [], []>} : vector<8x32xbf16>, vector<32x128xbf16>, vector<8x128xf32> -> vector<8x128xf32>
      %517 = arith.addf %513, %516 : vector<8x128xf32>
      %518 = vector.extract_strided_slice %517 {offsets = [0, 0], sizes = [8, 32], strides = [1, 1]} : vector<8x128xf32> to vector<8x32xf32>
      %519 = arith.negf %518 : vector<8x32xf32>
      %520 = math.exp %519 : vector<8x32xf32>
      %cst_214 = arith.constant 1.000000e+00 : f32
      %521 = vector.broadcast %cst_214 : f32 to vector<8x32xf32>
      %522 = arith.addf %521, %520 : vector<8x32xf32>
      %523 = arith.divf %521, %522 : vector<8x32xf32>
      %524 = vector.extract_strided_slice %517 {offsets = [0, 32], sizes = [8, 32], strides = [1, 1]} : vector<8x128xf32> to vector<8x32xf32>
      %525 = arith.negf %524 : vector<8x32xf32>
      %526 = math.exp %525 : vector<8x32xf32>
      %cst_215 = arith.constant 1.000000e+00 : f32
      %527 = vector.broadcast %cst_215 : f32 to vector<8x32xf32>
      %528 = arith.addf %527, %526 : vector<8x32xf32>
      %529 = arith.divf %527, %528 : vector<8x32xf32>
      %530 = vector.extract_strided_slice %517 {offsets = [0, 64], sizes = [8, 32], strides = [1, 1]} : vector<8x128xf32> to vector<8x32xf32>
      %531 = math.tanh %530 : vector<8x32xf32>
      %532 = vector.extract_strided_slice %517 {offsets = [0, 96], sizes = [8, 32], strides = [1, 1]} : vector<8x128xf32> to vector<8x32xf32>
      %533 = arith.negf %532 : vector<8x32xf32>
      %534 = math.exp %533 : vector<8x32xf32>
      %cst_216 = arith.constant 1.000000e+00 : f32
      %535 = vector.broadcast %cst_216 : f32 to vector<8x32xf32>
      %536 = arith.addf %535, %534 : vector<8x32xf32>
      %537 = arith.divf %535, %536 : vector<8x32xf32>
      %c0_217 = arith.constant 0 : index
      %c0_218 = arith.constant 0 : index
      %538 = vector.load %arg6[%c0_217, %c0_218] : memref<8x32xf32, #tpu.memory_space<vmem>>, vector<8x32xf32>
      %539 = arith.mulf %529, %538 : vector<8x32xf32>
      %540 = arith.mulf %523, %531 : vector<8x32xf32>
      %541 = arith.addf %539, %540 : vector<8x32xf32>
      %542 = math.tanh %541 : vector<8x32xf32>
      %543 = arith.mulf %537, %542 : vector<8x32xf32>
      %c0_219 = arith.constant 0 : index
      %c0_220 = arith.constant 0 : index
      %544 = vector.load %arg6[%c0_219, %c0_220] : memref<8x32xf32, #tpu.memory_space<vmem>>, vector<8x32xf32>
      tpu.vector_store %arg6[%c0_219, %c0_220], %541 {strides = array<i32>} : memref<8x32xf32, #tpu.memory_space<vmem>>, vector<8x32xf32>,
      %c0_221 = arith.constant 0 : index
      %c0_222 = arith.constant 0 : index
      %545 = vector.load %arg5[%c0_221, %c0_222] : memref<8x32xf32, #tpu.memory_space<vmem>>, vector<8x32xf32>
      tpu.vector_store %arg5[%c0_221, %c0_222], %543 {strides = array<i32>} : memref<8x32xf32, #tpu.memory_space<vmem>>, vector<8x32xf32>,
      %546 = arith.truncf %543 : vector<8x32xf32> to vector<8x32xbf16>
      %c0_223 = arith.constant 0 : index
      %547 = arith.index_cast %502 : i32 to index
      %c0_224 = arith.constant 0 : index
      %c0_225 = arith.constant 0 : index
      %548 = vector.load %arg4[%c0_223, %547, %c0_224, %c0_225] : memref<1x16x8x32xbf16, #tpu.memory_space<vmem>>, vector<1x1x8x32xbf16>
      %549 = vector.shape_cast %548 : vector<1x1x8x32xbf16> to vector<8x32xbf16>
      %550 = vector.shape_cast %546 : vector<8x32xbf16> to vector<1x1x8x32xbf16>
      tpu.vector_store %arg4[%c0_223, %547, %c0_224, %c0_225], %550 {strides = array<i32>} : memref<1x16x8x32xbf16, #tpu.memory_space<vmem>>, vector<1x1x8x32xbf16>,
      %c11_i32 = arith.constant 11 : i32
      %c15_i32_226 = arith.constant 15 : i32
      %551 = arith.subi %c15_i32_226, %c11_i32 : i32
      %c16_i32_227 = arith.constant 16 : i32
      %552 = arith.muli %11, %c16_i32_227 : i32
      %553 = arith.addi %552, %551 : i32
      %c8_i32_228 = arith.constant 8 : i32
      %554 = arith.cmpi slt, %553, %c8_i32_228 : i32
      %555 = arith.extui %554 : i1 to i32
      %556 = arith.sitofp %555 : i32 to f32
      %557 = arith.index_cast %551 : i32 to index
      %c0_229 = arith.constant 0 : index
      %c0_230 = arith.constant 0 : index
      %558 = vector.load %arg2[%557, %c0_229, %c0_230] : memref<16x8x128xbf16, #tpu.memory_space<vmem>>, vector<1x8x128xbf16>
      %559 = vector.shape_cast %558 : vector<1x8x128xbf16> to vector<8x128xbf16>
      %560 = arith.extf %559 : vector<8x128xbf16> to vector<8x128xf32>
      %561 = vector.broadcast %556 : f32 to vector<8x128xf32>
      %562 = arith.mulf %560, %561 : vector<8x128xf32>
      %c0_231 = arith.constant 0 : index
      %c0_232 = arith.constant 0 : index
      %563 = vector.load %arg5[%c0_231, %c0_232] : memref<8x32xf32, #tpu.memory_space<vmem>>, vector<8x32xf32>
      %564 = arith.truncf %563 : vector<8x32xf32> to vector<8x32xbf16>
      %cst_233 = arith.constant dense<0.000000e+00> : vector<8x128xf32>
      %565 = tpu.matmul %564, %4, %cst_233 {dimension_numbers = #tpu.dot_dimension_numbers<[1], [0], [0], [1], [0, 0, 1, 1], [], []>} : vector<8x32xbf16>, vector<32x128xbf16>, vector<8x128xf32> -> vector<8x128xf32>
      %566 = arith.addf %562, %565 : vector<8x128xf32>
      %567 = vector.extract_strided_slice %566 {offsets = [0, 0], sizes = [8, 32], strides = [1, 1]} : vector<8x128xf32> to vector<8x32xf32>
      %568 = arith.negf %567 : vector<8x32xf32>
      %569 = math.exp %568 : vector<8x32xf32>
      %cst_234 = arith.constant 1.000000e+00 : f32
      %570 = vector.broadcast %cst_234 : f32 to vector<8x32xf32>
      %571 = arith.addf %570, %569 : vector<8x32xf32>
      %572 = arith.divf %570, %571 : vector<8x32xf32>
      %573 = vector.extract_strided_slice %566 {offsets = [0, 32], sizes = [8, 32], strides = [1, 1]} : vector<8x128xf32> to vector<8x32xf32>
      %574 = arith.negf %573 : vector<8x32xf32>
      %575 = math.exp %574 : vector<8x32xf32>
      %cst_235 = arith.constant 1.000000e+00 : f32
      %576 = vector.broadcast %cst_235 : f32 to vector<8x32xf32>
      %577 = arith.addf %576, %575 : vector<8x32xf32>
      %578 = arith.divf %576, %577 : vector<8x32xf32>
      %579 = vector.extract_strided_slice %566 {offsets = [0, 64], sizes = [8, 32], strides = [1, 1]} : vector<8x128xf32> to vector<8x32xf32>
      %580 = math.tanh %579 : vector<8x32xf32>
      %581 = vector.extract_strided_slice %566 {offsets = [0, 96], sizes = [8, 32], strides = [1, 1]} : vector<8x128xf32> to vector<8x32xf32>
      %582 = arith.negf %581 : vector<8x32xf32>
      %583 = math.exp %582 : vector<8x32xf32>
      %cst_236 = arith.constant 1.000000e+00 : f32
      %584 = vector.broadcast %cst_236 : f32 to vector<8x32xf32>
      %585 = arith.addf %584, %583 : vector<8x32xf32>
      %586 = arith.divf %584, %585 : vector<8x32xf32>
      %c0_237 = arith.constant 0 : index
      %c0_238 = arith.constant 0 : index
      %587 = vector.load %arg6[%c0_237, %c0_238] : memref<8x32xf32, #tpu.memory_space<vmem>>, vector<8x32xf32>
      %588 = arith.mulf %578, %587 : vector<8x32xf32>
      %589 = arith.mulf %572, %580 : vector<8x32xf32>
      %590 = arith.addf %588, %589 : vector<8x32xf32>
      %591 = math.tanh %590 : vector<8x32xf32>
      %592 = arith.mulf %586, %591 : vector<8x32xf32>
      %c0_239 = arith.constant 0 : index
      %c0_240 = arith.constant 0 : index
      %593 = vector.load %arg6[%c0_239, %c0_240] : memref<8x32xf32, #tpu.memory_space<vmem>>, vector<8x32xf32>
      tpu.vector_store %arg6[%c0_239, %c0_240], %590 {strides = array<i32>} : memref<8x32xf32, #tpu.memory_space<vmem>>, vector<8x32xf32>,
      %c0_241 = arith.constant 0 : index
      %c0_242 = arith.constant 0 : index
      %594 = vector.load %arg5[%c0_241, %c0_242] : memref<8x32xf32, #tpu.memory_space<vmem>>, vector<8x32xf32>
      tpu.vector_store %arg5[%c0_241, %c0_242], %592 {strides = array<i32>} : memref<8x32xf32, #tpu.memory_space<vmem>>, vector<8x32xf32>,
      %595 = arith.truncf %592 : vector<8x32xf32> to vector<8x32xbf16>
      %c0_243 = arith.constant 0 : index
      %596 = arith.index_cast %551 : i32 to index
      %c0_244 = arith.constant 0 : index
      %c0_245 = arith.constant 0 : index
      %597 = vector.load %arg4[%c0_243, %596, %c0_244, %c0_245] : memref<1x16x8x32xbf16, #tpu.memory_space<vmem>>, vector<1x1x8x32xbf16>
      %598 = vector.shape_cast %597 : vector<1x1x8x32xbf16> to vector<8x32xbf16>
      %599 = vector.shape_cast %595 : vector<8x32xbf16> to vector<1x1x8x32xbf16>
      tpu.vector_store %arg4[%c0_243, %596, %c0_244, %c0_245], %599 {strides = array<i32>} : memref<1x16x8x32xbf16, #tpu.memory_space<vmem>>, vector<1x1x8x32xbf16>,
      %c12_i32 = arith.constant 12 : i32
      %c15_i32_246 = arith.constant 15 : i32
      %600 = arith.subi %c15_i32_246, %c12_i32 : i32
      %c16_i32_247 = arith.constant 16 : i32
      %601 = arith.muli %11, %c16_i32_247 : i32
      %602 = arith.addi %601, %600 : i32
      %c8_i32_248 = arith.constant 8 : i32
      %603 = arith.cmpi slt, %602, %c8_i32_248 : i32
      %604 = arith.extui %603 : i1 to i32
      %605 = arith.sitofp %604 : i32 to f32
      %606 = arith.index_cast %600 : i32 to index
      %c0_249 = arith.constant 0 : index
      %c0_250 = arith.constant 0 : index
      %607 = vector.load %arg2[%606, %c0_249, %c0_250] : memref<16x8x128xbf16, #tpu.memory_space<vmem>>, vector<1x8x128xbf16>
      %608 = vector.shape_cast %607 : vector<1x8x128xbf16> to vector<8x128xbf16>
      %609 = arith.extf %608 : vector<8x128xbf16> to vector<8x128xf32>
      %610 = vector.broadcast %605 : f32 to vector<8x128xf32>
      %611 = arith.mulf %609, %610 : vector<8x128xf32>
      %c0_251 = arith.constant 0 : index
      %c0_252 = arith.constant 0 : index
      %612 = vector.load %arg5[%c0_251, %c0_252] : memref<8x32xf32, #tpu.memory_space<vmem>>, vector<8x32xf32>
      %613 = arith.truncf %612 : vector<8x32xf32> to vector<8x32xbf16>
      %cst_253 = arith.constant dense<0.000000e+00> : vector<8x128xf32>
      %614 = tpu.matmul %613, %4, %cst_253 {dimension_numbers = #tpu.dot_dimension_numbers<[1], [0], [0], [1], [0, 0, 1, 1], [], []>} : vector<8x32xbf16>, vector<32x128xbf16>, vector<8x128xf32> -> vector<8x128xf32>
      %615 = arith.addf %611, %614 : vector<8x128xf32>
      %616 = vector.extract_strided_slice %615 {offsets = [0, 0], sizes = [8, 32], strides = [1, 1]} : vector<8x128xf32> to vector<8x32xf32>
      %617 = arith.negf %616 : vector<8x32xf32>
      %618 = math.exp %617 : vector<8x32xf32>
      %cst_254 = arith.constant 1.000000e+00 : f32
      %619 = vector.broadcast %cst_254 : f32 to vector<8x32xf32>
      %620 = arith.addf %619, %618 : vector<8x32xf32>
      %621 = arith.divf %619, %620 : vector<8x32xf32>
      %622 = vector.extract_strided_slice %615 {offsets = [0, 32], sizes = [8, 32], strides = [1, 1]} : vector<8x128xf32> to vector<8x32xf32>
      %623 = arith.negf %622 : vector<8x32xf32>
      %624 = math.exp %623 : vector<8x32xf32>
      %cst_255 = arith.constant 1.000000e+00 : f32
      %625 = vector.broadcast %cst_255 : f32 to vector<8x32xf32>
      %626 = arith.addf %625, %624 : vector<8x32xf32>
      %627 = arith.divf %625, %626 : vector<8x32xf32>
      %628 = vector.extract_strided_slice %615 {offsets = [0, 64], sizes = [8, 32], strides = [1, 1]} : vector<8x128xf32> to vector<8x32xf32>
      %629 = math.tanh %628 : vector<8x32xf32>
      %630 = vector.extract_strided_slice %615 {offsets = [0, 96], sizes = [8, 32], strides = [1, 1]} : vector<8x128xf32> to vector<8x32xf32>
      %631 = arith.negf %630 : vector<8x32xf32>
      %632 = math.exp %631 : vector<8x32xf32>
      %cst_256 = arith.constant 1.000000e+00 : f32
      %633 = vector.broadcast %cst_256 : f32 to vector<8x32xf32>
      %634 = arith.addf %633, %632 : vector<8x32xf32>
      %635 = arith.divf %633, %634 : vector<8x32xf32>
      %c0_257 = arith.constant 0 : index
      %c0_258 = arith.constant 0 : index
      %636 = vector.load %arg6[%c0_257, %c0_258] : memref<8x32xf32, #tpu.memory_space<vmem>>, vector<8x32xf32>
      %637 = arith.mulf %627, %636 : vector<8x32xf32>
      %638 = arith.mulf %621, %629 : vector<8x32xf32>
      %639 = arith.addf %637, %638 : vector<8x32xf32>
      %640 = math.tanh %639 : vector<8x32xf32>
      %641 = arith.mulf %635, %640 : vector<8x32xf32>
      %c0_259 = arith.constant 0 : index
      %c0_260 = arith.constant 0 : index
      %642 = vector.load %arg6[%c0_259, %c0_260] : memref<8x32xf32, #tpu.memory_space<vmem>>, vector<8x32xf32>
      tpu.vector_store %arg6[%c0_259, %c0_260], %639 {strides = array<i32>} : memref<8x32xf32, #tpu.memory_space<vmem>>, vector<8x32xf32>,
      %c0_261 = arith.constant 0 : index
      %c0_262 = arith.constant 0 : index
      %643 = vector.load %arg5[%c0_261, %c0_262] : memref<8x32xf32, #tpu.memory_space<vmem>>, vector<8x32xf32>
      tpu.vector_store %arg5[%c0_261, %c0_262], %641 {strides = array<i32>} : memref<8x32xf32, #tpu.memory_space<vmem>>, vector<8x32xf32>,
      %644 = arith.truncf %641 : vector<8x32xf32> to vector<8x32xbf16>
      %c0_263 = arith.constant 0 : index
      %645 = arith.index_cast %600 : i32 to index
      %c0_264 = arith.constant 0 : index
      %c0_265 = arith.constant 0 : index
      %646 = vector.load %arg4[%c0_263, %645, %c0_264, %c0_265] : memref<1x16x8x32xbf16, #tpu.memory_space<vmem>>, vector<1x1x8x32xbf16>
      %647 = vector.shape_cast %646 : vector<1x1x8x32xbf16> to vector<8x32xbf16>
      %648 = vector.shape_cast %644 : vector<8x32xbf16> to vector<1x1x8x32xbf16>
      tpu.vector_store %arg4[%c0_263, %645, %c0_264, %c0_265], %648 {strides = array<i32>} : memref<1x16x8x32xbf16, #tpu.memory_space<vmem>>, vector<1x1x8x32xbf16>,
      %c13_i32 = arith.constant 13 : i32
      %c15_i32_266 = arith.constant 15 : i32
      %649 = arith.subi %c15_i32_266, %c13_i32 : i32
      %c16_i32_267 = arith.constant 16 : i32
      %650 = arith.muli %11, %c16_i32_267 : i32
      %651 = arith.addi %650, %649 : i32
      %c8_i32_268 = arith.constant 8 : i32
      %652 = arith.cmpi slt, %651, %c8_i32_268 : i32
      %653 = arith.extui %652 : i1 to i32
      %654 = arith.sitofp %653 : i32 to f32
      %655 = arith.index_cast %649 : i32 to index
      %c0_269 = arith.constant 0 : index
      %c0_270 = arith.constant 0 : index
      %656 = vector.load %arg2[%655, %c0_269, %c0_270] : memref<16x8x128xbf16, #tpu.memory_space<vmem>>, vector<1x8x128xbf16>
      %657 = vector.shape_cast %656 : vector<1x8x128xbf16> to vector<8x128xbf16>
      %658 = arith.extf %657 : vector<8x128xbf16> to vector<8x128xf32>
      %659 = vector.broadcast %654 : f32 to vector<8x128xf32>
      %660 = arith.mulf %658, %659 : vector<8x128xf32>
      %c0_271 = arith.constant 0 : index
      %c0_272 = arith.constant 0 : index
      %661 = vector.load %arg5[%c0_271, %c0_272] : memref<8x32xf32, #tpu.memory_space<vmem>>, vector<8x32xf32>
      %662 = arith.truncf %661 : vector<8x32xf32> to vector<8x32xbf16>
      %cst_273 = arith.constant dense<0.000000e+00> : vector<8x128xf32>
      %663 = tpu.matmul %662, %4, %cst_273 {dimension_numbers = #tpu.dot_dimension_numbers<[1], [0], [0], [1], [0, 0, 1, 1], [], []>} : vector<8x32xbf16>, vector<32x128xbf16>, vector<8x128xf32> -> vector<8x128xf32>
      %664 = arith.addf %660, %663 : vector<8x128xf32>
      %665 = vector.extract_strided_slice %664 {offsets = [0, 0], sizes = [8, 32], strides = [1, 1]} : vector<8x128xf32> to vector<8x32xf32>
      %666 = arith.negf %665 : vector<8x32xf32>
      %667 = math.exp %666 : vector<8x32xf32>
      %cst_274 = arith.constant 1.000000e+00 : f32
      %668 = vector.broadcast %cst_274 : f32 to vector<8x32xf32>
      %669 = arith.addf %668, %667 : vector<8x32xf32>
      %670 = arith.divf %668, %669 : vector<8x32xf32>
      %671 = vector.extract_strided_slice %664 {offsets = [0, 32], sizes = [8, 32], strides = [1, 1]} : vector<8x128xf32> to vector<8x32xf32>
      %672 = arith.negf %671 : vector<8x32xf32>
      %673 = math.exp %672 : vector<8x32xf32>
      %cst_275 = arith.constant 1.000000e+00 : f32
      %674 = vector.broadcast %cst_275 : f32 to vector<8x32xf32>
      %675 = arith.addf %674, %673 : vector<8x32xf32>
      %676 = arith.divf %674, %675 : vector<8x32xf32>
      %677 = vector.extract_strided_slice %664 {offsets = [0, 64], sizes = [8, 32], strides = [1, 1]} : vector<8x128xf32> to vector<8x32xf32>
      %678 = math.tanh %677 : vector<8x32xf32>
      %679 = vector.extract_strided_slice %664 {offsets = [0, 96], sizes = [8, 32], strides = [1, 1]} : vector<8x128xf32> to vector<8x32xf32>
      %680 = arith.negf %679 : vector<8x32xf32>
      %681 = math.exp %680 : vector<8x32xf32>
      %cst_276 = arith.constant 1.000000e+00 : f32
      %682 = vector.broadcast %cst_276 : f32 to vector<8x32xf32>
      %683 = arith.addf %682, %681 : vector<8x32xf32>
      %684 = arith.divf %682, %683 : vector<8x32xf32>
      %c0_277 = arith.constant 0 : index
      %c0_278 = arith.constant 0 : index
      %685 = vector.load %arg6[%c0_277, %c0_278] : memref<8x32xf32, #tpu.memory_space<vmem>>, vector<8x32xf32>
      %686 = arith.mulf %676, %685 : vector<8x32xf32>
      %687 = arith.mulf %670, %678 : vector<8x32xf32>
      %688 = arith.addf %686, %687 : vector<8x32xf32>
      %689 = math.tanh %688 : vector<8x32xf32>
      %690 = arith.mulf %684, %689 : vector<8x32xf32>
      %c0_279 = arith.constant 0 : index
      %c0_280 = arith.constant 0 : index
      %691 = vector.load %arg6[%c0_279, %c0_280] : memref<8x32xf32, #tpu.memory_space<vmem>>, vector<8x32xf32>
      tpu.vector_store %arg6[%c0_279, %c0_280], %688 {strides = array<i32>} : memref<8x32xf32, #tpu.memory_space<vmem>>, vector<8x32xf32>,
      %c0_281 = arith.constant 0 : index
      %c0_282 = arith.constant 0 : index
      %692 = vector.load %arg5[%c0_281, %c0_282] : memref<8x32xf32, #tpu.memory_space<vmem>>, vector<8x32xf32>
      tpu.vector_store %arg5[%c0_281, %c0_282], %690 {strides = array<i32>} : memref<8x32xf32, #tpu.memory_space<vmem>>, vector<8x32xf32>,
      %693 = arith.truncf %690 : vector<8x32xf32> to vector<8x32xbf16>
      %c0_283 = arith.constant 0 : index
      %694 = arith.index_cast %649 : i32 to index
      %c0_284 = arith.constant 0 : index
      %c0_285 = arith.constant 0 : index
      %695 = vector.load %arg4[%c0_283, %694, %c0_284, %c0_285] : memref<1x16x8x32xbf16, #tpu.memory_space<vmem>>, vector<1x1x8x32xbf16>
      %696 = vector.shape_cast %695 : vector<1x1x8x32xbf16> to vector<8x32xbf16>
      %697 = vector.shape_cast %693 : vector<8x32xbf16> to vector<1x1x8x32xbf16>
      tpu.vector_store %arg4[%c0_283, %694, %c0_284, %c0_285], %697 {strides = array<i32>} : memref<1x16x8x32xbf16, #tpu.memory_space<vmem>>, vector<1x1x8x32xbf16>,
      %c14_i32 = arith.constant 14 : i32
      %c15_i32_286 = arith.constant 15 : i32
      %698 = arith.subi %c15_i32_286, %c14_i32 : i32
      %c16_i32_287 = arith.constant 16 : i32
      %699 = arith.muli %11, %c16_i32_287 : i32
      %700 = arith.addi %699, %698 : i32
      %c8_i32_288 = arith.constant 8 : i32
      %701 = arith.cmpi slt, %700, %c8_i32_288 : i32
      %702 = arith.extui %701 : i1 to i32
      %703 = arith.sitofp %702 : i32 to f32
      %704 = arith.index_cast %698 : i32 to index
      %c0_289 = arith.constant 0 : index
      %c0_290 = arith.constant 0 : index
      %705 = vector.load %arg2[%704, %c0_289, %c0_290] : memref<16x8x128xbf16, #tpu.memory_space<vmem>>, vector<1x8x128xbf16>
      %706 = vector.shape_cast %705 : vector<1x8x128xbf16> to vector<8x128xbf16>
      %707 = arith.extf %706 : vector<8x128xbf16> to vector<8x128xf32>
      %708 = vector.broadcast %703 : f32 to vector<8x128xf32>
      %709 = arith.mulf %707, %708 : vector<8x128xf32>
      %c0_291 = arith.constant 0 : index
      %c0_292 = arith.constant 0 : index
      %710 = vector.load %arg5[%c0_291, %c0_292] : memref<8x32xf32, #tpu.memory_space<vmem>>, vector<8x32xf32>
      %711 = arith.truncf %710 : vector<8x32xf32> to vector<8x32xbf16>
      %cst_293 = arith.constant dense<0.000000e+00> : vector<8x128xf32>
      %712 = tpu.matmul %711, %4, %cst_293 {dimension_numbers = #tpu.dot_dimension_numbers<[1], [0], [0], [1], [0, 0, 1, 1], [], []>} : vector<8x32xbf16>, vector<32x128xbf16>, vector<8x128xf32> -> vector<8x128xf32>
      %713 = arith.addf %709, %712 : vector<8x128xf32>
      %714 = vector.extract_strided_slice %713 {offsets = [0, 0], sizes = [8, 32], strides = [1, 1]} : vector<8x128xf32> to vector<8x32xf32>
      %715 = arith.negf %714 : vector<8x32xf32>
      %716 = math.exp %715 : vector<8x32xf32>
      %cst_294 = arith.constant 1.000000e+00 : f32
      %717 = vector.broadcast %cst_294 : f32 to vector<8x32xf32>
      %718 = arith.addf %717, %716 : vector<8x32xf32>
      %719 = arith.divf %717, %718 : vector<8x32xf32>
      %720 = vector.extract_strided_slice %713 {offsets = [0, 32], sizes = [8, 32], strides = [1, 1]} : vector<8x128xf32> to vector<8x32xf32>
      %721 = arith.negf %720 : vector<8x32xf32>
      %722 = math.exp %721 : vector<8x32xf32>
      %cst_295 = arith.constant 1.000000e+00 : f32
      %723 = vector.broadcast %cst_295 : f32 to vector<8x32xf32>
      %724 = arith.addf %723, %722 : vector<8x32xf32>
      %725 = arith.divf %723, %724 : vector<8x32xf32>
      %726 = vector.extract_strided_slice %713 {offsets = [0, 64], sizes = [8, 32], strides = [1, 1]} : vector<8x128xf32> to vector<8x32xf32>
      %727 = math.tanh %726 : vector<8x32xf32>
      %728 = vector.extract_strided_slice %713 {offsets = [0, 96], sizes = [8, 32], strides = [1, 1]} : vector<8x128xf32> to vector<8x32xf32>
      %729 = arith.negf %728 : vector<8x32xf32>
      %730 = math.exp %729 : vector<8x32xf32>
      %cst_296 = arith.constant 1.000000e+00 : f32
      %731 = vector.broadcast %cst_296 : f32 to vector<8x32xf32>
      %732 = arith.addf %731, %730 : vector<8x32xf32>
      %733 = arith.divf %731, %732 : vector<8x32xf32>
      %c0_297 = arith.constant 0 : index
      %c0_298 = arith.constant 0 : index
      %734 = vector.load %arg6[%c0_297, %c0_298] : memref<8x32xf32, #tpu.memory_space<vmem>>, vector<8x32xf32>
      %735 = arith.mulf %725, %734 : vector<8x32xf32>
      %736 = arith.mulf %719, %727 : vector<8x32xf32>
      %737 = arith.addf %735, %736 : vector<8x32xf32>
      %738 = math.tanh %737 : vector<8x32xf32>
      %739 = arith.mulf %733, %738 : vector<8x32xf32>
      %c0_299 = arith.constant 0 : index
      %c0_300 = arith.constant 0 : index
      %740 = vector.load %arg6[%c0_299, %c0_300] : memref<8x32xf32, #tpu.memory_space<vmem>>, vector<8x32xf32>
      tpu.vector_store %arg6[%c0_299, %c0_300], %737 {strides = array<i32>} : memref<8x32xf32, #tpu.memory_space<vmem>>, vector<8x32xf32>,
      %c0_301 = arith.constant 0 : index
      %c0_302 = arith.constant 0 : index
      %741 = vector.load %arg5[%c0_301, %c0_302] : memref<8x32xf32, #tpu.memory_space<vmem>>, vector<8x32xf32>
      tpu.vector_store %arg5[%c0_301, %c0_302], %739 {strides = array<i32>} : memref<8x32xf32, #tpu.memory_space<vmem>>, vector<8x32xf32>,
      %742 = arith.truncf %739 : vector<8x32xf32> to vector<8x32xbf16>
      %c0_303 = arith.constant 0 : index
      %743 = arith.index_cast %698 : i32 to index
      %c0_304 = arith.constant 0 : index
      %c0_305 = arith.constant 0 : index
      %744 = vector.load %arg4[%c0_303, %743, %c0_304, %c0_305] : memref<1x16x8x32xbf16, #tpu.memory_space<vmem>>, vector<1x1x8x32xbf16>
      %745 = vector.shape_cast %744 : vector<1x1x8x32xbf16> to vector<8x32xbf16>
      %746 = vector.shape_cast %742 : vector<8x32xbf16> to vector<1x1x8x32xbf16>
      tpu.vector_store %arg4[%c0_303, %743, %c0_304, %c0_305], %746 {strides = array<i32>} : memref<1x16x8x32xbf16, #tpu.memory_space<vmem>>, vector<1x1x8x32xbf16>,
      %c15_i32_306 = arith.constant 15 : i32
      %c15_i32_307 = arith.constant 15 : i32
      %747 = arith.subi %c15_i32_307, %c15_i32_306 : i32
      %c16_i32_308 = arith.constant 16 : i32
      %748 = arith.muli %11, %c16_i32_308 : i32
      %749 = arith.addi %748, %747 : i32
      %c8_i32_309 = arith.constant 8 : i32
      %750 = arith.cmpi slt, %749, %c8_i32_309 : i32
      %751 = arith.extui %750 : i1 to i32
      %752 = arith.sitofp %751 : i32 to f32
      %753 = arith.index_cast %747 : i32 to index
      %c0_310 = arith.constant 0 : index
      %c0_311 = arith.constant 0 : index
      %754 = vector.load %arg2[%753, %c0_310, %c0_311] : memref<16x8x128xbf16, #tpu.memory_space<vmem>>, vector<1x8x128xbf16>
      %755 = vector.shape_cast %754 : vector<1x8x128xbf16> to vector<8x128xbf16>
      %756 = arith.extf %755 : vector<8x128xbf16> to vector<8x128xf32>
      %757 = vector.broadcast %752 : f32 to vector<8x128xf32>
      %758 = arith.mulf %756, %757 : vector<8x128xf32>
      %c0_312 = arith.constant 0 : index
      %c0_313 = arith.constant 0 : index
      %759 = vector.load %arg5[%c0_312, %c0_313] : memref<8x32xf32, #tpu.memory_space<vmem>>, vector<8x32xf32>
      %760 = arith.truncf %759 : vector<8x32xf32> to vector<8x32xbf16>
      %cst_314 = arith.constant dense<0.000000e+00> : vector<8x128xf32>
      %761 = tpu.matmul %760, %4, %cst_314 {dimension_numbers = #tpu.dot_dimension_numbers<[1], [0], [0], [1], [0, 0, 1, 1], [], []>} : vector<8x32xbf16>, vector<32x128xbf16>, vector<8x128xf32> -> vector<8x128xf32>
      %762 = arith.addf %758, %761 : vector<8x128xf32>
      %763 = vector.extract_strided_slice %762 {offsets = [0, 0], sizes = [8, 32], strides = [1, 1]} : vector<8x128xf32> to vector<8x32xf32>
      %764 = arith.negf %763 : vector<8x32xf32>
      %765 = math.exp %764 : vector<8x32xf32>
      %cst_315 = arith.constant 1.000000e+00 : f32
      %766 = vector.broadcast %cst_315 : f32 to vector<8x32xf32>
      %767 = arith.addf %766, %765 : vector<8x32xf32>
      %768 = arith.divf %766, %767 : vector<8x32xf32>
      %769 = vector.extract_strided_slice %762 {offsets = [0, 32], sizes = [8, 32], strides = [1, 1]} : vector<8x128xf32> to vector<8x32xf32>
      %770 = arith.negf %769 : vector<8x32xf32>
      %771 = math.exp %770 : vector<8x32xf32>
      %cst_316 = arith.constant 1.000000e+00 : f32
      %772 = vector.broadcast %cst_316 : f32 to vector<8x32xf32>
      %773 = arith.addf %772, %771 : vector<8x32xf32>
      %774 = arith.divf %772, %773 : vector<8x32xf32>
      %775 = vector.extract_strided_slice %762 {offsets = [0, 64], sizes = [8, 32], strides = [1, 1]} : vector<8x128xf32> to vector<8x32xf32>
      %776 = math.tanh %775 : vector<8x32xf32>
      %777 = vector.extract_strided_slice %762 {offsets = [0, 96], sizes = [8, 32], strides = [1, 1]} : vector<8x128xf32> to vector<8x32xf32>
      %778 = arith.negf %777 : vector<8x32xf32>
      %779 = math.exp %778 : vector<8x32xf32>
      %cst_317 = arith.constant 1.000000e+00 : f32
      %780 = vector.broadcast %cst_317 : f32 to vector<8x32xf32>
      %781 = arith.addf %780, %779 : vector<8x32xf32>
      %782 = arith.divf %780, %781 : vector<8x32xf32>
      %c0_318 = arith.constant 0 : index
      %c0_319 = arith.constant 0 : index
      %783 = vector.load %arg6[%c0_318, %c0_319] : memref<8x32xf32, #tpu.memory_space<vmem>>, vector<8x32xf32>
      %784 = arith.mulf %774, %783 : vector<8x32xf32>
      %785 = arith.mulf %768, %776 : vector<8x32xf32>
      %786 = arith.addf %784, %785 : vector<8x32xf32>
      %787 = math.tanh %786 : vector<8x32xf32>
      %788 = arith.mulf %782, %787 : vector<8x32xf32>
      %c0_320 = arith.constant 0 : index
      %c0_321 = arith.constant 0 : index
      %789 = vector.load %arg6[%c0_320, %c0_321] : memref<8x32xf32, #tpu.memory_space<vmem>>, vector<8x32xf32>
      tpu.vector_store %arg6[%c0_320, %c0_321], %786 {strides = array<i32>} : memref<8x32xf32, #tpu.memory_space<vmem>>, vector<8x32xf32>,
      %c0_322 = arith.constant 0 : index
      %c0_323 = arith.constant 0 : index
      %790 = vector.load %arg5[%c0_322, %c0_323] : memref<8x32xf32, #tpu.memory_space<vmem>>, vector<8x32xf32>
      tpu.vector_store %arg5[%c0_322, %c0_323], %788 {strides = array<i32>} : memref<8x32xf32, #tpu.memory_space<vmem>>, vector<8x32xf32>,
      %791 = arith.truncf %788 : vector<8x32xf32> to vector<8x32xbf16>
      %c0_324 = arith.constant 0 : index
      %792 = arith.index_cast %747 : i32 to index
      %c0_325 = arith.constant 0 : index
      %c0_326 = arith.constant 0 : index
      %793 = vector.load %arg4[%c0_324, %792, %c0_325, %c0_326] : memref<1x16x8x32xbf16, #tpu.memory_space<vmem>>, vector<1x1x8x32xbf16>
      %794 = vector.shape_cast %793 : vector<1x1x8x32xbf16> to vector<8x32xbf16>
      %795 = vector.shape_cast %791 : vector<8x32xbf16> to vector<1x1x8x32xbf16>
      tpu.vector_store %arg4[%c0_324, %792, %c0_325, %c0_326], %795 {strides = array<i32>} : memref<1x16x8x32xbf16, #tpu.memory_space<vmem>>, vector<1x1x8x32xbf16>,
      %c16_i32_327 = arith.constant 16 : i32
    } else {
    }
    return
  }
  func.func @transform_0(%arg0: i32, %arg1: i32) -> (i32, i32, i32) {
    %c2_i32 = arith.constant 2 : i32
    %0 = arith.muli %c2_i32, %arg1 : i32
    %c0_i32 = arith.constant 0 : i32
    %1 = arith.subi %c0_i32, %0 : i32
    %2 = arith.muli %arg0, %1 : i32
    %3 = arith.addi %arg1, %2 : i32
    %c0_i32_0 = arith.constant 0 : i32
    %c0_i32_1 = arith.constant 0 : i32
    return %3, %c0_i32_0, %arg0 : i32, i32, i32
  }
  func.func @transform_1(%arg0: i32, %arg1: i32) -> (i32, i32, i32) {
    %c0_i32 = arith.constant 0 : i32
    %c0_i32_0 = arith.constant 0 : i32
    %c0_i32_1 = arith.constant 0 : i32
    return %arg0, %c0_i32, %c0_i32_0 : i32, i32, i32
  }
  func.func @transform_2(%arg0: i32, %arg1: i32) -> (i32, i32, i32, i32) {
    %c2_i32 = arith.constant 2 : i32
    %0 = arith.muli %c2_i32, %arg1 : i32
    %c0_i32 = arith.constant 0 : i32
    %1 = arith.subi %c0_i32, %0 : i32
    %2 = arith.muli %arg0, %1 : i32
    %3 = arith.addi %arg1, %2 : i32
    %c0_i32_0 = arith.constant 0 : i32
    %c0_i32_1 = arith.constant 0 : i32
    %c0_i32_2 = arith.constant 0 : i32
    return %arg0, %3, %c0_i32_0, %c0_i32_1 : i32, i32, i32, i32
  }
}

</mosaic_0001>

<llo_original>
// kernel: bert_country_forward.19
$region0: #{bert_country_forward.19}
  #allocation0 [shape = 'u32[]', space=smem, size = 0x4, offset = 0x4, fixed_abs, tag = 'smem constant byte address 0x4 - core index']
  #allocation1 [shape = 'u32[144,128]{1,0:T(1,128)}', space=vmem, size = 0x12000, scoped, tag = 'internal scratch']
  %s0 = inlined_call_operand.vmem [shape: bf16[32,32], index: 0, kind: input, shape index: {}]
  %s1 = inlined_call_operand.vmem [shape: bf16[32,32], index: 1, kind: input, shape index: {}]
  %s2 = inlined_call_operand.vmem [shape: f32[1,32], index: 2, kind: input, shape index: {}]
  %s3 = inlined_call_operand.vmem [shape: bf16[32,32], index: 3, kind: input, shape index: {}]
  %s4 = inlined_call_operand.vmem [shape: f32[1,32], index: 4, kind: input, shape index: {}]
  %s5 = inlined_call_operand.vmem [shape: f32[1,32], index: 5, kind: input, shape index: {}]
  %s6 = inlined_call_operand.vmem [shape: bf16[32,32], index: 6, kind: output, shape index: {}]
  %s7 = sld [smem:[#allocation0]]
  $region34: #{bert_country_forward.19} parent=0
    _
  %s9 = ssub.s32 1, %s7
  %s10 = scalar_select 0, %s9, %s7
  // Predicated region
  $region2: #{bert_country_forward.19} parent=0 // pred_check
    _
  $region3: #{bert_country_forward.19} parent=0 // pred_check_branch
    %12 = sbr.rel (0) target = $region5
  $region4: #{bert_country_forward.19} parent=0 // pred_region
    _
  $region5: #{bert_country_forward.19} parent=0 // pred_fallthru
    _
  // Predicated region
  $region6: #{bert_country_forward.19} parent=0 // pred_check
    _
  $region7: #{bert_country_forward.19} parent=0 // pred_check_branch
    %14 = sbr.rel (0) target = $region9
  $region8: #{bert_country_forward.19} parent=0 // pred_region
    _
  $region9: #{bert_country_forward.19} parent=0 // pred_fallthru
    _
  // Predicated region
  $region10: #{bert_country_forward.19} parent=0 // pred_check
    _
  $region11: #{bert_country_forward.19} parent=0 // pred_check_branch
    %16 = sbr.rel (0) target = $region13
  $region12: #{bert_country_forward.19} parent=0 // pred_region
    _
  $region13: #{bert_country_forward.19} parent=0 // pred_fallthru
    _
  // Predicated region
  $region14: #{bert_country_forward.19} parent=0 // pred_check
    _
  $region15: #{bert_country_forward.19} parent=0 // pred_check_branch
    %18 = sbr.rel (0) target = $region17
  $region16: #{bert_country_forward.19} parent=0 // pred_region
    _
  $region17: #{bert_country_forward.19} parent=0 // pred_fallthru
    _
  // Predicated region
  $region18: #{bert_country_forward.19} parent=0 // pred_check
    _
  $region19: #{bert_country_forward.19} parent=0 // pred_check_branch
    %20 = sbr.rel (0) target = $region21
  $region20: #{bert_country_forward.19} parent=0 // pred_region
    _
  $region21: #{bert_country_forward.19} parent=0 // pred_fallthru
    _
  // Predicated region
  $region22: #{bert_country_forward.19} parent=0 // pred_check
    _
  $region23: #{bert_country_forward.19} parent=0 // pred_check_branch
    %22 = sbr.rel (0) target = $region25
  $region24: #{bert_country_forward.19} parent=0 // pred_region
    _
  $region25: #{bert_country_forward.19} parent=0 // pred_fallthru
    _
  %v24 = vld [vmem:[%s0] sm:$0xf]
  %v25 = vld [vmem:[%s0 + $0x4] sm:$0xf]
  %v26 = vld [vmem:[%s0 + $0x8] sm:$0xf]
  %v27 = vld [vmem:[%s0 + $0xc] sm:$0xf]
  %v28 = vld [vmem:[%s1] sm:$0xf]
  %v29 = vld [vmem:[%s1 + $0x4] sm:$0xf]
  %v30 = vld [vmem:[%s1 + $0x8] sm:$0xf]
  %v31 = vld [vmem:[%s1 + $0xc] sm:$0xf]
  %v32 = vld [vmem:[%s2] sm:$0x1]
  %v34 = vlaneseq
  %v35 = vshrl.u32 %v34, 7
  %v36 = vsub.s32 0, %v35
  %v37 = vrot.slane %v32, %v36
  %v43 = vunpack.c.l.b16 %v24
  %v44 = vunpack.c.l.b16 %v25
  %v45 = vunpack.c.l.b16 %v26
  %v46 = vunpack.c.l.b16 %v27
  %v47 = vpack.c.b16 %v44, %v43
  %v48 = vpack.c.b16 %v46, %v45
  %v53 = vunpack.c.l.b16 %v28
  %v54 = vunpack.c.l.b16 %v29
  %v55 = vunpack.c.l.b16 %v30
  %v56 = vunpack.c.l.b16 %v31
  %v57 = vpack.c.b16 %v54, %v53
  %v58 = vpack.c.b16 %v56, %v55
  %vm61 = vcmask 261120
  %v63 = vsel %vm61, %v47, 0
  %v66 = vsel %vm61, %v48, 0
  %68 = vmatprep.subr.bf16.mxu0 0
  %69 = vmatpush1.bf16.msra.mxu0 %v57
  %70 = vmatprep.subr.bf16.mxu0 0
  %71 = vmatpush1.bf16.msra.mxu0 %v58
  %72 = vmatprep.subr.bf16.mxu0 0
  %73 = vmatpush1.bf16.msra.mxu0 0
  %74 = vmatprep.subr.bf16.mxu0 0
  %75 = vmatpush1.bf16.msra.mxu0 0
  %76 = vmatprep.subr.bf16.mxu0 0
  %77 = vmatpush1.bf16.msra.mxu0 0
  %78 = vmatprep.subr.bf16.mxu0 0
  %79 = vmatpush1.bf16.msra.mxu0 0
  %80 = vmatprep.subr.bf16.mxu0 0
  %81 = vmatpush1.bf16.msra.mxu0 0
  %82 = vmatprep.subr.bf16.mxu0 0
  %83 = vmatpush1.bf16.msra.mxu0 0
  %84 = vmatprep.subr.bf16.mxu0 0
  %85 = vmatpush1.bf16.msra.mxu0 0
  %86 = vmatprep.subr.bf16.mxu0 0
  %87 = vmatpush1.bf16.msra.mxu0 0
  %88 = vmatprep.subr.bf16.mxu0 0
  %89 = vmatpush1.bf16.msra.mxu0 0
  %90 = vmatprep.subr.bf16.mxu0 0
  %91 = vmatpush1.bf16.msra.mxu0 0
  %92 = vmatprep.subr.bf16.mxu0 0
  %93 = vmatpush1.bf16.msra.mxu0 0
  %94 = vmatprep.subr.bf16.mxu0 0
  %95 = vmatpush1.bf16.msra.mxu0 0
  %96 = vmatprep.subr.bf16.mxu0 0
  %97 = vmatpush1.bf16.msra.mxu0 0
  %98 = vmatprep.subr.bf16.mxu0 0
  %99 = vmatpush1.bf16.msra.mxu0 0
  %100 = vmatprep.mubr.bf16.mxu0 0
  %101 = vmatmul.mubr.bf16.gmra.mrb[0].mxu0 %v63
  %v102 = vpop.f32.mrb[0].mxu0
  %v103 = vadd.f32 %v37, %v102
  %v104 = vpop.f32.mrb[0].mxu0
  %v105 = vpop.f32.mrb[0].mxu0
  %v106 = vadd.f32 %v37, %v105
  %v107 = vpop.f32.mrb[0].mxu0
  %108 = vmatprep.mubr.bf16.mxu0 0
  %109 = vmatmul.mubr.bf16.gmra.mrb[0].mxu0 %v66
  %v110 = vpop.f32.mrb[0].mxu0
  %v111 = vadd.f32 %v37, %v110
  %v112 = vpop.f32.mrb[0].mxu0
  %v113 = vpop.f32.mrb[0].mxu0
  %v114 = vadd.f32 %v37, %v113
  %v115 = vpop.f32.mrb[0].mxu0
  %116 = vdwg.mxu0
  %v117 = vld [vmem:[%s3] sm:$0xf]
  %v118 = vld [vmem:[%s3 + $0x4] sm:$0xf]
  %v119 = vld [vmem:[%s3 + $0x8] sm:$0xf]
  %v120 = vld [vmem:[%s3 + $0xc] sm:$0xf]
  %v121 = vunpack.c.l.bf16 %v117
  %v122 = vunpack.c.l.bf16 %v118
  %v123 = vunpack.c.l.bf16 %v119
  %v124 = vunpack.c.l.bf16 %v120
  %v125 = vadd.f32 %v103, %v121
  %v126 = vadd.f32 %v106, %v122
  %v127 = vadd.f32 %v111, %v123
  %v128 = vadd.f32 %v114, %v124
  %v129 = vsel %vm61, %v125, 0.0
  %130 = vadd.xlane.f32.xlu0 %v129
  %v131 = vpop.xlane.xlu0 %130
  %v132 = vsel %vm61, %v126, 0.0
  %133 = vadd.xlane.f32.xlu0 %v132
  %v134 = vpop.xlane.xlu0 %133
  %v135 = vsel %vm61, %v127, 0.0
  %136 = vadd.xlane.f32.xlu0 %v135
  %v137 = vpop.xlane.xlu0 %136
  %v138 = vsel %vm61, %v128, 0.0
  %139 = vadd.xlane.f32.xlu0 %v138
  %v140 = vpop.xlane.xlu0 %139
  %v141 = vrcp.pop 32.0
  %v142 = vmul.f32 %v131, %v141
  %v143 = vmul.f32 %v134, %v141
  %v144 = vmul.f32 %v137, %v141
  %v145 = vmul.f32 %v140, %v141
  %v146 = vsub.f32 %v125, %v142
  %v147 = vsub.f32 %v126, %v143
  %v148 = vsub.f32 %v127, %v144
  %v149 = vsub.f32 %v128, %v145
  %v150 = vmul.f32 %v146, %v146
  %v151 = vmul.f32 %v147, %v147
  %v152 = vmul.f32 %v148, %v148
  %v153 = vmul.f32 %v149, %v149
  %v154 = vsel %vm61, %v150, 0.0
  %155 = vadd.xlane.f32.xlu0 %v154
  %v156 = vpop.xlane.xlu0 %155
  %v157 = vsel %vm61, %v151, 0.0
  %158 = vadd.xlane.f32.xlu0 %v157
  %v159 = vpop.xlane.xlu0 %158
  %v160 = vsel %vm61, %v152, 0.0
  %161 = vadd.xlane.f32.xlu0 %v160
  %v162 = vpop.xlane.xlu0 %161
  %v163 = vsel %vm61, %v153, 0.0
  %164 = vadd.xlane.f32.xlu0 %v163
  %v165 = vpop.xlane.xlu0 %164
  %v166 = vmul.f32 %v156, %v141
  %v167 = vmul.f32 %v159, %v141
  %v168 = vmul.f32 %v162, %v141
  %v169 = vmul.f32 %v165, %v141
  %v170 = vadd.f32 %v166, 1e-12
  %v171 = vadd.f32 %v167, 1e-12
  %v172 = vadd.f32 %v168, 1e-12
  %v173 = vadd.f32 %v169, 1e-12
  %v174 = vrsqrt.pop %v170
  %v175 = vrsqrt.pop %v171
  %v176 = vrsqrt.pop %v172
  %v177 = vrsqrt.pop %v173
  %v178 = vmul.f32 %v146, %v174
  %v179 = vmul.f32 %v147, %v175
  %v180 = vmul.f32 %v148, %v176
  %v181 = vmul.f32 %v149, %v177
  %v182 = vld [vmem:[%s4] sm:$0x1]
  %v184 = vlaneseq
  %v185 = vshrl.u32 %v184, 7
  %v186 = vsub.s32 0, %v185
  %v187 = vrot.slane %v182, %v186
  %v189 = vmul.f32 %v178, %v187
  %v190 = vmul.f32 %v179, %v187
  %v191 = vmul.f32 %v180, %v187
  %v192 = vmul.f32 %v181, %v187
  %v193 = vld [vmem:[%s5] sm:$0x1]
  %v195 = vlaneseq
  %v196 = vshrl.u32 %v195, 7
  %v197 = vsub.s32 0, %v196
  %v198 = vrot.slane %v193, %v197
  %v200 = vadd.f32 %v189, %v198
  %v201 = vadd.f32 %v190, %v198
  %v202 = vadd.f32 %v191, %v198
  %v203 = vadd.f32 %v192, %v198
  %v204 = vpack.c.bf16 %v201, %v200
  %v205 = vpack.c.bf16 %v203, %v202
  %v208 = vunpack.c.l.b16 %v204
  %v209 = vunpack.c.h.b16 %v204
  %v210 = vunpack.c.l.b16 %v205
  %v211 = vunpack.c.h.b16 %v205
  %v212 = vpack.c.b16 %v208, %v208
  %v213 = vpack.c.b16 %v209, %v209
  %v214 = vpack.c.b16 %v210, %v210
  %v215 = vpack.c.b16 %v211, %v211
  %vm220 = vcmask 257024
  %221 = vst.msk [vmem:[%s6] sm:$0xf] %vm220, %v212
  %222 = vst.msk [vmem:[%s6 + $0x4] sm:$0xf] %vm220, %v213
  %223 = vst.msk [vmem:[%s6 + $0x8] sm:$0xf] %vm220, %v214
  %224 = vst.msk [vmem:[%s6 + $0xc] sm:$0xf] %vm220, %v215
  // Predicated region
  $region26: #{bert_country_forward.19} parent=0 // pred_check
    _
  $region27: #{bert_country_forward.19} parent=0 // pred_check_branch
    %226 = sbr.rel (0) target = $region29
  $region28: #{bert_country_forward.19} parent=0 // pred_region
    _
  $region29: #{bert_country_forward.19} parent=0 // pred_fallthru
    _
  // Predicated region
  $region30: #{bert_country_forward.19} parent=0 // pred_check
    _
  $region31: #{bert_country_forward.19} parent=0 // pred_check_branch
    %228 = sbr.rel (0) target = $region33
  $region32: #{bert_country_forward.19} parent=0 // pred_region
    _
  $region33: #{bert_country_forward.19} parent=0 // pred_fallthru
    _

// kernel: bert_country_forward.17
$region0: #{bert_country_forward.17}
  #allocation0 [shape = 'u32[]', space=smem, size = 0x4, offset = 0x4, fixed_abs, tag = 'smem constant byte address 0x4 - core index']
  #allocation1 [shape = 'u32[144,128]{1,0:T(1,128)}', space=vmem, size = 0x12000, scoped, tag = 'internal scratch']
  %s0 = inlined_call_operand.vmem [shape: bf16[32,32], index: 0, kind: input, shape index: {}]
  %s1 = inlined_call_operand.vmem [shape: bf16[32,96], index: 1, kind: input, shape index: {}]
  %s2 = inlined_call_operand.vmem [shape: f32[1,96], index: 2, kind: input, shape index: {}]
  %s3 = inlined_call_operand.vmem [shape: bf16[32,96], index: 3, kind: output, shape index: {}]
  %s4 = sld [smem:[#allocation0]]
  $region22: #{bert_country_forward.17} parent=0
    _
  %s6 = ssub.s32 1, %s4
  %s7 = scalar_select 0, %s6, %s4
  // Predicated region
  $region2: #{bert_country_forward.17} parent=0 // pred_check
    _
  $region3: #{bert_country_forward.17} parent=0 // pred_check_branch
    %9 = sbr.rel (0) target = $region5
  $region4: #{bert_country_forward.17} parent=0 // pred_region
    _
  $region5: #{bert_country_forward.17} parent=0 // pred_fallthru
    _
  // Predicated region
  $region6: #{bert_country_forward.17} parent=0 // pred_check
    _
  $region7: #{bert_country_forward.17} parent=0 // pred_check_branch
    %11 = sbr.rel (0) target = $region9
  $region8: #{bert_country_forward.17} parent=0 // pred_region
    _
  $region9: #{bert_country_forward.17} parent=0 // pred_fallthru
    _
  // Predicated region
  $region10: #{bert_country_forward.17} parent=0 // pred_check
    _
  $region11: #{bert_country_forward.17} parent=0 // pred_check_branch
    %13 = sbr.rel (0) target = $region13
  $region12: #{bert_country_forward.17} parent=0 // pred_region
    _
  $region13: #{bert_country_forward.17} parent=0 // pred_fallthru
    _
  %v15 = vld [vmem:[%s0] sm:$0xf]
  %v16 = vld [vmem:[%s0 + $0x4] sm:$0xf]
  %v17 = vld [vmem:[%s0 + $0x8] sm:$0xf]
  %v18 = vld [vmem:[%s0 + $0xc] sm:$0xf]
  %v19 = vld [vmem:[%s1] sm:$0xf]
  %v20 = vld [vmem:[%s1 + $0x4] sm:$0xf]
  %v21 = vld [vmem:[%s1 + $0x8] sm:$0xf]
  %v22 = vld [vmem:[%s1 + $0xc] sm:$0xf]
  %v23 = vld [vmem:[%s2] sm:$0x1]
  %v25 = vlaneseq
  %v26 = vshrl.u32 %v25, 7
  %v27 = vsub.s32 0, %v26
  %v28 = vrot.slane %v23, %v27
  %v34 = vunpack.c.l.b16 %v15
  %v35 = vunpack.c.l.b16 %v16
  %v36 = vunpack.c.l.b16 %v17
  %v37 = vunpack.c.l.b16 %v18
  %v38 = vpack.c.b16 %v35, %v34
  %v39 = vpack.c.b16 %v37, %v36
  %v44 = vunpack.c.l.b16 %v19
  %v45 = vunpack.c.l.b16 %v20
  %v46 = vunpack.c.l.b16 %v21
  %v47 = vunpack.c.l.b16 %v22
  %v48 = vpack.c.b16 %v45, %v44
  %v49 = vpack.c.b16 %v47, %v46
  %vm52 = vcmask 261120
  %v54 = vsel %vm52, %v38, 0
  %v57 = vsel %vm52, %v39, 0
  %59 = vmatprep.subr.bf16.mxu0 0
  %60 = vmatpush1.bf16.msra.mxu0 %v48
  %61 = vmatprep.subr.bf16.mxu0 0
  %62 = vmatpush1.bf16.msra.mxu0 %v49
  %63 = vmatprep.subr.bf16.mxu0 0
  %64 = vmatpush1.bf16.msra.mxu0 0
  %65 = vmatprep.subr.bf16.mxu0 0
  %66 = vmatpush1.bf16.msra.mxu0 0
  %67 = vmatprep.subr.bf16.mxu0 0
  %68 = vmatpush1.bf16.msra.mxu0 0
  %69 = vmatprep.subr.bf16.mxu0 0
  %70 = vmatpush1.bf16.msra.mxu0 0
  %71 = vmatprep.subr.bf16.mxu0 0
  %72 = vmatpush1.bf16.msra.mxu0 0
  %73 = vmatprep.subr.bf16.mxu0 0
  %74 = vmatpush1.bf16.msra.mxu0 0
  %75 = vmatprep.subr.bf16.mxu0 0
  %76 = vmatpush1.bf16.msra.mxu0 0
  %77 = vmatprep.subr.bf16.mxu0 0
  %78 = vmatpush1.bf16.msra.mxu0 0
  %79 = vmatprep.subr.bf16.mxu0 0
  %80 = vmatpush1.bf16.msra.mxu0 0
  %81 = vmatprep.subr.bf16.mxu0 0
  %82 = vmatpush1.bf16.msra.mxu0 0
  %83 = vmatprep.subr.bf16.mxu0 0
  %84 = vmatpush1.bf16.msra.mxu0 0
  %85 = vmatprep.subr.bf16.mxu0 0
  %86 = vmatpush1.bf16.msra.mxu0 0
  %87 = vmatprep.subr.bf16.mxu0 0
  %88 = vmatpush1.bf16.msra.mxu0 0
  %89 = vmatprep.subr.bf16.mxu0 0
  %90 = vmatpush1.bf16.msra.mxu0 0
  %91 = vmatprep.mubr.bf16.mxu0 0
  %92 = vmatmul.mubr.bf16.gmra.mrb[0].mxu0 %v54
  %v93 = vpop.f32.mrb[0].mxu0
  %v94 = vadd.f32 %v28, %v93
  %v95 = vpop.f32.mrb[0].mxu0
  %v96 = vpop.f32.mrb[0].mxu0
  %v97 = vadd.f32 %v28, %v96
  %v98 = vpop.f32.mrb[0].mxu0
  %99 = vmatprep.mubr.bf16.mxu0 0
  %100 = vmatmul.mubr.bf16.gmra.mrb[0].mxu0 %v57
  %v101 = vpop.f32.mrb[0].mxu0
  %v102 = vadd.f32 %v28, %v101
  %v103 = vpop.f32.mrb[0].mxu0
  %v104 = vpop.f32.mrb[0].mxu0
  %v105 = vadd.f32 %v28, %v104
  %v106 = vpop.f32.mrb[0].mxu0
  %107 = vdwg.mxu0
  %v108 = vpack.c.bf16 %v97, %v94
  %v109 = vpack.c.bf16 %v105, %v102
  %v112 = vunpack.c.l.b16 %v108
  %v113 = vunpack.c.h.b16 %v108
  %v114 = vunpack.c.l.b16 %v109
  %v115 = vunpack.c.h.b16 %v109
  %v116 = vpack.c.b16 %v112, %v112
  %v117 = vpack.c.b16 %v113, %v113
  %v118 = vpack.c.b16 %v114, %v114
  %v119 = vpack.c.b16 %v115, %v115
  %vm124 = vcmask 781312
  %125 = vst.msk [vmem:[%s3] sm:$0xf] %vm124, %v116
  %126 = vst.msk [vmem:[%s3 + $0x4] sm:$0xf] %vm124, %v117
  %127 = vst.msk [vmem:[%s3 + $0x8] sm:$0xf] %vm124, %v118
  %128 = vst.msk [vmem:[%s3 + $0xc] sm:$0xf] %vm124, %v119
  // Predicated region
  $region14: #{bert_country_forward.17} parent=0 // pred_check
    _
  $region15: #{bert_country_forward.17} parent=0 // pred_check_branch
    %130 = sbr.rel (0) target = $region17
  $region16: #{bert_country_forward.17} parent=0 // pred_region
    _
  $region17: #{bert_country_forward.17} parent=0 // pred_fallthru
    _
  // Predicated region
  $region18: #{bert_country_forward.17} parent=0 // pred_check
    _
  $region19: #{bert_country_forward.17} parent=0 // pred_check_branch
    %132 = sbr.rel (0) target = $region21
  $region20: #{bert_country_forward.17} parent=0 // pred_region
    _
  $region21: #{bert_country_forward.17} parent=0 // pred_fallthru
    _

// kernel: bert_country_forward.16
$region0: #{bert_country_forward.16}
  #allocation0 [shape = 'u32[]', space=smem, size = 0x4, offset = 0x4, fixed_abs, tag = 'smem constant byte address 0x4 - core index']
  #allocation1 [shape = 'u32[144,128]{1,0:T(1,128)}', space=vmem, size = 0x12000, scoped, tag = 'internal scratch']
  %s0 = inlined_call_operand.vmem [shape: f32[32,32], index: 0, kind: input, shape index: {}]
  %s1 = inlined_call_operand.vmem [shape: f32[1,32], index: 1, kind: input, shape index: {}]
  %s2 = inlined_call_operand.vmem [shape: f32[1,32], index: 2, kind: input, shape index: {}]
  %s3 = inlined_call_operand.vmem [shape: bf16[32,32], index: 3, kind: output, shape index: {}]
  %s4 = sld [smem:[#allocation0]]
  $region22: #{bert_country_forward.16} parent=0
    _
  %s6 = ssub.s32 1, %s4
  %s7 = scalar_select 0, %s6, %s4
  // Predicated region
  $region2: #{bert_country_forward.16} parent=0 // pred_check
    _
  $region3: #{bert_country_forward.16} parent=0 // pred_check_branch
    %9 = sbr.rel (0) target = $region5
  $region4: #{bert_country_forward.16} parent=0 // pred_region
    _
  $region5: #{bert_country_forward.16} parent=0 // pred_fallthru
    _
  // Predicated region
  $region6: #{bert_country_forward.16} parent=0 // pred_check
    _
  $region7: #{bert_country_forward.16} parent=0 // pred_check_branch
    %11 = sbr.rel (0) target = $region9
  $region8: #{bert_country_forward.16} parent=0 // pred_region
    _
  $region9: #{bert_country_forward.16} parent=0 // pred_fallthru
    _
  // Predicated region
  $region10: #{bert_country_forward.16} parent=0 // pred_check
    _
  $region11: #{bert_country_forward.16} parent=0 // pred_check_branch
    %13 = sbr.rel (0) target = $region13
  $region12: #{bert_country_forward.16} parent=0 // pred_region
    _
  $region13: #{bert_country_forward.16} parent=0 // pred_fallthru
    _
  %v14 = vld [vmem:[%s0] sm:$0xff]
  %v15 = vld [vmem:[%s0 + $0x8] sm:$0xff]
  %v16 = vld [vmem:[%s0 + $0x10] sm:$0xff]
  %v17 = vld [vmem:[%s0 + $0x18] sm:$0xff]
  %vm18 = vcmask 261120
  %v19 = vsel %vm18, %v14, 0.0
  %20 = vadd.xlane.f32.xlu0 %v19
  %v21 = vpop.xlane.xlu0 %20
  %v22 = vsel %vm18, %v15, 0.0
  %23 = vadd.xlane.f32.xlu0 %v22
  %v24 = vpop.xlane.xlu0 %23
  %v25 = vsel %vm18, %v16, 0.0
  %26 = vadd.xlane.f32.xlu0 %v25
  %v27 = vpop.xlane.xlu0 %26
  %v28 = vsel %vm18, %v17, 0.0
  %29 = vadd.xlane.f32.xlu0 %v28
  %v30 = vpop.xlane.xlu0 %29
  %v31 = vrcp.pop 32.0
  %v32 = vmul.f32 %v21, %v31
  %v33 = vmul.f32 %v24, %v31
  %v34 = vmul.f32 %v27, %v31
  %v35 = vmul.f32 %v30, %v31
  %v36 = vsub.f32 %v14, %v32
  %v37 = vsub.f32 %v15, %v33
  %v38 = vsub.f32 %v16, %v34
  %v39 = vsub.f32 %v17, %v35
  %v40 = vmul.f32 %v36, %v36
  %v41 = vmul.f32 %v37, %v37
  %v42 = vmul.f32 %v38, %v38
  %v43 = vmul.f32 %v39, %v39
  %v44 = vsel %vm18, %v40, 0.0
  %45 = vadd.xlane.f32.xlu0 %v44
  %v46 = vpop.xlane.xlu0 %45
  %v47 = vsel %vm18, %v41, 0.0
  %48 = vadd.xlane.f32.xlu0 %v47
  %v49 = vpop.xlane.xlu0 %48
  %v50 = vsel %vm18, %v42, 0.0
  %51 = vadd.xlane.f32.xlu0 %v50
  %v52 = vpop.xlane.xlu0 %51
  %v53 = vsel %vm18, %v43, 0.0
  %54 = vadd.xlane.f32.xlu0 %v53
  %v55 = vpop.xlane.xlu0 %54
  %v56 = vmul.f32 %v46, %v31
  %v57 = vmul.f32 %v49, %v31
  %v58 = vmul.f32 %v52, %v31
  %v59 = vmul.f32 %v55, %v31
  %v60 = vadd.f32 %v56, 1e-12
  %v61 = vadd.f32 %v57, 1e-12
  %v62 = vadd.f32 %v58, 1e-12
  %v63 = vadd.f32 %v59, 1e-12
  %v64 = vrsqrt.pop %v60
  %v65 = vrsqrt.pop %v61
  %v66 = vrsqrt.pop %v62
  %v67 = vrsqrt.pop %v63
  %v68 = vmul.f32 %v36, %v64
  %v69 = vmul.f32 %v37, %v65
  %v70 = vmul.f32 %v38, %v66
  %v71 = vmul.f32 %v39, %v67
  %v72 = vld [vmem:[%s1] sm:$0x1]
  %v74 = vlaneseq
  %v75 = vshrl.u32 %v74, 7
  %v76 = vsub.s32 0, %v75
  %v77 = vrot.slane %v72, %v76
  %v79 = vmul.f32 %v68, %v77
  %v80 = vmul.f32 %v69, %v77
  %v81 = vmul.f32 %v70, %v77
  %v82 = vmul.f32 %v71, %v77
  %v83 = vld [vmem:[%s2] sm:$0x1]
  %v85 = vlaneseq
  %v86 = vshrl.u32 %v85, 7
  %v87 = vsub.s32 0, %v86
  %v88 = vrot.slane %v83, %v87
  %v90 = vadd.f32 %v79, %v88
  %v91 = vadd.f32 %v80, %v88
  %v92 = vadd.f32 %v81, %v88
  %v93 = vadd.f32 %v82, %v88
  %v94 = vpack.c.bf16 %v91, %v90
  %v95 = vpack.c.bf16 %v93, %v92
  %v98 = vunpack.c.l.b16 %v94
  %v99 = vunpack.c.h.b16 %v94
  %v100 = vunpack.c.l.b16 %v95
  %v101 = vunpack.c.h.b16 %v95
  %v102 = vpack.c.b16 %v98, %v98
  %v103 = vpack.c.b16 %v99, %v99
  %v104 = vpack.c.b16 %v100, %v100
  %v105 = vpack.c.b16 %v101, %v101
  %vm110 = vcmask 257024
  %111 = vst.msk [vmem:[%s3] sm:$0xf] %vm110, %v102
  %112 = vst.msk [vmem:[%s3 + $0x4] sm:$0xf] %vm110, %v103
  %113 = vst.msk [vmem:[%s3 + $0x8] sm:$0xf] %vm110, %v104
  %114 = vst.msk [vmem:[%s3 + $0xc] sm:$0xf] %vm110, %v105
  // Predicated region
  $region14: #{bert_country_forward.16} parent=0 // pred_check
    _
  $region15: #{bert_country_forward.16} parent=0 // pred_check_branch
    %116 = sbr.rel (0) target = $region17
  $region16: #{bert_country_forward.16} parent=0 // pred_region
    _
  $region17: #{bert_country_forward.16} parent=0 // pred_fallthru
    _
  // Predicated region
  $region18: #{bert_country_forward.16} parent=0 // pred_check
    _
  $region19: #{bert_country_forward.16} parent=0 // pred_check_branch
    %118 = sbr.rel (0) target = $region21
  $region20: #{bert_country_forward.16} parent=0 // pred_region
    _
  $region21: #{bert_country_forward.16} parent=0 // pred_fallthru
    _

// kernel: bert_country_forward.18
$region0: #{bert_country_forward.18}
  #allocation0 [shape = 'u32[]', space=smem, size = 0x4, offset = 0x4, fixed_abs, tag = 'smem constant byte address 0x4 - core index']
  #allocation1 [shape = 'u32[144,128]{1,0:T(1,128)}', space=vmem, size = 0x12000, scoped, tag = 'internal scratch']
  %s0 = inlined_call_operand.vmem [shape: bf16[2,16,96], index: 0, kind: input, shape index: {}]
  %s1 = inlined_call_operand.vmem [shape: f32[2,1,16], index: 1, kind: input, shape index: {}]
  %s2 = inlined_call_operand.vmem [shape: bf16[2,16,32], index: 2, kind: output, shape index: {}]
  %s3 = sld [smem:[#allocation0]]
  $region41: #{bert_country_forward.18} parent=0
    _
  %s5 = ssub.s32 1, %s3
  %s6 = scalar_select 0, %s5, %s3
  loop: start=0, step=1, limit=4
  $region2: #{bert_country_forward.18} parent=0 // loop_pre_header
    _
  $region3: #{bert_country_forward.18} parent=0 // loop_header
    %s8 = sphi 0, %s12
    %p9 = scmp.ge.s32.totalorder %s8, 4
    %s18 = sphi 0, %s20
    %s21 = sphi 0, %s18
    %s22 = sphi 0, %s21
    %s38 = sphi 0, %s22
    %s44 = sphi 0, %s46
    %s47 = sphi 0, %s44
    %s48 = sphi 0, %s47
    %s64 = sphi 0, %s48
    %s70 = sphi 0, %s72
    %s73 = sphi 0, %s70
    %s74 = sphi 0, %s73
    %s90 = sphi 0, %s74
  $region4: #{bert_country_forward.18} parent=0 // loop_header_branch
    %11 = sbr.rel (%p9) target = $region8
  $region5: #{bert_country_forward.18} parent=0 // loop_body
    %s13 = ssub.s32 %s8, 1
    %s14 = ssub.s32 %s8, 2
    %s15 = sadd.s32 %s8, 1
    %s16 = ssub.s32 %s8, %s15
    %p17 = scmp.eq.s32.totalorder %s16, 0
    %s19 = sadd.s32 %s18, 1
    %s20 = scalar_select %p17, %s18, %s19
    %p23 = pneg %p17
    %p24 = scmp.eq.s32.totalorder %s8, 1
    %p25 = por %p23, %p24
    %p26 = scmp.ne.s32.totalorder %s18, %s21
    %p27 = scmp.eq.s32.totalorder %s8, 0
    %p28 = por %p26, %p27
    %p29 = scmp.ne.s32.totalorder %s18, %s21
    %p30 = scmp.eq.s32.totalorder %s13, 1
    %p31 = por %p29, %p30
    %p32 = scmp.ne.s32.totalorder %s21, %s22
    %p33 = scmp.eq.s32.totalorder %s13, 0
    %p34 = por %p32, %p33
    %p35 = scmp.ne.s32.totalorder %s21, %s22
    %p36 = scmp.eq.s32.totalorder %s14, 1
    %p37 = por %p35, %p36
    %p39 = scmp.ne.s32.totalorder %s22, %s38
    %p40 = scmp.eq.s32.totalorder %s14, 0
    %p41 = por %p39, %p40
    %s42 = ssub.s32 %s8, %s15
    %p43 = scmp.eq.s32.totalorder %s42, 0
    %s45 = sadd.s32 %s44, 1
    %s46 = scalar_select %p43, %s44, %s45
    %p49 = pneg %p43
    %p50 = scmp.eq.s32.totalorder %s8, 1
    %p51 = por %p49, %p50
    %p52 = scmp.ne.s32.totalorder %s44, %s47
    %p53 = scmp.eq.s32.totalorder %s8, 0
    %p54 = por %p52, %p53
    %p55 = scmp.ne.s32.totalorder %s44, %s47
    %p56 = scmp.eq.s32.totalorder %s13, 1
    %p57 = por %p55, %p56
    %p58 = scmp.ne.s32.totalorder %s47, %s48
    %p59 = scmp.eq.s32.totalorder %s13, 0
    %p60 = por %p58, %p59
    %p61 = scmp.ne.s32.totalorder %s47, %s48
    %p62 = scmp.eq.s32.totalorder %s14, 1
    %p63 = por %p61, %p62
    %p65 = scmp.ne.s32.totalorder %s48, %s64
    %p66 = scmp.eq.s32.totalorder %s14, 0
    %p67 = por %p65, %p66
    %s68 = ssub.s32 %s8, %s15
    %p69 = scmp.eq.s32.totalorder %s68, 0
    %s71 = sadd.s32 %s70, 1
    %s72 = scalar_select %p69, %s70, %s71
    %p75 = pneg %p69
    %p76 = scmp.eq.s32.totalorder %s8, 1
    %p77 = por %p75, %p76
    %p78 = scmp.ne.s32.totalorder %s70, %s73
    %p79 = scmp.eq.s32.totalorder %s8, 0
    %p80 = por %p78, %p79
    %p81 = scmp.ne.s32.totalorder %s70, %s73
    %p82 = scmp.eq.s32.totalorder %s13, 1
    %p83 = por %p81, %p82
    %p84 = scmp.ne.s32.totalorder %s73, %s74
    %p85 = scmp.eq.s32.totalorder %s13, 0
    %p86 = por %p84, %p85
    %p87 = scmp.ne.s32.totalorder %s73, %s74
    %p88 = scmp.eq.s32.totalorder %s14, 1
    %p89 = por %p87, %p88
    %p91 = scmp.ne.s32.totalorder %s74, %s90
    %p92 = scmp.eq.s32.totalorder %s14, 0
    %p93 = por %p91, %p92
    %p94 = scmp.le.s32.totalorder 1, %s8
    %p95 = scmp.lt.s32.totalorder %s8, 3
    %p96 = pnand %p94, %p95
    %p97 = pneg %p96
    // Predicated region
    $region9: #{bert_country_forward.18} parent=5 // pred_check
      _
    $region10: #{bert_country_forward.18} parent=5 // pred_check_branch
      %99 = sbr.rel (%p96) target = $region12
    $region11: #{bert_country_forward.18} parent=5 // pred_region
      %s100 = ssub.s32 %s8, 1
    $region12: #{bert_country_forward.18} parent=5 // pred_fallthru
      _
    %p101 = scmp.lt.s32.totalorder %s8, 2
    // Predicated region
    $region13: #{bert_country_forward.18} parent=5 // pred_check
      %p102 = pneg %p101
    $region14: #{bert_country_forward.18} parent=5 // pred_check_branch
      %104 = sbr.rel (%p102) target = $region16
    $region15: #{bert_country_forward.18} parent=5 // pred_region
      // Predicated region
      $region17: #{bert_country_forward.18} parent=15 // pred_check
        %p105 = pneg %p28
      $region18: #{bert_country_forward.18} parent=15 // pred_check_branch
        %107 = sbr.rel (%p105) target = $region20
      $region19: #{bert_country_forward.18} parent=15 // pred_region
        %p108 = scmp.lt.s32.totalorder %s8, 1
        %s109 = scalar_select %p108, %s8, 1
        %s110 = smul.addr %s109, 2
        %s111 = smul.addr %s110, 4
        %s112 = scalar_lea.vmem %s0, %s111
      $region20: #{bert_country_forward.18} parent=15 // pred_fallthru
        _
      // Predicated region
      $region21: #{bert_country_forward.18} parent=15 // pred_check
        %p113 = pneg %p54
      $region22: #{bert_country_forward.18} parent=15 // pred_check_branch
        %115 = sbr.rel (%p113) target = $region24
      $region23: #{bert_country_forward.18} parent=15 // pred_region
        %p116 = scmp.lt.s32.totalorder %s8, 1
        %s117 = scalar_select %p116, %s8, 1
        %s118 = scalar_lea.vmem %s1, %s117
      $region24: #{bert_country_forward.18} parent=15 // pred_fallthru
        _
    $region16: #{bert_country_forward.18} parent=5 // pred_fallthru
      _
    %p119 = scmp.le.s32.totalorder 1, %s8
    %p120 = scmp.lt.s32.totalorder %s8, 3
    %p121 = pnand %p119, %p120
    %p122 = pneg %p121
    // Predicated region
    $region25: #{bert_country_forward.18} parent=5 // pred_check
      _
    $region26: #{bert_country_forward.18} parent=5 // pred_check_branch
      %124 = sbr.rel (%p121) target = $region28
    $region27: #{bert_country_forward.18} parent=5 // pred_region
      %s125 = ssub.s32 %s8, 1
      %p126 = scmp.lt.s32.totalorder %s13, 1
      %s127 = scalar_select %p126, %s13, 1
      %s128 = smul.addr %s127, 2
      %s129 = smul.addr %s128, 4
      %s130 = scalar_lea.vmem %s0, %s129
      %p131 = pneg %p34
      %p132 = pneg %p31
      %p133 = scmp.lt.s32.totalorder %s13, 1
      %s134 = scalar_select %p133, %s13, 1
      %s135 = scalar_lea.vmem %s1, %s134
      %p136 = pneg %p60
      %p137 = pneg %p57
      %p138 = pneg %p86
      %p139 = pneg %p83
      %p140 = scmp.lt.s32.totalorder %s13, 1
      %s141 = scalar_select %p140, %s13, 1
      %s142 = smul.addr %s141, 2
      %s143 = smul.addr %s142, 4
      %s144 = scalar_lea.vmem %s2, %s143
      %p145 = scmp.lt.s32.totalorder %s13, 1
      %s146 = scalar_select %p145, %s13, 1
      %s147 = smul.addr %s146, 2
      %s148 = smul.addr %s147, 4
      %s149 = scalar_lea.vmem %s0, %s148
      %p150 = scmp.lt.s32.totalorder %s13, 1
      %s151 = scalar_select %p150, %s13, 1
      %s152 = scalar_lea.vmem %s1, %s151
      %p153 = scmp.lt.s32.totalorder %s13, 1
      %s154 = scalar_select %p153, %s13, 1
      %s155 = smul.addr %s154, 2
      %s156 = smul.addr %s155, 4
      %s157 = scalar_lea.vmem %s2, %s156
      %v159 = vld [vmem:[%s152] sm:$0x1]
      %v160 = vld [vmem:[%s149] sm:$0xf]
      %v161 = vld [vmem:[%s149 + $0x4] sm:$0xf]
      %v164 = vunpack.c.l.b16 %v160
      %v165 = vunpack.c.l.b16 %v161
      %v166 = vpack.c.b16 %v165, %v164
      %167 = vrot.lane.b32.xlu0 %v166, 96
      %v168 = vpop.permute.xlu0 %167
      %vm169 = vcmask 64512
      %v171 = vsel %vm169, %v166, 0
      %v174 = vsel %vm169, %v168, 0
      %176 = vmatprep.subr.bf16.mxu0 0
      %177 = vmatpush1.bf16.xpose.msra.mxu0 %v174
      %178 = vmatprep.subr.bf16.mxu0 0
      %179 = vmatpush1.bf16.xpose.msra.mxu0 0
      %180 = vmatprep.subr.bf16.mxu0 0
      %181 = vmatpush1.bf16.xpose.msra.mxu0 0
      %182 = vmatprep.subr.bf16.mxu0 0
      %183 = vmatpush1.bf16.xpose.msra.mxu0 0
      %184 = vmatprep.subr.bf16.mxu0 0
      %185 = vmatpush1.bf16.xpose.msra.mxu0 0
      %186 = vmatprep.subr.bf16.mxu0 0
      %187 = vmatpush1.bf16.xpose.msra.mxu0 0
      %188 = vmatprep.subr.bf16.mxu0 0
      %189 = vmatpush1.bf16.xpose.msra.mxu0 0
      %190 = vmatprep.subr.bf16.mxu0 0
      %191 = vmatpush1.bf16.xpose.msra.mxu0 0
      %192 = vmatprep.subr.bf16.mxu0 0
      %193 = vmatpush1.bf16.xpose.msra.mxu0 0
      %194 = vmatprep.subr.bf16.mxu0 0
      %195 = vmatpush1.bf16.xpose.msra.mxu0 0
      %196 = vmatprep.subr.bf16.mxu0 0
      %197 = vmatpush1.bf16.xpose.msra.mxu0 0
      %198 = vmatprep.subr.bf16.mxu0 0
      %199 = vmatpush1.bf16.xpose.msra.mxu0 0
      %200 = vmatprep.subr.bf16.mxu0 0
      %201 = vmatpush1.bf16.xpose.msra.mxu0 0
      %202 = vmatprep.subr.bf16.mxu0 0
      %203 = vmatpush1.bf16.xpose.msra.mxu0 0
      %204 = vmatprep.subr.bf16.mxu0 0
      %205 = vmatpush1.bf16.xpose.msra.mxu0 0
      %206 = vmatprep.subr.bf16.mxu0 0
      %207 = vmatpush1.bf16.xpose.msra.mxu0 0
      %208 = vmatprep.mubr.bf16.mxu0 0
      %209 = vmatmul.mubr.bf16.gmra.mrb[0].mxu0 %v171
      %v210 = vpop.f32.mrb[0].mxu0
      %v211 = vadd.f32 0.0, %v210
      %v212 = vpop.f32.mrb[0].mxu0
      %v213 = vpop.f32.mrb[0].mxu0
      %v214 = vadd.f32 0.0, %v213
      %v215 = vpop.f32.mrb[0].mxu0
      %216 = vdwg.mxu0
      %v217 = vmul.f32 %v211, 0.35355338
      %v218 = vmul.f32 %v214, 0.35355338
      %v220 = vlaneseq
      %v221 = vshrl.u32 %v220, 7
      %v222 = vsub.s32 0, %v221
      %v223 = vrot.slane %v159, %v222
      %v225 = vadd.f32 %v217, %v223
      %v226 = vadd.f32 %v218, %v223
      %vm227 = vcmask 130048
      %v228 = vsel %vm227, %v225, -inf
      %229 = vmax.xlane.f32.xlu0 %v228
      %v230 = vpop.xlane.xlu0 %229
      %v231 = vsel %vm227, %v226, -inf
      %232 = vmax.xlane.f32.xlu0 %v231
      %v233 = vpop.xlane.xlu0 %232
      %v234 = vsub.f32 %v225, %v230
      %v235 = vsub.f32 %v226, %v233
      %v236 = vmul.f32 %v234, 1.442695
      %v237 = vpow.pop %v236
      %v238 = vmul.f32 %v235, 1.442695
      %v239 = vpow.pop %v238
      %v240 = vsel %vm227, %v237, 0.0
      %241 = vadd.xlane.f32.xlu0 %v240
      %v242 = vpop.xlane.xlu0 %241
      %v243 = vsel %vm227, %v239, 0.0
      %244 = vadd.xlane.f32.xlu0 %v243
      %v245 = vpop.xlane.xlu0 %244
      %v246 = vrcp.pop %v242
      %v247 = vrcp.pop %v245
      %v248 = vmul.f32 %v237, %v246
      %v249 = vmul.f32 %v239, %v247
      %v250 = vpack.c.bf16 %v249, %v248
      %251 = vrot.lane.b32.xlu0 %v166, 64
      %v252 = vpop.permute.xlu0 %251
      %v255 = vsel %vm227, %v250, 0
      %257 = vmatprep.subr.bf16.mxu0 0
      %258 = vmatpush1.bf16.msra.mxu0 %v252
      %259 = vmatprep.subr.bf16.mxu0 0
      %260 = vmatpush1.bf16.msra.mxu0 0
      %261 = vmatprep.subr.bf16.mxu0 0
      %262 = vmatpush1.bf16.msra.mxu0 0
      %263 = vmatprep.subr.bf16.mxu0 0
      %264 = vmatpush1.bf16.msra.mxu0 0
      %265 = vmatprep.subr.bf16.mxu0 0
      %266 = vmatpush1.bf16.msra.mxu0 0
      %267 = vmatprep.subr.bf16.mxu0 0
      %268 = vmatpush1.bf16.msra.mxu0 0
      %269 = vmatprep.subr.bf16.mxu0 0
      %270 = vmatpush1.bf16.msra.mxu0 0
      %271 = vmatprep.subr.bf16.mxu0 0
      %272 = vmatpush1.bf16.msra.mxu0 0
      %273 = vmatprep.subr.bf16.mxu0 0
      %274 = vmatpush1.bf16.msra.mxu0 0
      %275 = vmatprep.subr.bf16.mxu0 0
      %276 = vmatpush1.bf16.msra.mxu0 0
      %277 = vmatprep.subr.bf16.mxu0 0
      %278 = vmatpush1.bf16.msra.mxu0 0
      %279 = vmatprep.subr.bf16.mxu0 0
      %280 = vmatpush1.bf16.msra.mxu0 0
      %281 = vmatprep.subr.bf16.mxu0 0
      %282 = vmatpush1.bf16.msra.mxu0 0
      %283 = vmatprep.subr.bf16.mxu0 0
      %284 = vmatpush1.bf16.msra.mxu0 0
      %285 = vmatprep.subr.bf16.mxu0 0
      %286 = vmatpush1.bf16.msra.mxu0 0
      %287 = vmatprep.subr.bf16.mxu0 0
      %288 = vmatpush1.bf16.msra.mxu0 0
      %289 = vmatprep.mubr.bf16.mxu0 0
      %290 = vmatmul.mubr.bf16.gmra.mrb[0].mxu0 %v255
      %v291 = vpop.f32.mrb[0].mxu0
      %v292 = vadd.f32 0.0, %v291
      %v293 = vpop.f32.mrb[0].mxu0
      %v294 = vpop.f32.mrb[0].mxu0
      %v295 = vadd.f32 0.0, %v294
      %v296 = vpop.f32.mrb[0].mxu0
      %297 = vdwg.mxu0
      %v298 = vpack.c.bf16 %v295, %v292
      %v300 = vunpack.c.l.b16 %v298
      %v301 = vunpack.c.h.b16 %v298
      %v302 = vpack.c.b16 %v300, %v300
      %v303 = vpack.c.b16 %v301, %v301
      %vm306 = vcmask 60416
      %307 = vst.msk [vmem:[%s157] sm:$0xf] %vm306, %v302
      %308 = vst.msk [vmem:[%s157 + $0x4] sm:$0xf] %vm306, %v303
      %v309 = vld [vmem:[%s149] sm:$0xf]
      %v310 = vld [vmem:[%s149 + $0x4] sm:$0xf]
      %v313 = vunpack.c.l.b16 %v309
      %v314 = vunpack.c.l.b16 %v310
      %v315 = vpack.c.b16 %v314, %v313
      %316 = vrot.lane.b32.xlu0 %v315, 120
      %v317 = vpop.permute.xlu0 %316
      %318 = vrot.lane.b32.xlu0 %v315, 88
      %v319 = vpop.permute.xlu0 %318
      %v321 = vsel %vm169, %v317, 0
      %v324 = vsel %vm169, %v319, 0
      %326 = vmatprep.subr.bf16.mxu0 0
      %327 = vmatpush1.bf16.xpose.msra.mxu0 %v324
      %328 = vmatprep.subr.bf16.mxu0 0
      %329 = vmatpush1.bf16.xpose.msra.mxu0 0
      %330 = vmatprep.subr.bf16.mxu0 0
      %331 = vmatpush1.bf16.xpose.msra.mxu0 0
      %332 = vmatprep.subr.bf16.mxu0 0
      %333 = vmatpush1.bf16.xpose.msra.mxu0 0
      %334 = vmatprep.subr.bf16.mxu0 0
      %335 = vmatpush1.bf16.xpose.msra.mxu0 0
      %336 = vmatprep.subr.bf16.mxu0 0
      %337 = vmatpush1.bf16.xpose.msra.mxu0 0
      %338 = vmatprep.subr.bf16.mxu0 0
      %339 = vmatpush1.bf16.xpose.msra.mxu0 0
      %340 = vmatprep.subr.bf16.mxu0 0
      %341 = vmatpush1.bf16.xpose.msra.mxu0 0
      %342 = vmatprep.subr.bf16.mxu0 0
      %343 = vmatpush1.bf16.xpose.msra.mxu0 0
      %344 = vmatprep.subr.bf16.mxu0 0
      %345 = vmatpush1.bf16.xpose.msra.mxu0 0
      %346 = vmatprep.subr.bf16.mxu0 0
      %347 = vmatpush1.bf16.xpose.msra.mxu0 0
      %348 = vmatprep.subr.bf16.mxu0 0
      %349 = vmatpush1.bf16.xpose.msra.mxu0 0
      %350 = vmatprep.subr.bf16.mxu0 0
      %351 = vmatpush1.bf16.xpose.msra.mxu0 0
      %352 = vmatprep.subr.bf16.mxu0 0
      %353 = vmatpush1.bf16.xpose.msra.mxu0 0
      %354 = vmatprep.subr.bf16.mxu0 0
      %355 = vmatpush1.bf16.xpose.msra.mxu0 0
      %356 = vmatprep.subr.bf16.mxu0 0
      %357 = vmatpush1.bf16.xpose.msra.mxu0 0
      %358 = vmatprep.mubr.bf16.mxu0 0
      %359 = vmatmul.mubr.bf16.gmra.mrb[0].mxu0 %v321
      %v360 = vpop.f32.mrb[0].mxu0
      %v361 = vadd.f32 0.0, %v360
      %v362 = vpop.f32.mrb[0].mxu0
      %v363 = vpop.f32.mrb[0].mxu0
      %v364 = vadd.f32 0.0, %v363
      %v365 = vpop.f32.mrb[0].mxu0
      %366 = vdwg.mxu0
      %v367 = vmul.f32 %v361, 0.35355338
      %v368 = vmul.f32 %v364, 0.35355338
      %v369 = vadd.f32 %v367, %v223
      %v370 = vadd.f32 %v368, %v223
      %v371 = vsel %vm227, %v369, -inf
      %372 = vmax.xlane.f32.xlu0 %v371
      %v373 = vpop.xlane.xlu0 %372
      %v374 = vsel %vm227, %v370, -inf
      %375 = vmax.xlane.f32.xlu0 %v374
      %v376 = vpop.xlane.xlu0 %375
      %v377 = vsub.f32 %v369, %v373
      %v378 = vsub.f32 %v370, %v376
      %v379 = vmul.f32 %v377, 1.442695
      %v380 = vpow.pop %v379
      %v381 = vmul.f32 %v378, 1.442695
      %v382 = vpow.pop %v381
      %v383 = vsel %vm227, %v380, 0.0
      %384 = vadd.xlane.f32.xlu0 %v383
      %v385 = vpop.xlane.xlu0 %384
      %v386 = vsel %vm227, %v382, 0.0
      %387 = vadd.xlane.f32.xlu0 %v386
      %v388 = vpop.xlane.xlu0 %387
      %v389 = vrcp.pop %v385
      %v390 = vrcp.pop %v388
      %v391 = vmul.f32 %v380, %v389
      %v392 = vmul.f32 %v382, %v390
      %v393 = vpack.c.bf16 %v392, %v391
      %394 = vrot.lane.b32.xlu0 %v315, 56
      %v395 = vpop.permute.xlu0 %394
      %v398 = vsel %vm227, %v393, 0
      %400 = vmatprep.subr.bf16.mxu0 0
      %401 = vmatpush1.bf16.msra.mxu0 %v395
      %402 = vmatprep.subr.bf16.mxu0 0
      %403 = vmatpush1.bf16.msra.mxu0 0
      %404 = vmatprep.subr.bf16.mxu0 0
      %405 = vmatpush1.bf16.msra.mxu0 0
      %406 = vmatprep.subr.bf16.mxu0 0
      %407 = vmatpush1.bf16.msra.mxu0 0
      %408 = vmatprep.subr.bf16.mxu0 0
      %409 = vmatpush1.bf16.msra.mxu0 0
      %410 = vmatprep.subr.bf16.mxu0 0
      %411 = vmatpush1.bf16.msra.mxu0 0
      %412 = vmatprep.subr.bf16.mxu0 0
      %413 = vmatpush1.bf16.msra.mxu0 0
      %414 = vmatprep.subr.bf16.mxu0 0
      %415 = vmatpush1.bf16.msra.mxu0 0
      %416 = vmatprep.subr.bf16.mxu0 0
      %417 = vmatpush1.bf16.msra.mxu0 0
      %418 = vmatprep.subr.bf16.mxu0 0
      %419 = vmatpush1.bf16.msra.mxu0 0
      %420 = vmatprep.subr.bf16.mxu0 0
      %421 = vmatpush1.bf16.msra.mxu0 0
      %422 = vmatprep.subr.bf16.mxu0 0
      %423 = vmatpush1.bf16.msra.mxu0 0
      %424 = vmatprep.subr.bf16.mxu0 0
      %425 = vmatpush1.bf16.msra.mxu0 0
      %426 = vmatprep.subr.bf16.mxu0 0
      %427 = vmatpush1.bf16.msra.mxu0 0
      %428 = vmatprep.subr.bf16.mxu0 0
      %429 = vmatpush1.bf16.msra.mxu0 0
      %430 = vmatprep.subr.bf16.mxu0 0
      %431 = vmatpush1.bf16.msra.mxu0 0
      %432 = vmatprep.mubr.bf16.mxu0 0
      %433 = vmatmul.mubr.bf16.gmra.mrb[0].mxu0 %v398
      %v434 = vpop.f32.mrb[0].mxu0
      %v435 = vadd.f32 0.0, %v434
      %v436 = vpop.f32.mrb[0].mxu0
      %v437 = vpop.f32.mrb[0].mxu0
      %v438 = vadd.f32 0.0, %v437
      %v439 = vpop.f32.mrb[0].mxu0
      %440 = vdwg.mxu0
      %v441 = vpack.c.bf16 %v438, %v435
      %v443 = vunpack.c.l.b16 %v441
      %v444 = vunpack.c.h.b16 %v441
      %v445 = vpack.c.b16 %v443, %v443
      %v446 = vpack.c.b16 %v444, %v444
      %447 = vrot.lane.b32.xlu0 %v445, 8
      %v448 = vpop.permute.xlu0 %447
      %449 = vrot.lane.b32.xlu0 %v446, 8
      %v450 = vpop.permute.xlu0 %449
      %vm453 = vcmask 126016
      %454 = vst.msk [vmem:[%s157] sm:$0xf] %vm453, %v448
      %455 = vst.msk [vmem:[%s157 + $0x4] sm:$0xf] %vm453, %v450
      %v456 = vld [vmem:[%s149] sm:$0xf]
      %v457 = vld [vmem:[%s149 + $0x4] sm:$0xf]
      %v460 = vunpack.c.l.b16 %v456
      %v461 = vunpack.c.l.b16 %v457
      %v462 = vpack.c.b16 %v461, %v460
      %463 = vrot.lane.b32.xlu0 %v462, 112
      %v464 = vpop.permute.xlu0 %463
      %465 = vrot.lane.b32.xlu0 %v462, 80
      %v466 = vpop.permute.xlu0 %465
      %v468 = vsel %vm169, %v464, 0
      %v471 = vsel %vm169, %v466, 0
      %473 = vmatprep.subr.bf16.mxu0 0
      %474 = vmatpush1.bf16.xpose.msra.mxu0 %v471
      %475 = vmatprep.subr.bf16.mxu0 0
      %476 = vmatpush1.bf16.xpose.msra.mxu0 0
      %477 = vmatprep.subr.bf16.mxu0 0
      %478 = vmatpush1.bf16.xpose.msra.mxu0 0
      %479 = vmatprep.subr.bf16.mxu0 0
      %480 = vmatpush1.bf16.xpose.msra.mxu0 0
      %481 = vmatprep.subr.bf16.mxu0 0
      %482 = vmatpush1.bf16.xpose.msra.mxu0 0
      %483 = vmatprep.subr.bf16.mxu0 0
      %484 = vmatpush1.bf16.xpose.msra.mxu0 0
      %485 = vmatprep.subr.bf16.mxu0 0
      %486 = vmatpush1.bf16.xpose.msra.mxu0 0
      %487 = vmatprep.subr.bf16.mxu0 0
      %488 = vmatpush1.bf16.xpose.msra.mxu0 0
      %489 = vmatprep.subr.bf16.mxu0 0
      %490 = vmatpush1.bf16.xpose.msra.mxu0 0
      %491 = vmatprep.subr.bf16.mxu0 0
      %492 = vmatpush1.bf16.xpose.msra.mxu0 0
      %493 = vmatprep.subr.bf16.mxu0 0
      %494 = vmatpush1.bf16.xpose.msra.mxu0 0
      %495 = vmatprep.subr.bf16.mxu0 0
      %496 = vmatpush1.bf16.xpose.msra.mxu0 0
      %497 = vmatprep.subr.bf16.mxu0 0
      %498 = vmatpush1.bf16.xpose.msra.mxu0 0
      %499 = vmatprep.subr.bf16.mxu0 0
      %500 = vmatpush1.bf16.xpose.msra.mxu0 0
      %501 = vmatprep.subr.bf16.mxu0 0
      %502 = vmatpush1.bf16.xpose.msra.mxu0 0
      %503 = vmatprep.subr.bf16.mxu0 0
      %504 = vmatpush1.bf16.xpose.msra.mxu0 0
      %505 = vmatprep.mubr.bf16.mxu0 0
      %506 = vmatmul.mubr.bf16.gmra.mrb[0].mxu0 %v468
      %v507 = vpop.f32.mrb[0].mxu0
      %v508 = vadd.f32 0.0, %v507
      %v509 = vpop.f32.mrb[0].mxu0
      %v510 = vpop.f32.mrb[0].mxu0
      %v511 = vadd.f32 0.0, %v510
      %v512 = vpop.f32.mrb[0].mxu0
      %513 = vdwg.mxu0
      %v514 = vmul.f32 %v508, 0.35355338
      %v515 = vmul.f32 %v511, 0.35355338
      %v516 = vadd.f32 %v514, %v223
      %v517 = vadd.f32 %v515, %v223
      %v518 = vsel %vm227, %v516, -inf
      %519 = vmax.xlane.f32.xlu0 %v518
      %v520 = vpop.xlane.xlu0 %519
      %v521 = vsel %vm227, %v517, -inf
      %522 = vmax.xlane.f32.xlu0 %v521
      %v523 = vpop.xlane.xlu0 %522
      %v524 = vsub.f32 %v516, %v520
      %v525 = vsub.f32 %v517, %v523
      %v526 = vmul.f32 %v524, 1.442695
      %v527 = vpow.pop %v526
      %v528 = vmul.f32 %v525, 1.442695
      %v529 = vpow.pop %v528
      %v530 = vsel %vm227, %v527, 0.0
      %531 = vadd.xlane.f32.xlu0 %v530
      %v532 = vpop.xlane.xlu0 %531
      %v533 = vsel %vm227, %v529, 0.0
      %534 = vadd.xlane.f32.xlu0 %v533
      %v535 = vpop.xlane.xlu0 %534
      %v536 = vrcp.pop %v532
      %v537 = vrcp.pop %v535
      %v538 = vmul.f32 %v527, %v536
      %v539 = vmul.f32 %v529, %v537
      %v540 = vpack.c.bf16 %v539, %v538
      %541 = vrot.lane.b32.xlu0 %v462, 48
      %v542 = vpop.permute.xlu0 %541
      %v545 = vsel %vm227, %v540, 0
      %547 = vmatprep.subr.bf16.mxu0 0
      %548 = vmatpush1.bf16.msra.mxu0 %v542
      %549 = vmatprep.subr.bf16.mxu0 0
      %550 = vmatpush1.bf16.msra.mxu0 0
      %551 = vmatprep.subr.bf16.mxu0 0
      %552 = vmatpush1.bf16.msra.mxu0 0
      %553 = vmatprep.subr.bf16.mxu0 0
      %554 = vmatpush1.bf16.msra.mxu0 0
      %555 = vmatprep.subr.bf16.mxu0 0
      %556 = vmatpush1.bf16.msra.mxu0 0
      %557 = vmatprep.subr.bf16.mxu0 0
      %558 = vmatpush1.bf16.msra.mxu0 0
      %559 = vmatprep.subr.bf16.mxu0 0
      %560 = vmatpush1.bf16.msra.mxu0 0
      %561 = vmatprep.subr.bf16.mxu0 0
      %562 = vmatpush1.bf16.msra.mxu0 0
      %563 = vmatprep.subr.bf16.mxu0 0
      %564 = vmatpush1.bf16.msra.mxu0 0
      %565 = vmatprep.subr.bf16.mxu0 0
      %566 = vmatpush1.bf16.msra.mxu0 0
      %567 = vmatprep.subr.bf16.mxu0 0
      %568 = vmatpush1.bf16.msra.mxu0 0
      %569 = vmatprep.subr.bf16.mxu0 0
      %570 = vmatpush1.bf16.msra.mxu0 0
      %571 = vmatprep.subr.bf16.mxu0 0
      %572 = vmatpush1.bf16.msra.mxu0 0
      %573 = vmatprep.subr.bf16.mxu0 0
      %574 = vmatpush1.bf16.msra.mxu0 0
      %575 = vmatprep.subr.bf16.mxu0 0
      %576 = vmatpush1.bf16.msra.mxu0 0
      %577 = vmatprep.subr.bf16.mxu0 0
      %578 = vmatpush1.bf16.msra.mxu0 0
      %579 = vmatprep.mubr.bf16.mxu0 0
      %580 = vmatmul.mubr.bf16.gmra.mrb[0].mxu0 %v545
      %v581 = vpop.f32.mrb[0].mxu0
      %v582 = vadd.f32 0.0, %v581
      %v583 = vpop.f32.mrb[0].mxu0
      %v584 = vpop.f32.mrb[0].mxu0
      %v585 = vadd.f32 0.0, %v584
      %v586 = vpop.f32.mrb[0].mxu0
      %587 = vdwg.mxu0
      %v588 = vpack.c.bf16 %v585, %v582
      %v590 = vunpack.c.l.b16 %v588
      %v591 = vunpack.c.h.b16 %v588
      %v592 = vpack.c.b16 %v590, %v590
      %v593 = vpack.c.b16 %v591, %v591
      %594 = vrot.lane.b32.xlu0 %v592, 16
      %v595 = vpop.permute.xlu0 %594
      %596 = vrot.lane.b32.xlu0 %v593, 16
      %v597 = vpop.permute.xlu0 %596
      %vm600 = vcmask 191616
      %601 = vst.msk [vmem:[%s157] sm:$0xf] %vm600, %v595
      %602 = vst.msk [vmem:[%s157 + $0x4] sm:$0xf] %vm600, %v597
      %v603 = vld [vmem:[%s149] sm:$0xf]
      %v604 = vld [vmem:[%s149 + $0x4] sm:$0xf]
      %v607 = vunpack.c.l.b16 %v603
      %v608 = vunpack.c.l.b16 %v604
      %v609 = vpack.c.b16 %v608, %v607
      %610 = vrot.lane.b32.xlu0 %v609, 104
      %v611 = vpop.permute.xlu0 %610
      %612 = vrot.lane.b32.xlu0 %v609, 72
      %v613 = vpop.permute.xlu0 %612
      %v615 = vsel %vm169, %v611, 0
      %v618 = vsel %vm169, %v613, 0
      %620 = vmatprep.subr.bf16.mxu0 0
      %621 = vmatpush1.bf16.xpose.msra.mxu0 %v618
      %622 = vmatprep.subr.bf16.mxu0 0
      %623 = vmatpush1.bf16.xpose.msra.mxu0 0
      %624 = vmatprep.subr.bf16.mxu0 0
      %625 = vmatpush1.bf16.xpose.msra.mxu0 0
      %626 = vmatprep.subr.bf16.mxu0 0
      %627 = vmatpush1.bf16.xpose.msra.mxu0 0
      %628 = vmatprep.subr.bf16.mxu0 0
      %629 = vmatpush1.bf16.xpose.msra.mxu0 0
      %630 = vmatprep.subr.bf16.mxu0 0
      %631 = vmatpush1.bf16.xpose.msra.mxu0 0
      %632 = vmatprep.subr.bf16.mxu0 0
      %633 = vmatpush1.bf16.xpose.msra.mxu0 0
      %634 = vmatprep.subr.bf16.mxu0 0
      %635 = vmatpush1.bf16.xpose.msra.mxu0 0
      %636 = vmatprep.subr.bf16.mxu0 0
      %637 = vmatpush1.bf16.xpose.msra.mxu0 0
      %638 = vmatprep.subr.bf16.mxu0 0
      %639 = vmatpush1.bf16.xpose.msra.mxu0 0
      %640 = vmatprep.subr.bf16.mxu0 0
      %641 = vmatpush1.bf16.xpose.msra.mxu0 0
      %642 = vmatprep.subr.bf16.mxu0 0
      %643 = vmatpush1.bf16.xpose.msra.mxu0 0
      %644 = vmatprep.subr.bf16.mxu0 0
      %645 = vmatpush1.bf16.xpose.msra.mxu0 0
      %646 = vmatprep.subr.bf16.mxu0 0
      %647 = vmatpush1.bf16.xpose.msra.mxu0 0
      %648 = vmatprep.subr.bf16.mxu0 0
      %649 = vmatpush1.bf16.xpose.msra.mxu0 0
      %650 = vmatprep.subr.bf16.mxu0 0
      %651 = vmatpush1.bf16.xpose.msra.mxu0 0
      %652 = vmatprep.mubr.bf16.mxu0 0
      %653 = vmatmul.mubr.bf16.gmra.mrb[0].mxu0 %v615
      %v654 = vpop.f32.mrb[0].mxu0
      %v655 = vadd.f32 0.0, %v654
      %v656 = vpop.f32.mrb[0].mxu0
      %v657 = vpop.f32.mrb[0].mxu0
      %v658 = vadd.f32 0.0, %v657
      %v659 = vpop.f32.mrb[0].mxu0
      %660 = vdwg.mxu0
      %v661 = vmul.f32 %v655, 0.35355338
      %v662 = vmul.f32 %v658, 0.35355338
      %v663 = vadd.f32 %v661, %v223
      %v664 = vadd.f32 %v662, %v223
      %v665 = vsel %vm227, %v663, -inf
      %666 = vmax.xlane.f32.xlu0 %v665
      %v667 = vpop.xlane.xlu0 %666
      %v668 = vsel %vm227, %v664, -inf
      %669 = vmax.xlane.f32.xlu0 %v668
      %v670 = vpop.xlane.xlu0 %669
      %v671 = vsub.f32 %v663, %v667
      %v672 = vsub.f32 %v664, %v670
      %v673 = vmul.f32 %v671, 1.442695
      %v674 = vpow.pop %v673
      %v675 = vmul.f32 %v672, 1.442695
      %v676 = vpow.pop %v675
      %v677 = vsel %vm227, %v674, 0.0
      %678 = vadd.xlane.f32.xlu0 %v677
      %v679 = vpop.xlane.xlu0 %678
      %v680 = vsel %vm227, %v676, 0.0
      %681 = vadd.xlane.f32.xlu0 %v680
      %v682 = vpop.xlane.xlu0 %681
      %v683 = vrcp.pop %v679
      %v684 = vrcp.pop %v682
      %v685 = vmul.f32 %v674, %v683
      %v686 = vmul.f32 %v676, %v684
      %v687 = vpack.c.bf16 %v686, %v685
      %688 = vrot.lane.b32.xlu0 %v609, 40
      %v689 = vpop.permute.xlu0 %688
      %v692 = vsel %vm227, %v687, 0
      %694 = vmatprep.subr.bf16.mxu0 0
      %695 = vmatpush1.bf16.msra.mxu0 %v689
      %696 = vmatprep.subr.bf16.mxu0 0
      %697 = vmatpush1.bf16.msra.mxu0 0
      %698 = vmatprep.subr.bf16.mxu0 0
      %699 = vmatpush1.bf16.msra.mxu0 0
      %700 = vmatprep.subr.bf16.mxu0 0
      %701 = vmatpush1.bf16.msra.mxu0 0
      %702 = vmatprep.subr.bf16.mxu0 0
      %703 = vmatpush1.bf16.msra.mxu0 0
      %704 = vmatprep.subr.bf16.mxu0 0
      %705 = vmatpush1.bf16.msra.mxu0 0
      %706 = vmatprep.subr.bf16.mxu0 0
      %707 = vmatpush1.bf16.msra.mxu0 0
      %708 = vmatprep.subr.bf16.mxu0 0
      %709 = vmatpush1.bf16.msra.mxu0 0
      %710 = vmatprep.subr.bf16.mxu0 0
      %711 = vmatpush1.bf16.msra.mxu0 0
      %712 = vmatprep.subr.bf16.mxu0 0
      %713 = vmatpush1.bf16.msra.mxu0 0
      %714 = vmatprep.subr.bf16.mxu0 0
      %715 = vmatpush1.bf16.msra.mxu0 0
      %716 = vmatprep.subr.bf16.mxu0 0
      %717 = vmatpush1.bf16.msra.mxu0 0
      %718 = vmatprep.subr.bf16.mxu0 0
      %719 = vmatpush1.bf16.msra.mxu0 0
      %720 = vmatprep.subr.bf16.mxu0 0
      %721 = vmatpush1.bf16.msra.mxu0 0
      %722 = vmatprep.subr.bf16.mxu0 0
      %723 = vmatpush1.bf16.msra.mxu0 0
      %724 = vmatprep.subr.bf16.mxu0 0
      %725 = vmatpush1.bf16.msra.mxu0 0
      %726 = vmatprep.mubr.bf16.mxu0 0
      %727 = vmatmul.mubr.bf16.gmra.mrb[0].mxu0 %v692
      %v728 = vpop.f32.mrb[0].mxu0
      %v729 = vadd.f32 0.0, %v728
      %v730 = vpop.f32.mrb[0].mxu0
      %v731 = vpop.f32.mrb[0].mxu0
      %v732 = vadd.f32 0.0, %v731
      %v733 = vpop.f32.mrb[0].mxu0
      %734 = vdwg.mxu0
      %v735 = vpack.c.bf16 %v732, %v729
      %v737 = vunpack.c.l.b16 %v735
      %v738 = vunpack.c.h.b16 %v735
      %v739 = vpack.c.b16 %v737, %v737
      %v740 = vpack.c.b16 %v738, %v738
      %741 = vrot.lane.b32.xlu0 %v739, 24
      %v742 = vpop.permute.xlu0 %741
      %743 = vrot.lane.b32.xlu0 %v740, 24
      %v744 = vpop.permute.xlu0 %743
      %vm747 = vcmask 257216
      %748 = vst.msk [vmem:[%s157] sm:$0xf] %vm747, %v742
      %749 = vst.msk [vmem:[%s157 + $0x4] sm:$0xf] %vm747, %v744
      %p750 = scmp.lt.s32.totalorder %s13, 1
      %s751 = scalar_select %p750, %s13, 1
      %s752 = smul.addr %s751, 2
      %s753 = smul.addr %s752, 4
      %s754 = scalar_lea.vmem %s2, %s753
      // Predicated region
      $region29: #{bert_country_forward.18} parent=27 // pred_check
        %p755 = pneg %p83
      $region30: #{bert_country_forward.18} parent=27 // pred_check_branch
        %757 = sbr.rel (%p755) target = $region32
      $region31: #{bert_country_forward.18} parent=27 // pred_region
        _
      $region32: #{bert_country_forward.18} parent=27 // pred_fallthru
        _
    $region28: #{bert_country_forward.18} parent=5 // pred_fallthru
      _
    %p758 = scmp.le.s32.totalorder 2, %s8
    // Predicated region
    $region33: #{bert_country_forward.18} parent=5 // pred_check
      %p759 = pneg %p758
    $region34: #{bert_country_forward.18} parent=5 // pred_check_branch
      %761 = sbr.rel (%p759) target = $region36
    $region35: #{bert_country_forward.18} parent=5 // pred_region
      %s762 = ssub.s32 %s8, 2
      // Predicated region
      $region37: #{bert_country_forward.18} parent=35 // pred_check
        %p763 = pneg %p89
      $region38: #{bert_country_forward.18} parent=35 // pred_check_branch
        %765 = sbr.rel (%p763) target = $region40
      $region39: #{bert_country_forward.18} parent=35 // pred_region
        %p766 = scmp.lt.s32.totalorder %s14, 1
        %s767 = scalar_select %p766, %s14, 1
        %s768 = smul.addr %s767, 2
        %s769 = smul.addr %s768, 4
        %s770 = scalar_lea.vmem %s2, %s769
      $region40: #{bert_country_forward.18} parent=35 // pred_fallthru
        _
    $region36: #{bert_country_forward.18} parent=5 // pred_fallthru
      _
  $region6: #{bert_country_forward.18} parent=0 // loop_footer
    %s12 = sadd.s32 1, %s8
  $region7: #{bert_country_forward.18} parent=0 // loop_footer_branch
    %7 = sbr.rel target = $region3
  $region8: #{bert_country_forward.18} parent=0 // loop_exit
    _

// kernel: bert_country_forward.20
$region0: #{bert_country_forward.20}
  #allocation0 [shape = 'u32[]', space=smem, size = 0x4, offset = 0x4, fixed_abs, tag = 'smem constant byte address 0x4 - core index']
  #allocation1 [shape = 'u32[144,128]{1,0:T(1,128)}', space=vmem, size = 0x12000, scoped, tag = 'internal scratch']
  %s0 = inlined_call_operand.vmem [shape: bf16[32,32], index: 0, kind: input, shape index: {}]
  %s1 = inlined_call_operand.vmem [shape: bf16[32,64], index: 1, kind: input, shape index: {}]
  %s2 = inlined_call_operand.vmem [shape: f32[1,64], index: 2, kind: input, shape index: {}]
  %s3 = inlined_call_operand.vmem [shape: bf16[32,64], index: 3, kind: output, shape index: {}]
  %s4 = sld [smem:[#allocation0]]
  $region22: #{bert_country_forward.20} parent=0
    _
  %s6 = ssub.s32 1, %s4
  %s7 = scalar_select 0, %s6, %s4
  // Predicated region
  $region2: #{bert_country_forward.20} parent=0 // pred_check
    _
  $region3: #{bert_country_forward.20} parent=0 // pred_check_branch
    %9 = sbr.rel (0) target = $region5
  $region4: #{bert_country_forward.20} parent=0 // pred_region
    _
  $region5: #{bert_country_forward.20} parent=0 // pred_fallthru
    _
  // Predicated region
  $region6: #{bert_country_forward.20} parent=0 // pred_check
    _
  $region7: #{bert_country_forward.20} parent=0 // pred_check_branch
    %11 = sbr.rel (0) target = $region9
  $region8: #{bert_country_forward.20} parent=0 // pred_region
    _
  $region9: #{bert_country_forward.20} parent=0 // pred_fallthru
    _
  // Predicated region
  $region10: #{bert_country_forward.20} parent=0 // pred_check
    _
  $region11: #{bert_country_forward.20} parent=0 // pred_check_branch
    %13 = sbr.rel (0) target = $region13
  $region12: #{bert_country_forward.20} parent=0 // pred_region
    _
  $region13: #{bert_country_forward.20} parent=0 // pred_fallthru
    _
  %v15 = vld [vmem:[%s0] sm:$0xf]
  %v16 = vld [vmem:[%s0 + $0x4] sm:$0xf]
  %v17 = vld [vmem:[%s0 + $0x8] sm:$0xf]
  %v18 = vld [vmem:[%s0 + $0xc] sm:$0xf]
  %v19 = vld [vmem:[%s1] sm:$0xf]
  %v20 = vld [vmem:[%s1 + $0x4] sm:$0xf]
  %v21 = vld [vmem:[%s1 + $0x8] sm:$0xf]
  %v22 = vld [vmem:[%s1 + $0xc] sm:$0xf]
  %v23 = vld [vmem:[%s2] sm:$0x1]
  %v25 = vlaneseq
  %v26 = vshrl.u32 %v25, 7
  %v27 = vsub.s32 0, %v26
  %v28 = vrot.slane %v23, %v27
  %v34 = vunpack.c.l.b16 %v15
  %v35 = vunpack.c.l.b16 %v16
  %v36 = vunpack.c.l.b16 %v17
  %v37 = vunpack.c.l.b16 %v18
  %v38 = vpack.c.b16 %v35, %v34
  %v39 = vpack.c.b16 %v37, %v36
  %v44 = vunpack.c.l.b16 %v19
  %v45 = vunpack.c.l.b16 %v20
  %v46 = vunpack.c.l.b16 %v21
  %v47 = vunpack.c.l.b16 %v22
  %v48 = vpack.c.b16 %v45, %v44
  %v49 = vpack.c.b16 %v47, %v46
  %vm52 = vcmask 261120
  %v54 = vsel %vm52, %v38, 0
  %v57 = vsel %vm52, %v39, 0
  %59 = vmatprep.subr.bf16.mxu0 0
  %60 = vmatpush1.bf16.msra.mxu0 %v48
  %61 = vmatprep.subr.bf16.mxu0 0
  %62 = vmatpush1.bf16.msra.mxu0 %v49
  %63 = vmatprep.subr.bf16.mxu0 0
  %64 = vmatpush1.bf16.msra.mxu0 0
  %65 = vmatprep.subr.bf16.mxu0 0
  %66 = vmatpush1.bf16.msra.mxu0 0
  %67 = vmatprep.subr.bf16.mxu0 0
  %68 = vmatpush1.bf16.msra.mxu0 0
  %69 = vmatprep.subr.bf16.mxu0 0
  %70 = vmatpush1.bf16.msra.mxu0 0
  %71 = vmatprep.subr.bf16.mxu0 0
  %72 = vmatpush1.bf16.msra.mxu0 0
  %73 = vmatprep.subr.bf16.mxu0 0
  %74 = vmatpush1.bf16.msra.mxu0 0
  %75 = vmatprep.subr.bf16.mxu0 0
  %76 = vmatpush1.bf16.msra.mxu0 0
  %77 = vmatprep.subr.bf16.mxu0 0
  %78 = vmatpush1.bf16.msra.mxu0 0
  %79 = vmatprep.subr.bf16.mxu0 0
  %80 = vmatpush1.bf16.msra.mxu0 0
  %81 = vmatprep.subr.bf16.mxu0 0
  %82 = vmatpush1.bf16.msra.mxu0 0
  %83 = vmatprep.subr.bf16.mxu0 0
  %84 = vmatpush1.bf16.msra.mxu0 0
  %85 = vmatprep.subr.bf16.mxu0 0
  %86 = vmatpush1.bf16.msra.mxu0 0
  %87 = vmatprep.subr.bf16.mxu0 0
  %88 = vmatpush1.bf16.msra.mxu0 0
  %89 = vmatprep.subr.bf16.mxu0 0
  %90 = vmatpush1.bf16.msra.mxu0 0
  %91 = vmatprep.mubr.bf16.mxu0 0
  %92 = vmatmul.mubr.bf16.gmra.mrb[0].mxu0 %v54
  %v93 = vpop.f32.mrb[0].mxu0
  %v94 = vadd.f32 %v28, %v93
  %v95 = vpop.f32.mrb[0].mxu0
  %v96 = vpop.f32.mrb[0].mxu0
  %v97 = vadd.f32 %v28, %v96
  %v98 = vpop.f32.mrb[0].mxu0
  %99 = vmatprep.mubr.bf16.mxu0 0
  %100 = vmatmul.mubr.bf16.gmra.mrb[0].mxu0 %v57
  %v101 = vpop.f32.mrb[0].mxu0
  %v102 = vadd.f32 %v28, %v101
  %v103 = vpop.f32.mrb[0].mxu0
  %v104 = vpop.f32.mrb[0].mxu0
  %v105 = vadd.f32 %v28, %v104
  %v106 = vpop.f32.mrb[0].mxu0
  %107 = vdwg.mxu0
  %v108 = vmul.f32 %v94, %v94
  %v109 = vmul.f32 %v97, %v97
  %v110 = vmul.f32 %v102, %v102
  %v111 = vmul.f32 %v105, %v105
  %v112 = vmul.f32 %v94, %v108
  %v113 = vmul.f32 %v97, %v109
  %v114 = vmul.f32 %v102, %v110
  %v115 = vmul.f32 %v105, %v111
  %v116 = vmul.f32 %v112, 0.044715
  %v117 = vmul.f32 %v113, 0.044715
  %v118 = vmul.f32 %v114, 0.044715
  %v119 = vmul.f32 %v115, 0.044715
  %v120 = vadd.f32 %v94, %v116
  %v121 = vadd.f32 %v97, %v117
  %v122 = vadd.f32 %v102, %v118
  %v123 = vadd.f32 %v105, %v119
  %v124 = vmul.f32 %v120, 0.7978846
  %v125 = vmul.f32 %v121, 0.7978846
  %v126 = vmul.f32 %v122, 0.7978846
  %v127 = vmul.f32 %v123, 0.7978846
  %v128 = vtanh.pop %v124
  %v129 = vtanh.pop %v125
  %v130 = vtanh.pop %v126
  %v131 = vtanh.pop %v127
  %v132 = vadd.f32 %v128, 1.0
  %v133 = vadd.f32 %v129, 1.0
  %v134 = vadd.f32 %v130, 1.0
  %v135 = vadd.f32 %v131, 1.0
  %v136 = vmul.f32 %v132, 0.5
  %v137 = vmul.f32 %v133, 0.5
  %v138 = vmul.f32 %v134, 0.5
  %v139 = vmul.f32 %v135, 0.5
  %v140 = vmul.f32 %v94, %v136
  %v141 = vmul.f32 %v97, %v137
  %v142 = vmul.f32 %v102, %v138
  %v143 = vmul.f32 %v105, %v139
  %v144 = vpack.c.bf16 %v141, %v140
  %v145 = vpack.c.bf16 %v143, %v142
  %v148 = vunpack.c.l.b16 %v144
  %v149 = vunpack.c.h.b16 %v144
  %v150 = vunpack.c.l.b16 %v145
  %v151 = vunpack.c.h.b16 %v145
  %v152 = vpack.c.b16 %v148, %v148
  %v153 = vpack.c.b16 %v149, %v149
  %v154 = vpack.c.b16 %v150, %v150
  %v155 = vpack.c.b16 %v151, %v151
  %vm160 = vcmask 519168
  %161 = vst.msk [vmem:[%s3] sm:$0xf] %vm160, %v152
  %162 = vst.msk [vmem:[%s3 + $0x4] sm:$0xf] %vm160, %v153
  %163 = vst.msk [vmem:[%s3 + $0x8] sm:$0xf] %vm160, %v154
  %164 = vst.msk [vmem:[%s3 + $0xc] sm:$0xf] %vm160, %v155
  // Predicated region
  $region14: #{bert_country_forward.20} parent=0 // pred_check
    _
  $region15: #{bert_country_forward.20} parent=0 // pred_check_branch
    %166 = sbr.rel (0) target = $region17
  $region16: #{bert_country_forward.20} parent=0 // pred_region
    _
  $region17: #{bert_country_forward.20} parent=0 // pred_fallthru
    _
  // Predicated region
  $region18: #{bert_country_forward.20} parent=0 // pred_check
    _
  $region19: #{bert_country_forward.20} parent=0 // pred_check_branch
    %168 = sbr.rel (0) target = $region21
  $region20: #{bert_country_forward.20} parent=0 // pred_region
    _
  $region21: #{bert_country_forward.20} parent=0 // pred_fallthru
    _

// kernel: bert_country_forward.21
$region0: #{bert_country_forward.21}
  #allocation0 [shape = 'u32[]', space=smem, size = 0x4, offset = 0x4, fixed_abs, tag = 'smem constant byte address 0x4 - core index']
  #allocation1 [shape = 'u32[144,128]{1,0:T(1,128)}', space=vmem, size = 0x12000, scoped, tag = 'internal scratch']
  %s0 = inlined_call_operand.vmem [shape: bf16[32,64], index: 0, kind: input, shape index: {}]
  %s1 = inlined_call_operand.vmem [shape: bf16[64,32], index: 1, kind: input, shape index: {}]
  %s2 = inlined_call_operand.vmem [shape: f32[1,32], index: 2, kind: input, shape index: {}]
  %s3 = inlined_call_operand.vmem [shape: bf16[32,32], index: 3, kind: input, shape index: {}]
  %s4 = inlined_call_operand.vmem [shape: f32[1,32], index: 4, kind: input, shape index: {}]
  %s5 = inlined_call_operand.vmem [shape: f32[1,32], index: 5, kind: input, shape index: {}]
  %s6 = inlined_call_operand.vmem [shape: bf16[32,32], index: 6, kind: output, shape index: {}]
  %s7 = sld [smem:[#allocation0]]
  $region34: #{bert_country_forward.21} parent=0
    _
  %s9 = ssub.s32 1, %s7
  %s10 = scalar_select 0, %s9, %s7
  // Predicated region
  $region2: #{bert_country_forward.21} parent=0 // pred_check
    _
  $region3: #{bert_country_forward.21} parent=0 // pred_check_branch
    %12 = sbr.rel (0) target = $region5
  $region4: #{bert_country_forward.21} parent=0 // pred_region
    _
  $region5: #{bert_country_forward.21} parent=0 // pred_fallthru
    _
  // Predicated region
  $region6: #{bert_country_forward.21} parent=0 // pred_check
    _
  $region7: #{bert_country_forward.21} parent=0 // pred_check_branch
    %14 = sbr.rel (0) target = $region9
  $region8: #{bert_country_forward.21} parent=0 // pred_region
    _
  $region9: #{bert_country_forward.21} parent=0 // pred_fallthru
    _
  // Predicated region
  $region10: #{bert_country_forward.21} parent=0 // pred_check
    _
  $region11: #{bert_country_forward.21} parent=0 // pred_check_branch
    %16 = sbr.rel (0) target = $region13
  $region12: #{bert_country_forward.21} parent=0 // pred_region
    _
  $region13: #{bert_country_forward.21} parent=0 // pred_fallthru
    _
  // Predicated region
  $region14: #{bert_country_forward.21} parent=0 // pred_check
    _
  $region15: #{bert_country_forward.21} parent=0 // pred_check_branch
    %18 = sbr.rel (0) target = $region17
  $region16: #{bert_country_forward.21} parent=0 // pred_region
    _
  $region17: #{bert_country_forward.21} parent=0 // pred_fallthru
    _
  // Predicated region
  $region18: #{bert_country_forward.21} parent=0 // pred_check
    _
  $region19: #{bert_country_forward.21} parent=0 // pred_check_branch
    %20 = sbr.rel (0) target = $region21
  $region20: #{bert_country_forward.21} parent=0 // pred_region
    _
  $region21: #{bert_country_forward.21} parent=0 // pred_fallthru
    _
  // Predicated region
  $region22: #{bert_country_forward.21} parent=0 // pred_check
    _
  $region23: #{bert_country_forward.21} parent=0 // pred_check_branch
    %22 = sbr.rel (0) target = $region25
  $region24: #{bert_country_forward.21} parent=0 // pred_region
    _
  $region25: #{bert_country_forward.21} parent=0 // pred_fallthru
    _
  %v24 = vld [vmem:[%s0] sm:$0xf]
  %v25 = vld [vmem:[%s0 + $0x4] sm:$0xf]
  %v26 = vld [vmem:[%s0 + $0x8] sm:$0xf]
  %v27 = vld [vmem:[%s0 + $0xc] sm:$0xf]
  %v28 = vld [vmem:[%s1] sm:$0xf]
  %v29 = vld [vmem:[%s1 + $0x4] sm:$0xf]
  %v30 = vld [vmem:[%s1 + $0x8] sm:$0xf]
  %v31 = vld [vmem:[%s1 + $0xc] sm:$0xf]
  %v32 = vld [vmem:[%s1 + $0x10] sm:$0xf]
  %v33 = vld [vmem:[%s1 + $0x14] sm:$0xf]
  %v34 = vld [vmem:[%s1 + $0x18] sm:$0xf]
  %v35 = vld [vmem:[%s1 + $0x1c] sm:$0xf]
  %v36 = vld [vmem:[%s2] sm:$0x1]
  %v38 = vlaneseq
  %v39 = vshrl.u32 %v38, 7
  %v40 = vsub.s32 0, %v39
  %v41 = vrot.slane %v36, %v40
  %v47 = vunpack.c.l.b16 %v24
  %v48 = vunpack.c.l.b16 %v25
  %v49 = vunpack.c.l.b16 %v26
  %v50 = vunpack.c.l.b16 %v27
  %v51 = vpack.c.b16 %v48, %v47
  %v52 = vpack.c.b16 %v50, %v49
  %v61 = vunpack.c.l.b16 %v28
  %v62 = vunpack.c.l.b16 %v29
  %v63 = vunpack.c.l.b16 %v30
  %v64 = vunpack.c.l.b16 %v31
  %v65 = vunpack.c.l.b16 %v32
  %v66 = vunpack.c.l.b16 %v33
  %v67 = vunpack.c.l.b16 %v34
  %v68 = vunpack.c.l.b16 %v35
  %v69 = vpack.c.b16 %v62, %v61
  %v70 = vpack.c.b16 %v64, %v63
  %v71 = vpack.c.b16 %v66, %v65
  %v72 = vpack.c.b16 %v68, %v67
  %vm77 = vcmask 523264
  %v79 = vsel %vm77, %v51, 0
  %v82 = vsel %vm77, %v52, 0
  %84 = vmatprep.subr.bf16.mxu0 0
  %85 = vmatpush1.bf16.msra.mxu0 %v69
  %86 = vmatprep.subr.bf16.mxu0 0
  %87 = vmatpush1.bf16.msra.mxu0 %v70
  %88 = vmatprep.subr.bf16.mxu0 0
  %89 = vmatpush1.bf16.msra.mxu0 %v71
  %90 = vmatprep.subr.bf16.mxu0 0
  %91 = vmatpush1.bf16.msra.mxu0 %v72
  %92 = vmatprep.subr.bf16.mxu0 0
  %93 = vmatpush1.bf16.msra.mxu0 0
  %94 = vmatprep.subr.bf16.mxu0 0
  %95 = vmatpush1.bf16.msra.mxu0 0
  %96 = vmatprep.subr.bf16.mxu0 0
  %97 = vmatpush1.bf16.msra.mxu0 0
  %98 = vmatprep.subr.bf16.mxu0 0
  %99 = vmatpush1.bf16.msra.mxu0 0
  %100 = vmatprep.subr.bf16.mxu0 0
  %101 = vmatpush1.bf16.msra.mxu0 0
  %102 = vmatprep.subr.bf16.mxu0 0
  %103 = vmatpush1.bf16.msra.mxu0 0
  %104 = vmatprep.subr.bf16.mxu0 0
  %105 = vmatpush1.bf16.msra.mxu0 0
  %106 = vmatprep.subr.bf16.mxu0 0
  %107 = vmatpush1.bf16.msra.mxu0 0
  %108 = vmatprep.subr.bf16.mxu0 0
  %109 = vmatpush1.bf16.msra.mxu0 0
  %110 = vmatprep.subr.bf16.mxu0 0
  %111 = vmatpush1.bf16.msra.mxu0 0
  %112 = vmatprep.subr.bf16.mxu0 0
  %113 = vmatpush1.bf16.msra.mxu0 0
  %114 = vmatprep.subr.bf16.mxu0 0
  %115 = vmatpush1.bf16.msra.mxu0 0
  %116 = vmatprep.mubr.bf16.mxu0 0
  %117 = vmatmul.mubr.bf16.gmra.mrb[0].mxu0 %v79
  %v118 = vpop.f32.mrb[0].mxu0
  %v119 = vadd.f32 %v41, %v118
  %v120 = vpop.f32.mrb[0].mxu0
  %v121 = vpop.f32.mrb[0].mxu0
  %v122 = vadd.f32 %v41, %v121
  %v123 = vpop.f32.mrb[0].mxu0
  %124 = vmatprep.mubr.bf16.mxu0 0
  %125 = vmatmul.mubr.bf16.gmra.mrb[0].mxu0 %v82
  %v126 = vpop.f32.mrb[0].mxu0
  %v127 = vadd.f32 %v41, %v126
  %v128 = vpop.f32.mrb[0].mxu0
  %v129 = vpop.f32.mrb[0].mxu0
  %v130 = vadd.f32 %v41, %v129
  %v131 = vpop.f32.mrb[0].mxu0
  %132 = vdwg.mxu0
  %v133 = vld [vmem:[%s3] sm:$0xf]
  %v134 = vld [vmem:[%s3 + $0x4] sm:$0xf]
  %v135 = vld [vmem:[%s3 + $0x8] sm:$0xf]
  %v136 = vld [vmem:[%s3 + $0xc] sm:$0xf]
  %v137 = vunpack.c.l.bf16 %v133
  %v138 = vunpack.c.l.bf16 %v134
  %v139 = vunpack.c.l.bf16 %v135
  %v140 = vunpack.c.l.bf16 %v136
  %v141 = vadd.f32 %v119, %v137
  %v142 = vadd.f32 %v122, %v138
  %v143 = vadd.f32 %v127, %v139
  %v144 = vadd.f32 %v130, %v140
  %vm145 = vcmask 261120
  %v146 = vsel %vm145, %v141, 0.0
  %147 = vadd.xlane.f32.xlu0 %v146
  %v148 = vpop.xlane.xlu0 %147
  %v149 = vsel %vm145, %v142, 0.0
  %150 = vadd.xlane.f32.xlu0 %v149
  %v151 = vpop.xlane.xlu0 %150
  %v152 = vsel %vm145, %v143, 0.0
  %153 = vadd.xlane.f32.xlu0 %v152
  %v154 = vpop.xlane.xlu0 %153
  %v155 = vsel %vm145, %v144, 0.0
  %156 = vadd.xlane.f32.xlu0 %v155
  %v157 = vpop.xlane.xlu0 %156
  %v158 = vrcp.pop 32.0
  %v159 = vmul.f32 %v148, %v158
  %v160 = vmul.f32 %v151, %v158
  %v161 = vmul.f32 %v154, %v158
  %v162 = vmul.f32 %v157, %v158
  %v163 = vsub.f32 %v141, %v159
  %v164 = vsub.f32 %v142, %v160
  %v165 = vsub.f32 %v143, %v161
  %v166 = vsub.f32 %v144, %v162
  %v167 = vmul.f32 %v163, %v163
  %v168 = vmul.f32 %v164, %v164
  %v169 = vmul.f32 %v165, %v165
  %v170 = vmul.f32 %v166, %v166
  %v171 = vsel %vm145, %v167, 0.0
  %172 = vadd.xlane.f32.xlu0 %v171
  %v173 = vpop.xlane.xlu0 %172
  %v174 = vsel %vm145, %v168, 0.0
  %175 = vadd.xlane.f32.xlu0 %v174
  %v176 = vpop.xlane.xlu0 %175
  %v177 = vsel %vm145, %v169, 0.0
  %178 = vadd.xlane.f32.xlu0 %v177
  %v179 = vpop.xlane.xlu0 %178
  %v180 = vsel %vm145, %v170, 0.0
  %181 = vadd.xlane.f32.xlu0 %v180
  %v182 = vpop.xlane.xlu0 %181
  %v183 = vmul.f32 %v173, %v158
  %v184 = vmul.f32 %v176, %v158
  %v185 = vmul.f32 %v179, %v158
  %v186 = vmul.f32 %v182, %v158
  %v187 = vadd.f32 %v183, 1e-12
  %v188 = vadd.f32 %v184, 1e-12
  %v189 = vadd.f32 %v185, 1e-12
  %v190 = vadd.f32 %v186, 1e-12
  %v191 = vrsqrt.pop %v187
  %v192 = vrsqrt.pop %v188
  %v193 = vrsqrt.pop %v189
  %v194 = vrsqrt.pop %v190
  %v195 = vmul.f32 %v163, %v191
  %v196 = vmul.f32 %v164, %v192
  %v197 = vmul.f32 %v165, %v193
  %v198 = vmul.f32 %v166, %v194
  %v199 = vld [vmem:[%s4] sm:$0x1]
  %v201 = vlaneseq
  %v202 = vshrl.u32 %v201, 7
  %v203 = vsub.s32 0, %v202
  %v204 = vrot.slane %v199, %v203
  %v206 = vmul.f32 %v195, %v204
  %v207 = vmul.f32 %v196, %v204
  %v208 = vmul.f32 %v197, %v204
  %v209 = vmul.f32 %v198, %v204
  %v210 = vld [vmem:[%s5] sm:$0x1]
  %v212 = vlaneseq
  %v213 = vshrl.u32 %v212, 7
  %v214 = vsub.s32 0, %v213
  %v215 = vrot.slane %v210, %v214
  %v217 = vadd.f32 %v206, %v215
  %v218 = vadd.f32 %v207, %v215
  %v219 = vadd.f32 %v208, %v215
  %v220 = vadd.f32 %v209, %v215
  %v221 = vpack.c.bf16 %v218, %v217
  %v222 = vpack.c.bf16 %v220, %v219
  %v225 = vunpack.c.l.b16 %v221
  %v226 = vunpack.c.h.b16 %v221
  %v227 = vunpack.c.l.b16 %v222
  %v228 = vunpack.c.h.b16 %v222
  %v229 = vpack.c.b16 %v225, %v225
  %v230 = vpack.c.b16 %v226, %v226
  %v231 = vpack.c.b16 %v227, %v227
  %v232 = vpack.c.b16 %v228, %v228
  %vm237 = vcmask 257024
  %238 = vst.msk [vmem:[%s6] sm:$0xf] %vm237, %v229
  %239 = vst.msk [vmem:[%s6 + $0x4] sm:$0xf] %vm237, %v230
  %240 = vst.msk [vmem:[%s6 + $0x8] sm:$0xf] %vm237, %v231
  %241 = vst.msk [vmem:[%s6 + $0xc] sm:$0xf] %vm237, %v232
  // Predicated region
  $region26: #{bert_country_forward.21} parent=0 // pred_check
    _
  $region27: #{bert_country_forward.21} parent=0 // pred_check_branch
    %243 = sbr.rel (0) target = $region29
  $region28: #{bert_country_forward.21} parent=0 // pred_region
    _
  $region29: #{bert_country_forward.21} parent=0 // pred_fallthru
    _
  // Predicated region
  $region30: #{bert_country_forward.21} parent=0 // pred_check
    _
  $region31: #{bert_country_forward.21} parent=0 // pred_check_branch
    %245 = sbr.rel (0) target = $region33
  $region32: #{bert_country_forward.21} parent=0 // pred_region
    _
  $region33: #{bert_country_forward.21} parent=0 // pred_fallthru
    _

// kernel: bert_country_forward.27
$region0: #{bert_country_forward.27}
  #allocation0 [shape = 'u32[]', space=smem, size = 0x4, offset = 0x4, fixed_abs, tag = 'smem constant byte address 0x4 - core index']
  #allocation1 [shape = 'u32[144,128]{1,0:T(1,128)}', space=vmem, size = 0x12000, scoped, tag = 'internal scratch']
  %s0 = inlined_call_operand.vmem [shape: bf16[32,32], index: 0, kind: input, shape index: {}]
  %s1 = inlined_call_operand.vmem [shape: bf16[32,256], index: 1, kind: input, shape index: {}]
  %s2 = inlined_call_operand.vmem [shape: f32[1,256], index: 2, kind: input, shape index: {}]
  %s3 = inlined_call_operand.vmem [shape: bf16[32,256], index: 3, kind: output, shape index: {}]
  %s4 = sld [smem:[#allocation0]]
  $region22: #{bert_country_forward.27} parent=0
    _
  %s6 = ssub.s32 1, %s4
  %s7 = scalar_select 0, %s6, %s4
  // Predicated region
  $region2: #{bert_country_forward.27} parent=0 // pred_check
    _
  $region3: #{bert_country_forward.27} parent=0 // pred_check_branch
    %9 = sbr.rel (0) target = $region5
  $region4: #{bert_country_forward.27} parent=0 // pred_region
    _
  $region5: #{bert_country_forward.27} parent=0 // pred_fallthru
    _
  // Predicated region
  $region6: #{bert_country_forward.27} parent=0 // pred_check
    _
  $region7: #{bert_country_forward.27} parent=0 // pred_check_branch
    %11 = sbr.rel (0) target = $region9
  $region8: #{bert_country_forward.27} parent=0 // pred_region
    _
  $region9: #{bert_country_forward.27} parent=0 // pred_fallthru
    _
  // Predicated region
  $region10: #{bert_country_forward.27} parent=0 // pred_check
    _
  $region11: #{bert_country_forward.27} parent=0 // pred_check_branch
    %13 = sbr.rel (0) target = $region13
  $region12: #{bert_country_forward.27} parent=0 // pred_region
    _
  $region13: #{bert_country_forward.27} parent=0 // pred_fallthru
    _
  %v15 = vld [vmem:[%s0] sm:$0xf]
  %v16 = vld [vmem:[%s0 + $0x4] sm:$0xf]
  %v17 = vld [vmem:[%s0 + $0x8] sm:$0xf]
  %v18 = vld [vmem:[%s0 + $0xc] sm:$0xf]
  %v19 = vld [vmem:[%s1] sm:$0xff]
  %v20 = vld [vmem:[%s1 + $0x8] sm:$0xff]
  %v21 = vld [vmem:[%s1 + $0x10] sm:$0xff]
  %v22 = vld [vmem:[%s1 + $0x18] sm:$0xff]
  %v23 = vld [vmem:[%s2] sm:$0x3]
  %v25 = vlaneseq
  %v26 = vshrl.u32 %v25, 7
  %v27 = vsub.s32 0, %v26
  %v28 = vrot.slane %v23, %v27
  %v29 = vlaneseq
  %v30 = vshrl.u32 %v29, 7
  %v31 = vsub.s32 1, %v30
  %v32 = vrot.slane %v23, %v31
  %v39 = vunpack.c.l.b16 %v15
  %v40 = vunpack.c.l.b16 %v16
  %v41 = vunpack.c.l.b16 %v17
  %v42 = vunpack.c.l.b16 %v18
  %v43 = vpack.c.b16 %v40, %v39
  %v44 = vpack.c.b16 %v42, %v41
  %v49 = vunpack.c.l.b16 %v19
  %v50 = vunpack.c.h.b16 %v19
  %v51 = vunpack.c.l.b16 %v20
  %v52 = vunpack.c.h.b16 %v20
  %v53 = vunpack.c.l.b16 %v21
  %v54 = vunpack.c.h.b16 %v21
  %v55 = vunpack.c.l.b16 %v22
  %v56 = vunpack.c.h.b16 %v22
  %v57 = vpack.c.b16 %v51, %v49
  %v58 = vpack.c.b16 %v52, %v50
  %v59 = vpack.c.b16 %v55, %v53
  %v60 = vpack.c.b16 %v56, %v54
  %vm65 = vcmask 261120
  %v67 = vsel %vm65, %v43, 0
  %v70 = vsel %vm65, %v44, 0
  %72 = vmatprep.subr.bf16.mxu0 %v58
  %73 = vmatpush1.bf16.msra.mxu0 %v57
  %74 = vmatprep.subr.bf16.mxu0 %v60
  %75 = vmatpush1.bf16.msra.mxu0 %v59
  %76 = vmatprep.subr.bf16.mxu0 0
  %77 = vmatpush1.bf16.msra.mxu0 0
  %78 = vmatprep.subr.bf16.mxu0 0
  %79 = vmatpush1.bf16.msra.mxu0 0
  %80 = vmatprep.subr.bf16.mxu0 0
  %81 = vmatpush1.bf16.msra.mxu0 0
  %82 = vmatprep.subr.bf16.mxu0 0
  %83 = vmatpush1.bf16.msra.mxu0 0
  %84 = vmatprep.subr.bf16.mxu0 0
  %85 = vmatpush1.bf16.msra.mxu0 0
  %86 = vmatprep.subr.bf16.mxu0 0
  %87 = vmatpush1.bf16.msra.mxu0 0
  %88 = vmatprep.subr.bf16.mxu0 0
  %89 = vmatpush1.bf16.msra.mxu0 0
  %90 = vmatprep.subr.bf16.mxu0 0
  %91 = vmatpush1.bf16.msra.mxu0 0
  %92 = vmatprep.subr.bf16.mxu0 0
  %93 = vmatpush1.bf16.msra.mxu0 0
  %94 = vmatprep.subr.bf16.mxu0 0
  %95 = vmatpush1.bf16.msra.mxu0 0
  %96 = vmatprep.subr.bf16.mxu0 0
  %97 = vmatpush1.bf16.msra.mxu0 0
  %98 = vmatprep.subr.bf16.mxu0 0
  %99 = vmatpush1.bf16.msra.mxu0 0
  %100 = vmatprep.subr.bf16.mxu0 0
  %101 = vmatpush1.bf16.msra.mxu0 0
  %102 = vmatprep.subr.bf16.mxu0 0
  %103 = vmatpush1.bf16.msra.mxu0 0
  %104 = vmatprep.mubr.bf16.mxu0 0
  %105 = vmatmul.mubr.bf16.gmra.mrb[0].mxu0 %v67
  %v106 = vpop.f32.mrb[0].mxu0
  %v107 = vadd.f32 %v28, %v106
  %v108 = vpop.f32.mrb[0].mxu0
  %v109 = vadd.f32 %v32, %v108
  %v110 = vpop.f32.mrb[0].mxu0
  %v111 = vadd.f32 %v28, %v110
  %v112 = vpop.f32.mrb[0].mxu0
  %v113 = vadd.f32 %v32, %v112
  %114 = vmatprep.mubr.bf16.mxu0 0
  %115 = vmatmul.mubr.bf16.gmra.mrb[0].mxu0 %v70
  %v116 = vpop.f32.mrb[0].mxu0
  %v117 = vadd.f32 %v28, %v116
  %v118 = vpop.f32.mrb[0].mxu0
  %v119 = vadd.f32 %v32, %v118
  %v120 = vpop.f32.mrb[0].mxu0
  %v121 = vadd.f32 %v28, %v120
  %v122 = vpop.f32.mrb[0].mxu0
  %v123 = vadd.f32 %v32, %v122
  %124 = vdwg.mxu0
  %v125 = vpack.c.bf16 %v111, %v107
  %v126 = vpack.c.bf16 %v113, %v109
  %v127 = vpack.c.bf16 %v121, %v117
  %v128 = vpack.c.bf16 %v123, %v119
  %v133 = vunpack.c.l.b16 %v125
  %v134 = vunpack.c.l.b16 %v126
  %v135 = vunpack.c.h.b16 %v125
  %v136 = vunpack.c.h.b16 %v126
  %v137 = vunpack.c.l.b16 %v127
  %v138 = vunpack.c.l.b16 %v128
  %v139 = vunpack.c.h.b16 %v127
  %v140 = vunpack.c.h.b16 %v128
  %v141 = vpack.c.b16 %v134, %v133
  %v142 = vpack.c.b16 %v136, %v135
  %v143 = vpack.c.b16 %v138, %v137
  %v144 = vpack.c.b16 %v140, %v139
  %149 = vst [vmem:[%s3] sm:$0xff] %v141
  %150 = vst [vmem:[%s3 + $0x8] sm:$0xff] %v142
  %151 = vst [vmem:[%s3 + $0x10] sm:$0xff] %v143
  %152 = vst [vmem:[%s3 + $0x18] sm:$0xff] %v144
  // Predicated region
  $region14: #{bert_country_forward.27} parent=0 // pred_check
    _
  $region15: #{bert_country_forward.27} parent=0 // pred_check_branch
    %154 = sbr.rel (0) target = $region17
  $region16: #{bert_country_forward.27} parent=0 // pred_region
    _
  $region17: #{bert_country_forward.27} parent=0 // pred_fallthru
    _
  // Predicated region
  $region18: #{bert_country_forward.27} parent=0 // pred_check
    _
  $region19: #{bert_country_forward.27} parent=0 // pred_check_branch
    %156 = sbr.rel (0) target = $region21
  $region20: #{bert_country_forward.27} parent=0 // pred_region
    _
  $region21: #{bert_country_forward.27} parent=0 // pred_fallthru
    _

// kernel: custom-call.6
$region0: #{custom-call.6}
  %s0 = inlined_call_operand.vmem [shape: s32[15,2,6], index: 0, kind: output, shape index: {}]

// kernel: bert_country_forward.29
$region0: #{bert_country_forward.29}
  #allocation0 [shape = 'u32[]', space=smem, size = 0x4, offset = 0x4, fixed_abs, tag = 'smem constant byte address 0x4 - core index']
  #allocation1 [shape = 'u32[144,128]{1,0:T(1,128)}', space=vmem, size = 0x12000, scoped, tag = 'internal scratch']
  %s0 = inlined_call_operand.vmem [shape: bf16[32,64], index: 0, kind: input, shape index: {}]
  %s1 = inlined_call_operand.vmem [shape: bf16[64,256], index: 1, kind: input, shape index: {}]
  %s2 = inlined_call_operand.vmem [shape: f32[1,256], index: 2, kind: input, shape index: {}]
  %s3 = inlined_call_operand.vmem [shape: bf16[32,256], index: 3, kind: output, shape index: {}]
  %s4 = sld [smem:[#allocation0]]
  $region22: #{bert_country_forward.29} parent=0
    _
  %s6 = ssub.s32 1, %s4
  %s7 = scalar_select 0, %s6, %s4
  // Predicated region
  $region2: #{bert_country_forward.29} parent=0 // pred_check
    _
  $region3: #{bert_country_forward.29} parent=0 // pred_check_branch
    %9 = sbr.rel (0) target = $region5
  $region4: #{bert_country_forward.29} parent=0 // pred_region
    _
  $region5: #{bert_country_forward.29} parent=0 // pred_fallthru
    _
  // Predicated region
  $region6: #{bert_country_forward.29} parent=0 // pred_check
    _
  $region7: #{bert_country_forward.29} parent=0 // pred_check_branch
    %11 = sbr.rel (0) target = $region9
  $region8: #{bert_country_forward.29} parent=0 // pred_region
    _
  $region9: #{bert_country_forward.29} parent=0 // pred_fallthru
    _
  // Predicated region
  $region10: #{bert_country_forward.29} parent=0 // pred_check
    _
  $region11: #{bert_country_forward.29} parent=0 // pred_check_branch
    %13 = sbr.rel (0) target = $region13
  $region12: #{bert_country_forward.29} parent=0 // pred_region
    _
  $region13: #{bert_country_forward.29} parent=0 // pred_fallthru
    _
  %v15 = vld [vmem:[%s0] sm:$0xf]
  %v16 = vld [vmem:[%s0 + $0x4] sm:$0xf]
  %v17 = vld [vmem:[%s0 + $0x8] sm:$0xf]
  %v18 = vld [vmem:[%s0 + $0xc] sm:$0xf]
  %v19 = vld [vmem:[%s1] sm:$0xff]
  %v20 = vld [vmem:[%s1 + $0x8] sm:$0xff]
  %v21 = vld [vmem:[%s1 + $0x10] sm:$0xff]
  %v22 = vld [vmem:[%s1 + $0x18] sm:$0xff]
  %v23 = vld [vmem:[%s1 + $0x20] sm:$0xff]
  %v24 = vld [vmem:[%s1 + $0x28] sm:$0xff]
  %v25 = vld [vmem:[%s1 + $0x30] sm:$0xff]
  %v26 = vld [vmem:[%s1 + $0x38] sm:$0xff]
  %v27 = vld [vmem:[%s2] sm:$0x3]
  %v29 = vlaneseq
  %v30 = vshrl.u32 %v29, 7
  %v31 = vsub.s32 0, %v30
  %v32 = vrot.slane %v27, %v31
  %v33 = vlaneseq
  %v34 = vshrl.u32 %v33, 7
  %v35 = vsub.s32 1, %v34
  %v36 = vrot.slane %v27, %v35
  %v43 = vunpack.c.l.b16 %v15
  %v44 = vunpack.c.l.b16 %v16
  %v45 = vunpack.c.l.b16 %v17
  %v46 = vunpack.c.l.b16 %v18
  %v47 = vpack.c.b16 %v44, %v43
  %v48 = vpack.c.b16 %v46, %v45
  %v57 = vunpack.c.l.b16 %v19
  %v58 = vunpack.c.h.b16 %v19
  %v59 = vunpack.c.l.b16 %v20
  %v60 = vunpack.c.h.b16 %v20
  %v61 = vunpack.c.l.b16 %v21
  %v62 = vunpack.c.h.b16 %v21
  %v63 = vunpack.c.l.b16 %v22
  %v64 = vunpack.c.h.b16 %v22
  %v65 = vunpack.c.l.b16 %v23
  %v66 = vunpack.c.h.b16 %v23
  %v67 = vunpack.c.l.b16 %v24
  %v68 = vunpack.c.h.b16 %v24
  %v69 = vunpack.c.l.b16 %v25
  %v70 = vunpack.c.h.b16 %v25
  %v71 = vunpack.c.l.b16 %v26
  %v72 = vunpack.c.h.b16 %v26
  %v73 = vpack.c.b16 %v59, %v57
  %v74 = vpack.c.b16 %v60, %v58
  %v75 = vpack.c.b16 %v63, %v61
  %v76 = vpack.c.b16 %v64, %v62
  %v77 = vpack.c.b16 %v67, %v65
  %v78 = vpack.c.b16 %v68, %v66
  %v79 = vpack.c.b16 %v71, %v69
  %v80 = vpack.c.b16 %v72, %v70
  %vm89 = vcmask 523264
  %v91 = vsel %vm89, %v47, 0
  %v94 = vsel %vm89, %v48, 0
  %96 = vmatprep.subr.bf16.mxu0 %v74
  %97 = vmatpush1.bf16.msra.mxu0 %v73
  %98 = vmatprep.subr.bf16.mxu0 %v76
  %99 = vmatpush1.bf16.msra.mxu0 %v75
  %100 = vmatprep.subr.bf16.mxu0 %v78
  %101 = vmatpush1.bf16.msra.mxu0 %v77
  %102 = vmatprep.subr.bf16.mxu0 %v80
  %103 = vmatpush1.bf16.msra.mxu0 %v79
  %104 = vmatprep.subr.bf16.mxu0 0
  %105 = vmatpush1.bf16.msra.mxu0 0
  %106 = vmatprep.subr.bf16.mxu0 0
  %107 = vmatpush1.bf16.msra.mxu0 0
  %108 = vmatprep.subr.bf16.mxu0 0
  %109 = vmatpush1.bf16.msra.mxu0 0
  %110 = vmatprep.subr.bf16.mxu0 0
  %111 = vmatpush1.bf16.msra.mxu0 0
  %112 = vmatprep.subr.bf16.mxu0 0
  %113 = vmatpush1.bf16.msra.mxu0 0
  %114 = vmatprep.subr.bf16.mxu0 0
  %115 = vmatpush1.bf16.msra.mxu0 0
  %116 = vmatprep.subr.bf16.mxu0 0
  %117 = vmatpush1.bf16.msra.mxu0 0
  %118 = vmatprep.subr.bf16.mxu0 0
  %119 = vmatpush1.bf16.msra.mxu0 0
  %120 = vmatprep.subr.bf16.mxu0 0
  %121 = vmatpush1.bf16.msra.mxu0 0
  %122 = vmatprep.subr.bf16.mxu0 0
  %123 = vmatpush1.bf16.msra.mxu0 0
  %124 = vmatprep.subr.bf16.mxu0 0
  %125 = vmatpush1.bf16.msra.mxu0 0
  %126 = vmatprep.subr.bf16.mxu0 0
  %127 = vmatpush1.bf16.msra.mxu0 0
  %128 = vmatprep.mubr.bf16.mxu0 0
  %129 = vmatmul.mubr.bf16.gmra.mrb[0].mxu0 %v91
  %v130 = vpop.f32.mrb[0].mxu0
  %v131 = vadd.f32 %v32, %v130
  %v132 = vpop.f32.mrb[0].mxu0
  %v133 = vadd.f32 %v36, %v132
  %v134 = vpop.f32.mrb[0].mxu0
  %v135 = vadd.f32 %v32, %v134
  %v136 = vpop.f32.mrb[0].mxu0
  %v137 = vadd.f32 %v36, %v136
  %138 = vmatprep.mubr.bf16.mxu0 0
  %139 = vmatmul.mubr.bf16.gmra.mrb[0].mxu0 %v94
  %v140 = vpop.f32.mrb[0].mxu0
  %v141 = vadd.f32 %v32, %v140
  %v142 = vpop.f32.mrb[0].mxu0
  %v143 = vadd.f32 %v36, %v142
  %v144 = vpop.f32.mrb[0].mxu0
  %v145 = vadd.f32 %v32, %v144
  %v146 = vpop.f32.mrb[0].mxu0
  %v147 = vadd.f32 %v36, %v146
  %148 = vdwg.mxu0
  %v149 = vpack.c.bf16 %v135, %v131
  %v150 = vpack.c.bf16 %v137, %v133
  %v151 = vpack.c.bf16 %v145, %v141
  %v152 = vpack.c.bf16 %v147, %v143
  %v157 = vunpack.c.l.b16 %v149
  %v158 = vunpack.c.l.b16 %v150
  %v159 = vunpack.c.h.b16 %v149
  %v160 = vunpack.c.h.b16 %v150
  %v161 = vunpack.c.l.b16 %v151
  %v162 = vunpack.c.l.b16 %v152
  %v163 = vunpack.c.h.b16 %v151
  %v164 = vunpack.c.h.b16 %v152
  %v165 = vpack.c.b16 %v158, %v157
  %v166 = vpack.c.b16 %v160, %v159
  %v167 = vpack.c.b16 %v162, %v161
  %v168 = vpack.c.b16 %v164, %v163
  %173 = vst [vmem:[%s3] sm:$0xff] %v165
  %174 = vst [vmem:[%s3 + $0x8] sm:$0xff] %v166
  %175 = vst [vmem:[%s3 + $0x10] sm:$0xff] %v167
  %176 = vst [vmem:[%s3 + $0x18] sm:$0xff] %v168
  // Predicated region
  $region14: #{bert_country_forward.29} parent=0 // pred_check
    _
  $region15: #{bert_country_forward.29} parent=0 // pred_check_branch
    %178 = sbr.rel (0) target = $region17
  $region16: #{bert_country_forward.29} parent=0 // pred_region
    _
  $region17: #{bert_country_forward.29} parent=0 // pred_fallthru
    _
  // Predicated region
  $region18: #{bert_country_forward.29} parent=0 // pred_check
    _
  $region19: #{bert_country_forward.29} parent=0 // pred_check_branch
    %180 = sbr.rel (0) target = $region21
  $region20: #{bert_country_forward.29} parent=0 // pred_region
    _
  $region21: #{bert_country_forward.29} parent=0 // pred_fallthru
    _

// kernel: bert_country_forward.31
$region0: #{bert_country_forward.31}
  #allocation0 [shape = 'u32[]', space=smem, size = 0x4, offset = 0x4, fixed_abs, tag = 'smem constant byte address 0x4 - core index']
  #allocation1 [shape = 'u32[144,128]{1,0:T(1,128)}', space=vmem, size = 0x12000, scoped, tag = 'internal scratch']
  %s0 = inlined_call_operand.vmem [shape: bf16[32,64], index: 0, kind: input, shape index: {}]
  %s1 = inlined_call_operand.vmem [shape: bf16[64,128], index: 1, kind: input, shape index: {}]
  %s2 = inlined_call_operand.vmem [shape: f32[1,128], index: 2, kind: input, shape index: {}]
  %s3 = inlined_call_operand.vmem [shape: bf16[128,128], index: 3, kind: input, shape index: {}]
  %s4 = inlined_call_operand.vmem [shape: f32[1,128], index: 4, kind: input, shape index: {}]
  %s5 = inlined_call_operand.vmem [shape: f32[32,128], index: 5, kind: output, shape index: {}]
  %s6 = sld [smem:[#allocation0]]
  $region30: #{bert_country_forward.31} parent=0
    _
  %s8 = ssub.s32 1, %s6
  %s9 = scalar_select 0, %s8, %s6
  // Predicated region
  $region2: #{bert_country_forward.31} parent=0 // pred_check
    _
  $region3: #{bert_country_forward.31} parent=0 // pred_check_branch
    %11 = sbr.rel (0) target = $region5
  $region4: #{bert_country_forward.31} parent=0 // pred_region
    _
  $region5: #{bert_country_forward.31} parent=0 // pred_fallthru
    _
  // Predicated region
  $region6: #{bert_country_forward.31} parent=0 // pred_check
    _
  $region7: #{bert_country_forward.31} parent=0 // pred_check_branch
    %13 = sbr.rel (0) target = $region9
  $region8: #{bert_country_forward.31} parent=0 // pred_region
    _
  $region9: #{bert_country_forward.31} parent=0 // pred_fallthru
    _
  // Predicated region
  $region10: #{bert_country_forward.31} parent=0 // pred_check
    _
  $region11: #{bert_country_forward.31} parent=0 // pred_check_branch
    %15 = sbr.rel (0) target = $region13
  $region12: #{bert_country_forward.31} parent=0 // pred_region
    _
  $region13: #{bert_country_forward.31} parent=0 // pred_fallthru
    _
  // Predicated region
  $region14: #{bert_country_forward.31} parent=0 // pred_check
    _
  $region15: #{bert_country_forward.31} parent=0 // pred_check_branch
    %17 = sbr.rel (0) target = $region17
  $region16: #{bert_country_forward.31} parent=0 // pred_region
    _
  $region17: #{bert_country_forward.31} parent=0 // pred_fallthru
    _
  // Predicated region
  $region18: #{bert_country_forward.31} parent=0 // pred_check
    _
  $region19: #{bert_country_forward.31} parent=0 // pred_check_branch
    %19 = sbr.rel (0) target = $region21
  $region20: #{bert_country_forward.31} parent=0 // pred_region
    _
  $region21: #{bert_country_forward.31} parent=0 // pred_fallthru
    _
  %v21 = vld [vmem:[%s0] sm:$0xf]
  %v22 = vld [vmem:[%s0 + $0x4] sm:$0xf]
  %v23 = vld [vmem:[%s0 + $0x8] sm:$0xf]
  %v24 = vld [vmem:[%s0 + $0xc] sm:$0xf]
  %v25 = vld [vmem:[%s1] sm:$0xf]
  %v26 = vld [vmem:[%s1 + $0x4] sm:$0xf]
  %v27 = vld [vmem:[%s1 + $0x8] sm:$0xf]
  %v28 = vld [vmem:[%s1 + $0xc] sm:$0xf]
  %v29 = vld [vmem:[%s1 + $0x10] sm:$0xf]
  %v30 = vld [vmem:[%s1 + $0x14] sm:$0xf]
  %v31 = vld [vmem:[%s1 + $0x18] sm:$0xf]
  %v32 = vld [vmem:[%s1 + $0x1c] sm:$0xf]
  %v33 = vld [vmem:[%s2] sm:$0x1]
  %v35 = vlaneseq
  %v36 = vshrl.u32 %v35, 7
  %v37 = vsub.s32 0, %v36
  %v38 = vrot.slane %v33, %v37
  %v44 = vunpack.c.l.b16 %v21
  %v45 = vunpack.c.l.b16 %v22
  %v46 = vunpack.c.l.b16 %v23
  %v47 = vunpack.c.l.b16 %v24
  %v48 = vpack.c.b16 %v45, %v44
  %v49 = vpack.c.b16 %v47, %v46
  %v58 = vunpack.c.l.b16 %v25
  %v59 = vunpack.c.l.b16 %v26
  %v60 = vunpack.c.l.b16 %v27
  %v61 = vunpack.c.l.b16 %v28
  %v62 = vunpack.c.l.b16 %v29
  %v63 = vunpack.c.l.b16 %v30
  %v64 = vunpack.c.l.b16 %v31
  %v65 = vunpack.c.l.b16 %v32
  %v66 = vpack.c.b16 %v59, %v58
  %v67 = vpack.c.b16 %v61, %v60
  %v68 = vpack.c.b16 %v63, %v62
  %v69 = vpack.c.b16 %v65, %v64
  %vm74 = vcmask 523264
  %v76 = vsel %vm74, %v48, 0
  %v79 = vsel %vm74, %v49, 0
  %81 = vmatprep.subr.bf16.mxu0 0
  %82 = vmatpush1.bf16.msra.mxu0 %v66
  %83 = vmatprep.subr.bf16.mxu0 0
  %84 = vmatpush1.bf16.msra.mxu0 %v67
  %85 = vmatprep.subr.bf16.mxu0 0
  %86 = vmatpush1.bf16.msra.mxu0 %v68
  %87 = vmatprep.subr.bf16.mxu0 0
  %88 = vmatpush1.bf16.msra.mxu0 %v69
  %89 = vmatprep.subr.bf16.mxu0 0
  %90 = vmatpush1.bf16.msra.mxu0 0
  %91 = vmatprep.subr.bf16.mxu0 0
  %92 = vmatpush1.bf16.msra.mxu0 0
  %93 = vmatprep.subr.bf16.mxu0 0
  %94 = vmatpush1.bf16.msra.mxu0 0
  %95 = vmatprep.subr.bf16.mxu0 0
  %96 = vmatpush1.bf16.msra.mxu0 0
  %97 = vmatprep.subr.bf16.mxu0 0
  %98 = vmatpush1.bf16.msra.mxu0 0
  %99 = vmatprep.subr.bf16.mxu0 0
  %100 = vmatpush1.bf16.msra.mxu0 0
  %101 = vmatprep.subr.bf16.mxu0 0
  %102 = vmatpush1.bf16.msra.mxu0 0
  %103 = vmatprep.subr.bf16.mxu0 0
  %104 = vmatpush1.bf16.msra.mxu0 0
  %105 = vmatprep.subr.bf16.mxu0 0
  %106 = vmatpush1.bf16.msra.mxu0 0
  %107 = vmatprep.subr.bf16.mxu0 0
  %108 = vmatpush1.bf16.msra.mxu0 0
  %109 = vmatprep.subr.bf16.mxu0 0
  %110 = vmatpush1.bf16.msra.mxu0 0
  %111 = vmatprep.subr.bf16.mxu0 0
  %112 = vmatpush1.bf16.msra.mxu0 0
  %113 = vmatprep.mubr.bf16.mxu0 0
  %114 = vmatmul.mubr.bf16.gmra.mrb[0].mxu0 %v76
  %v115 = vpop.f32.mrb[0].mxu0
  %v116 = vadd.f32 %v38, %v115
  %v117 = vpop.f32.mrb[0].mxu0
  %v118 = vpop.f32.mrb[0].mxu0
  %v119 = vadd.f32 %v38, %v118
  %v120 = vpop.f32.mrb[0].mxu0
  %121 = vmatprep.mubr.bf16.mxu0 0
  %122 = vmatmul.mubr.bf16.gmra.mrb[0].mxu0 %v79
  %v123 = vpop.f32.mrb[0].mxu0
  %v124 = vadd.f32 %v38, %v123
  %v125 = vpop.f32.mrb[0].mxu0
  %v126 = vpop.f32.mrb[0].mxu0
  %v127 = vadd.f32 %v38, %v126
  %v128 = vpop.f32.mrb[0].mxu0
  %129 = vdwg.mxu0
  %v130 = vmax.f32 %v116, 0.0
  %v131 = vmax.f32 %v119, 0.0
  %v132 = vmax.f32 %v124, 0.0
  %v133 = vmax.f32 %v127, 0.0
  %v134 = vpack.c.bf16 %v131, %v130
  %v135 = vpack.c.bf16 %v133, %v132
  %v136 = vld [vmem:[%s3] sm:$0xf]
  %v137 = vld [vmem:[%s3 + $0x4] sm:$0xf]
  %v138 = vld [vmem:[%s3 + $0x8] sm:$0xf]
  %v139 = vld [vmem:[%s3 + $0xc] sm:$0xf]
  %v140 = vld [vmem:[%s3 + $0x10] sm:$0xf]
  %v141 = vld [vmem:[%s3 + $0x14] sm:$0xf]
  %v142 = vld [vmem:[%s3 + $0x18] sm:$0xf]
  %v143 = vld [vmem:[%s3 + $0x1c] sm:$0xf]
  %v144 = vld [vmem:[%s3 + $0x20] sm:$0xf]
  %v145 = vld [vmem:[%s3 + $0x24] sm:$0xf]
  %v146 = vld [vmem:[%s3 + $0x28] sm:$0xf]
  %v147 = vld [vmem:[%s3 + $0x2c] sm:$0xf]
  %v148 = vld [vmem:[%s3 + $0x30] sm:$0xf]
  %v149 = vld [vmem:[%s3 + $0x34] sm:$0xf]
  %v150 = vld [vmem:[%s3 + $0x38] sm:$0xf]
  %v151 = vld [vmem:[%s3 + $0x3c] sm:$0xf]
  %v152 = vld [vmem:[%s4] sm:$0x1]
  %v154 = vlaneseq
  %v155 = vshrl.u32 %v154, 7
  %v156 = vsub.s32 0, %v155
  %v157 = vrot.slane %v152, %v156
  %v175 = vunpack.c.l.b16 %v136
  %v176 = vunpack.c.l.b16 %v137
  %v177 = vunpack.c.l.b16 %v138
  %v178 = vunpack.c.l.b16 %v139
  %v179 = vunpack.c.l.b16 %v140
  %v180 = vunpack.c.l.b16 %v141
  %v181 = vunpack.c.l.b16 %v142
  %v182 = vunpack.c.l.b16 %v143
  %v183 = vunpack.c.l.b16 %v144
  %v184 = vunpack.c.l.b16 %v145
  %v185 = vunpack.c.l.b16 %v146
  %v186 = vunpack.c.l.b16 %v147
  %v187 = vunpack.c.l.b16 %v148
  %v188 = vunpack.c.l.b16 %v149
  %v189 = vunpack.c.l.b16 %v150
  %v190 = vunpack.c.l.b16 %v151
  %v191 = vpack.c.b16 %v176, %v175
  %v192 = vpack.c.b16 %v178, %v177
  %v193 = vpack.c.b16 %v180, %v179
  %v194 = vpack.c.b16 %v182, %v181
  %v195 = vpack.c.b16 %v184, %v183
  %v196 = vpack.c.b16 %v186, %v185
  %v197 = vpack.c.b16 %v188, %v187
  %v198 = vpack.c.b16 %v190, %v189
  %207 = vmatprep.subr.bf16.mxu0 0
  %208 = vmatpush1.bf16.msra.mxu0 %v191
  %209 = vmatprep.subr.bf16.mxu0 0
  %210 = vmatpush1.bf16.msra.mxu0 %v192
  %211 = vmatprep.subr.bf16.mxu0 0
  %212 = vmatpush1.bf16.msra.mxu0 %v193
  %213 = vmatprep.subr.bf16.mxu0 0
  %214 = vmatpush1.bf16.msra.mxu0 %v194
  %215 = vmatprep.subr.bf16.mxu0 0
  %216 = vmatpush1.bf16.msra.mxu0 %v195
  %217 = vmatprep.subr.bf16.mxu0 0
  %218 = vmatpush1.bf16.msra.mxu0 %v196
  %219 = vmatprep.subr.bf16.mxu0 0
  %220 = vmatpush1.bf16.msra.mxu0 %v197
  %221 = vmatprep.subr.bf16.mxu0 0
  %222 = vmatpush1.bf16.msra.mxu0 %v198
  %223 = vmatprep.subr.bf16.mxu0 0
  %224 = vmatpush1.bf16.msra.mxu0 0
  %225 = vmatprep.subr.bf16.mxu0 0
  %226 = vmatpush1.bf16.msra.mxu0 0
  %227 = vmatprep.subr.bf16.mxu0 0
  %228 = vmatpush1.bf16.msra.mxu0 0
  %229 = vmatprep.subr.bf16.mxu0 0
  %230 = vmatpush1.bf16.msra.mxu0 0
  %231 = vmatprep.subr.bf16.mxu0 0
  %232 = vmatpush1.bf16.msra.mxu0 0
  %233 = vmatprep.subr.bf16.mxu0 0
  %234 = vmatpush1.bf16.msra.mxu0 0
  %235 = vmatprep.subr.bf16.mxu0 0
  %236 = vmatpush1.bf16.msra.mxu0 0
  %237 = vmatprep.subr.bf16.mxu0 0
  %238 = vmatpush1.bf16.msra.mxu0 0
  %239 = vmatprep.mubr.bf16.mxu0 0
  %240 = vmatmul.mubr.bf16.gmra.mrb[0].mxu0 %v134
  %v241 = vpop.f32.mrb[0].mxu0
  %v242 = vadd.f32 %v157, %v241
  %v243 = vpop.f32.mrb[0].mxu0
  %v244 = vpop.f32.mrb[0].mxu0
  %v245 = vadd.f32 %v157, %v244
  %v246 = vpop.f32.mrb[0].mxu0
  %247 = vmatprep.mubr.bf16.mxu0 0
  %248 = vmatmul.mubr.bf16.gmra.mrb[0].mxu0 %v135
  %v249 = vpop.f32.mrb[0].mxu0
  %v250 = vadd.f32 %v157, %v249
  %v251 = vpop.f32.mrb[0].mxu0
  %v252 = vpop.f32.mrb[0].mxu0
  %v253 = vadd.f32 %v157, %v252
  %v254 = vpop.f32.mrb[0].mxu0
  %255 = vdwg.mxu0
  %256 = vst [vmem:[%s5] sm:$0xff] %v242
  %257 = vst [vmem:[%s5 + $0x8] sm:$0xff] %v245
  %258 = vst [vmem:[%s5 + $0x10] sm:$0xff] %v250
  %259 = vst [vmem:[%s5 + $0x18] sm:$0xff] %v253
  // Predicated region
  $region22: #{bert_country_forward.31} parent=0 // pred_check
    _
  $region23: #{bert_country_forward.31} parent=0 // pred_check_branch
    %261 = sbr.rel (0) target = $region25
  $region24: #{bert_country_forward.31} parent=0 // pred_region
    _
  $region25: #{bert_country_forward.31} parent=0 // pred_fallthru
    _
  // Predicated region
  $region26: #{bert_country_forward.31} parent=0 // pred_check
    _
  $region27: #{bert_country_forward.31} parent=0 // pred_check_branch
    %263 = sbr.rel (0) target = $region29
  $region28: #{bert_country_forward.31} parent=0 // pred_region
    _
  $region29: #{bert_country_forward.31} parent=0 // pred_fallthru
    _

// kernel: custom-call.7
$region0: #{custom-call.7}
  %s0 = inlined_call_operand.vmem [shape: s32[15,2], index: 0, kind: output, shape index: {}]

// kernel: bert_country_forward.28
$region0: #{bert_country_forward.28}
  #allocation0 [shape = 'u32[]', space=smem, size = 0x4, offset = 0x4, fixed_abs, tag = 'smem constant byte address 0x4 - core index']
  #allocation1 [shape = 'u32[144,128]{1,0:T(1,128)}', space=vmem, size = 0x12000, scoped, tag = 'internal scratch']
  #allocation2 [shape = 'f32[8,32]{1,0:T(8,128)}', space=vmem, size = 0x1000, scoped, tag = 'scratch operand']
  #allocation3 [shape = 'f32[8,32]{1,0:T(8,128)}', space=vmem, size = 0x1000, scoped, tag = 'scratch operand']
  %s0 = inlined_call_operand.vmem [shape: bf16[16,8,256], index: 0, kind: input, shape index: {}]
  %s1 = inlined_call_operand.vmem [shape: bf16[2,32,128], index: 1, kind: input, shape index: {}]
  %s2 = inlined_call_operand.vmem [shape: bf16[2,16,8,32], index: 2, kind: output, shape index: {}]
  %s3 = sld [smem:[#allocation0]]
  $region94: #{bert_country_forward.28} parent=0
    _
  %s5 = ssub.s32 1, %s3
  %s6 = scalar_select 0, %s5, %s3
  $region1: #{bert_country_forward.28} parent=0
    #allocation4 [shape = 'u8[65536]{0}', space=vmem, size = 0x10000, scoped, tag = 'input window, operand 0']
    loop: start=0, step=1, limit=4
    $region2: #{bert_country_forward.28} parent=1 // loop_pre_header
      _
    $region3: #{bert_country_forward.28} parent=1 // loop_header
      %s8 = sphi 0, %s12
      %p9 = scmp.ge.s32.totalorder %s8, 4
      %s15 = sphi 0, %s27
      %s16 = sphi 0, %s23
      %s17 = sphi 0, %s15
      %s18 = sphi 0, %s16
      %s19 = sphi 0, %s17
      %s20 = sphi 0, %s18
      %s40 = sphi 0, %s42
      %s43 = sphi 0, %s40
      %s44 = sphi 0, %s43
      %s60 = sphi 0, %s44
      %s66 = sphi 0, %s68
      %s69 = sphi 0, %s66
      %s70 = sphi 0, %s69
      %s86 = sphi 0, %s70
      %s102 = sphi 0, %s104
      %s105 = sphi 0, %s102
      %s106 = sphi 0, %s105
      %s122 = sphi 0, %s106
    $region4: #{bert_country_forward.28} parent=1 // loop_header_branch
      %11 = sbr.rel (%p9) target = $region8
    $region5: #{bert_country_forward.28} parent=1 // loop_body
      %s13 = ssub.s32 %s8, 1
      %s14 = ssub.s32 %s8, 2
      %s21 = sadd.s32 1, %s16
      %p22 = scmp.ge.s32.totalorder %s21, 1
      %s23 = scalar_select %p22, 0, %s21
      %s24 = sadd.s32 1, %s15
      %s25 = scalar_select %p22, %s24, %s15
      %p26 = scmp.ge.s32.totalorder %s25, 2
      %s27 = scalar_select %p26, 0, %s25
      %s28 = smul.u32 %s16, 2
      %s29 = ssub.s32 0, %s28
      %s30 = smul.u32 %s15, %s29
      %s31 = sadd.s32 %s16, %s30
      %s32 = smul.u32 %s23, 2
      %s33 = ssub.s32 0, %s32
      %s34 = smul.u32 %s27, %s33
      %s35 = sadd.s32 %s23, %s34
      %s36 = ssub.s32 %s31, %s35
      %s37 = ssub.s32 %s15, %s27
      %s38 = sor.u32 %s36, %s37
      %p39 = scmp.eq.s32.totalorder %s38, 0
      %s41 = sadd.s32 %s40, 1
      %s42 = scalar_select %p39, %s40, %s41
      %p45 = pneg %p39
      %p46 = scmp.eq.s32.totalorder %s8, 1
      %p47 = por %p45, %p46
      %p48 = scmp.ne.s32.totalorder %s40, %s43
      %p49 = scmp.eq.s32.totalorder %s8, 0
      %p50 = por %p48, %p49
      %p51 = scmp.ne.s32.totalorder %s40, %s43
      %p52 = scmp.eq.s32.totalorder %s13, 1
      %p53 = por %p51, %p52
      %p54 = scmp.ne.s32.totalorder %s43, %s44
      %p55 = scmp.eq.s32.totalorder %s13, 0
      %p56 = por %p54, %p55
      %p57 = scmp.ne.s32.totalorder %s43, %s44
      %p58 = scmp.eq.s32.totalorder %s14, 1
      %p59 = por %p57, %p58
      %p61 = scmp.ne.s32.totalorder %s44, %s60
      %p62 = scmp.eq.s32.totalorder %s14, 0
      %p63 = por %p61, %p62
      %s64 = ssub.s32 %s15, %s27
      %p65 = scmp.eq.s32.totalorder %s64, 0
      %s67 = sadd.s32 %s66, 1
      %s68 = scalar_select %p65, %s66, %s67
      %p71 = pneg %p65
      %p72 = scmp.eq.s32.totalorder %s8, 1
      %p73 = por %p71, %p72
      %p74 = scmp.ne.s32.totalorder %s66, %s69
      %p75 = scmp.eq.s32.totalorder %s8, 0
      %p76 = por %p74, %p75
      %p77 = scmp.ne.s32.totalorder %s66, %s69
      %p78 = scmp.eq.s32.totalorder %s13, 1
      %p79 = por %p77, %p78
      %p80 = scmp.ne.s32.totalorder %s69, %s70
      %p81 = scmp.eq.s32.totalorder %s13, 0
      %p82 = por %p80, %p81
      %p83 = scmp.ne.s32.totalorder %s69, %s70
      %p84 = scmp.eq.s32.totalorder %s14, 1
      %p85 = por %p83, %p84
      %p87 = scmp.ne.s32.totalorder %s70, %s86
      %p88 = scmp.eq.s32.totalorder %s14, 0
      %p89 = por %p87, %p88
      %s90 = smul.u32 %s16, 2
      %s91 = ssub.s32 0, %s90
      %s92 = smul.u32 %s15, %s91
      %s93 = sadd.s32 %s16, %s92
      %s94 = smul.u32 %s23, 2
      %s95 = ssub.s32 0, %s94
      %s96 = smul.u32 %s27, %s95
      %s97 = sadd.s32 %s23, %s96
      %s98 = ssub.s32 %s15, %s27
      %s99 = ssub.s32 %s93, %s97
      %s100 = sor.u32 %s98, %s99
      %p101 = scmp.eq.s32.totalorder %s100, 0
      %s103 = sadd.s32 %s102, 1
      %s104 = scalar_select %p101, %s102, %s103
      %p107 = pneg %p101
      %p108 = scmp.eq.s32.totalorder %s8, 1
      %p109 = por %p107, %p108
      %p110 = scmp.ne.s32.totalorder %s102, %s105
      %p111 = scmp.eq.s32.totalorder %s8, 0
      %p112 = por %p110, %p111
      %p113 = scmp.ne.s32.totalorder %s102, %s105
      %p114 = scmp.eq.s32.totalorder %s13, 1
      %p115 = por %p113, %p114
      %p116 = scmp.ne.s32.totalorder %s105, %s106
      %p117 = scmp.eq.s32.totalorder %s13, 0
      %p118 = por %p116, %p117
      %p119 = scmp.ne.s32.totalorder %s105, %s106
      %p120 = scmp.eq.s32.totalorder %s14, 1
      %p121 = por %p119, %p120
      %p123 = scmp.ne.s32.totalorder %s106, %s122
      %p124 = scmp.eq.s32.totalorder %s14, 0
      %p125 = por %p123, %p124
      %p126 = scmp.le.s32.totalorder 1, %s8
      %p127 = scmp.lt.s32.totalorder %s8, 3
      %p128 = pnand %p126, %p127
      %p129 = pneg %p128
      // Predicated region
      $region9: #{bert_country_forward.28} parent=5 // pred_check
        _
      $region10: #{bert_country_forward.28} parent=5 // pred_check_branch
        %131 = sbr.rel (%p128) target = $region12
      $region11: #{bert_country_forward.28} parent=5 // pred_region
        %s132 = ssub.s32 %s8, 1
      $region12: #{bert_country_forward.28} parent=5 // pred_fallthru
        _
      %p133 = scmp.lt.s32.totalorder %s8, 2
      // Predicated region
      $region13: #{bert_country_forward.28} parent=5 // pred_check
        %p134 = pneg %p133
      $region14: #{bert_country_forward.28} parent=5 // pred_check_branch
        %136 = sbr.rel (%p134) target = $region16
      $region15: #{bert_country_forward.28} parent=5 // pred_region
        // Predicated region
        $region17: #{bert_country_forward.28} parent=15 // pred_check
          %p137 = pneg %p50
        $region18: #{bert_country_forward.28} parent=15 // pred_check_branch
          %139 = sbr.rel (%p137) target = $region20
        $region19: #{bert_country_forward.28} parent=15 // pred_region
          %s140 = sand.u32 %s40, 1
          %s141 = sand.u32 %s40, 1
          %s142 = smul.addr %s141, 64
          %s143 = scalar_lea.vmem [#allocation4], %s142
          %s144 = smul.u32 %s16, 2
          %s145 = ssub.s32 0, %s144
          %s146 = smul.u32 %s15, %s145
          %s147 = sadd.s32 %s16, %s146
          %s148 = smul.u32 16, %s147
          %s149 = smul.addr %s148, 2
          %s150 = sadd.s32 %s15, %s149
          %s151 = smul.addr %s150, 4
          %s152 = scalar_lea.vmem %s0, %s151
          // Predicated region
          $region21: #{bert_country_forward.28} parent=19 // pred_check
            _
          $region22: #{bert_country_forward.28} parent=19 // pred_check_branch
            %154 = sbr.rel (0) target = $region24
          $region23: #{bert_country_forward.28} parent=19 // pred_region
            // Predicated region
            $region25: #{bert_country_forward.28} parent=23 // pred_check
              _
            $region26: #{bert_country_forward.28} parent=23 // pred_check_branch
              %156 = sbr.rel target = $region28
            $region27: #{bert_country_forward.28} parent=23 // pred_region
              // Predicated region
              $region40: #{bert_country_forward.28} parent=27 // pred_check
                _
              $region41: #{bert_country_forward.28} parent=27 // pred_check_branch
                %201 = sbr.rel (0) target = $region43
              $region42: #{bert_country_forward.28} parent=27 // pred_region
                loop: start=0, step=1, limit=1
                $region44: #{bert_country_forward.28} parent=42 // loop_pre_header
                  _
                $region45: #{bert_country_forward.28} parent=42 // loop_header
                  %s203 = sphi 0, %s207
                  %p204 = scmp.ge.s32.totalorder %s203, 1
                  %s208 = sphi %s152, %s152
                  %s209 = sphi %s143, %s143
                $region46: #{bert_country_forward.28} parent=42 // loop_header_branch
                  %206 = sbr.rel (%p204) target = $region50
                $region47: #{bert_country_forward.28} parent=42 // loop_body
                  _
                $region48: #{bert_country_forward.28} parent=42 // loop_footer
                  %s207 = sadd.s32 1, %s203
                $region49: #{bert_country_forward.28} parent=42 // loop_footer_branch
                  %202 = sbr.rel target = $region45
                $region50: #{bert_country_forward.28} parent=42 // loop_exit
                  _
                loop: start=0, step=1, limit=1
                $region51: #{bert_country_forward.28} parent=42 // loop_pre_header
                  _
                $region52: #{bert_country_forward.28} parent=42 // loop_header
                  %s212 = sphi 0, %s216
                  %p213 = scmp.ge.s32.totalorder %s212, 1
                  %s217 = sphi %s152, %s152
                  %s218 = sphi %s143, %s143
                $region53: #{bert_country_forward.28} parent=42 // loop_header_branch
                  %215 = sbr.rel (%p213) target = $region57
                $region54: #{bert_country_forward.28} parent=42 // loop_body
                  %v219 = vld [vmem:[%s217] sm:$0xf]
                  %220 = vst [vmem:[%s218] sm:$0xf] %v219
                  %v221 = vld [vmem:[%s217 + $0x8] sm:$0xf]
                  %222 = vst [vmem:[%s218 + $0x4] sm:$0xf] %v221
                  %v223 = vld [vmem:[%s217 + $0x10] sm:$0xf]
                  %224 = vst [vmem:[%s218 + $0x8] sm:$0xf] %v223
                  %v225 = vld [vmem:[%s217 + $0x18] sm:$0xf]
                  %226 = vst [vmem:[%s218 + $0xc] sm:$0xf] %v225
                  %v227 = vld [vmem:[%s217 + $0x20] sm:$0xf]
                  %228 = vst [vmem:[%s218 + $0x10] sm:$0xf] %v227
                  %v229 = vld [vmem:[%s217 + $0x28] sm:$0xf]
                  %230 = vst [vmem:[%s218 + $0x14] sm:$0xf] %v229
                  %v231 = vld [vmem:[%s217 + $0x30] sm:$0xf]
                  %232 = vst [vmem:[%s218 + $0x18] sm:$0xf] %v231
                  %v233 = vld [vmem:[%s217 + $0x38] sm:$0xf]
                  %234 = vst [vmem:[%s218 + $0x1c] sm:$0xf] %v233
                  %v235 = vld [vmem:[%s217 + $0x40] sm:$0xf]
                  %236 = vst [vmem:[%s218 + $0x20] sm:$0xf] %v235
                  %v237 = vld [vmem:[%s217 + $0x48] sm:$0xf]
                  %238 = vst [vmem:[%s218 + $0x24] sm:$0xf] %v237
                  %v239 = vld [vmem:[%s217 + $0x50] sm:$0xf]
                  %240 = vst [vmem:[%s218 + $0x28] sm:$0xf] %v239
                  %v241 = vld [vmem:[%s217 + $0x58] sm:$0xf]
                  %242 = vst [vmem:[%s218 + $0x2c] sm:$0xf] %v241
                  %v243 = vld [vmem:[%s217 + $0x60] sm:$0xf]
                  %244 = vst [vmem:[%s218 + $0x30] sm:$0xf] %v243
                  %v245 = vld [vmem:[%s217 + $0x68] sm:$0xf]
                  %246 = vst [vmem:[%s218 + $0x34] sm:$0xf] %v245
                  %v247 = vld [vmem:[%s217 + $0x70] sm:$0xf]
                  %248 = vst [vmem:[%s218 + $0x38] sm:$0xf] %v247
                  %v249 = vld [vmem:[%s217 + $0x78] sm:$0xf]
                  %250 = vst [vmem:[%s218 + $0x3c] sm:$0xf] %v249
                $region55: #{bert_country_forward.28} parent=42 // loop_footer
                  %s216 = sadd.s32 1, %s212
                $region56: #{bert_country_forward.28} parent=42 // loop_footer_branch
                  %211 = sbr.rel target = $region52
                $region57: #{bert_country_forward.28} parent=42 // loop_exit
                  _
              $region43: #{bert_country_forward.28} parent=27 // pred_fallthru
                _
            $region28: #{bert_country_forward.28} parent=23 // pred_fallthru
              _
            // Predicated region
            $region29: #{bert_country_forward.28} parent=23 // pred_check
              _
            $region30: #{bert_country_forward.28} parent=23 // pred_check_branch
              %158 = sbr.rel (0) target = $region32
            $region31: #{bert_country_forward.28} parent=23 // pred_region
              loop: start=0, step=1, limit=1
              $region33: #{bert_country_forward.28} parent=31 // loop_pre_header
                _
              $region34: #{bert_country_forward.28} parent=31 // loop_header
                %s161 = sphi 0, %s165
                %p162 = scmp.ge.s32.totalorder %s161, 1
                %s166 = sphi %s152, %s152
                %s167 = sphi %s143, %s143
              $region35: #{bert_country_forward.28} parent=31 // loop_header_branch
                %164 = sbr.rel (%p162) target = $region39
              $region36: #{bert_country_forward.28} parent=31 // loop_body
                %v168 = vld [vmem:[%s166] sm:$0xf]
                %169 = vst [vmem:[%s167] sm:$0xf] %v168
                %v170 = vld [vmem:[%s166 + $0x8] sm:$0xf]
                %171 = vst [vmem:[%s167 + $0x4] sm:$0xf] %v170
                %v172 = vld [vmem:[%s166 + $0x10] sm:$0xf]
                %173 = vst [vmem:[%s167 + $0x8] sm:$0xf] %v172
                %v174 = vld [vmem:[%s166 + $0x18] sm:$0xf]
                %175 = vst [vmem:[%s167 + $0xc] sm:$0xf] %v174
                %v176 = vld [vmem:[%s166 + $0x20] sm:$0xf]
                %177 = vst [vmem:[%s167 + $0x10] sm:$0xf] %v176
                %v178 = vld [vmem:[%s166 + $0x28] sm:$0xf]
                %179 = vst [vmem:[%s167 + $0x14] sm:$0xf] %v178
                %v180 = vld [vmem:[%s166 + $0x30] sm:$0xf]
                %181 = vst [vmem:[%s167 + $0x18] sm:$0xf] %v180
                %v182 = vld [vmem:[%s166 + $0x38] sm:$0xf]
                %183 = vst [vmem:[%s167 + $0x1c] sm:$0xf] %v182
                %v184 = vld [vmem:[%s166 + $0x40] sm:$0xf]
                %185 = vst [vmem:[%s167 + $0x20] sm:$0xf] %v184
                %v186 = vld [vmem:[%s166 + $0x48] sm:$0xf]
                %187 = vst [vmem:[%s167 + $0x24] sm:$0xf] %v186
                %v188 = vld [vmem:[%s166 + $0x50] sm:$0xf]
                %189 = vst [vmem:[%s167 + $0x28] sm:$0xf] %v188
                %v190 = vld [vmem:[%s166 + $0x58] sm:$0xf]
                %191 = vst [vmem:[%s167 + $0x2c] sm:$0xf] %v190
                %v192 = vld [vmem:[%s166 + $0x60] sm:$0xf]
                %193 = vst [vmem:[%s167 + $0x30] sm:$0xf] %v192
                %v194 = vld [vmem:[%s166 + $0x68] sm:$0xf]
                %195 = vst [vmem:[%s167 + $0x34] sm:$0xf] %v194
                %v196 = vld [vmem:[%s166 + $0x70] sm:$0xf]
                %197 = vst [vmem:[%s167 + $0x38] sm:$0xf] %v196
                %v198 = vld [vmem:[%s166 + $0x78] sm:$0xf]
                %199 = vst [vmem:[%s167 + $0x3c] sm:$0xf] %v198
              $region37: #{bert_country_forward.28} parent=31 // loop_footer
                %s165 = sadd.s32 1, %s161
              $region38: #{bert_country_forward.28} parent=31 // loop_footer_branch
                %160 = sbr.rel target = $region34
              $region39: #{bert_country_forward.28} parent=31 // loop_exit
                _
            $region32: #{bert_country_forward.28} parent=23 // pred_fallthru
              _
          $region24: #{bert_country_forward.28} parent=19 // pred_fallthru
            _
          %251 = vnop
        $region20: #{bert_country_forward.28} parent=15 // pred_fallthru
          _
        // Predicated region
        $region58: #{bert_country_forward.28} parent=15 // pred_check
          %p252 = pneg %p76
        $region59: #{bert_country_forward.28} parent=15 // pred_check_branch
          %254 = sbr.rel (%p252) target = $region61
        $region60: #{bert_country_forward.28} parent=15 // pred_region
          %p255 = scmp.lt.s32.totalorder %s15, 1
          %s256 = scalar_select %p255, %s15, 1
          %s257 = smul.addr %s256, 4
          %s258 = smul.addr %s257, 4
          %s259 = scalar_lea.vmem %s1, %s258
        $region61: #{bert_country_forward.28} parent=15 // pred_fallthru
          _
      $region16: #{bert_country_forward.28} parent=5 // pred_fallthru
        _
      %p260 = scmp.le.s32.totalorder 1, %s8
      %p261 = scmp.lt.s32.totalorder %s8, 3
      %p262 = pnand %p260, %p261
      %p263 = pneg %p262
      // Predicated region
      $region62: #{bert_country_forward.28} parent=5 // pred_check
        _
      $region63: #{bert_country_forward.28} parent=5 // pred_check_branch
        %265 = sbr.rel (%p262) target = $region65
      $region64: #{bert_country_forward.28} parent=5 // pred_region
        %s266 = ssub.s32 %s8, 1
        %s267 = sand.u32 %s43, 1
        %s268 = sand.u32 %s43, 1
        %s269 = smul.addr %s268, 64
        %s270 = scalar_lea.vmem [#allocation4], %s269
        // Predicated region
        $region66: #{bert_country_forward.28} parent=64 // pred_check
          %p271 = pneg %p56
        $region67: #{bert_country_forward.28} parent=64 // pred_check_branch
          %273 = sbr.rel (%p271) target = $region69
        $region68: #{bert_country_forward.28} parent=64 // pred_region
          _
        $region69: #{bert_country_forward.28} parent=64 // pred_fallthru
          _
        %s274 = sand.u32 %s43, 1
        %s275 = sand.u32 %s43, 1
        %s276 = smul.addr %s275, 64
        %s277 = scalar_lea.vmem [#allocation4], %s276
        %p278 = pneg %p56
        %p279 = pneg %p53
        %p280 = scmp.lt.s32.totalorder %s17, 1
        %s281 = scalar_select %p280, %s17, 1
        %s282 = smul.addr %s281, 4
        %s283 = smul.addr %s282, 4
        %s284 = scalar_lea.vmem %s1, %s283
        %p285 = pneg %p82
        %p286 = pneg %p79
        %p287 = pneg %p118
        %p288 = pneg %p115
        %s289 = smul.u32 %s18, 2
        %s290 = ssub.s32 0, %s289
        %s291 = smul.u32 %s17, %s290
        %s292 = sadd.s32 %s18, %s291
        %s293 = smul.u32 16, %s292
        %p294 = scmp.lt.s32.totalorder %s17, 1
        %s295 = scalar_select %p294, %s17, 1
        %p296 = scmp.lt.s32.totalorder %s293, 15
        %s297 = scalar_select %p296, %s293, 15
        %s298 = smul.addr %s295, 16
        %s299 = sadd.s32 %s297, %s298
        %s300 = smul.addr %s299, 4
        %s301 = scalar_lea.vmem %s2, %s300
        %s302 = smul.u32 %s18, 2
        %s303 = ssub.s32 0, %s302
        %s304 = smul.u32 %s17, %s303
        %s305 = sadd.s32 %s18, %s304
        %s306 = smul.u32 16, %s305
        %p307 = scmp.lt.s32.totalorder %s17, 1
        %s308 = scalar_select %p307, %s17, 1
        %s309 = smul.addr %s308, 4
        %s310 = smul.addr %s309, 4
        %s311 = scalar_lea.vmem %s1, %s310
        %s312 = smul.u32 %s18, 2
        %s313 = ssub.s32 0, %s312
        %s314 = smul.u32 %s17, %s313
        %s315 = sadd.s32 %s18, %s314
        %s316 = smul.u32 16, %s315
        %p317 = scmp.lt.s32.totalorder %s17, 1
        %s318 = scalar_select %p317, %s17, 1
        %p319 = scmp.lt.s32.totalorder %s316, 15
        %s320 = scalar_select %p319, %s316, 15
        %s321 = smul.addr %s318, 16
        %s322 = sadd.s32 %s320, %s321
        %s323 = smul.addr %s322, 4
        %s324 = scalar_lea.vmem %s2, %s323
        %s325 = smul.u32 %s18, 2
        %s326 = ssub.s32 0, %s325
        %s327 = smul.u32 %s17, %s326
        %s328 = sadd.s32 %s18, %s327
        %s329 = smul.u32 16, %s328
        %p331 = scmp.eq.s32.totalorder %s18, 0
        // Predicated region
        $region70: #{bert_country_forward.28} parent=64 // pred_check
          %p332 = pneg %p331
        $region71: #{bert_country_forward.28} parent=64 // pred_check_branch
          %334 = sbr.rel (%p332) target = $region73
        $region72: #{bert_country_forward.28} parent=64 // pred_region
          %vm335 = vcmask 261120
          %336 = vst.msk [vmem:[#allocation2] sm:$0xff] %vm335, 0.0
          %337 = vst.msk [vmem:[#allocation3] sm:$0xff] %vm335, 0.0
        $region73: #{bert_country_forward.28} parent=64 // pred_fallthru
          _
        %v338 = vld [vmem:[%s311] sm:$0xf]
        %v339 = vld [vmem:[%s311 + $0x4] sm:$0xf]
        %v340 = vld [vmem:[%s311 + $0x8] sm:$0xf]
        %v341 = vld [vmem:[%s311 + $0xc] sm:$0xf]
        %p342 = scmp.eq.s32.totalorder %s17, 0
        // Predicated region
        $region74: #{bert_country_forward.28} parent=64 // pred_check
          %p343 = pneg %p342
        $region75: #{bert_country_forward.28} parent=64 // pred_check_branch
          %345 = sbr.rel (%p343) target = $region77
        $region76: #{bert_country_forward.28} parent=64 // pred_region
          %s346 = smul.u32 %s18, 16
          %p347 = scmp.lt.s32.totalorder %s346, 8
          %s348 = scalar_select %p347, 1, 0
          %s349 = scvt.s32.f32 %s348
          %v350 = vld [vmem:[%s270] sm:$0xf]
          %v351 = vunpack.c.l.bf16 %v350
          %v352 = vstv %s349
          %v353 = vmul.f32 %v351, %v352
          %v354 = vld [vmem:[#allocation2] sm:$0xff]
          %v355 = vpack.c.bf16 %v354, %v354
          %v360 = vunpack.c.l.b16 %v338
          %v361 = vunpack.c.l.b16 %v339
          %v362 = vunpack.c.l.b16 %v340
          %v363 = vunpack.c.l.b16 %v341
          %v364 = vpack.c.b16 %v361, %v360
          %v365 = vpack.c.b16 %v363, %v362
          %vm368 = vcmask 261120
          %v370 = vsel %vm368, %v355, 0
          %372 = vmatprep.subr.bf16.mxu0 0
          %373 = vmatpush1.bf16.msra.mxu0 %v364
          %374 = vmatprep.subr.bf16.mxu0 0
          %375 = vmatpush1.bf16.msra.mxu0 %v365
          %376 = vmatprep.subr.bf16.mxu0 0
          %377 = vmatpush1.bf16.msra.mxu0 0
          %378 = vmatprep.subr.bf16.mxu0 0
          %379 = vmatpush1.bf16.msra.mxu0 0
          %380 = vmatprep.subr.bf16.mxu0 0
          %381 = vmatpush1.bf16.msra.mxu0 0
          %382 = vmatprep.subr.bf16.mxu0 0
          %383 = vmatpush1.bf16.msra.mxu0 0
          %384 = vmatprep.subr.bf16.mxu0 0
          %385 = vmatpush1.bf16.msra.mxu0 0
          %386 = vmatprep.subr.bf16.mxu0 0
          %387 = vmatpush1.bf16.msra.mxu0 0
          %388 = vmatprep.subr.bf16.mxu0 0
          %389 = vmatpush1.bf16.msra.mxu0 0
          %390 = vmatprep.subr.bf16.mxu0 0
          %391 = vmatpush1.bf16.msra.mxu0 0
          %392 = vmatprep.subr.bf16.mxu0 0
          %393 = vmatpush1.bf16.msra.mxu0 0
          %394 = vmatprep.subr.bf16.mxu0 0
          %395 = vmatpush1.bf16.msra.mxu0 0
          %396 = vmatprep.subr.bf16.mxu0 0
          %397 = vmatpush1.bf16.msra.mxu0 0
          %398 = vmatprep.subr.bf16.mxu0 0
          %399 = vmatpush1.bf16.msra.mxu0 0
          %400 = vmatprep.subr.bf16.mxu0 0
          %401 = vmatpush1.bf16.msra.mxu0 0
          %402 = vmatprep.subr.bf16.mxu0 0
          %403 = vmatpush1.bf16.msra.mxu0 0
          %404 = vmatprep.mubr.bf16.mxu0 0
          %405 = vmatmul.mubr.bf16.gmra.mrb[0].mxu0 %v370
          %v406 = vpop.f32.mrb[0].mxu0
          %v407 = vadd.f32 0.0, %v406
          %v408 = vpop.f32.mrb[0].mxu0
          %v409 = vpop.f32.mrb[0].mxu0
          %v410 = vpop.f32.mrb[0].mxu0
          %411 = vdwg.mxu0
          %v412 = vadd.f32 %v353, %v407
          %v413 = vxor.u32 %v412, 2147483648
          %v414 = vmul.f32 %v413, 1.442695
          %v415 = vpow.pop %v414
          %v416 = vadd.f32 %v415, 1.0
          %v417 = vrcp.pop %v416
          %v418 = vmul.f32 1.0, %v417
          %v419 = vtanh.pop %v412
          %v420 = vld [vmem:[#allocation3] sm:$0xff]
          %422 = vrot.lane.b32.xlu0 %v420, 32
          %v423 = vpop.permute.xlu0 %422
          %v425 = vmul.f32 %v418, %v423
          %427 = vrot.lane.b32.xlu0 %v419, 64
          %v428 = vpop.permute.xlu0 %427
          %v430 = vmul.f32 %v418, %v428
          %432 = vrot.lane.b32.xlu0 %v430, 32
          %v433 = vpop.permute.xlu0 %432
          %v435 = vadd.f32 %v425, %v433
          %v436 = vtanh.pop %v435
          %438 = vrot.lane.b32.xlu0 %v436, 64
          %v439 = vpop.permute.xlu0 %438
          %v441 = vmul.f32 %v418, %v439
          %443 = vrot.lane.b32.xlu0 %v435, 96
          %v444 = vpop.permute.xlu0 %443
          %446 = vst.msk [vmem:[#allocation3] sm:$0xff] %vm368, %v444
          %448 = vrot.lane.b32.xlu0 %v441, 32
          %v449 = vpop.permute.xlu0 %448
          %451 = vst.msk [vmem:[#allocation2] sm:$0xff] %vm368, %v449
          %v452 = vpack.c.bf16 %v441, %v441
          %v454 = vunpack.c.l.b16 %v452
          %v455 = vpack.c.b16 %v454, %v454
          %456 = vrot.lane.b32.xlu0 %v455, 32
          %v457 = vpop.permute.xlu0 %456
          %vm459 = vcmask 257024
          %460 = vst.msk [vmem:[%s324] sm:$0xf] %vm459, %v457
          %s461 = sadd.s32 %s346, 1
          %p462 = scmp.lt.s32.totalorder %s461, 8
          %s463 = scalar_select %p462, 1, 0
          %s464 = scvt.s32.f32 %s463
          %s465 = scalar_lea.vmem %s270, 4 [#allocation4]
          %v466 = vld [vmem:[%s465] sm:$0xf]
          %v467 = vunpack.c.l.bf16 %v466
          %v468 = vstv %s464
          %v469 = vmul.f32 %v467, %v468
          %v470 = vld [vmem:[#allocation2] sm:$0xff]
          %v471 = vpack.c.bf16 %v470, %v470
          %v473 = vsel %vm368, %v471, 0
          %475 = vmatprep.subr.bf16.mxu0 0
          %476 = vmatpush1.bf16.msra.mxu0 %v364
          %477 = vmatprep.subr.bf16.mxu0 0
          %478 = vmatpush1.bf16.msra.mxu0 %v365
          %479 = vmatprep.subr.bf16.mxu0 0
          %480 = vmatpush1.bf16.msra.mxu0 0
          %481 = vmatprep.subr.bf16.mxu0 0
          %482 = vmatpush1.bf16.msra.mxu0 0
          %483 = vmatprep.subr.bf16.mxu0 0
          %484 = vmatpush1.bf16.msra.mxu0 0
          %485 = vmatprep.subr.bf16.mxu0 0
          %486 = vmatpush1.bf16.msra.mxu0 0
          %487 = vmatprep.subr.bf16.mxu0 0
          %488 = vmatpush1.bf16.msra.mxu0 0
          %489 = vmatprep.subr.bf16.mxu0 0
          %490 = vmatpush1.bf16.msra.mxu0 0
          %491 = vmatprep.subr.bf16.mxu0 0
          %492 = vmatpush1.bf16.msra.mxu0 0
          %493 = vmatprep.subr.bf16.mxu0 0
          %494 = vmatpush1.bf16.msra.mxu0 0
          %495 = vmatprep.subr.bf16.mxu0 0
          %496 = vmatpush1.bf16.msra.mxu0 0
          %497 = vmatprep.subr.bf16.mxu0 0
          %498 = vmatpush1.bf16.msra.mxu0 0
          %499 = vmatprep.subr.bf16.mxu0 0
          %500 = vmatpush1.bf16.msra.mxu0 0
          %501 = vmatprep.subr.bf16.mxu0 0
          %502 = vmatpush1.bf16.msra.mxu0 0
          %503 = vmatprep.subr.bf16.mxu0 0
          %504 = vmatpush1.bf16.msra.mxu0 0
          %505 = vmatprep.subr.bf16.mxu0 0
          %506 = vmatpush1.bf16.msra.mxu0 0
          %507 = vmatprep.mubr.bf16.mxu0 0
          %508 = vmatmul.mubr.bf16.gmra.mrb[0].mxu0 %v473
          %v509 = vpop.f32.mrb[0].mxu0
          %v510 = vadd.f32 0.0, %v509
          %v511 = vpop.f32.mrb[0].mxu0
          %v512 = vpop.f32.mrb[0].mxu0
          %v513 = vpop.f32.mrb[0].mxu0
          %514 = vdwg.mxu0
          %v515 = vadd.f32 %v469, %v510
          %v516 = vxor.u32 %v515, 2147483648
          %v517 = vmul.f32 %v516, 1.442695
          %v518 = vpow.pop %v517
          %v519 = vadd.f32 %v518, 1.0
          %v520 = vrcp.pop %v519
          %v521 = vmul.f32 1.0, %v520
          %v522 = vtanh.pop %v515
          %v523 = vld [vmem:[#allocation3] sm:$0xff]
          %525 = vrot.lane.b32.xlu0 %v523, 32
          %v526 = vpop.permute.xlu0 %525
          %v528 = vmul.f32 %v521, %v526
          %530 = vrot.lane.b32.xlu0 %v522, 64
          %v531 = vpop.permute.xlu0 %530
          %v533 = vmul.f32 %v521, %v531
          %535 = vrot.lane.b32.xlu0 %v533, 32
          %v536 = vpop.permute.xlu0 %535
          %v538 = vadd.f32 %v528, %v536
          %v539 = vtanh.pop %v538
          %541 = vrot.lane.b32.xlu0 %v539, 64
          %v542 = vpop.permute.xlu0 %541
          %v544 = vmul.f32 %v521, %v542
          %546 = vrot.lane.b32.xlu0 %v538, 96
          %v547 = vpop.permute.xlu0 %546
          %549 = vst.msk [vmem:[#allocation3] sm:$0xff] %vm368, %v547
          %551 = vrot.lane.b32.xlu0 %v544, 32
          %v552 = vpop.permute.xlu0 %551
          %554 = vst.msk [vmem:[#allocation2] sm:$0xff] %vm368, %v552
          %v555 = vpack.c.bf16 %v544, %v544
          %v557 = vunpack.c.l.b16 %v555
          %v558 = vpack.c.b16 %v557, %v557
          %559 = vrot.lane.b32.xlu0 %v558, 32
          %v560 = vpop.permute.xlu0 %559
          %s562 = scalar_lea.vmem %s324, 4
          %563 = vst.msk [vmem:[%s562] sm:$0xf] %vm459, %v560
          %s564 = sadd.s32 %s346, 2
          %p565 = scmp.lt.s32.totalorder %s564, 8
          %s566 = scalar_select %p565, 1, 0
          %s567 = scvt.s32.f32 %s566
          %s568 = scalar_lea.vmem %s270, 8 [#allocation4]
          %v569 = vld [vmem:[%s568] sm:$0xf]
          %v570 = vunpack.c.l.bf16 %v569
          %v571 = vstv %s567
          %v572 = vmul.f32 %v570, %v571
          %v573 = vld [vmem:[#allocation2] sm:$0xff]
          %v574 = vpack.c.bf16 %v573, %v573
          %v576 = vsel %vm368, %v574, 0
          %578 = vmatprep.subr.bf16.mxu0 0
          %579 = vmatpush1.bf16.msra.mxu0 %v364
          %580 = vmatprep.subr.bf16.mxu0 0
          %581 = vmatpush1.bf16.msra.mxu0 %v365
          %582 = vmatprep.subr.bf16.mxu0 0
          %583 = vmatpush1.bf16.msra.mxu0 0
          %584 = vmatprep.subr.bf16.mxu0 0
          %585 = vmatpush1.bf16.msra.mxu0 0
          %586 = vmatprep.subr.bf16.mxu0 0
          %587 = vmatpush1.bf16.msra.mxu0 0
          %588 = vmatprep.subr.bf16.mxu0 0
          %589 = vmatpush1.bf16.msra.mxu0 0
          %590 = vmatprep.subr.bf16.mxu0 0
          %591 = vmatpush1.bf16.msra.mxu0 0
          %592 = vmatprep.subr.bf16.mxu0 0
          %593 = vmatpush1.bf16.msra.mxu0 0
          %594 = vmatprep.subr.bf16.mxu0 0
          %595 = vmatpush1.bf16.msra.mxu0 0
          %596 = vmatprep.subr.bf16.mxu0 0
          %597 = vmatpush1.bf16.msra.mxu0 0
          %598 = vmatprep.subr.bf16.mxu0 0
          %599 = vmatpush1.bf16.msra.mxu0 0
          %600 = vmatprep.subr.bf16.mxu0 0
          %601 = vmatpush1.bf16.msra.mxu0 0
          %602 = vmatprep.subr.bf16.mxu0 0
          %603 = vmatpush1.bf16.msra.mxu0 0
          %604 = vmatprep.subr.bf16.mxu0 0
          %605 = vmatpush1.bf16.msra.mxu0 0
          %606 = vmatprep.subr.bf16.mxu0 0
          %607 = vmatpush1.bf16.msra.mxu0 0
          %608 = vmatprep.subr.bf16.mxu0 0
          %609 = vmatpush1.bf16.msra.mxu0 0
          %610 = vmatprep.mubr.bf16.mxu0 0
          %611 = vmatmul.mubr.bf16.gmra.mrb[0].mxu0 %v576
          %v612 = vpop.f32.mrb[0].mxu0
          %v613 = vadd.f32 0.0, %v612
          %v614 = vpop.f32.mrb[0].mxu0
          %v615 = vpop.f32.mrb[0].mxu0
          %v616 = vpop.f32.mrb[0].mxu0
          %617 = vdwg.mxu0
          %v618 = vadd.f32 %v572, %v613
          %v619 = vxor.u32 %v618, 2147483648
          %v620 = vmul.f32 %v619, 1.442695
          %v621 = vpow.pop %v620
          %v622 = vadd.f32 %v621, 1.0
          %v623 = vrcp.pop %v622
          %v624 = vmul.f32 1.0, %v623
          %v625 = vtanh.pop %v618
          %v626 = vld [vmem:[#allocation3] sm:$0xff]
          %628 = vrot.lane.b32.xlu0 %v626, 32
          %v629 = vpop.permute.xlu0 %628
          %v631 = vmul.f32 %v624, %v629
          %633 = vrot.lane.b32.xlu0 %v625, 64
          %v634 = vpop.permute.xlu0 %633
          %v636 = vmul.f32 %v624, %v634
          %638 = vrot.lane.b32.xlu0 %v636, 32
          %v639 = vpop.permute.xlu0 %638
          %v641 = vadd.f32 %v631, %v639
          %v642 = vtanh.pop %v641
          %644 = vrot.lane.b32.xlu0 %v642, 64
          %v645 = vpop.permute.xlu0 %644
          %v647 = vmul.f32 %v624, %v645
          %649 = vrot.lane.b32.xlu0 %v641, 96
          %v650 = vpop.permute.xlu0 %649
          %652 = vst.msk [vmem:[#allocation3] sm:$0xff] %vm368, %v650
          %654 = vrot.lane.b32.xlu0 %v647, 32
          %v655 = vpop.permute.xlu0 %654
          %657 = vst.msk [vmem:[#allocation2] sm:$0xff] %vm368, %v655
          %v658 = vpack.c.bf16 %v647, %v647
          %v660 = vunpack.c.l.b16 %v658
          %v661 = vpack.c.b16 %v660, %v660
          %662 = vrot.lane.b32.xlu0 %v661, 32
          %v663 = vpop.permute.xlu0 %662
          %s665 = scalar_lea.vmem %s324, 8
          %666 = vst.msk [vmem:[%s665] sm:$0xf] %vm459, %v663
          %s667 = sadd.s32 %s346, 3
          %p668 = scmp.lt.s32.totalorder %s667, 8
          %s669 = scalar_select %p668, 1, 0
          %s670 = scvt.s32.f32 %s669
          %s671 = scalar_lea.vmem %s270, 12 [#allocation4]
          %v672 = vld [vmem:[%s671] sm:$0xf]
          %v673 = vunpack.c.l.bf16 %v672
          %v674 = vstv %s670
          %v675 = vmul.f32 %v673, %v674
          %v676 = vld [vmem:[#allocation2] sm:$0xff]
          %v677 = vpack.c.bf16 %v676, %v676
          %v679 = vsel %vm368, %v677, 0
          %681 = vmatprep.subr.bf16.mxu0 0
          %682 = vmatpush1.bf16.msra.mxu0 %v364
          %683 = vmatprep.subr.bf16.mxu0 0
          %684 = vmatpush1.bf16.msra.mxu0 %v365
          %685 = vmatprep.subr.bf16.mxu0 0
          %686 = vmatpush1.bf16.msra.mxu0 0
          %687 = vmatprep.subr.bf16.mxu0 0
          %688 = vmatpush1.bf16.msra.mxu0 0
          %689 = vmatprep.subr.bf16.mxu0 0
          %690 = vmatpush1.bf16.msra.mxu0 0
          %691 = vmatprep.subr.bf16.mxu0 0
          %692 = vmatpush1.bf16.msra.mxu0 0
          %693 = vmatprep.subr.bf16.mxu0 0
          %694 = vmatpush1.bf16.msra.mxu0 0
          %695 = vmatprep.subr.bf16.mxu0 0
          %696 = vmatpush1.bf16.msra.mxu0 0
          %697 = vmatprep.subr.bf16.mxu0 0
          %698 = vmatpush1.bf16.msra.mxu0 0
          %699 = vmatprep.subr.bf16.mxu0 0
          %700 = vmatpush1.bf16.msra.mxu0 0
          %701 = vmatprep.subr.bf16.mxu0 0
          %702 = vmatpush1.bf16.msra.mxu0 0
          %703 = vmatprep.subr.bf16.mxu0 0
          %704 = vmatpush1.bf16.msra.mxu0 0
          %705 = vmatprep.subr.bf16.mxu0 0
          %706 = vmatpush1.bf16.msra.mxu0 0
          %707 = vmatprep.subr.bf16.mxu0 0
          %708 = vmatpush1.bf16.msra.mxu0 0
          %709 = vmatprep.subr.bf16.mxu0 0
          %710 = vmatpush1.bf16.msra.mxu0 0
          %711 = vmatprep.subr.bf16.mxu0 0
          %712 = vmatpush1.bf16.msra.mxu0 0
          %713 = vmatprep.mubr.bf16.mxu0 0
          %714 = vmatmul.mubr.bf16.gmra.mrb[0].mxu0 %v679
          %v715 = vpop.f32.mrb[0].mxu0
          %v716 = vadd.f32 0.0, %v715
          %v717 = vpop.f32.mrb[0].mxu0
          %v718 = vpop.f32.mrb[0].mxu0
          %v719 = vpop.f32.mrb[0].mxu0
          %720 = vdwg.mxu0
          %v721 = vadd.f32 %v675, %v716
          %v722 = vxor.u32 %v721, 2147483648
          %v723 = vmul.f32 %v722, 1.442695
          %v724 = vpow.pop %v723
          %v725 = vadd.f32 %v724, 1.0
          %v726 = vrcp.pop %v725
          %v727 = vmul.f32 1.0, %v726
          %v728 = vtanh.pop %v721
          %v729 = vld [vmem:[#allocation3] sm:$0xff]
          %731 = vrot.lane.b32.xlu0 %v729, 32
          %v732 = vpop.permute.xlu0 %731
          %v734 = vmul.f32 %v727, %v732
          %736 = vrot.lane.b32.xlu0 %v728, 64
          %v737 = vpop.permute.xlu0 %736
          %v739 = vmul.f32 %v727, %v737
          %741 = vrot.lane.b32.xlu0 %v739, 32
          %v742 = vpop.permute.xlu0 %741
          %v744 = vadd.f32 %v734, %v742
          %v745 = vtanh.pop %v744
          %747 = vrot.lane.b32.xlu0 %v745, 64
          %v748 = vpop.permute.xlu0 %747
          %v750 = vmul.f32 %v727, %v748
          %752 = vrot.lane.b32.xlu0 %v744, 96
          %v753 = vpop.permute.xlu0 %752
          %755 = vst.msk [vmem:[#allocation3] sm:$0xff] %vm368, %v753
          %757 = vrot.lane.b32.xlu0 %v750, 32
          %v758 = vpop.permute.xlu0 %757
          %760 = vst.msk [vmem:[#allocation2] sm:$0xff] %vm368, %v758
          %v761 = vpack.c.bf16 %v750, %v750
          %v763 = vunpack.c.l.b16 %v761
          %v764 = vpack.c.b16 %v763, %v763
          %765 = vrot.lane.b32.xlu0 %v764, 32
          %v766 = vpop.permute.xlu0 %765
          %s768 = scalar_lea.vmem %s324, 12
          %769 = vst.msk [vmem:[%s768] sm:$0xf] %vm459, %v766
          %s770 = sadd.s32 %s346, 4
          %p771 = scmp.lt.s32.totalorder %s770, 8
          %s772 = scalar_select %p771, 1, 0
          %s773 = scvt.s32.f32 %s772
          %s774 = scalar_lea.vmem %s270, 16 [#allocation4]
          %v775 = vld [vmem:[%s774] sm:$0xf]
          %v776 = vunpack.c.l.bf16 %v775
          %v777 = vstv %s773
          %v778 = vmul.f32 %v776, %v777
          %v779 = vld [vmem:[#allocation2] sm:$0xff]
          %v780 = vpack.c.bf16 %v779, %v779
          %v782 = vsel %vm368, %v780, 0
          %784 = vmatprep.subr.bf16.mxu0 0
          %785 = vmatpush1.bf16.msra.mxu0 %v364
          %786 = vmatprep.subr.bf16.mxu0 0
          %787 = vmatpush1.bf16.msra.mxu0 %v365
          %788 = vmatprep.subr.bf16.mxu0 0
          %789 = vmatpush1.bf16.msra.mxu0 0
          %790 = vmatprep.subr.bf16.mxu0 0
          %791 = vmatpush1.bf16.msra.mxu0 0
          %792 = vmatprep.subr.bf16.mxu0 0
          %793 = vmatpush1.bf16.msra.mxu0 0
          %794 = vmatprep.subr.bf16.mxu0 0
          %795 = vmatpush1.bf16.msra.mxu0 0
          %796 = vmatprep.subr.bf16.mxu0 0
          %797 = vmatpush1.bf16.msra.mxu0 0
          %798 = vmatprep.subr.bf16.mxu0 0
          %799 = vmatpush1.bf16.msra.mxu0 0
          %800 = vmatprep.subr.bf16.mxu0 0
          %801 = vmatpush1.bf16.msra.mxu0 0
          %802 = vmatprep.subr.bf16.mxu0 0
          %803 = vmatpush1.bf16.msra.mxu0 0
          %804 = vmatprep.subr.bf16.mxu0 0
          %805 = vmatpush1.bf16.msra.mxu0 0
          %806 = vmatprep.subr.bf16.mxu0 0
          %807 = vmatpush1.bf16.msra.mxu0 0
          %808 = vmatprep.subr.bf16.mxu0 0
          %809 = vmatpush1.bf16.msra.mxu0 0
          %810 = vmatprep.subr.bf16.mxu0 0
          %811 = vmatpush1.bf16.msra.mxu0 0
          %812 = vmatprep.subr.bf16.mxu0 0
          %813 = vmatpush1.bf16.msra.mxu0 0
          %814 = vmatprep.subr.bf16.mxu0 0
          %815 = vmatpush1.bf16.msra.mxu0 0
          %816 = vmatprep.mubr.bf16.mxu0 0
          %817 = vmatmul.mubr.bf16.gmra.mrb[0].mxu0 %v782
          %v818 = vpop.f32.mrb[0].mxu0
          %v819 = vadd.f32 0.0, %v818
          %v820 = vpop.f32.mrb[0].mxu0
          %v821 = vpop.f32.mrb[0].mxu0
          %v822 = vpop.f32.mrb[0].mxu0
          %823 = vdwg.mxu0
          %v824 = vadd.f32 %v778, %v819
          %v825 = vxor.u32 %v824, 2147483648
          %v826 = vmul.f32 %v825, 1.442695
          %v827 = vpow.pop %v826
          %v828 = vadd.f32 %v827, 1.0
          %v829 = vrcp.pop %v828
          %v830 = vmul.f32 1.0, %v829
          %v831 = vtanh.pop %v824
          %v832 = vld [vmem:[#allocation3] sm:$0xff]
          %834 = vrot.lane.b32.xlu0 %v832, 32
          %v835 = vpop.permute.xlu0 %834
          %v837 = vmul.f32 %v830, %v835
          %839 = vrot.lane.b32.xlu0 %v831, 64
          %v840 = vpop.permute.xlu0 %839
          %v842 = vmul.f32 %v830, %v840
          %844 = vrot.lane.b32.xlu0 %v842, 32
          %v845 = vpop.permute.xlu0 %844
          %v847 = vadd.f32 %v837, %v845
          %v848 = vtanh.pop %v847
          %850 = vrot.lane.b32.xlu0 %v848, 64
          %v851 = vpop.permute.xlu0 %850
          %v853 = vmul.f32 %v830, %v851
          %855 = vrot.lane.b32.xlu0 %v847, 96
          %v856 = vpop.permute.xlu0 %855
          %858 = vst.msk [vmem:[#allocation3] sm:$0xff] %vm368, %v856
          %860 = vrot.lane.b32.xlu0 %v853, 32
          %v861 = vpop.permute.xlu0 %860
          %863 = vst.msk [vmem:[#allocation2] sm:$0xff] %vm368, %v861
          %v864 = vpack.c.bf16 %v853, %v853
          %v866 = vunpack.c.l.b16 %v864
          %v867 = vpack.c.b16 %v866, %v866
          %868 = vrot.lane.b32.xlu0 %v867, 32
          %v869 = vpop.permute.xlu0 %868
          %s871 = scalar_lea.vmem %s324, 16
          %872 = vst.msk [vmem:[%s871] sm:$0xf] %vm459, %v869
          %s873 = sadd.s32 %s346, 5
          %p874 = scmp.lt.s32.totalorder %s873, 8
          %s875 = scalar_select %p874, 1, 0
          %s876 = scvt.s32.f32 %s875
          %s877 = scalar_lea.vmem %s270, 20 [#allocation4]
          %v878 = vld [vmem:[%s877] sm:$0xf]
          %v879 = vunpack.c.l.bf16 %v878
          %v880 = vstv %s876
          %v881 = vmul.f32 %v879, %v880
          %v882 = vld [vmem:[#allocation2] sm:$0xff]
          %v883 = vpack.c.bf16 %v882, %v882
          %v885 = vsel %vm368, %v883, 0
          %887 = vmatprep.subr.bf16.mxu0 0
          %888 = vmatpush1.bf16.msra.mxu0 %v364
          %889 = vmatprep.subr.bf16.mxu0 0
          %890 = vmatpush1.bf16.msra.mxu0 %v365
          %891 = vmatprep.subr.bf16.mxu0 0
          %892 = vmatpush1.bf16.msra.mxu0 0
          %893 = vmatprep.subr.bf16.mxu0 0
          %894 = vmatpush1.bf16.msra.mxu0 0
          %895 = vmatprep.subr.bf16.mxu0 0
          %896 = vmatpush1.bf16.msra.mxu0 0
          %897 = vmatprep.subr.bf16.mxu0 0
          %898 = vmatpush1.bf16.msra.mxu0 0
          %899 = vmatprep.subr.bf16.mxu0 0
          %900 = vmatpush1.bf16.msra.mxu0 0
          %901 = vmatprep.subr.bf16.mxu0 0
          %902 = vmatpush1.bf16.msra.mxu0 0
          %903 = vmatprep.subr.bf16.mxu0 0
          %904 = vmatpush1.bf16.msra.mxu0 0
          %905 = vmatprep.subr.bf16.mxu0 0
          %906 = vmatpush1.bf16.msra.mxu0 0
          %907 = vmatprep.subr.bf16.mxu0 0
          %908 = vmatpush1.bf16.msra.mxu0 0
          %909 = vmatprep.subr.bf16.mxu0 0
          %910 = vmatpush1.bf16.msra.mxu0 0
          %911 = vmatprep.subr.bf16.mxu0 0
          %912 = vmatpush1.bf16.msra.mxu0 0
          %913 = vmatprep.subr.bf16.mxu0 0
          %914 = vmatpush1.bf16.msra.mxu0 0
          %915 = vmatprep.subr.bf16.mxu0 0
          %916 = vmatpush1.bf16.msra.mxu0 0
          %917 = vmatprep.subr.bf16.mxu0 0
          %918 = vmatpush1.bf16.msra.mxu0 0
          %919 = vmatprep.mubr.bf16.mxu0 0
          %920 = vmatmul.mubr.bf16.gmra.mrb[0].mxu0 %v885
          %v921 = vpop.f32.mrb[0].mxu0
          %v922 = vadd.f32 0.0, %v921
          %v923 = vpop.f32.mrb[0].mxu0
          %v924 = vpop.f32.mrb[0].mxu0
          %v925 = vpop.f32.mrb[0].mxu0
          %926 = vdwg.mxu0
          %v927 = vadd.f32 %v881, %v922
          %v928 = vxor.u32 %v927, 2147483648
          %v929 = vmul.f32 %v928, 1.442695
          %v930 = vpow.pop %v929
          %v931 = vadd.f32 %v930, 1.0
          %v932 = vrcp.pop %v931
          %v933 = vmul.f32 1.0, %v932
          %v934 = vtanh.pop %v927
          %v935 = vld [vmem:[#allocation3] sm:$0xff]
          %937 = vrot.lane.b32.xlu0 %v935, 32
          %v938 = vpop.permute.xlu0 %937
          %v940 = vmul.f32 %v933, %v938
          %942 = vrot.lane.b32.xlu0 %v934, 64
          %v943 = vpop.permute.xlu0 %942
          %v945 = vmul.f32 %v933, %v943
          %947 = vrot.lane.b32.xlu0 %v945, 32
          %v948 = vpop.permute.xlu0 %947
          %v950 = vadd.f32 %v940, %v948
          %v951 = vtanh.pop %v950
          %953 = vrot.lane.b32.xlu0 %v951, 64
          %v954 = vpop.permute.xlu0 %953
          %v956 = vmul.f32 %v933, %v954
          %958 = vrot.lane.b32.xlu0 %v950, 96
          %v959 = vpop.permute.xlu0 %958
          %961 = vst.msk [vmem:[#allocation3] sm:$0xff] %vm368, %v959
          %963 = vrot.lane.b32.xlu0 %v956, 32
          %v964 = vpop.permute.xlu0 %963
          %966 = vst.msk [vmem:[#allocation2] sm:$0xff] %vm368, %v964
          %v967 = vpack.c.bf16 %v956, %v956
          %v969 = vunpack.c.l.b16 %v967
          %v970 = vpack.c.b16 %v969, %v969
          %971 = vrot.lane.b32.xlu0 %v970, 32
          %v972 = vpop.permute.xlu0 %971
          %s974 = scalar_lea.vmem %s324, 20
          %975 = vst.msk [vmem:[%s974] sm:$0xf] %vm459, %v972
          %s976 = sadd.s32 %s346, 6
          %p977 = scmp.lt.s32.totalorder %s976, 8
          %s978 = scalar_select %p977, 1, 0
          %s979 = scvt.s32.f32 %s978
          %s980 = scalar_lea.vmem %s270, 24 [#allocation4]
          %v981 = vld [vmem:[%s980] sm:$0xf]
          %v982 = vunpack.c.l.bf16 %v981
          %v983 = vstv %s979
          %v984 = vmul.f32 %v982, %v983
          %v985 = vld [vmem:[#allocation2] sm:$0xff]
          %v986 = vpack.c.bf16 %v985, %v985
          %v988 = vsel %vm368, %v986, 0
          %990 = vmatprep.subr.bf16.mxu0 0
          %991 = vmatpush1.bf16.msra.mxu0 %v364
          %992 = vmatprep.subr.bf16.mxu0 0
          %993 = vmatpush1.bf16.msra.mxu0 %v365
          %994 = vmatprep.subr.bf16.mxu0 0
          %995 = vmatpush1.bf16.msra.mxu0 0
          %996 = vmatprep.subr.bf16.mxu0 0
          %997 = vmatpush1.bf16.msra.mxu0 0
          %998 = vmatprep.subr.bf16.mxu0 0
          %999 = vmatpush1.bf16.msra.mxu0 0
          %1000 = vmatprep.subr.bf16.mxu0 0
          %1001 = vmatpush1.bf16.msra.mxu0 0
          %1002 = vmatprep.subr.bf16.mxu0 0
          %1003 = vmatpush1.bf16.msra.mxu0 0
          %1004 = vmatprep.subr.bf16.mxu0 0
          %1005 = vmatpush1.bf16.msra.mxu0 0
          %1006 = vmatprep.subr.bf16.mxu0 0
          %1007 = vmatpush1.bf16.msra.mxu0 0
          %1008 = vmatprep.subr.bf16.mxu0 0
          %1009 = vmatpush1.bf16.msra.mxu0 0
          %1010 = vmatprep.subr.bf16.mxu0 0
          %1011 = vmatpush1.bf16.msra.mxu0 0
          %1012 = vmatprep.subr.bf16.mxu0 0
          %1013 = vmatpush1.bf16.msra.mxu0 0
          %1014 = vmatprep.subr.bf16.mxu0 0
          %1015 = vmatpush1.bf16.msra.mxu0 0
          %1016 = vmatprep.subr.bf16.mxu0 0
          %1017 = vmatpush1.bf16.msra.mxu0 0
          %1018 = vmatprep.subr.bf16.mxu0 0
          %1019 = vmatpush1.bf16.msra.mxu0 0
          %1020 = vmatprep.subr.bf16.mxu0 0
          %1021 = vmatpush1.bf16.msra.mxu0 0
          %1022 = vmatprep.mubr.bf16.mxu0 0
          %1023 = vmatmul.mubr.bf16.gmra.mrb[0].mxu0 %v988
          %v1024 = vpop.f32.mrb[0].mxu0
          %v1025 = vadd.f32 0.0, %v1024
          %v1026 = vpop.f32.mrb[0].mxu0
          %v1027 = vpop.f32.mrb[0].mxu0
          %v1028 = vpop.f32.mrb[0].mxu0
          %1029 = vdwg.mxu0
          %v1030 = vadd.f32 %v984, %v1025
          %v1031 = vxor.u32 %v1030, 2147483648
          %v1032 = vmul.f32 %v1031, 1.442695
          %v1033 = vpow.pop %v1032
          %v1034 = vadd.f32 %v1033, 1.0
          %v1035 = vrcp.pop %v1034
          %v1036 = vmul.f32 1.0, %v1035
          %v1037 = vtanh.pop %v1030
          %v1038 = vld [vmem:[#allocation3] sm:$0xff]
          %1040 = vrot.lane.b32.xlu0 %v1038, 32
          %v1041 = vpop.permute.xlu0 %1040
          %v1043 = vmul.f32 %v1036, %v1041
          %1045 = vrot.lane.b32.xlu0 %v1037, 64
          %v1046 = vpop.permute.xlu0 %1045
          %v1048 = vmul.f32 %v1036, %v1046
          %1050 = vrot.lane.b32.xlu0 %v1048, 32
          %v1051 = vpop.permute.xlu0 %1050
          %v1053 = vadd.f32 %v1043, %v1051
          %v1054 = vtanh.pop %v1053
          %1056 = vrot.lane.b32.xlu0 %v1054, 64
          %v1057 = vpop.permute.xlu0 %1056
          %v1059 = vmul.f32 %v1036, %v1057
          %1061 = vrot.lane.b32.xlu0 %v1053, 96
          %v1062 = vpop.permute.xlu0 %1061
          %1064 = vst.msk [vmem:[#allocation3] sm:$0xff] %vm368, %v1062
          %1066 = vrot.lane.b32.xlu0 %v1059, 32
          %v1067 = vpop.permute.xlu0 %1066
          %1069 = vst.msk [vmem:[#allocation2] sm:$0xff] %vm368, %v1067
          %v1070 = vpack.c.bf16 %v1059, %v1059
          %v1072 = vunpack.c.l.b16 %v1070
          %v1073 = vpack.c.b16 %v1072, %v1072
          %1074 = vrot.lane.b32.xlu0 %v1073, 32
          %v1075 = vpop.permute.xlu0 %1074
          %s1077 = scalar_lea.vmem %s324, 24
          %1078 = vst.msk [vmem:[%s1077] sm:$0xf] %vm459, %v1075
          %s1079 = sadd.s32 %s346, 7
          %p1080 = scmp.lt.s32.totalorder %s1079, 8
          %s1081 = scalar_select %p1080, 1, 0
          %s1082 = scvt.s32.f32 %s1081
          %s1083 = scalar_lea.vmem %s270, 28 [#allocation4]
          %v1084 = vld [vmem:[%s1083] sm:$0xf]
          %v1085 = vunpack.c.l.bf16 %v1084
          %v1086 = vstv %s1082
          %v1087 = vmul.f32 %v1085, %v1086
          %v1088 = vld [vmem:[#allocation2] sm:$0xff]
          %v1089 = vpack.c.bf16 %v1088, %v1088
          %v1091 = vsel %vm368, %v1089, 0
          %1093 = vmatprep.subr.bf16.mxu0 0
          %1094 = vmatpush1.bf16.msra.mxu0 %v364
          %1095 = vmatprep.subr.bf16.mxu0 0
          %1096 = vmatpush1.bf16.msra.mxu0 %v365
          %1097 = vmatprep.subr.bf16.mxu0 0
          %1098 = vmatpush1.bf16.msra.mxu0 0
          %1099 = vmatprep.subr.bf16.mxu0 0
          %1100 = vmatpush1.bf16.msra.mxu0 0
          %1101 = vmatprep.subr.bf16.mxu0 0
          %1102 = vmatpush1.bf16.msra.mxu0 0
          %1103 = vmatprep.subr.bf16.mxu0 0
          %1104 = vmatpush1.bf16.msra.mxu0 0
          %1105 = vmatprep.subr.bf16.mxu0 0
          %1106 = vmatpush1.bf16.msra.mxu0 0
          %1107 = vmatprep.subr.bf16.mxu0 0
          %1108 = vmatpush1.bf16.msra.mxu0 0
          %1109 = vmatprep.subr.bf16.mxu0 0
          %1110 = vmatpush1.bf16.msra.mxu0 0
          %1111 = vmatprep.subr.bf16.mxu0 0
          %1112 = vmatpush1.bf16.msra.mxu0 0
          %1113 = vmatprep.subr.bf16.mxu0 0
          %1114 = vmatpush1.bf16.msra.mxu0 0
          %1115 = vmatprep.subr.bf16.mxu0 0
          %1116 = vmatpush1.bf16.msra.mxu0 0
          %1117 = vmatprep.subr.bf16.mxu0 0
          %1118 = vmatpush1.bf16.msra.mxu0 0
          %1119 = vmatprep.subr.bf16.mxu0 0
          %1120 = vmatpush1.bf16.msra.mxu0 0
          %1121 = vmatprep.subr.bf16.mxu0 0
          %1122 = vmatpush1.bf16.msra.mxu0 0
          %1123 = vmatprep.subr.bf16.mxu0 0
          %1124 = vmatpush1.bf16.msra.mxu0 0
          %1125 = vmatprep.mubr.bf16.mxu0 0
          %1126 = vmatmul.mubr.bf16.gmra.mrb[0].mxu0 %v1091
          %v1127 = vpop.f32.mrb[0].mxu0
          %v1128 = vadd.f32 0.0, %v1127
          %v1129 = vpop.f32.mrb[0].mxu0
          %v1130 = vpop.f32.mrb[0].mxu0
          %v1131 = vpop.f32.mrb[0].mxu0
          %1132 = vdwg.mxu0
          %v1133 = vadd.f32 %v1087, %v1128
          %v1134 = vxor.u32 %v1133, 2147483648
          %v1135 = vmul.f32 %v1134, 1.442695
          %v1136 = vpow.pop %v1135
          %v1137 = vadd.f32 %v1136, 1.0
          %v1138 = vrcp.pop %v1137
          %v1139 = vmul.f32 1.0, %v1138
          %v1140 = vtanh.pop %v1133
          %v1141 = vld [vmem:[#allocation3] sm:$0xff]
          %1143 = vrot.lane.b32.xlu0 %v1141, 32
          %v1144 = vpop.permute.xlu0 %1143
          %v1146 = vmul.f32 %v1139, %v1144
          %1148 = vrot.lane.b32.xlu0 %v1140, 64
          %v1149 = vpop.permute.xlu0 %1148
          %v1151 = vmul.f32 %v1139, %v1149
          %1153 = vrot.lane.b32.xlu0 %v1151, 32
          %v1154 = vpop.permute.xlu0 %1153
          %v1156 = vadd.f32 %v1146, %v1154
          %v1157 = vtanh.pop %v1156
          %1159 = vrot.lane.b32.xlu0 %v1157, 64
          %v1160 = vpop.permute.xlu0 %1159
          %v1162 = vmul.f32 %v1139, %v1160
          %1164 = vrot.lane.b32.xlu0 %v1156, 96
          %v1165 = vpop.permute.xlu0 %1164
          %1167 = vst.msk [vmem:[#allocation3] sm:$0xff] %vm368, %v1165
          %1169 = vrot.lane.b32.xlu0 %v1162, 32
          %v1170 = vpop.permute.xlu0 %1169
          %1172 = vst.msk [vmem:[#allocation2] sm:$0xff] %vm368, %v1170
          %v1173 = vpack.c.bf16 %v1162, %v1162
          %v1175 = vunpack.c.l.b16 %v1173
          %v1176 = vpack.c.b16 %v1175, %v1175
          %1177 = vrot.lane.b32.xlu0 %v1176, 32
          %v1178 = vpop.permute.xlu0 %1177
          %s1180 = scalar_lea.vmem %s324, 28
          %1181 = vst.msk [vmem:[%s1180] sm:$0xf] %vm459, %v1178
          %s1182 = sadd.s32 %s346, 8
          %p1183 = scmp.lt.s32.totalorder %s1182, 8
          %s1184 = scalar_select %p1183, 1, 0
          %s1185 = scvt.s32.f32 %s1184
          %s1186 = scalar_lea.vmem %s270, 32 [#allocation4]
          %v1187 = vld [vmem:[%s1186] sm:$0xf]
          %v1188 = vunpack.c.l.bf16 %v1187
          %v1189 = vstv %s1185
          %v1190 = vmul.f32 %v1188, %v1189
          %v1191 = vld [vmem:[#allocation2] sm:$0xff]
          %v1192 = vpack.c.bf16 %v1191, %v1191
          %v1194 = vsel %vm368, %v1192, 0
          %1196 = vmatprep.subr.bf16.mxu0 0
          %1197 = vmatpush1.bf16.msra.mxu0 %v364
          %1198 = vmatprep.subr.bf16.mxu0 0
          %1199 = vmatpush1.bf16.msra.mxu0 %v365
          %1200 = vmatprep.subr.bf16.mxu0 0
          %1201 = vmatpush1.bf16.msra.mxu0 0
          %1202 = vmatprep.subr.bf16.mxu0 0
          %1203 = vmatpush1.bf16.msra.mxu0 0
          %1204 = vmatprep.subr.bf16.mxu0 0
          %1205 = vmatpush1.bf16.msra.mxu0 0
          %1206 = vmatprep.subr.bf16.mxu0 0
          %1207 = vmatpush1.bf16.msra.mxu0 0
          %1208 = vmatprep.subr.bf16.mxu0 0
          %1209 = vmatpush1.bf16.msra.mxu0 0
          %1210 = vmatprep.subr.bf16.mxu0 0
          %1211 = vmatpush1.bf16.msra.mxu0 0
          %1212 = vmatprep.subr.bf16.mxu0 0
          %1213 = vmatpush1.bf16.msra.mxu0 0
          %1214 = vmatprep.subr.bf16.mxu0 0
          %1215 = vmatpush1.bf16.msra.mxu0 0
          %1216 = vmatprep.subr.bf16.mxu0 0
          %1217 = vmatpush1.bf16.msra.mxu0 0
          %1218 = vmatprep.subr.bf16.mxu0 0
          %1219 = vmatpush1.bf16.msra.mxu0 0
          %1220 = vmatprep.subr.bf16.mxu0 0
          %1221 = vmatpush1.bf16.msra.mxu0 0
          %1222 = vmatprep.subr.bf16.mxu0 0
          %1223 = vmatpush1.bf16.msra.mxu0 0
          %1224 = vmatprep.subr.bf16.mxu0 0
          %1225 = vmatpush1.bf16.msra.mxu0 0
          %1226 = vmatprep.subr.bf16.mxu0 0
          %1227 = vmatpush1.bf16.msra.mxu0 0
          %1228 = vmatprep.mubr.bf16.mxu0 0
          %1229 = vmatmul.mubr.bf16.gmra.mrb[0].mxu0 %v1194
          %v1230 = vpop.f32.mrb[0].mxu0
          %v1231 = vadd.f32 0.0, %v1230
          %v1232 = vpop.f32.mrb[0].mxu0
          %v1233 = vpop.f32.mrb[0].mxu0
          %v1234 = vpop.f32.mrb[0].mxu0
          %1235 = vdwg.mxu0
          %v1236 = vadd.f32 %v1190, %v1231
          %v1237 = vxor.u32 %v1236, 2147483648
          %v1238 = vmul.f32 %v1237, 1.442695
          %v1239 = vpow.pop %v1238
          %v1240 = vadd.f32 %v1239, 1.0
          %v1241 = vrcp.pop %v1240
          %v1242 = vmul.f32 1.0, %v1241
          %v1243 = vtanh.pop %v1236
          %v1244 = vld [vmem:[#allocation3] sm:$0xff]
          %1246 = vrot.lane.b32.xlu0 %v1244, 32
          %v1247 = vpop.permute.xlu0 %1246
          %v1249 = vmul.f32 %v1242, %v1247
          %1251 = vrot.lane.b32.xlu0 %v1243, 64
          %v1252 = vpop.permute.xlu0 %1251
          %v1254 = vmul.f32 %v1242, %v1252
          %1256 = vrot.lane.b32.xlu0 %v1254, 32
          %v1257 = vpop.permute.xlu0 %1256
          %v1259 = vadd.f32 %v1249, %v1257
          %v1260 = vtanh.pop %v1259
          %1262 = vrot.lane.b32.xlu0 %v1260, 64
          %v1263 = vpop.permute.xlu0 %1262
          %v1265 = vmul.f32 %v1242, %v1263
          %1267 = vrot.lane.b32.xlu0 %v1259, 96
          %v1268 = vpop.permute.xlu0 %1267
          %1270 = vst.msk [vmem:[#allocation3] sm:$0xff] %vm368, %v1268
          %1272 = vrot.lane.b32.xlu0 %v1265, 32
          %v1273 = vpop.permute.xlu0 %1272
          %1275 = vst.msk [vmem:[#allocation2] sm:$0xff] %vm368, %v1273
          %v1276 = vpack.c.bf16 %v1265, %v1265
          %v1278 = vunpack.c.l.b16 %v1276
          %v1279 = vpack.c.b16 %v1278, %v1278
          %1280 = vrot.lane.b32.xlu0 %v1279, 32
          %v1281 = vpop.permute.xlu0 %1280
          %s1283 = scalar_lea.vmem %s324, 32
          %1284 = vst.msk [vmem:[%s1283] sm:$0xf] %vm459, %v1281
          %s1285 = sadd.s32 %s346, 9
          %p1286 = scmp.lt.s32.totalorder %s1285, 8
          %s1287 = scalar_select %p1286, 1, 0
          %s1288 = scvt.s32.f32 %s1287
          %s1289 = scalar_lea.vmem %s270, 36 [#allocation4]
          %v1290 = vld [vmem:[%s1289] sm:$0xf]
          %v1291 = vunpack.c.l.bf16 %v1290
          %v1292 = vstv %s1288
          %v1293 = vmul.f32 %v1291, %v1292
          %v1294 = vld [vmem:[#allocation2] sm:$0xff]
          %v1295 = vpack.c.bf16 %v1294, %v1294
          %v1297 = vsel %vm368, %v1295, 0
          %1299 = vmatprep.subr.bf16.mxu0 0
          %1300 = vmatpush1.bf16.msra.mxu0 %v364
          %1301 = vmatprep.subr.bf16.mxu0 0
          %1302 = vmatpush1.bf16.msra.mxu0 %v365
          %1303 = vmatprep.subr.bf16.mxu0 0
          %1304 = vmatpush1.bf16.msra.mxu0 0
          %1305 = vmatprep.subr.bf16.mxu0 0
          %1306 = vmatpush1.bf16.msra.mxu0 0
          %1307 = vmatprep.subr.bf16.mxu0 0
          %1308 = vmatpush1.bf16.msra.mxu0 0
          %1309 = vmatprep.subr.bf16.mxu0 0
          %1310 = vmatpush1.bf16.msra.mxu0 0
          %1311 = vmatprep.subr.bf16.mxu0 0
          %1312 = vmatpush1.bf16.msra.mxu0 0
          %1313 = vmatprep.subr.bf16.mxu0 0
          %1314 = vmatpush1.bf16.msra.mxu0 0
          %1315 = vmatprep.subr.bf16.mxu0 0
          %1316 = vmatpush1.bf16.msra.mxu0 0
          %1317 = vmatprep.subr.bf16.mxu0 0
          %1318 = vmatpush1.bf16.msra.mxu0 0
          %1319 = vmatprep.subr.bf16.mxu0 0
          %1320 = vmatpush1.bf16.msra.mxu0 0
          %1321 = vmatprep.subr.bf16.mxu0 0
          %1322 = vmatpush1.bf16.msra.mxu0 0
          %1323 = vmatprep.subr.bf16.mxu0 0
          %1324 = vmatpush1.bf16.msra.mxu0 0
          %1325 = vmatprep.subr.bf16.mxu0 0
          %1326 = vmatpush1.bf16.msra.mxu0 0
          %1327 = vmatprep.subr.bf16.mxu0 0
          %1328 = vmatpush1.bf16.msra.mxu0 0
          %1329 = vmatprep.subr.bf16.mxu0 0
          %1330 = vmatpush1.bf16.msra.mxu0 0
          %1331 = vmatprep.mubr.bf16.mxu0 0
          %1332 = vmatmul.mubr.bf16.gmra.mrb[0].mxu0 %v1297
          %v1333 = vpop.f32.mrb[0].mxu0
          %v1334 = vadd.f32 0.0, %v1333
          %v1335 = vpop.f32.mrb[0].mxu0
          %v1336 = vpop.f32.mrb[0].mxu0
          %v1337 = vpop.f32.mrb[0].mxu0
          %1338 = vdwg.mxu0
          %v1339 = vadd.f32 %v1293, %v1334
          %v1340 = vxor.u32 %v1339, 2147483648
          %v1341 = vmul.f32 %v1340, 1.442695
          %v1342 = vpow.pop %v1341
          %v1343 = vadd.f32 %v1342, 1.0
          %v1344 = vrcp.pop %v1343
          %v1345 = vmul.f32 1.0, %v1344
          %v1346 = vtanh.pop %v1339
          %v1347 = vld [vmem:[#allocation3] sm:$0xff]
          %1349 = vrot.lane.b32.xlu0 %v1347, 32
          %v1350 = vpop.permute.xlu0 %1349
          %v1352 = vmul.f32 %v1345, %v1350
          %1354 = vrot.lane.b32.xlu0 %v1346, 64
          %v1355 = vpop.permute.xlu0 %1354
          %v1357 = vmul.f32 %v1345, %v1355
          %1359 = vrot.lane.b32.xlu0 %v1357, 32
          %v1360 = vpop.permute.xlu0 %1359
          %v1362 = vadd.f32 %v1352, %v1360
          %v1363 = vtanh.pop %v1362
          %1365 = vrot.lane.b32.xlu0 %v1363, 64
          %v1366 = vpop.permute.xlu0 %1365
          %v1368 = vmul.f32 %v1345, %v1366
          %1370 = vrot.lane.b32.xlu0 %v1362, 96
          %v1371 = vpop.permute.xlu0 %1370
          %1373 = vst.msk [vmem:[#allocation3] sm:$0xff] %vm368, %v1371
          %1375 = vrot.lane.b32.xlu0 %v1368, 32
          %v1376 = vpop.permute.xlu0 %1375
          %1378 = vst.msk [vmem:[#allocation2] sm:$0xff] %vm368, %v1376
          %v1379 = vpack.c.bf16 %v1368, %v1368
          %v1381 = vunpack.c.l.b16 %v1379
          %v1382 = vpack.c.b16 %v1381, %v1381
          %1383 = vrot.lane.b32.xlu0 %v1382, 32
          %v1384 = vpop.permute.xlu0 %1383
          %s1386 = scalar_lea.vmem %s324, 36
          %1387 = vst.msk [vmem:[%s1386] sm:$0xf] %vm459, %v1384
          %s1388 = sadd.s32 %s346, 10
          %p1389 = scmp.lt.s32.totalorder %s1388, 8
          %s1390 = scalar_select %p1389, 1, 0
          %s1391 = scvt.s32.f32 %s1390
          %s1392 = scalar_lea.vmem %s270, 40 [#allocation4]
          %v1393 = vld [vmem:[%s1392] sm:$0xf]
          %v1394 = vunpack.c.l.bf16 %v1393
          %v1395 = vstv %s1391
          %v1396 = vmul.f32 %v1394, %v1395
          %v1397 = vld [vmem:[#allocation2] sm:$0xff]
          %v1398 = vpack.c.bf16 %v1397, %v1397
          %v1400 = vsel %vm368, %v1398, 0
          %1402 = vmatprep.subr.bf16.mxu0 0
          %1403 = vmatpush1.bf16.msra.mxu0 %v364
          %1404 = vmatprep.subr.bf16.mxu0 0
          %1405 = vmatpush1.bf16.msra.mxu0 %v365
          %1406 = vmatprep.subr.bf16.mxu0 0
          %1407 = vmatpush1.bf16.msra.mxu0 0
          %1408 = vmatprep.subr.bf16.mxu0 0
          %1409 = vmatpush1.bf16.msra.mxu0 0
          %1410 = vmatprep.subr.bf16.mxu0 0
          %1411 = vmatpush1.bf16.msra.mxu0 0
          %1412 = vmatprep.subr.bf16.mxu0 0
          %1413 = vmatpush1.bf16.msra.mxu0 0
          %1414 = vmatprep.subr.bf16.mxu0 0
          %1415 = vmatpush1.bf16.msra.mxu0 0
          %1416 = vmatprep.subr.bf16.mxu0 0
          %1417 = vmatpush1.bf16.msra.mxu0 0
          %1418 = vmatprep.subr.bf16.mxu0 0
          %1419 = vmatpush1.bf16.msra.mxu0 0
          %1420 = vmatprep.subr.bf16.mxu0 0
          %1421 = vmatpush1.bf16.msra.mxu0 0
          %1422 = vmatprep.subr.bf16.mxu0 0
          %1423 = vmatpush1.bf16.msra.mxu0 0
          %1424 = vmatprep.subr.bf16.mxu0 0
          %1425 = vmatpush1.bf16.msra.mxu0 0
          %1426 = vmatprep.subr.bf16.mxu0 0
          %1427 = vmatpush1.bf16.msra.mxu0 0
          %1428 = vmatprep.subr.bf16.mxu0 0
          %1429 = vmatpush1.bf16.msra.mxu0 0
          %1430 = vmatprep.subr.bf16.mxu0 0
          %1431 = vmatpush1.bf16.msra.mxu0 0
          %1432 = vmatprep.subr.bf16.mxu0 0
          %1433 = vmatpush1.bf16.msra.mxu0 0
          %1434 = vmatprep.mubr.bf16.mxu0 0
          %1435 = vmatmul.mubr.bf16.gmra.mrb[0].mxu0 %v1400
          %v1436 = vpop.f32.mrb[0].mxu0
          %v1437 = vadd.f32 0.0, %v1436
          %v1438 = vpop.f32.mrb[0].mxu0
          %v1439 = vpop.f32.mrb[0].mxu0
          %v1440 = vpop.f32.mrb[0].mxu0
          %1441 = vdwg.mxu0
          %v1442 = vadd.f32 %v1396, %v1437
          %v1443 = vxor.u32 %v1442, 2147483648
          %v1444 = vmul.f32 %v1443, 1.442695
          %v1445 = vpow.pop %v1444
          %v1446 = vadd.f32 %v1445, 1.0
          %v1447 = vrcp.pop %v1446
          %v1448 = vmul.f32 1.0, %v1447
          %v1449 = vtanh.pop %v1442
          %v1450 = vld [vmem:[#allocation3] sm:$0xff]
          %1452 = vrot.lane.b32.xlu0 %v1450, 32
          %v1453 = vpop.permute.xlu0 %1452
          %v1455 = vmul.f32 %v1448, %v1453
          %1457 = vrot.lane.b32.xlu0 %v1449, 64
          %v1458 = vpop.permute.xlu0 %1457
          %v1460 = vmul.f32 %v1448, %v1458
          %1462 = vrot.lane.b32.xlu0 %v1460, 32
          %v1463 = vpop.permute.xlu0 %1462
          %v1465 = vadd.f32 %v1455, %v1463
          %v1466 = vtanh.pop %v1465
          %1468 = vrot.lane.b32.xlu0 %v1466, 64
          %v1469 = vpop.permute.xlu0 %1468
          %v1471 = vmul.f32 %v1448, %v1469
          %1473 = vrot.lane.b32.xlu0 %v1465, 96
          %v1474 = vpop.permute.xlu0 %1473
          %1476 = vst.msk [vmem:[#allocation3] sm:$0xff] %vm368, %v1474
          %1478 = vrot.lane.b32.xlu0 %v1471, 32
          %v1479 = vpop.permute.xlu0 %1478
          %1481 = vst.msk [vmem:[#allocation2] sm:$0xff] %vm368, %v1479
          %v1482 = vpack.c.bf16 %v1471, %v1471
          %v1484 = vunpack.c.l.b16 %v1482
          %v1485 = vpack.c.b16 %v1484, %v1484
          %1486 = vrot.lane.b32.xlu0 %v1485, 32
          %v1487 = vpop.permute.xlu0 %1486
          %s1489 = scalar_lea.vmem %s324, 40
          %1490 = vst.msk [vmem:[%s1489] sm:$0xf] %vm459, %v1487
          %s1491 = sadd.s32 %s346, 11
          %p1492 = scmp.lt.s32.totalorder %s1491, 8
          %s1493 = scalar_select %p1492, 1, 0
          %s1494 = scvt.s32.f32 %s1493
          %s1495 = scalar_lea.vmem %s270, 44 [#allocation4]
          %v1496 = vld [vmem:[%s1495] sm:$0xf]
          %v1497 = vunpack.c.l.bf16 %v1496
          %v1498 = vstv %s1494
          %v1499 = vmul.f32 %v1497, %v1498
          %v1500 = vld [vmem:[#allocation2] sm:$0xff]
          %v1501 = vpack.c.bf16 %v1500, %v1500
          %v1503 = vsel %vm368, %v1501, 0
          %1505 = vmatprep.subr.bf16.mxu0 0
          %1506 = vmatpush1.bf16.msra.mxu0 %v364
          %1507 = vmatprep.subr.bf16.mxu0 0
          %1508 = vmatpush1.bf16.msra.mxu0 %v365
          %1509 = vmatprep.subr.bf16.mxu0 0
          %1510 = vmatpush1.bf16.msra.mxu0 0
          %1511 = vmatprep.subr.bf16.mxu0 0
          %1512 = vmatpush1.bf16.msra.mxu0 0
          %1513 = vmatprep.subr.bf16.mxu0 0
          %1514 = vmatpush1.bf16.msra.mxu0 0
          %1515 = vmatprep.subr.bf16.mxu0 0
          %1516 = vmatpush1.bf16.msra.mxu0 0
          %1517 = vmatprep.subr.bf16.mxu0 0
          %1518 = vmatpush1.bf16.msra.mxu0 0
          %1519 = vmatprep.subr.bf16.mxu0 0
          %1520 = vmatpush1.bf16.msra.mxu0 0
          %1521 = vmatprep.subr.bf16.mxu0 0
          %1522 = vmatpush1.bf16.msra.mxu0 0
          %1523 = vmatprep.subr.bf16.mxu0 0
          %1524 = vmatpush1.bf16.msra.mxu0 0
          %1525 = vmatprep.subr.bf16.mxu0 0
          %1526 = vmatpush1.bf16.msra.mxu0 0
          %1527 = vmatprep.subr.bf16.mxu0 0
          %1528 = vmatpush1.bf16.msra.mxu0 0
          %1529 = vmatprep.subr.bf16.mxu0 0
          %1530 = vmatpush1.bf16.msra.mxu0 0
          %1531 = vmatprep.subr.bf16.mxu0 0
          %1532 = vmatpush1.bf16.msra.mxu0 0
          %1533 = vmatprep.subr.bf16.mxu0 0
          %1534 = vmatpush1.bf16.msra.mxu0 0
          %1535 = vmatprep.subr.bf16.mxu0 0
          %1536 = vmatpush1.bf16.msra.mxu0 0
          %1537 = vmatprep.mubr.bf16.mxu0 0
          %1538 = vmatmul.mubr.bf16.gmra.mrb[0].mxu0 %v1503
          %v1539 = vpop.f32.mrb[0].mxu0
          %v1540 = vadd.f32 0.0, %v1539
          %v1541 = vpop.f32.mrb[0].mxu0
          %v1542 = vpop.f32.mrb[0].mxu0
          %v1543 = vpop.f32.mrb[0].mxu0
          %1544 = vdwg.mxu0
          %v1545 = vadd.f32 %v1499, %v1540
          %v1546 = vxor.u32 %v1545, 2147483648
          %v1547 = vmul.f32 %v1546, 1.442695
          %v1548 = vpow.pop %v1547
          %v1549 = vadd.f32 %v1548, 1.0
          %v1550 = vrcp.pop %v1549
          %v1551 = vmul.f32 1.0, %v1550
          %v1552 = vtanh.pop %v1545
          %v1553 = vld [vmem:[#allocation3] sm:$0xff]
          %1555 = vrot.lane.b32.xlu0 %v1553, 32
          %v1556 = vpop.permute.xlu0 %1555
          %v1558 = vmul.f32 %v1551, %v1556
          %1560 = vrot.lane.b32.xlu0 %v1552, 64
          %v1561 = vpop.permute.xlu0 %1560
          %v1563 = vmul.f32 %v1551, %v1561
          %1565 = vrot.lane.b32.xlu0 %v1563, 32
          %v1566 = vpop.permute.xlu0 %1565
          %v1568 = vadd.f32 %v1558, %v1566
          %v1569 = vtanh.pop %v1568
          %1571 = vrot.lane.b32.xlu0 %v1569, 64
          %v1572 = vpop.permute.xlu0 %1571
          %v1574 = vmul.f32 %v1551, %v1572
          %1576 = vrot.lane.b32.xlu0 %v1568, 96
          %v1577 = vpop.permute.xlu0 %1576
          %1579 = vst.msk [vmem:[#allocation3] sm:$0xff] %vm368, %v1577
          %1581 = vrot.lane.b32.xlu0 %v1574, 32
          %v1582 = vpop.permute.xlu0 %1581
          %1584 = vst.msk [vmem:[#allocation2] sm:$0xff] %vm368, %v1582
          %v1585 = vpack.c.bf16 %v1574, %v1574
          %v1587 = vunpack.c.l.b16 %v1585
          %v1588 = vpack.c.b16 %v1587, %v1587
          %1589 = vrot.lane.b32.xlu0 %v1588, 32
          %v1590 = vpop.permute.xlu0 %1589
          %s1592 = scalar_lea.vmem %s324, 44
          %1593 = vst.msk [vmem:[%s1592] sm:$0xf] %vm459, %v1590
          %s1594 = sadd.s32 %s346, 12
          %p1595 = scmp.lt.s32.totalorder %s1594, 8
          %s1596 = scalar_select %p1595, 1, 0
          %s1597 = scvt.s32.f32 %s1596
          %s1598 = scalar_lea.vmem %s270, 48 [#allocation4]
          %v1599 = vld [vmem:[%s1598] sm:$0xf]
          %v1600 = vunpack.c.l.bf16 %v1599
          %v1601 = vstv %s1597
          %v1602 = vmul.f32 %v1600, %v1601
          %v1603 = vld [vmem:[#allocation2] sm:$0xff]
          %v1604 = vpack.c.bf16 %v1603, %v1603
          %v1606 = vsel %vm368, %v1604, 0
          %1608 = vmatprep.subr.bf16.mxu0 0
          %1609 = vmatpush1.bf16.msra.mxu0 %v364
          %1610 = vmatprep.subr.bf16.mxu0 0
          %1611 = vmatpush1.bf16.msra.mxu0 %v365
          %1612 = vmatprep.subr.bf16.mxu0 0
          %1613 = vmatpush1.bf16.msra.mxu0 0
          %1614 = vmatprep.subr.bf16.mxu0 0
          %1615 = vmatpush1.bf16.msra.mxu0 0
          %1616 = vmatprep.subr.bf16.mxu0 0
          %1617 = vmatpush1.bf16.msra.mxu0 0
          %1618 = vmatprep.subr.bf16.mxu0 0
          %1619 = vmatpush1.bf16.msra.mxu0 0
          %1620 = vmatprep.subr.bf16.mxu0 0
          %1621 = vmatpush1.bf16.msra.mxu0 0
          %1622 = vmatprep.subr.bf16.mxu0 0
          %1623 = vmatpush1.bf16.msra.mxu0 0
          %1624 = vmatprep.subr.bf16.mxu0 0
          %1625 = vmatpush1.bf16.msra.mxu0 0
          %1626 = vmatprep.subr.bf16.mxu0 0
          %1627 = vmatpush1.bf16.msra.mxu0 0
          %1628 = vmatprep.subr.bf16.mxu0 0
          %1629 = vmatpush1.bf16.msra.mxu0 0
          %1630 = vmatprep.subr.bf16.mxu0 0
          %1631 = vmatpush1.bf16.msra.mxu0 0
          %1632 = vmatprep.subr.bf16.mxu0 0
          %1633 = vmatpush1.bf16.msra.mxu0 0
          %1634 = vmatprep.subr.bf16.mxu0 0
          %1635 = vmatpush1.bf16.msra.mxu0 0
          %1636 = vmatprep.subr.bf16.mxu0 0
          %1637 = vmatpush1.bf16.msra.mxu0 0
          %1638 = vmatprep.subr.bf16.mxu0 0
          %1639 = vmatpush1.bf16.msra.mxu0 0
          %1640 = vmatprep.mubr.bf16.mxu0 0
          %1641 = vmatmul.mubr.bf16.gmra.mrb[0].mxu0 %v1606
          %v1642 = vpop.f32.mrb[0].mxu0
          %v1643 = vadd.f32 0.0, %v1642
          %v1644 = vpop.f32.mrb[0].mxu0
          %v1645 = vpop.f32.mrb[0].mxu0
          %v1646 = vpop.f32.mrb[0].mxu0
          %1647 = vdwg.mxu0
          %v1648 = vadd.f32 %v1602, %v1643
          %v1649 = vxor.u32 %v1648, 2147483648
          %v1650 = vmul.f32 %v1649, 1.442695
          %v1651 = vpow.pop %v1650
          %v1652 = vadd.f32 %v1651, 1.0
          %v1653 = vrcp.pop %v1652
          %v1654 = vmul.f32 1.0, %v1653
          %v1655 = vtanh.pop %v1648
          %v1656 = vld [vmem:[#allocation3] sm:$0xff]
          %1658 = vrot.lane.b32.xlu0 %v1656, 32
          %v1659 = vpop.permute.xlu0 %1658
          %v1661 = vmul.f32 %v1654, %v1659
          %1663 = vrot.lane.b32.xlu0 %v1655, 64
          %v1664 = vpop.permute.xlu0 %1663
          %v1666 = vmul.f32 %v1654, %v1664
          %1668 = vrot.lane.b32.xlu0 %v1666, 32
          %v1669 = vpop.permute.xlu0 %1668
          %v1671 = vadd.f32 %v1661, %v1669
          %v1672 = vtanh.pop %v1671
          %1674 = vrot.lane.b32.xlu0 %v1672, 64
          %v1675 = vpop.permute.xlu0 %1674
          %v1677 = vmul.f32 %v1654, %v1675
          %1679 = vrot.lane.b32.xlu0 %v1671, 96
          %v1680 = vpop.permute.xlu0 %1679
          %1682 = vst.msk [vmem:[#allocation3] sm:$0xff] %vm368, %v1680
          %1684 = vrot.lane.b32.xlu0 %v1677, 32
          %v1685 = vpop.permute.xlu0 %1684
          %1687 = vst.msk [vmem:[#allocation2] sm:$0xff] %vm368, %v1685
          %v1688 = vpack.c.bf16 %v1677, %v1677
          %v1690 = vunpack.c.l.b16 %v1688
          %v1691 = vpack.c.b16 %v1690, %v1690
          %1692 = vrot.lane.b32.xlu0 %v1691, 32
          %v1693 = vpop.permute.xlu0 %1692
          %s1695 = scalar_lea.vmem %s324, 48
          %1696 = vst.msk [vmem:[%s1695] sm:$0xf] %vm459, %v1693
          %s1697 = sadd.s32 %s346, 13
          %p1698 = scmp.lt.s32.totalorder %s1697, 8
          %s1699 = scalar_select %p1698, 1, 0
          %s1700 = scvt.s32.f32 %s1699
          %s1701 = scalar_lea.vmem %s270, 52 [#allocation4]
          %v1702 = vld [vmem:[%s1701] sm:$0xf]
          %v1703 = vunpack.c.l.bf16 %v1702
          %v1704 = vstv %s1700
          %v1705 = vmul.f32 %v1703, %v1704
          %v1706 = vld [vmem:[#allocation2] sm:$0xff]
          %v1707 = vpack.c.bf16 %v1706, %v1706
          %v1709 = vsel %vm368, %v1707, 0
          %1711 = vmatprep.subr.bf16.mxu0 0
          %1712 = vmatpush1.bf16.msra.mxu0 %v364
          %1713 = vmatprep.subr.bf16.mxu0 0
          %1714 = vmatpush1.bf16.msra.mxu0 %v365
          %1715 = vmatprep.subr.bf16.mxu0 0
          %1716 = vmatpush1.bf16.msra.mxu0 0
          %1717 = vmatprep.subr.bf16.mxu0 0
          %1718 = vmatpush1.bf16.msra.mxu0 0
          %1719 = vmatprep.subr.bf16.mxu0 0
          %1720 = vmatpush1.bf16.msra.mxu0 0
          %1721 = vmatprep.subr.bf16.mxu0 0
          %1722 = vmatpush1.bf16.msra.mxu0 0
          %1723 = vmatprep.subr.bf16.mxu0 0
          %1724 = vmatpush1.bf16.msra.mxu0 0
          %1725 = vmatprep.subr.bf16.mxu0 0
          %1726 = vmatpush1.bf16.msra.mxu0 0
          %1727 = vmatprep.subr.bf16.mxu0 0
          %1728 = vmatpush1.bf16.msra.mxu0 0
          %1729 = vmatprep.subr.bf16.mxu0 0
          %1730 = vmatpush1.bf16.msra.mxu0 0
          %1731 = vmatprep.subr.bf16.mxu0 0
          %1732 = vmatpush1.bf16.msra.mxu0 0
          %1733 = vmatprep.subr.bf16.mxu0 0
          %1734 = vmatpush1.bf16.msra.mxu0 0
          %1735 = vmatprep.subr.bf16.mxu0 0
          %1736 = vmatpush1.bf16.msra.mxu0 0
          %1737 = vmatprep.subr.bf16.mxu0 0
          %1738 = vmatpush1.bf16.msra.mxu0 0
          %1739 = vmatprep.subr.bf16.mxu0 0
          %1740 = vmatpush1.bf16.msra.mxu0 0
          %1741 = vmatprep.subr.bf16.mxu0 0
          %1742 = vmatpush1.bf16.msra.mxu0 0
          %1743 = vmatprep.mubr.bf16.mxu0 0
          %1744 = vmatmul.mubr.bf16.gmra.mrb[0].mxu0 %v1709
          %v1745 = vpop.f32.mrb[0].mxu0
          %v1746 = vadd.f32 0.0, %v1745
          %v1747 = vpop.f32.mrb[0].mxu0
          %v1748 = vpop.f32.mrb[0].mxu0
          %v1749 = vpop.f32.mrb[0].mxu0
          %1750 = vdwg.mxu0
          %v1751 = vadd.f32 %v1705, %v1746
          %v1752 = vxor.u32 %v1751, 2147483648
          %v1753 = vmul.f32 %v1752, 1.442695
          %v1754 = vpow.pop %v1753
          %v1755 = vadd.f32 %v1754, 1.0
          %v1756 = vrcp.pop %v1755
          %v1757 = vmul.f32 1.0, %v1756
          %v1758 = vtanh.pop %v1751
          %v1759 = vld [vmem:[#allocation3] sm:$0xff]
          %1761 = vrot.lane.b32.xlu0 %v1759, 32
          %v1762 = vpop.permute.xlu0 %1761
          %v1764 = vmul.f32 %v1757, %v1762
          %1766 = vrot.lane.b32.xlu0 %v1758, 64
          %v1767 = vpop.permute.xlu0 %1766
          %v1769 = vmul.f32 %v1757, %v1767
          %1771 = vrot.lane.b32.xlu0 %v1769, 32
          %v1772 = vpop.permute.xlu0 %1771
          %v1774 = vadd.f32 %v1764, %v1772
          %v1775 = vtanh.pop %v1774
          %1777 = vrot.lane.b32.xlu0 %v1775, 64
          %v1778 = vpop.permute.xlu0 %1777
          %v1780 = vmul.f32 %v1757, %v1778
          %1782 = vrot.lane.b32.xlu0 %v1774, 96
          %v1783 = vpop.permute.xlu0 %1782
          %1785 = vst.msk [vmem:[#allocation3] sm:$0xff] %vm368, %v1783
          %1787 = vrot.lane.b32.xlu0 %v1780, 32
          %v1788 = vpop.permute.xlu0 %1787
          %1790 = vst.msk [vmem:[#allocation2] sm:$0xff] %vm368, %v1788
          %v1791 = vpack.c.bf16 %v1780, %v1780
          %v1793 = vunpack.c.l.b16 %v1791
          %v1794 = vpack.c.b16 %v1793, %v1793
          %1795 = vrot.lane.b32.xlu0 %v1794, 32
          %v1796 = vpop.permute.xlu0 %1795
          %s1798 = scalar_lea.vmem %s324, 52
          %1799 = vst.msk [vmem:[%s1798] sm:$0xf] %vm459, %v1796
          %s1800 = sadd.s32 %s346, 14
          %p1801 = scmp.lt.s32.totalorder %s1800, 8
          %s1802 = scalar_select %p1801, 1, 0
          %s1803 = scvt.s32.f32 %s1802
          %s1804 = scalar_lea.vmem %s270, 56 [#allocation4]
          %v1805 = vld [vmem:[%s1804] sm:$0xf]
          %v1806 = vunpack.c.l.bf16 %v1805
          %v1807 = vstv %s1803
          %v1808 = vmul.f32 %v1806, %v1807
          %v1809 = vld [vmem:[#allocation2] sm:$0xff]
          %v1810 = vpack.c.bf16 %v1809, %v1809
          %v1812 = vsel %vm368, %v1810, 0
          %1814 = vmatprep.subr.bf16.mxu0 0
          %1815 = vmatpush1.bf16.msra.mxu0 %v364
          %1816 = vmatprep.subr.bf16.mxu0 0
          %1817 = vmatpush1.bf16.msra.mxu0 %v365
          %1818 = vmatprep.subr.bf16.mxu0 0
          %1819 = vmatpush1.bf16.msra.mxu0 0
          %1820 = vmatprep.subr.bf16.mxu0 0
          %1821 = vmatpush1.bf16.msra.mxu0 0
          %1822 = vmatprep.subr.bf16.mxu0 0
          %1823 = vmatpush1.bf16.msra.mxu0 0
          %1824 = vmatprep.subr.bf16.mxu0 0
          %1825 = vmatpush1.bf16.msra.mxu0 0
          %1826 = vmatprep.subr.bf16.mxu0 0
          %1827 = vmatpush1.bf16.msra.mxu0 0
          %1828 = vmatprep.subr.bf16.mxu0 0
          %1829 = vmatpush1.bf16.msra.mxu0 0
          %1830 = vmatprep.subr.bf16.mxu0 0
          %1831 = vmatpush1.bf16.msra.mxu0 0
          %1832 = vmatprep.subr.bf16.mxu0 0
          %1833 = vmatpush1.bf16.msra.mxu0 0
          %1834 = vmatprep.subr.bf16.mxu0 0
          %1835 = vmatpush1.bf16.msra.mxu0 0
          %1836 = vmatprep.subr.bf16.mxu0 0
          %1837 = vmatpush1.bf16.msra.mxu0 0
          %1838 = vmatprep.subr.bf16.mxu0 0
          %1839 = vmatpush1.bf16.msra.mxu0 0
          %1840 = vmatprep.subr.bf16.mxu0 0
          %1841 = vmatpush1.bf16.msra.mxu0 0
          %1842 = vmatprep.subr.bf16.mxu0 0
          %1843 = vmatpush1.bf16.msra.mxu0 0
          %1844 = vmatprep.subr.bf16.mxu0 0
          %1845 = vmatpush1.bf16.msra.mxu0 0
          %1846 = vmatprep.mubr.bf16.mxu0 0
          %1847 = vmatmul.mubr.bf16.gmra.mrb[0].mxu0 %v1812
          %v1848 = vpop.f32.mrb[0].mxu0
          %v1849 = vadd.f32 0.0, %v1848
          %v1850 = vpop.f32.mrb[0].mxu0
          %v1851 = vpop.f32.mrb[0].mxu0
          %v1852 = vpop.f32.mrb[0].mxu0
          %1853 = vdwg.mxu0
          %v1854 = vadd.f32 %v1808, %v1849
          %v1855 = vxor.u32 %v1854, 2147483648
          %v1856 = vmul.f32 %v1855, 1.442695
          %v1857 = vpow.pop %v1856
          %v1858 = vadd.f32 %v1857, 1.0
          %v1859 = vrcp.pop %v1858
          %v1860 = vmul.f32 1.0, %v1859
          %v1861 = vtanh.pop %v1854
          %v1862 = vld [vmem:[#allocation3] sm:$0xff]
          %1864 = vrot.lane.b32.xlu0 %v1862, 32
          %v1865 = vpop.permute.xlu0 %1864
          %v1867 = vmul.f32 %v1860, %v1865
          %1869 = vrot.lane.b32.xlu0 %v1861, 64
          %v1870 = vpop.permute.xlu0 %1869
          %v1872 = vmul.f32 %v1860, %v1870
          %1874 = vrot.lane.b32.xlu0 %v1872, 32
          %v1875 = vpop.permute.xlu0 %1874
          %v1877 = vadd.f32 %v1867, %v1875
          %v1878 = vtanh.pop %v1877
          %1880 = vrot.lane.b32.xlu0 %v1878, 64
          %v1881 = vpop.permute.xlu0 %1880
          %v1883 = vmul.f32 %v1860, %v1881
          %1885 = vrot.lane.b32.xlu0 %v1877, 96
          %v1886 = vpop.permute.xlu0 %1885
          %1888 = vst.msk [vmem:[#allocation3] sm:$0xff] %vm368, %v1886
          %1890 = vrot.lane.b32.xlu0 %v1883, 32
          %v1891 = vpop.permute.xlu0 %1890
          %1893 = vst.msk [vmem:[#allocation2] sm:$0xff] %vm368, %v1891
          %v1894 = vpack.c.bf16 %v1883, %v1883
          %v1896 = vunpack.c.l.b16 %v1894
          %v1897 = vpack.c.b16 %v1896, %v1896
          %1898 = vrot.lane.b32.xlu0 %v1897, 32
          %v1899 = vpop.permute.xlu0 %1898
          %s1901 = scalar_lea.vmem %s324, 56
          %1902 = vst.msk [vmem:[%s1901] sm:$0xf] %vm459, %v1899
          %s1903 = sadd.s32 %s346, 15
          %p1904 = scmp.lt.s32.totalorder %s1903, 8
          %s1905 = scalar_select %p1904, 1, 0
          %s1906 = scvt.s32.f32 %s1905
          %s1907 = scalar_lea.vmem %s270, 60 [#allocation4]
          %v1908 = vld [vmem:[%s1907] sm:$0xf]
          %v1909 = vunpack.c.l.bf16 %v1908
          %v1910 = vstv %s1906
          %v1911 = vmul.f32 %v1909, %v1910
          %v1912 = vld [vmem:[#allocation2] sm:$0xff]
          %v1913 = vpack.c.bf16 %v1912, %v1912
          %v1915 = vsel %vm368, %v1913, 0
          %1917 = vmatprep.subr.bf16.mxu0 0
          %1918 = vmatpush1.bf16.msra.mxu0 %v364
          %1919 = vmatprep.subr.bf16.mxu0 0
          %1920 = vmatpush1.bf16.msra.mxu0 %v365
          %1921 = vmatprep.subr.bf16.mxu0 0
          %1922 = vmatpush1.bf16.msra.mxu0 0
          %1923 = vmatprep.subr.bf16.mxu0 0
          %1924 = vmatpush1.bf16.msra.mxu0 0
          %1925 = vmatprep.subr.bf16.mxu0 0
          %1926 = vmatpush1.bf16.msra.mxu0 0
          %1927 = vmatprep.subr.bf16.mxu0 0
          %1928 = vmatpush1.bf16.msra.mxu0 0
          %1929 = vmatprep.subr.bf16.mxu0 0
          %1930 = vmatpush1.bf16.msra.mxu0 0
          %1931 = vmatprep.subr.bf16.mxu0 0
          %1932 = vmatpush1.bf16.msra.mxu0 0
          %1933 = vmatprep.subr.bf16.mxu0 0
          %1934 = vmatpush1.bf16.msra.mxu0 0
          %1935 = vmatprep.subr.bf16.mxu0 0
          %1936 = vmatpush1.bf16.msra.mxu0 0
          %1937 = vmatprep.subr.bf16.mxu0 0
          %1938 = vmatpush1.bf16.msra.mxu0 0
          %1939 = vmatprep.subr.bf16.mxu0 0
          %1940 = vmatpush1.bf16.msra.mxu0 0
          %1941 = vmatprep.subr.bf16.mxu0 0
          %1942 = vmatpush1.bf16.msra.mxu0 0
          %1943 = vmatprep.subr.bf16.mxu0 0
          %1944 = vmatpush1.bf16.msra.mxu0 0
          %1945 = vmatprep.subr.bf16.mxu0 0
          %1946 = vmatpush1.bf16.msra.mxu0 0
          %1947 = vmatprep.subr.bf16.mxu0 0
          %1948 = vmatpush1.bf16.msra.mxu0 0
          %1949 = vmatprep.mubr.bf16.mxu0 0
          %1950 = vmatmul.mubr.bf16.gmra.mrb[0].mxu0 %v1915
          %v1951 = vpop.f32.mrb[0].mxu0
          %v1952 = vadd.f32 0.0, %v1951
          %v1953 = vpop.f32.mrb[0].mxu0
          %v1954 = vpop.f32.mrb[0].mxu0
          %v1955 = vpop.f32.mrb[0].mxu0
          %1956 = vdwg.mxu0
          %v1957 = vadd.f32 %v1911, %v1952
          %v1958 = vxor.u32 %v1957, 2147483648
          %v1959 = vmul.f32 %v1958, 1.442695
          %v1960 = vpow.pop %v1959
          %v1961 = vadd.f32 %v1960, 1.0
          %v1962 = vrcp.pop %v1961
          %v1963 = vmul.f32 1.0, %v1962
          %v1964 = vtanh.pop %v1957
          %v1965 = vld [vmem:[#allocation3] sm:$0xff]
          %1967 = vrot.lane.b32.xlu0 %v1965, 32
          %v1968 = vpop.permute.xlu0 %1967
          %v1970 = vmul.f32 %v1963, %v1968
          %1972 = vrot.lane.b32.xlu0 %v1964, 64
          %v1973 = vpop.permute.xlu0 %1972
          %v1975 = vmul.f32 %v1963, %v1973
          %1977 = vrot.lane.b32.xlu0 %v1975, 32
          %v1978 = vpop.permute.xlu0 %1977
          %v1980 = vadd.f32 %v1970, %v1978
          %v1981 = vtanh.pop %v1980
          %1983 = vrot.lane.b32.xlu0 %v1981, 64
          %v1984 = vpop.permute.xlu0 %1983
          %v1986 = vmul.f32 %v1963, %v1984
          %1988 = vrot.lane.b32.xlu0 %v1980, 96
          %v1989 = vpop.permute.xlu0 %1988
          %1991 = vst.msk [vmem:[#allocation3] sm:$0xff] %vm368, %v1989
          %1993 = vrot.lane.b32.xlu0 %v1986, 32
          %v1994 = vpop.permute.xlu0 %1993
          %1996 = vst.msk [vmem:[#allocation2] sm:$0xff] %vm368, %v1994
          %v1997 = vpack.c.bf16 %v1986, %v1986
          %v1999 = vunpack.c.l.b16 %v1997
          %v2000 = vpack.c.b16 %v1999, %v1999
          %2001 = vrot.lane.b32.xlu0 %v2000, 32
          %v2002 = vpop.permute.xlu0 %2001
          %s2004 = scalar_lea.vmem %s324, 60
          %2005 = vst.msk [vmem:[%s2004] sm:$0xf] %vm459, %v2002
        $region77: #{bert_country_forward.28} parent=64 // pred_fallthru
          _
        %p2006 = scmp.eq.s32.totalorder %s17, 1
        // Predicated region
        $region78: #{bert_country_forward.28} parent=64 // pred_check
          %p2007 = pneg %p2006
        $region79: #{bert_country_forward.28} parent=64 // pred_check_branch
          %2009 = sbr.rel (%p2007) target = $region81
        $region80: #{bert_country_forward.28} parent=64 // pred_region
          %s2010 = ssub.s32 0, %s18
          %s2011 = smul.u32 %s2010, 16
          %s2012 = sadd.s32 %s2011, 15
          %p2013 = scmp.lt.s32.totalorder %s2012, 8
          %s2014 = scalar_select %p2013, 1, 0
          %s2015 = scvt.s32.f32 %s2014
          %s2016 = scalar_lea.vmem %s270, 60 [#allocation4]
          %v2017 = vld [vmem:[%s2016] sm:$0xf]
          %v2018 = vunpack.c.l.bf16 %v2017
          %v2019 = vstv %s2015
          %v2020 = vmul.f32 %v2018, %v2019
          %v2021 = vld [vmem:[#allocation2] sm:$0xff]
          %v2022 = vpack.c.bf16 %v2021, %v2021
          %v2027 = vunpack.c.l.b16 %v338
          %v2028 = vunpack.c.l.b16 %v339
          %v2029 = vunpack.c.l.b16 %v340
          %v2030 = vunpack.c.l.b16 %v341
          %v2031 = vpack.c.b16 %v2028, %v2027
          %v2032 = vpack.c.b16 %v2030, %v2029
          %vm2035 = vcmask 261120
          %v2037 = vsel %vm2035, %v2022, 0
          %2039 = vmatprep.subr.bf16.mxu0 0
          %2040 = vmatpush1.bf16.msra.mxu0 %v2031
          %2041 = vmatprep.subr.bf16.mxu0 0
          %2042 = vmatpush1.bf16.msra.mxu0 %v2032
          %2043 = vmatprep.subr.bf16.mxu0 0
          %2044 = vmatpush1.bf16.msra.mxu0 0
          %2045 = vmatprep.subr.bf16.mxu0 0
          %2046 = vmatpush1.bf16.msra.mxu0 0
          %2047 = vmatprep.subr.bf16.mxu0 0
          %2048 = vmatpush1.bf16.msra.mxu0 0
          %2049 = vmatprep.subr.bf16.mxu0 0
          %2050 = vmatpush1.bf16.msra.mxu0 0
          %2051 = vmatprep.subr.bf16.mxu0 0
          %2052 = vmatpush1.bf16.msra.mxu0 0
          %2053 = vmatprep.subr.bf16.mxu0 0
          %2054 = vmatpush1.bf16.msra.mxu0 0
          %2055 = vmatprep.subr.bf16.mxu0 0
          %2056 = vmatpush1.bf16.msra.mxu0 0
          %2057 = vmatprep.subr.bf16.mxu0 0
          %2058 = vmatpush1.bf16.msra.mxu0 0
          %2059 = vmatprep.subr.bf16.mxu0 0
          %2060 = vmatpush1.bf16.msra.mxu0 0
          %2061 = vmatprep.subr.bf16.mxu0 0
          %2062 = vmatpush1.bf16.msra.mxu0 0
          %2063 = vmatprep.subr.bf16.mxu0 0
          %2064 = vmatpush1.bf16.msra.mxu0 0
          %2065 = vmatprep.subr.bf16.mxu0 0
          %2066 = vmatpush1.bf16.msra.mxu0 0
          %2067 = vmatprep.subr.bf16.mxu0 0
          %2068 = vmatpush1.bf16.msra.mxu0 0
          %2069 = vmatprep.subr.bf16.mxu0 0
          %2070 = vmatpush1.bf16.msra.mxu0 0
          %2071 = vmatprep.mubr.bf16.mxu0 0
          %2072 = vmatmul.mubr.bf16.gmra.mrb[0].mxu0 %v2037
          %v2073 = vpop.f32.mrb[0].mxu0
          %v2074 = vadd.f32 0.0, %v2073
          %v2075 = vpop.f32.mrb[0].mxu0
          %v2076 = vpop.f32.mrb[0].mxu0
          %v2077 = vpop.f32.mrb[0].mxu0
          %2078 = vdwg.mxu0
          %v2079 = vadd.f32 %v2020, %v2074
          %v2080 = vxor.u32 %v2079, 2147483648
          %v2081 = vmul.f32 %v2080, 1.442695
          %v2082 = vpow.pop %v2081
          %v2083 = vadd.f32 %v2082, 1.0
          %v2084 = vrcp.pop %v2083
          %v2085 = vmul.f32 1.0, %v2084
          %v2086 = vtanh.pop %v2079
          %v2087 = vld [vmem:[#allocation3] sm:$0xff]
          %2089 = vrot.lane.b32.xlu0 %v2087, 32
          %v2090 = vpop.permute.xlu0 %2089
          %v2092 = vmul.f32 %v2085, %v2090
          %2094 = vrot.lane.b32.xlu0 %v2086, 64
          %v2095 = vpop.permute.xlu0 %2094
          %v2097 = vmul.f32 %v2085, %v2095
          %2099 = vrot.lane.b32.xlu0 %v2097, 32
          %v2100 = vpop.permute.xlu0 %2099
          %v2102 = vadd.f32 %v2092, %v2100
          %v2103 = vtanh.pop %v2102
          %2105 = vrot.lane.b32.xlu0 %v2103, 64
          %v2106 = vpop.permute.xlu0 %2105
          %v2108 = vmul.f32 %v2085, %v2106
          %2110 = vrot.lane.b32.xlu0 %v2102, 96
          %v2111 = vpop.permute.xlu0 %2110
          %2113 = vst.msk [vmem:[#allocation3] sm:$0xff] %vm2035, %v2111
          %2115 = vrot.lane.b32.xlu0 %v2108, 32
          %v2116 = vpop.permute.xlu0 %2115
          %2118 = vst.msk [vmem:[#allocation2] sm:$0xff] %vm2035, %v2116
          %v2119 = vpack.c.bf16 %v2108, %v2108
          %v2121 = vunpack.c.l.b16 %v2119
          %v2122 = vpack.c.b16 %v2121, %v2121
          %2123 = vrot.lane.b32.xlu0 %v2122, 32
          %v2124 = vpop.permute.xlu0 %2123
          %s2126 = scalar_lea.vmem %s324, 60
          %vm2127 = vcmask 257024
          %2128 = vst.msk [vmem:[%s2126] sm:$0xf] %vm2127, %v2124
          %s2129 = sadd.s32 %s2011, 14
          %p2130 = scmp.lt.s32.totalorder %s2129, 8
          %s2131 = scalar_select %p2130, 1, 0
          %s2132 = scvt.s32.f32 %s2131
          %s2133 = scalar_lea.vmem %s270, 56 [#allocation4]
          %v2134 = vld [vmem:[%s2133] sm:$0xf]
          %v2135 = vunpack.c.l.bf16 %v2134
          %v2136 = vstv %s2132
          %v2137 = vmul.f32 %v2135, %v2136
          %v2138 = vld [vmem:[#allocation2] sm:$0xff]
          %v2139 = vpack.c.bf16 %v2138, %v2138
          %v2141 = vsel %vm2035, %v2139, 0
          %2143 = vmatprep.subr.bf16.mxu0 0
          %2144 = vmatpush1.bf16.msra.mxu0 %v2031
          %2145 = vmatprep.subr.bf16.mxu0 0
          %2146 = vmatpush1.bf16.msra.mxu0 %v2032
          %2147 = vmatprep.subr.bf16.mxu0 0
          %2148 = vmatpush1.bf16.msra.mxu0 0
          %2149 = vmatprep.subr.bf16.mxu0 0
          %2150 = vmatpush1.bf16.msra.mxu0 0
          %2151 = vmatprep.subr.bf16.mxu0 0
          %2152 = vmatpush1.bf16.msra.mxu0 0
          %2153 = vmatprep.subr.bf16.mxu0 0
          %2154 = vmatpush1.bf16.msra.mxu0 0
          %2155 = vmatprep.subr.bf16.mxu0 0
          %2156 = vmatpush1.bf16.msra.mxu0 0
          %2157 = vmatprep.subr.bf16.mxu0 0
          %2158 = vmatpush1.bf16.msra.mxu0 0
          %2159 = vmatprep.subr.bf16.mxu0 0
          %2160 = vmatpush1.bf16.msra.mxu0 0
          %2161 = vmatprep.subr.bf16.mxu0 0
          %2162 = vmatpush1.bf16.msra.mxu0 0
          %2163 = vmatprep.subr.bf16.mxu0 0
          %2164 = vmatpush1.bf16.msra.mxu0 0
          %2165 = vmatprep.subr.bf16.mxu0 0
          %2166 = vmatpush1.bf16.msra.mxu0 0
          %2167 = vmatprep.subr.bf16.mxu0 0
          %2168 = vmatpush1.bf16.msra.mxu0 0
          %2169 = vmatprep.subr.bf16.mxu0 0
          %2170 = vmatpush1.bf16.msra.mxu0 0
          %2171 = vmatprep.subr.bf16.mxu0 0
          %2172 = vmatpush1.bf16.msra.mxu0 0
          %2173 = vmatprep.subr.bf16.mxu0 0
          %2174 = vmatpush1.bf16.msra.mxu0 0
          %2175 = vmatprep.mubr.bf16.mxu0 0
          %2176 = vmatmul.mubr.bf16.gmra.mrb[0].mxu0 %v2141
          %v2177 = vpop.f32.mrb[0].mxu0
          %v2178 = vadd.f32 0.0, %v2177
          %v2179 = vpop.f32.mrb[0].mxu0
          %v2180 = vpop.f32.mrb[0].mxu0
          %v2181 = vpop.f32.mrb[0].mxu0
          %2182 = vdwg.mxu0
          %v2183 = vadd.f32 %v2137, %v2178
          %v2184 = vxor.u32 %v2183, 2147483648
          %v2185 = vmul.f32 %v2184, 1.442695
          %v2186 = vpow.pop %v2185
          %v2187 = vadd.f32 %v2186, 1.0
          %v2188 = vrcp.pop %v2187
          %v2189 = vmul.f32 1.0, %v2188
          %v2190 = vtanh.pop %v2183
          %v2191 = vld [vmem:[#allocation3] sm:$0xff]
          %2193 = vrot.lane.b32.xlu0 %v2191, 32
          %v2194 = vpop.permute.xlu0 %2193
          %v2196 = vmul.f32 %v2189, %v2194
          %2198 = vrot.lane.b32.xlu0 %v2190, 64
          %v2199 = vpop.permute.xlu0 %2198
          %v2201 = vmul.f32 %v2189, %v2199
          %2203 = vrot.lane.b32.xlu0 %v2201, 32
          %v2204 = vpop.permute.xlu0 %2203
          %v2206 = vadd.f32 %v2196, %v2204
          %v2207 = vtanh.pop %v2206
          %2209 = vrot.lane.b32.xlu0 %v2207, 64
          %v2210 = vpop.permute.xlu0 %2209
          %v2212 = vmul.f32 %v2189, %v2210
          %2214 = vrot.lane.b32.xlu0 %v2206, 96
          %v2215 = vpop.permute.xlu0 %2214
          %2217 = vst.msk [vmem:[#allocation3] sm:$0xff] %vm2035, %v2215
          %2219 = vrot.lane.b32.xlu0 %v2212, 32
          %v2220 = vpop.permute.xlu0 %2219
          %2222 = vst.msk [vmem:[#allocation2] sm:$0xff] %vm2035, %v2220
          %v2223 = vpack.c.bf16 %v2212, %v2212
          %v2225 = vunpack.c.l.b16 %v2223
          %v2226 = vpack.c.b16 %v2225, %v2225
          %2227 = vrot.lane.b32.xlu0 %v2226, 32
          %v2228 = vpop.permute.xlu0 %2227
          %s2230 = scalar_lea.vmem %s324, 56
          %2231 = vst.msk [vmem:[%s2230] sm:$0xf] %vm2127, %v2228
          %s2232 = sadd.s32 %s2011, 13
          %p2233 = scmp.lt.s32.totalorder %s2232, 8
          %s2234 = scalar_select %p2233, 1, 0
          %s2235 = scvt.s32.f32 %s2234
          %s2236 = scalar_lea.vmem %s270, 52 [#allocation4]
          %v2237 = vld [vmem:[%s2236] sm:$0xf]
          %v2238 = vunpack.c.l.bf16 %v2237
          %v2239 = vstv %s2235
          %v2240 = vmul.f32 %v2238, %v2239
          %v2241 = vld [vmem:[#allocation2] sm:$0xff]
          %v2242 = vpack.c.bf16 %v2241, %v2241
          %v2244 = vsel %vm2035, %v2242, 0
          %2246 = vmatprep.subr.bf16.mxu0 0
          %2247 = vmatpush1.bf16.msra.mxu0 %v2031
          %2248 = vmatprep.subr.bf16.mxu0 0
          %2249 = vmatpush1.bf16.msra.mxu0 %v2032
          %2250 = vmatprep.subr.bf16.mxu0 0
          %2251 = vmatpush1.bf16.msra.mxu0 0
          %2252 = vmatprep.subr.bf16.mxu0 0
          %2253 = vmatpush1.bf16.msra.mxu0 0
          %2254 = vmatprep.subr.bf16.mxu0 0
          %2255 = vmatpush1.bf16.msra.mxu0 0
          %2256 = vmatprep.subr.bf16.mxu0 0
          %2257 = vmatpush1.bf16.msra.mxu0 0
          %2258 = vmatprep.subr.bf16.mxu0 0
          %2259 = vmatpush1.bf16.msra.mxu0 0
          %2260 = vmatprep.subr.bf16.mxu0 0
          %2261 = vmatpush1.bf16.msra.mxu0 0
          %2262 = vmatprep.subr.bf16.mxu0 0
          %2263 = vmatpush1.bf16.msra.mxu0 0
          %2264 = vmatprep.subr.bf16.mxu0 0
          %2265 = vmatpush1.bf16.msra.mxu0 0
          %2266 = vmatprep.subr.bf16.mxu0 0
          %2267 = vmatpush1.bf16.msra.mxu0 0
          %2268 = vmatprep.subr.bf16.mxu0 0
          %2269 = vmatpush1.bf16.msra.mxu0 0
          %2270 = vmatprep.subr.bf16.mxu0 0
          %2271 = vmatpush1.bf16.msra.mxu0 0
          %2272 = vmatprep.subr.bf16.mxu0 0
          %2273 = vmatpush1.bf16.msra.mxu0 0
          %2274 = vmatprep.subr.bf16.mxu0 0
          %2275 = vmatpush1.bf16.msra.mxu0 0
          %2276 = vmatprep.subr.bf16.mxu0 0
          %2277 = vmatpush1.bf16.msra.mxu0 0
          %2278 = vmatprep.mubr.bf16.mxu0 0
          %2279 = vmatmul.mubr.bf16.gmra.mrb[0].mxu0 %v2244
          %v2280 = vpop.f32.mrb[0].mxu0
          %v2281 = vadd.f32 0.0, %v2280
          %v2282 = vpop.f32.mrb[0].mxu0
          %v2283 = vpop.f32.mrb[0].mxu0
          %v2284 = vpop.f32.mrb[0].mxu0
          %2285 = vdwg.mxu0
          %v2286 = vadd.f32 %v2240, %v2281
          %v2287 = vxor.u32 %v2286, 2147483648
          %v2288 = vmul.f32 %v2287, 1.442695
          %v2289 = vpow.pop %v2288
          %v2290 = vadd.f32 %v2289, 1.0
          %v2291 = vrcp.pop %v2290
          %v2292 = vmul.f32 1.0, %v2291
          %v2293 = vtanh.pop %v2286
          %v2294 = vld [vmem:[#allocation3] sm:$0xff]
          %2296 = vrot.lane.b32.xlu0 %v2294, 32
          %v2297 = vpop.permute.xlu0 %2296
          %v2299 = vmul.f32 %v2292, %v2297
          %2301 = vrot.lane.b32.xlu0 %v2293, 64
          %v2302 = vpop.permute.xlu0 %2301
          %v2304 = vmul.f32 %v2292, %v2302
          %2306 = vrot.lane.b32.xlu0 %v2304, 32
          %v2307 = vpop.permute.xlu0 %2306
          %v2309 = vadd.f32 %v2299, %v2307
          %v2310 = vtanh.pop %v2309
          %2312 = vrot.lane.b32.xlu0 %v2310, 64
          %v2313 = vpop.permute.xlu0 %2312
          %v2315 = vmul.f32 %v2292, %v2313
          %2317 = vrot.lane.b32.xlu0 %v2309, 96
          %v2318 = vpop.permute.xlu0 %2317
          %2320 = vst.msk [vmem:[#allocation3] sm:$0xff] %vm2035, %v2318
          %2322 = vrot.lane.b32.xlu0 %v2315, 32
          %v2323 = vpop.permute.xlu0 %2322
          %2325 = vst.msk [vmem:[#allocation2] sm:$0xff] %vm2035, %v2323
          %v2326 = vpack.c.bf16 %v2315, %v2315
          %v2328 = vunpack.c.l.b16 %v2326
          %v2329 = vpack.c.b16 %v2328, %v2328
          %2330 = vrot.lane.b32.xlu0 %v2329, 32
          %v2331 = vpop.permute.xlu0 %2330
          %s2333 = scalar_lea.vmem %s324, 52
          %2334 = vst.msk [vmem:[%s2333] sm:$0xf] %vm2127, %v2331
          %s2335 = sadd.s32 %s2011, 12
          %p2336 = scmp.lt.s32.totalorder %s2335, 8
          %s2337 = scalar_select %p2336, 1, 0
          %s2338 = scvt.s32.f32 %s2337
          %s2339 = scalar_lea.vmem %s270, 48 [#allocation4]
          %v2340 = vld [vmem:[%s2339] sm:$0xf]
          %v2341 = vunpack.c.l.bf16 %v2340
          %v2342 = vstv %s2338
          %v2343 = vmul.f32 %v2341, %v2342
          %v2344 = vld [vmem:[#allocation2] sm:$0xff]
          %v2345 = vpack.c.bf16 %v2344, %v2344
          %v2347 = vsel %vm2035, %v2345, 0
          %2349 = vmatprep.subr.bf16.mxu0 0
          %2350 = vmatpush1.bf16.msra.mxu0 %v2031
          %2351 = vmatprep.subr.bf16.mxu0 0
          %2352 = vmatpush1.bf16.msra.mxu0 %v2032
          %2353 = vmatprep.subr.bf16.mxu0 0
          %2354 = vmatpush1.bf16.msra.mxu0 0
          %2355 = vmatprep.subr.bf16.mxu0 0
          %2356 = vmatpush1.bf16.msra.mxu0 0
          %2357 = vmatprep.subr.bf16.mxu0 0
          %2358 = vmatpush1.bf16.msra.mxu0 0
          %2359 = vmatprep.subr.bf16.mxu0 0
          %2360 = vmatpush1.bf16.msra.mxu0 0
          %2361 = vmatprep.subr.bf16.mxu0 0
          %2362 = vmatpush1.bf16.msra.mxu0 0
          %2363 = vmatprep.subr.bf16.mxu0 0
          %2364 = vmatpush1.bf16.msra.mxu0 0
          %2365 = vmatprep.subr.bf16.mxu0 0
          %2366 = vmatpush1.bf16.msra.mxu0 0
          %2367 = vmatprep.subr.bf16.mxu0 0
          %2368 = vmatpush1.bf16.msra.mxu0 0
          %2369 = vmatprep.subr.bf16.mxu0 0
          %2370 = vmatpush1.bf16.msra.mxu0 0
          %2371 = vmatprep.subr.bf16.mxu0 0
          %2372 = vmatpush1.bf16.msra.mxu0 0
          %2373 = vmatprep.subr.bf16.mxu0 0
          %2374 = vmatpush1.bf16.msra.mxu0 0
          %2375 = vmatprep.subr.bf16.mxu0 0
          %2376 = vmatpush1.bf16.msra.mxu0 0
          %2377 = vmatprep.subr.bf16.mxu0 0
          %2378 = vmatpush1.bf16.msra.mxu0 0
          %2379 = vmatprep.subr.bf16.mxu0 0
          %2380 = vmatpush1.bf16.msra.mxu0 0
          %2381 = vmatprep.mubr.bf16.mxu0 0
          %2382 = vmatmul.mubr.bf16.gmra.mrb[0].mxu0 %v2347
          %v2383 = vpop.f32.mrb[0].mxu0
          %v2384 = vadd.f32 0.0, %v2383
          %v2385 = vpop.f32.mrb[0].mxu0
          %v2386 = vpop.f32.mrb[0].mxu0
          %v2387 = vpop.f32.mrb[0].mxu0
          %2388 = vdwg.mxu0
          %v2389 = vadd.f32 %v2343, %v2384
          %v2390 = vxor.u32 %v2389, 2147483648
          %v2391 = vmul.f32 %v2390, 1.442695
          %v2392 = vpow.pop %v2391
          %v2393 = vadd.f32 %v2392, 1.0
          %v2394 = vrcp.pop %v2393
          %v2395 = vmul.f32 1.0, %v2394
          %v2396 = vtanh.pop %v2389
          %v2397 = vld [vmem:[#allocation3] sm:$0xff]
          %2399 = vrot.lane.b32.xlu0 %v2397, 32
          %v2400 = vpop.permute.xlu0 %2399
          %v2402 = vmul.f32 %v2395, %v2400
          %2404 = vrot.lane.b32.xlu0 %v2396, 64
          %v2405 = vpop.permute.xlu0 %2404
          %v2407 = vmul.f32 %v2395, %v2405
          %2409 = vrot.lane.b32.xlu0 %v2407, 32
          %v2410 = vpop.permute.xlu0 %2409
          %v2412 = vadd.f32 %v2402, %v2410
          %v2413 = vtanh.pop %v2412
          %2415 = vrot.lane.b32.xlu0 %v2413, 64
          %v2416 = vpop.permute.xlu0 %2415
          %v2418 = vmul.f32 %v2395, %v2416
          %2420 = vrot.lane.b32.xlu0 %v2412, 96
          %v2421 = vpop.permute.xlu0 %2420
          %2423 = vst.msk [vmem:[#allocation3] sm:$0xff] %vm2035, %v2421
          %2425 = vrot.lane.b32.xlu0 %v2418, 32
          %v2426 = vpop.permute.xlu0 %2425
          %2428 = vst.msk [vmem:[#allocation2] sm:$0xff] %vm2035, %v2426
          %v2429 = vpack.c.bf16 %v2418, %v2418
          %v2431 = vunpack.c.l.b16 %v2429
          %v2432 = vpack.c.b16 %v2431, %v2431
          %2433 = vrot.lane.b32.xlu0 %v2432, 32
          %v2434 = vpop.permute.xlu0 %2433
          %s2436 = scalar_lea.vmem %s324, 48
          %2437 = vst.msk [vmem:[%s2436] sm:$0xf] %vm2127, %v2434
          %s2438 = sadd.s32 %s2011, 11
          %p2439 = scmp.lt.s32.totalorder %s2438, 8
          %s2440 = scalar_select %p2439, 1, 0
          %s2441 = scvt.s32.f32 %s2440
          %s2442 = scalar_lea.vmem %s270, 44 [#allocation4]
          %v2443 = vld [vmem:[%s2442] sm:$0xf]
          %v2444 = vunpack.c.l.bf16 %v2443
          %v2445 = vstv %s2441
          %v2446 = vmul.f32 %v2444, %v2445
          %v2447 = vld [vmem:[#allocation2] sm:$0xff]
          %v2448 = vpack.c.bf16 %v2447, %v2447
          %v2450 = vsel %vm2035, %v2448, 0
          %2452 = vmatprep.subr.bf16.mxu0 0
          %2453 = vmatpush1.bf16.msra.mxu0 %v2031
          %2454 = vmatprep.subr.bf16.mxu0 0
          %2455 = vmatpush1.bf16.msra.mxu0 %v2032
          %2456 = vmatprep.subr.bf16.mxu0 0
          %2457 = vmatpush1.bf16.msra.mxu0 0
          %2458 = vmatprep.subr.bf16.mxu0 0
          %2459 = vmatpush1.bf16.msra.mxu0 0
          %2460 = vmatprep.subr.bf16.mxu0 0
          %2461 = vmatpush1.bf16.msra.mxu0 0
          %2462 = vmatprep.subr.bf16.mxu0 0
          %2463 = vmatpush1.bf16.msra.mxu0 0
          %2464 = vmatprep.subr.bf16.mxu0 0
          %2465 = vmatpush1.bf16.msra.mxu0 0
          %2466 = vmatprep.subr.bf16.mxu0 0
          %2467 = vmatpush1.bf16.msra.mxu0 0
          %2468 = vmatprep.subr.bf16.mxu0 0
          %2469 = vmatpush1.bf16.msra.mxu0 0
          %2470 = vmatprep.subr.bf16.mxu0 0
          %2471 = vmatpush1.bf16.msra.mxu0 0
          %2472 = vmatprep.subr.bf16.mxu0 0
          %2473 = vmatpush1.bf16.msra.mxu0 0
          %2474 = vmatprep.subr.bf16.mxu0 0
          %2475 = vmatpush1.bf16.msra.mxu0 0
          %2476 = vmatprep.subr.bf16.mxu0 0
          %2477 = vmatpush1.bf16.msra.mxu0 0
          %2478 = vmatprep.subr.bf16.mxu0 0
          %2479 = vmatpush1.bf16.msra.mxu0 0
          %2480 = vmatprep.subr.bf16.mxu0 0
          %2481 = vmatpush1.bf16.msra.mxu0 0
          %2482 = vmatprep.subr.bf16.mxu0 0
          %2483 = vmatpush1.bf16.msra.mxu0 0
          %2484 = vmatprep.mubr.bf16.mxu0 0
          %2485 = vmatmul.mubr.bf16.gmra.mrb[0].mxu0 %v2450
          %v2486 = vpop.f32.mrb[0].mxu0
          %v2487 = vadd.f32 0.0, %v2486
          %v2488 = vpop.f32.mrb[0].mxu0
          %v2489 = vpop.f32.mrb[0].mxu0
          %v2490 = vpop.f32.mrb[0].mxu0
          %2491 = vdwg.mxu0
          %v2492 = vadd.f32 %v2446, %v2487
          %v2493 = vxor.u32 %v2492, 2147483648
          %v2494 = vmul.f32 %v2493, 1.442695
          %v2495 = vpow.pop %v2494
          %v2496 = vadd.f32 %v2495, 1.0
          %v2497 = vrcp.pop %v2496
          %v2498 = vmul.f32 1.0, %v2497
          %v2499 = vtanh.pop %v2492
          %v2500 = vld [vmem:[#allocation3] sm:$0xff]
          %2502 = vrot.lane.b32.xlu0 %v2500, 32
          %v2503 = vpop.permute.xlu0 %2502
          %v2505 = vmul.f32 %v2498, %v2503
          %2507 = vrot.lane.b32.xlu0 %v2499, 64
          %v2508 = vpop.permute.xlu0 %2507
          %v2510 = vmul.f32 %v2498, %v2508
          %2512 = vrot.lane.b32.xlu0 %v2510, 32
          %v2513 = vpop.permute.xlu0 %2512
          %v2515 = vadd.f32 %v2505, %v2513
          %v2516 = vtanh.pop %v2515
          %2518 = vrot.lane.b32.xlu0 %v2516, 64
          %v2519 = vpop.permute.xlu0 %2518
          %v2521 = vmul.f32 %v2498, %v2519
          %2523 = vrot.lane.b32.xlu0 %v2515, 96
          %v2524 = vpop.permute.xlu0 %2523
          %2526 = vst.msk [vmem:[#allocation3] sm:$0xff] %vm2035, %v2524
          %2528 = vrot.lane.b32.xlu0 %v2521, 32
          %v2529 = vpop.permute.xlu0 %2528
          %2531 = vst.msk [vmem:[#allocation2] sm:$0xff] %vm2035, %v2529
          %v2532 = vpack.c.bf16 %v2521, %v2521
          %v2534 = vunpack.c.l.b16 %v2532
          %v2535 = vpack.c.b16 %v2534, %v2534
          %2536 = vrot.lane.b32.xlu0 %v2535, 32
          %v2537 = vpop.permute.xlu0 %2536
          %s2539 = scalar_lea.vmem %s324, 44
          %2540 = vst.msk [vmem:[%s2539] sm:$0xf] %vm2127, %v2537
          %s2541 = sadd.s32 %s2011, 10
          %p2542 = scmp.lt.s32.totalorder %s2541, 8
          %s2543 = scalar_select %p2542, 1, 0
          %s2544 = scvt.s32.f32 %s2543
          %s2545 = scalar_lea.vmem %s270, 40 [#allocation4]
          %v2546 = vld [vmem:[%s2545] sm:$0xf]
          %v2547 = vunpack.c.l.bf16 %v2546
          %v2548 = vstv %s2544
          %v2549 = vmul.f32 %v2547, %v2548
          %v2550 = vld [vmem:[#allocation2] sm:$0xff]
          %v2551 = vpack.c.bf16 %v2550, %v2550
          %v2553 = vsel %vm2035, %v2551, 0
          %2555 = vmatprep.subr.bf16.mxu0 0
          %2556 = vmatpush1.bf16.msra.mxu0 %v2031
          %2557 = vmatprep.subr.bf16.mxu0 0
          %2558 = vmatpush1.bf16.msra.mxu0 %v2032
          %2559 = vmatprep.subr.bf16.mxu0 0
          %2560 = vmatpush1.bf16.msra.mxu0 0
          %2561 = vmatprep.subr.bf16.mxu0 0
          %2562 = vmatpush1.bf16.msra.mxu0 0
          %2563 = vmatprep.subr.bf16.mxu0 0
          %2564 = vmatpush1.bf16.msra.mxu0 0
          %2565 = vmatprep.subr.bf16.mxu0 0
          %2566 = vmatpush1.bf16.msra.mxu0 0
          %2567 = vmatprep.subr.bf16.mxu0 0
          %2568 = vmatpush1.bf16.msra.mxu0 0
          %2569 = vmatprep.subr.bf16.mxu0 0
          %2570 = vmatpush1.bf16.msra.mxu0 0
          %2571 = vmatprep.subr.bf16.mxu0 0
          %2572 = vmatpush1.bf16.msra.mxu0 0
          %2573 = vmatprep.subr.bf16.mxu0 0
          %2574 = vmatpush1.bf16.msra.mxu0 0
          %2575 = vmatprep.subr.bf16.mxu0 0
          %2576 = vmatpush1.bf16.msra.mxu0 0
          %2577 = vmatprep.subr.bf16.mxu0 0
          %2578 = vmatpush1.bf16.msra.mxu0 0
          %2579 = vmatprep.subr.bf16.mxu0 0
          %2580 = vmatpush1.bf16.msra.mxu0 0
          %2581 = vmatprep.subr.bf16.mxu0 0
          %2582 = vmatpush1.bf16.msra.mxu0 0
          %2583 = vmatprep.subr.bf16.mxu0 0
          %2584 = vmatpush1.bf16.msra.mxu0 0
          %2585 = vmatprep.subr.bf16.mxu0 0
          %2586 = vmatpush1.bf16.msra.mxu0 0
          %2587 = vmatprep.mubr.bf16.mxu0 0
          %2588 = vmatmul.mubr.bf16.gmra.mrb[0].mxu0 %v2553
          %v2589 = vpop.f32.mrb[0].mxu0
          %v2590 = vadd.f32 0.0, %v2589
          %v2591 = vpop.f32.mrb[0].mxu0
          %v2592 = vpop.f32.mrb[0].mxu0
          %v2593 = vpop.f32.mrb[0].mxu0
          %2594 = vdwg.mxu0
          %v2595 = vadd.f32 %v2549, %v2590
          %v2596 = vxor.u32 %v2595, 2147483648
          %v2597 = vmul.f32 %v2596, 1.442695
          %v2598 = vpow.pop %v2597
          %v2599 = vadd.f32 %v2598, 1.0
          %v2600 = vrcp.pop %v2599
          %v2601 = vmul.f32 1.0, %v2600
          %v2602 = vtanh.pop %v2595
          %v2603 = vld [vmem:[#allocation3] sm:$0xff]
          %2605 = vrot.lane.b32.xlu0 %v2603, 32
          %v2606 = vpop.permute.xlu0 %2605
          %v2608 = vmul.f32 %v2601, %v2606
          %2610 = vrot.lane.b32.xlu0 %v2602, 64
          %v2611 = vpop.permute.xlu0 %2610
          %v2613 = vmul.f32 %v2601, %v2611
          %2615 = vrot.lane.b32.xlu0 %v2613, 32
          %v2616 = vpop.permute.xlu0 %2615
          %v2618 = vadd.f32 %v2608, %v2616
          %v2619 = vtanh.pop %v2618
          %2621 = vrot.lane.b32.xlu0 %v2619, 64
          %v2622 = vpop.permute.xlu0 %2621
          %v2624 = vmul.f32 %v2601, %v2622
          %2626 = vrot.lane.b32.xlu0 %v2618, 96
          %v2627 = vpop.permute.xlu0 %2626
          %2629 = vst.msk [vmem:[#allocation3] sm:$0xff] %vm2035, %v2627
          %2631 = vrot.lane.b32.xlu0 %v2624, 32
          %v2632 = vpop.permute.xlu0 %2631
          %2634 = vst.msk [vmem:[#allocation2] sm:$0xff] %vm2035, %v2632
          %v2635 = vpack.c.bf16 %v2624, %v2624
          %v2637 = vunpack.c.l.b16 %v2635
          %v2638 = vpack.c.b16 %v2637, %v2637
          %2639 = vrot.lane.b32.xlu0 %v2638, 32
          %v2640 = vpop.permute.xlu0 %2639
          %s2642 = scalar_lea.vmem %s324, 40
          %2643 = vst.msk [vmem:[%s2642] sm:$0xf] %vm2127, %v2640
          %s2644 = sadd.s32 %s2011, 9
          %p2645 = scmp.lt.s32.totalorder %s2644, 8
          %s2646 = scalar_select %p2645, 1, 0
          %s2647 = scvt.s32.f32 %s2646
          %s2648 = scalar_lea.vmem %s270, 36 [#allocation4]
          %v2649 = vld [vmem:[%s2648] sm:$0xf]
          %v2650 = vunpack.c.l.bf16 %v2649
          %v2651 = vstv %s2647
          %v2652 = vmul.f32 %v2650, %v2651
          %v2653 = vld [vmem:[#allocation2] sm:$0xff]
          %v2654 = vpack.c.bf16 %v2653, %v2653
          %v2656 = vsel %vm2035, %v2654, 0
          %2658 = vmatprep.subr.bf16.mxu0 0
          %2659 = vmatpush1.bf16.msra.mxu0 %v2031
          %2660 = vmatprep.subr.bf16.mxu0 0
          %2661 = vmatpush1.bf16.msra.mxu0 %v2032
          %2662 = vmatprep.subr.bf16.mxu0 0
          %2663 = vmatpush1.bf16.msra.mxu0 0
          %2664 = vmatprep.subr.bf16.mxu0 0
          %2665 = vmatpush1.bf16.msra.mxu0 0
          %2666 = vmatprep.subr.bf16.mxu0 0
          %2667 = vmatpush1.bf16.msra.mxu0 0
          %2668 = vmatprep.subr.bf16.mxu0 0
          %2669 = vmatpush1.bf16.msra.mxu0 0
          %2670 = vmatprep.subr.bf16.mxu0 0
          %2671 = vmatpush1.bf16.msra.mxu0 0
          %2672 = vmatprep.subr.bf16.mxu0 0
          %2673 = vmatpush1.bf16.msra.mxu0 0
          %2674 = vmatprep.subr.bf16.mxu0 0
          %2675 = vmatpush1.bf16.msra.mxu0 0
          %2676 = vmatprep.subr.bf16.mxu0 0
          %2677 = vmatpush1.bf16.msra.mxu0 0
          %2678 = vmatprep.subr.bf16.mxu0 0
          %2679 = vmatpush1.bf16.msra.mxu0 0
          %2680 = vmatprep.subr.bf16.mxu0 0
          %2681 = vmatpush1.bf16.msra.mxu0 0
          %2682 = vmatprep.subr.bf16.mxu0 0
          %2683 = vmatpush1.bf16.msra.mxu0 0
          %2684 = vmatprep.subr.bf16.mxu0 0
          %2685 = vmatpush1.bf16.msra.mxu0 0
          %2686 = vmatprep.subr.bf16.mxu0 0
          %2687 = vmatpush1.bf16.msra.mxu0 0
          %2688 = vmatprep.subr.bf16.mxu0 0
          %2689 = vmatpush1.bf16.msra.mxu0 0
          %2690 = vmatprep.mubr.bf16.mxu0 0
          %2691 = vmatmul.mubr.bf16.gmra.mrb[0].mxu0 %v2656
          %v2692 = vpop.f32.mrb[0].mxu0
          %v2693 = vadd.f32 0.0, %v2692
          %v2694 = vpop.f32.mrb[0].mxu0
          %v2695 = vpop.f32.mrb[0].mxu0
          %v2696 = vpop.f32.mrb[0].mxu0
          %2697 = vdwg.mxu0
          %v2698 = vadd.f32 %v2652, %v2693
          %v2699 = vxor.u32 %v2698, 2147483648
          %v2700 = vmul.f32 %v2699, 1.442695
          %v2701 = vpow.pop %v2700
          %v2702 = vadd.f32 %v2701, 1.0
          %v2703 = vrcp.pop %v2702
          %v2704 = vmul.f32 1.0, %v2703
          %v2705 = vtanh.pop %v2698
          %v2706 = vld [vmem:[#allocation3] sm:$0xff]
          %2708 = vrot.lane.b32.xlu0 %v2706, 32
          %v2709 = vpop.permute.xlu0 %2708
          %v2711 = vmul.f32 %v2704, %v2709
          %2713 = vrot.lane.b32.xlu0 %v2705, 64
          %v2714 = vpop.permute.xlu0 %2713
          %v2716 = vmul.f32 %v2704, %v2714
          %2718 = vrot.lane.b32.xlu0 %v2716, 32
          %v2719 = vpop.permute.xlu0 %2718
          %v2721 = vadd.f32 %v2711, %v2719
          %v2722 = vtanh.pop %v2721
          %2724 = vrot.lane.b32.xlu0 %v2722, 64
          %v2725 = vpop.permute.xlu0 %2724
          %v2727 = vmul.f32 %v2704, %v2725
          %2729 = vrot.lane.b32.xlu0 %v2721, 96
          %v2730 = vpop.permute.xlu0 %2729
          %2732 = vst.msk [vmem:[#allocation3] sm:$0xff] %vm2035, %v2730
          %2734 = vrot.lane.b32.xlu0 %v2727, 32
          %v2735 = vpop.permute.xlu0 %2734
          %2737 = vst.msk [vmem:[#allocation2] sm:$0xff] %vm2035, %v2735
          %v2738 = vpack.c.bf16 %v2727, %v2727
          %v2740 = vunpack.c.l.b16 %v2738
          %v2741 = vpack.c.b16 %v2740, %v2740
          %2742 = vrot.lane.b32.xlu0 %v2741, 32
          %v2743 = vpop.permute.xlu0 %2742
          %s2745 = scalar_lea.vmem %s324, 36
          %2746 = vst.msk [vmem:[%s2745] sm:$0xf] %vm2127, %v2743
          %s2747 = sadd.s32 %s2011, 8
          %p2748 = scmp.lt.s32.totalorder %s2747, 8
          %s2749 = scalar_select %p2748, 1, 0
          %s2750 = scvt.s32.f32 %s2749
          %s2751 = scalar_lea.vmem %s270, 32 [#allocation4]
          %v2752 = vld [vmem:[%s2751] sm:$0xf]
          %v2753 = vunpack.c.l.bf16 %v2752
          %v2754 = vstv %s2750
          %v2755 = vmul.f32 %v2753, %v2754
          %v2756 = vld [vmem:[#allocation2] sm:$0xff]
          %v2757 = vpack.c.bf16 %v2756, %v2756
          %v2759 = vsel %vm2035, %v2757, 0
          %2761 = vmatprep.subr.bf16.mxu0 0
          %2762 = vmatpush1.bf16.msra.mxu0 %v2031
          %2763 = vmatprep.subr.bf16.mxu0 0
          %2764 = vmatpush1.bf16.msra.mxu0 %v2032
          %2765 = vmatprep.subr.bf16.mxu0 0
          %2766 = vmatpush1.bf16.msra.mxu0 0
          %2767 = vmatprep.subr.bf16.mxu0 0
          %2768 = vmatpush1.bf16.msra.mxu0 0
          %2769 = vmatprep.subr.bf16.mxu0 0
          %2770 = vmatpush1.bf16.msra.mxu0 0
          %2771 = vmatprep.subr.bf16.mxu0 0
          %2772 = vmatpush1.bf16.msra.mxu0 0
          %2773 = vmatprep.subr.bf16.mxu0 0
          %2774 = vmatpush1.bf16.msra.mxu0 0
          %2775 = vmatprep.subr.bf16.mxu0 0
          %2776 = vmatpush1.bf16.msra.mxu0 0
          %2777 = vmatprep.subr.bf16.mxu0 0
          %2778 = vmatpush1.bf16.msra.mxu0 0
          %2779 = vmatprep.subr.bf16.mxu0 0
          %2780 = vmatpush1.bf16.msra.mxu0 0
          %2781 = vmatprep.subr.bf16.mxu0 0
          %2782 = vmatpush1.bf16.msra.mxu0 0
          %2783 = vmatprep.subr.bf16.mxu0 0
          %2784 = vmatpush1.bf16.msra.mxu0 0
          %2785 = vmatprep.subr.bf16.mxu0 0
          %2786 = vmatpush1.bf16.msra.mxu0 0
          %2787 = vmatprep.subr.bf16.mxu0 0
          %2788 = vmatpush1.bf16.msra.mxu0 0
          %2789 = vmatprep.subr.bf16.mxu0 0
          %2790 = vmatpush1.bf16.msra.mxu0 0
          %2791 = vmatprep.subr.bf16.mxu0 0
          %2792 = vmatpush1.bf16.msra.mxu0 0
          %2793 = vmatprep.mubr.bf16.mxu0 0
          %2794 = vmatmul.mubr.bf16.gmra.mrb[0].mxu0 %v2759
          %v2795 = vpop.f32.mrb[0].mxu0
          %v2796 = vadd.f32 0.0, %v2795
          %v2797 = vpop.f32.mrb[0].mxu0
          %v2798 = vpop.f32.mrb[0].mxu0
          %v2799 = vpop.f32.mrb[0].mxu0
          %2800 = vdwg.mxu0
          %v2801 = vadd.f32 %v2755, %v2796
          %v2802 = vxor.u32 %v2801, 2147483648
          %v2803 = vmul.f32 %v2802, 1.442695
          %v2804 = vpow.pop %v2803
          %v2805 = vadd.f32 %v2804, 1.0
          %v2806 = vrcp.pop %v2805
          %v2807 = vmul.f32 1.0, %v2806
          %v2808 = vtanh.pop %v2801
          %v2809 = vld [vmem:[#allocation3] sm:$0xff]
          %2811 = vrot.lane.b32.xlu0 %v2809, 32
          %v2812 = vpop.permute.xlu0 %2811
          %v2814 = vmul.f32 %v2807, %v2812
          %2816 = vrot.lane.b32.xlu0 %v2808, 64
          %v2817 = vpop.permute.xlu0 %2816
          %v2819 = vmul.f32 %v2807, %v2817
          %2821 = vrot.lane.b32.xlu0 %v2819, 32
          %v2822 = vpop.permute.xlu0 %2821
          %v2824 = vadd.f32 %v2814, %v2822
          %v2825 = vtanh.pop %v2824
          %2827 = vrot.lane.b32.xlu0 %v2825, 64
          %v2828 = vpop.permute.xlu0 %2827
          %v2830 = vmul.f32 %v2807, %v2828
          %2832 = vrot.lane.b32.xlu0 %v2824, 96
          %v2833 = vpop.permute.xlu0 %2832
          %2835 = vst.msk [vmem:[#allocation3] sm:$0xff] %vm2035, %v2833
          %2837 = vrot.lane.b32.xlu0 %v2830, 32
          %v2838 = vpop.permute.xlu0 %2837
          %2840 = vst.msk [vmem:[#allocation2] sm:$0xff] %vm2035, %v2838
          %v2841 = vpack.c.bf16 %v2830, %v2830
          %v2843 = vunpack.c.l.b16 %v2841
          %v2844 = vpack.c.b16 %v2843, %v2843
          %2845 = vrot.lane.b32.xlu0 %v2844, 32
          %v2846 = vpop.permute.xlu0 %2845
          %s2848 = scalar_lea.vmem %s324, 32
          %2849 = vst.msk [vmem:[%s2848] sm:$0xf] %vm2127, %v2846
          %s2850 = sadd.s32 %s2011, 7
          %p2851 = scmp.lt.s32.totalorder %s2850, 8
          %s2852 = scalar_select %p2851, 1, 0
          %s2853 = scvt.s32.f32 %s2852
          %s2854 = scalar_lea.vmem %s270, 28 [#allocation4]
          %v2855 = vld [vmem:[%s2854] sm:$0xf]
          %v2856 = vunpack.c.l.bf16 %v2855
          %v2857 = vstv %s2853
          %v2858 = vmul.f32 %v2856, %v2857
          %v2859 = vld [vmem:[#allocation2] sm:$0xff]
          %v2860 = vpack.c.bf16 %v2859, %v2859
          %v2862 = vsel %vm2035, %v2860, 0
          %2864 = vmatprep.subr.bf16.mxu0 0
          %2865 = vmatpush1.bf16.msra.mxu0 %v2031
          %2866 = vmatprep.subr.bf16.mxu0 0
          %2867 = vmatpush1.bf16.msra.mxu0 %v2032
          %2868 = vmatprep.subr.bf16.mxu0 0
          %2869 = vmatpush1.bf16.msra.mxu0 0
          %2870 = vmatprep.subr.bf16.mxu0 0
          %2871 = vmatpush1.bf16.msra.mxu0 0
          %2872 = vmatprep.subr.bf16.mxu0 0
          %2873 = vmatpush1.bf16.msra.mxu0 0
          %2874 = vmatprep.subr.bf16.mxu0 0
          %2875 = vmatpush1.bf16.msra.mxu0 0
          %2876 = vmatprep.subr.bf16.mxu0 0
          %2877 = vmatpush1.bf16.msra.mxu0 0
          %2878 = vmatprep.subr.bf16.mxu0 0
          %2879 = vmatpush1.bf16.msra.mxu0 0
          %2880 = vmatprep.subr.bf16.mxu0 0
          %2881 = vmatpush1.bf16.msra.mxu0 0
          %2882 = vmatprep.subr.bf16.mxu0 0
          %2883 = vmatpush1.bf16.msra.mxu0 0
          %2884 = vmatprep.subr.bf16.mxu0 0
          %2885 = vmatpush1.bf16.msra.mxu0 0
          %2886 = vmatprep.subr.bf16.mxu0 0
          %2887 = vmatpush1.bf16.msra.mxu0 0
          %2888 = vmatprep.subr.bf16.mxu0 0
          %2889 = vmatpush1.bf16.msra.mxu0 0
          %2890 = vmatprep.subr.bf16.mxu0 0
          %2891 = vmatpush1.bf16.msra.mxu0 0
          %2892 = vmatprep.subr.bf16.mxu0 0
          %2893 = vmatpush1.bf16.msra.mxu0 0
          %2894 = vmatprep.subr.bf16.mxu0 0
          %2895 = vmatpush1.bf16.msra.mxu0 0
          %2896 = vmatprep.mubr.bf16.mxu0 0
          %2897 = vmatmul.mubr.bf16.gmra.mrb[0].mxu0 %v2862
          %v2898 = vpop.f32.mrb[0].mxu0
          %v2899 = vadd.f32 0.0, %v2898
          %v2900 = vpop.f32.mrb[0].mxu0
          %v2901 = vpop.f32.mrb[0].mxu0
          %v2902 = vpop.f32.mrb[0].mxu0
          %2903 = vdwg.mxu0
          %v2904 = vadd.f32 %v2858, %v2899
          %v2905 = vxor.u32 %v2904, 2147483648
          %v2906 = vmul.f32 %v2905, 1.442695
          %v2907 = vpow.pop %v2906
          %v2908 = vadd.f32 %v2907, 1.0
          %v2909 = vrcp.pop %v2908
          %v2910 = vmul.f32 1.0, %v2909
          %v2911 = vtanh.pop %v2904
          %v2912 = vld [vmem:[#allocation3] sm:$0xff]
          %2914 = vrot.lane.b32.xlu0 %v2912, 32
          %v2915 = vpop.permute.xlu0 %2914
          %v2917 = vmul.f32 %v2910, %v2915
          %2919 = vrot.lane.b32.xlu0 %v2911, 64
          %v2920 = vpop.permute.xlu0 %2919
          %v2922 = vmul.f32 %v2910, %v2920
          %2924 = vrot.lane.b32.xlu0 %v2922, 32
          %v2925 = vpop.permute.xlu0 %2924
          %v2927 = vadd.f32 %v2917, %v2925
          %v2928 = vtanh.pop %v2927
          %2930 = vrot.lane.b32.xlu0 %v2928, 64
          %v2931 = vpop.permute.xlu0 %2930
          %v2933 = vmul.f32 %v2910, %v2931
          %2935 = vrot.lane.b32.xlu0 %v2927, 96
          %v2936 = vpop.permute.xlu0 %2935
          %2938 = vst.msk [vmem:[#allocation3] sm:$0xff] %vm2035, %v2936
          %2940 = vrot.lane.b32.xlu0 %v2933, 32
          %v2941 = vpop.permute.xlu0 %2940
          %2943 = vst.msk [vmem:[#allocation2] sm:$0xff] %vm2035, %v2941
          %v2944 = vpack.c.bf16 %v2933, %v2933
          %v2946 = vunpack.c.l.b16 %v2944
          %v2947 = vpack.c.b16 %v2946, %v2946
          %2948 = vrot.lane.b32.xlu0 %v2947, 32
          %v2949 = vpop.permute.xlu0 %2948
          %s2951 = scalar_lea.vmem %s324, 28
          %2952 = vst.msk [vmem:[%s2951] sm:$0xf] %vm2127, %v2949
          %s2953 = sadd.s32 %s2011, 6
          %p2954 = scmp.lt.s32.totalorder %s2953, 8
          %s2955 = scalar_select %p2954, 1, 0
          %s2956 = scvt.s32.f32 %s2955
          %s2957 = scalar_lea.vmem %s270, 24 [#allocation4]
          %v2958 = vld [vmem:[%s2957] sm:$0xf]
          %v2959 = vunpack.c.l.bf16 %v2958
          %v2960 = vstv %s2956
          %v2961 = vmul.f32 %v2959, %v2960
          %v2962 = vld [vmem:[#allocation2] sm:$0xff]
          %v2963 = vpack.c.bf16 %v2962, %v2962
          %v2965 = vsel %vm2035, %v2963, 0
          %2967 = vmatprep.subr.bf16.mxu0 0
          %2968 = vmatpush1.bf16.msra.mxu0 %v2031
          %2969 = vmatprep.subr.bf16.mxu0 0
          %2970 = vmatpush1.bf16.msra.mxu0 %v2032
          %2971 = vmatprep.subr.bf16.mxu0 0
          %2972 = vmatpush1.bf16.msra.mxu0 0
          %2973 = vmatprep.subr.bf16.mxu0 0
          %2974 = vmatpush1.bf16.msra.mxu0 0
          %2975 = vmatprep.subr.bf16.mxu0 0
          %2976 = vmatpush1.bf16.msra.mxu0 0
          %2977 = vmatprep.subr.bf16.mxu0 0
          %2978 = vmatpush1.bf16.msra.mxu0 0
          %2979 = vmatprep.subr.bf16.mxu0 0
          %2980 = vmatpush1.bf16.msra.mxu0 0
          %2981 = vmatprep.subr.bf16.mxu0 0
          %2982 = vmatpush1.bf16.msra.mxu0 0
          %2983 = vmatprep.subr.bf16.mxu0 0
          %2984 = vmatpush1.bf16.msra.mxu0 0
          %2985 = vmatprep.subr.bf16.mxu0 0
          %2986 = vmatpush1.bf16.msra.mxu0 0
          %2987 = vmatprep.subr.bf16.mxu0 0
          %2988 = vmatpush1.bf16.msra.mxu0 0
          %2989 = vmatprep.subr.bf16.mxu0 0
          %2990 = vmatpush1.bf16.msra.mxu0 0
          %2991 = vmatprep.subr.bf16.mxu0 0
          %2992 = vmatpush1.bf16.msra.mxu0 0
          %2993 = vmatprep.subr.bf16.mxu0 0
          %2994 = vmatpush1.bf16.msra.mxu0 0
          %2995 = vmatprep.subr.bf16.mxu0 0
          %2996 = vmatpush1.bf16.msra.mxu0 0
          %2997 = vmatprep.subr.bf16.mxu0 0
          %2998 = vmatpush1.bf16.msra.mxu0 0
          %2999 = vmatprep.mubr.bf16.mxu0 0
          %3000 = vmatmul.mubr.bf16.gmra.mrb[0].mxu0 %v2965
          %v3001 = vpop.f32.mrb[0].mxu0
          %v3002 = vadd.f32 0.0, %v3001
          %v3003 = vpop.f32.mrb[0].mxu0
          %v3004 = vpop.f32.mrb[0].mxu0
          %v3005 = vpop.f32.mrb[0].mxu0
          %3006 = vdwg.mxu0
          %v3007 = vadd.f32 %v2961, %v3002
          %v3008 = vxor.u32 %v3007, 2147483648
          %v3009 = vmul.f32 %v3008, 1.442695
          %v3010 = vpow.pop %v3009
          %v3011 = vadd.f32 %v3010, 1.0
          %v3012 = vrcp.pop %v3011
          %v3013 = vmul.f32 1.0, %v3012
          %v3014 = vtanh.pop %v3007
          %v3015 = vld [vmem:[#allocation3] sm:$0xff]
          %3017 = vrot.lane.b32.xlu0 %v3015, 32
          %v3018 = vpop.permute.xlu0 %3017
          %v3020 = vmul.f32 %v3013, %v3018
          %3022 = vrot.lane.b32.xlu0 %v3014, 64
          %v3023 = vpop.permute.xlu0 %3022
          %v3025 = vmul.f32 %v3013, %v3023
          %3027 = vrot.lane.b32.xlu0 %v3025, 32
          %v3028 = vpop.permute.xlu0 %3027
          %v3030 = vadd.f32 %v3020, %v3028
          %v3031 = vtanh.pop %v3030
          %3033 = vrot.lane.b32.xlu0 %v3031, 64
          %v3034 = vpop.permute.xlu0 %3033
          %v3036 = vmul.f32 %v3013, %v3034
          %3038 = vrot.lane.b32.xlu0 %v3030, 96
          %v3039 = vpop.permute.xlu0 %3038
          %3041 = vst.msk [vmem:[#allocation3] sm:$0xff] %vm2035, %v3039
          %3043 = vrot.lane.b32.xlu0 %v3036, 32
          %v3044 = vpop.permute.xlu0 %3043
          %3046 = vst.msk [vmem:[#allocation2] sm:$0xff] %vm2035, %v3044
          %v3047 = vpack.c.bf16 %v3036, %v3036
          %v3049 = vunpack.c.l.b16 %v3047
          %v3050 = vpack.c.b16 %v3049, %v3049
          %3051 = vrot.lane.b32.xlu0 %v3050, 32
          %v3052 = vpop.permute.xlu0 %3051
          %s3054 = scalar_lea.vmem %s324, 24
          %3055 = vst.msk [vmem:[%s3054] sm:$0xf] %vm2127, %v3052
          %s3056 = sadd.s32 %s2011, 5
          %p3057 = scmp.lt.s32.totalorder %s3056, 8
          %s3058 = scalar_select %p3057, 1, 0
          %s3059 = scvt.s32.f32 %s3058
          %s3060 = scalar_lea.vmem %s270, 20 [#allocation4]
          %v3061 = vld [vmem:[%s3060] sm:$0xf]
          %v3062 = vunpack.c.l.bf16 %v3061
          %v3063 = vstv %s3059
          %v3064 = vmul.f32 %v3062, %v3063
          %v3065 = vld [vmem:[#allocation2] sm:$0xff]
          %v3066 = vpack.c.bf16 %v3065, %v3065
          %v3068 = vsel %vm2035, %v3066, 0
          %3070 = vmatprep.subr.bf16.mxu0 0
          %3071 = vmatpush1.bf16.msra.mxu0 %v2031
          %3072 = vmatprep.subr.bf16.mxu0 0
          %3073 = vmatpush1.bf16.msra.mxu0 %v2032
          %3074 = vmatprep.subr.bf16.mxu0 0
          %3075 = vmatpush1.bf16.msra.mxu0 0
          %3076 = vmatprep.subr.bf16.mxu0 0
          %3077 = vmatpush1.bf16.msra.mxu0 0
          %3078 = vmatprep.subr.bf16.mxu0 0
          %3079 = vmatpush1.bf16.msra.mxu0 0
          %3080 = vmatprep.subr.bf16.mxu0 0
          %3081 = vmatpush1.bf16.msra.mxu0 0
          %3082 = vmatprep.subr.bf16.mxu0 0
          %3083 = vmatpush1.bf16.msra.mxu0 0
          %3084 = vmatprep.subr.bf16.mxu0 0
          %3085 = vmatpush1.bf16.msra.mxu0 0
          %3086 = vmatprep.subr.bf16.mxu0 0
          %3087 = vmatpush1.bf16.msra.mxu0 0
          %3088 = vmatprep.subr.bf16.mxu0 0
          %3089 = vmatpush1.bf16.msra.mxu0 0
          %3090 = vmatprep.subr.bf16.mxu0 0
          %3091 = vmatpush1.bf16.msra.mxu0 0
          %3092 = vmatprep.subr.bf16.mxu0 0
          %3093 = vmatpush1.bf16.msra.mxu0 0
          %3094 = vmatprep.subr.bf16.mxu0 0
          %3095 = vmatpush1.bf16.msra.mxu0 0
          %3096 = vmatprep.subr.bf16.mxu0 0
          %3097 = vmatpush1.bf16.msra.mxu0 0
          %3098 = vmatprep.subr.bf16.mxu0 0
          %3099 = vmatpush1.bf16.msra.mxu0 0
          %3100 = vmatprep.subr.bf16.mxu0 0
          %3101 = vmatpush1.bf16.msra.mxu0 0
          %3102 = vmatprep.mubr.bf16.mxu0 0
          %3103 = vmatmul.mubr.bf16.gmra.mrb[0].mxu0 %v3068
          %v3104 = vpop.f32.mrb[0].mxu0
          %v3105 = vadd.f32 0.0, %v3104
          %v3106 = vpop.f32.mrb[0].mxu0
          %v3107 = vpop.f32.mrb[0].mxu0
          %v3108 = vpop.f32.mrb[0].mxu0
          %3109 = vdwg.mxu0
          %v3110 = vadd.f32 %v3064, %v3105
          %v3111 = vxor.u32 %v3110, 2147483648
          %v3112 = vmul.f32 %v3111, 1.442695
          %v3113 = vpow.pop %v3112
          %v3114 = vadd.f32 %v3113, 1.0
          %v3115 = vrcp.pop %v3114
          %v3116 = vmul.f32 1.0, %v3115
          %v3117 = vtanh.pop %v3110
          %v3118 = vld [vmem:[#allocation3] sm:$0xff]
          %3120 = vrot.lane.b32.xlu0 %v3118, 32
          %v3121 = vpop.permute.xlu0 %3120
          %v3123 = vmul.f32 %v3116, %v3121
          %3125 = vrot.lane.b32.xlu0 %v3117, 64
          %v3126 = vpop.permute.xlu0 %3125
          %v3128 = vmul.f32 %v3116, %v3126
          %3130 = vrot.lane.b32.xlu0 %v3128, 32
          %v3131 = vpop.permute.xlu0 %3130
          %v3133 = vadd.f32 %v3123, %v3131
          %v3134 = vtanh.pop %v3133
          %3136 = vrot.lane.b32.xlu0 %v3134, 64
          %v3137 = vpop.permute.xlu0 %3136
          %v3139 = vmul.f32 %v3116, %v3137
          %3141 = vrot.lane.b32.xlu0 %v3133, 96
          %v3142 = vpop.permute.xlu0 %3141
          %3144 = vst.msk [vmem:[#allocation3] sm:$0xff] %vm2035, %v3142
          %3146 = vrot.lane.b32.xlu0 %v3139, 32
          %v3147 = vpop.permute.xlu0 %3146
          %3149 = vst.msk [vmem:[#allocation2] sm:$0xff] %vm2035, %v3147
          %v3150 = vpack.c.bf16 %v3139, %v3139
          %v3152 = vunpack.c.l.b16 %v3150
          %v3153 = vpack.c.b16 %v3152, %v3152
          %3154 = vrot.lane.b32.xlu0 %v3153, 32
          %v3155 = vpop.permute.xlu0 %3154
          %s3157 = scalar_lea.vmem %s324, 20
          %3158 = vst.msk [vmem:[%s3157] sm:$0xf] %vm2127, %v3155
          %s3159 = sadd.s32 %s2011, 4
          %p3160 = scmp.lt.s32.totalorder %s3159, 8
          %s3161 = scalar_select %p3160, 1, 0
          %s3162 = scvt.s32.f32 %s3161
          %s3163 = scalar_lea.vmem %s270, 16 [#allocation4]
          %v3164 = vld [vmem:[%s3163] sm:$0xf]
          %v3165 = vunpack.c.l.bf16 %v3164
          %v3166 = vstv %s3162
          %v3167 = vmul.f32 %v3165, %v3166
          %v3168 = vld [vmem:[#allocation2] sm:$0xff]
          %v3169 = vpack.c.bf16 %v3168, %v3168
          %v3171 = vsel %vm2035, %v3169, 0
          %3173 = vmatprep.subr.bf16.mxu0 0
          %3174 = vmatpush1.bf16.msra.mxu0 %v2031
          %3175 = vmatprep.subr.bf16.mxu0 0
          %3176 = vmatpush1.bf16.msra.mxu0 %v2032
          %3177 = vmatprep.subr.bf16.mxu0 0
          %3178 = vmatpush1.bf16.msra.mxu0 0
          %3179 = vmatprep.subr.bf16.mxu0 0
          %3180 = vmatpush1.bf16.msra.mxu0 0
          %3181 = vmatprep.subr.bf16.mxu0 0
          %3182 = vmatpush1.bf16.msra.mxu0 0
          %3183 = vmatprep.subr.bf16.mxu0 0
          %3184 = vmatpush1.bf16.msra.mxu0 0
          %3185 = vmatprep.subr.bf16.mxu0 0
          %3186 = vmatpush1.bf16.msra.mxu0 0
          %3187 = vmatprep.subr.bf16.mxu0 0
          %3188 = vmatpush1.bf16.msra.mxu0 0
          %3189 = vmatprep.subr.bf16.mxu0 0
          %3190 = vmatpush1.bf16.msra.mxu0 0
          %3191 = vmatprep.subr.bf16.mxu0 0
          %3192 = vmatpush1.bf16.msra.mxu0 0
          %3193 = vmatprep.subr.bf16.mxu0 0
          %3194 = vmatpush1.bf16.msra.mxu0 0
          %3195 = vmatprep.subr.bf16.mxu0 0
          %3196 = vmatpush1.bf16.msra.mxu0 0
          %3197 = vmatprep.subr.bf16.mxu0 0
          %3198 = vmatpush1.bf16.msra.mxu0 0
          %3199 = vmatprep.subr.bf16.mxu0 0
          %3200 = vmatpush1.bf16.msra.mxu0 0
          %3201 = vmatprep.subr.bf16.mxu0 0
          %3202 = vmatpush1.bf16.msra.mxu0 0
          %3203 = vmatprep.subr.bf16.mxu0 0
          %3204 = vmatpush1.bf16.msra.mxu0 0
          %3205 = vmatprep.mubr.bf16.mxu0 0
          %3206 = vmatmul.mubr.bf16.gmra.mrb[0].mxu0 %v3171
          %v3207 = vpop.f32.mrb[0].mxu0
          %v3208 = vadd.f32 0.0, %v3207
          %v3209 = vpop.f32.mrb[0].mxu0
          %v3210 = vpop.f32.mrb[0].mxu0
          %v3211 = vpop.f32.mrb[0].mxu0
          %3212 = vdwg.mxu0
          %v3213 = vadd.f32 %v3167, %v3208
          %v3214 = vxor.u32 %v3213, 2147483648
          %v3215 = vmul.f32 %v3214, 1.442695
          %v3216 = vpow.pop %v3215
          %v3217 = vadd.f32 %v3216, 1.0
          %v3218 = vrcp.pop %v3217
          %v3219 = vmul.f32 1.0, %v3218
          %v3220 = vtanh.pop %v3213
          %v3221 = vld [vmem:[#allocation3] sm:$0xff]
          %3223 = vrot.lane.b32.xlu0 %v3221, 32
          %v3224 = vpop.permute.xlu0 %3223
          %v3226 = vmul.f32 %v3219, %v3224
          %3228 = vrot.lane.b32.xlu0 %v3220, 64
          %v3229 = vpop.permute.xlu0 %3228
          %v3231 = vmul.f32 %v3219, %v3229
          %3233 = vrot.lane.b32.xlu0 %v3231, 32
          %v3234 = vpop.permute.xlu0 %3233
          %v3236 = vadd.f32 %v3226, %v3234
          %v3237 = vtanh.pop %v3236
          %3239 = vrot.lane.b32.xlu0 %v3237, 64
          %v3240 = vpop.permute.xlu0 %3239
          %v3242 = vmul.f32 %v3219, %v3240
          %3244 = vrot.lane.b32.xlu0 %v3236, 96
          %v3245 = vpop.permute.xlu0 %3244
          %3247 = vst.msk [vmem:[#allocation3] sm:$0xff] %vm2035, %v3245
          %3249 = vrot.lane.b32.xlu0 %v3242, 32
          %v3250 = vpop.permute.xlu0 %3249
          %3252 = vst.msk [vmem:[#allocation2] sm:$0xff] %vm2035, %v3250
          %v3253 = vpack.c.bf16 %v3242, %v3242
          %v3255 = vunpack.c.l.b16 %v3253
          %v3256 = vpack.c.b16 %v3255, %v3255
          %3257 = vrot.lane.b32.xlu0 %v3256, 32
          %v3258 = vpop.permute.xlu0 %3257
          %s3260 = scalar_lea.vmem %s324, 16
          %3261 = vst.msk [vmem:[%s3260] sm:$0xf] %vm2127, %v3258
          %s3262 = sadd.s32 %s2011, 3
          %p3263 = scmp.lt.s32.totalorder %s3262, 8
          %s3264 = scalar_select %p3263, 1, 0
          %s3265 = scvt.s32.f32 %s3264
          %s3266 = scalar_lea.vmem %s270, 12 [#allocation4]
          %v3267 = vld [vmem:[%s3266] sm:$0xf]
          %v3268 = vunpack.c.l.bf16 %v3267
          %v3269 = vstv %s3265
          %v3270 = vmul.f32 %v3268, %v3269
          %v3271 = vld [vmem:[#allocation2] sm:$0xff]
          %v3272 = vpack.c.bf16 %v3271, %v3271
          %v3274 = vsel %vm2035, %v3272, 0
          %3276 = vmatprep.subr.bf16.mxu0 0
          %3277 = vmatpush1.bf16.msra.mxu0 %v2031
          %3278 = vmatprep.subr.bf16.mxu0 0
          %3279 = vmatpush1.bf16.msra.mxu0 %v2032
          %3280 = vmatprep.subr.bf16.mxu0 0
          %3281 = vmatpush1.bf16.msra.mxu0 0
          %3282 = vmatprep.subr.bf16.mxu0 0
          %3283 = vmatpush1.bf16.msra.mxu0 0
          %3284 = vmatprep.subr.bf16.mxu0 0
          %3285 = vmatpush1.bf16.msra.mxu0 0
          %3286 = vmatprep.subr.bf16.mxu0 0
          %3287 = vmatpush1.bf16.msra.mxu0 0
          %3288 = vmatprep.subr.bf16.mxu0 0
          %3289 = vmatpush1.bf16.msra.mxu0 0
          %3290 = vmatprep.subr.bf16.mxu0 0
          %3291 = vmatpush1.bf16.msra.mxu0 0
          %3292 = vmatprep.subr.bf16.mxu0 0
          %3293 = vmatpush1.bf16.msra.mxu0 0
          %3294 = vmatprep.subr.bf16.mxu0 0
          %3295 = vmatpush1.bf16.msra.mxu0 0
          %3296 = vmatprep.subr.bf16.mxu0 0
          %3297 = vmatpush1.bf16.msra.mxu0 0
          %3298 = vmatprep.subr.bf16.mxu0 0
          %3299 = vmatpush1.bf16.msra.mxu0 0
          %3300 = vmatprep.subr.bf16.mxu0 0
          %3301 = vmatpush1.bf16.msra.mxu0 0
          %3302 = vmatprep.subr.bf16.mxu0 0
          %3303 = vmatpush1.bf16.msra.mxu0 0
          %3304 = vmatprep.subr.bf16.mxu0 0
          %3305 = vmatpush1.bf16.msra.mxu0 0
          %3306 = vmatprep.subr.bf16.mxu0 0
          %3307 = vmatpush1.bf16.msra.mxu0 0
          %3308 = vmatprep.mubr.bf16.mxu0 0
          %3309 = vmatmul.mubr.bf16.gmra.mrb[0].mxu0 %v3274
          %v3310 = vpop.f32.mrb[0].mxu0
          %v3311 = vadd.f32 0.0, %v3310
          %v3312 = vpop.f32.mrb[0].mxu0
          %v3313 = vpop.f32.mrb[0].mxu0
          %v3314 = vpop.f32.mrb[0].mxu0
          %3315 = vdwg.mxu0
          %v3316 = vadd.f32 %v3270, %v3311
          %v3317 = vxor.u32 %v3316, 2147483648
          %v3318 = vmul.f32 %v3317, 1.442695
          %v3319 = vpow.pop %v3318
          %v3320 = vadd.f32 %v3319, 1.0
          %v3321 = vrcp.pop %v3320
          %v3322 = vmul.f32 1.0, %v3321
          %v3323 = vtanh.pop %v3316
          %v3324 = vld [vmem:[#allocation3] sm:$0xff]
          %3326 = vrot.lane.b32.xlu0 %v3324, 32
          %v3327 = vpop.permute.xlu0 %3326
          %v3329 = vmul.f32 %v3322, %v3327
          %3331 = vrot.lane.b32.xlu0 %v3323, 64
          %v3332 = vpop.permute.xlu0 %3331
          %v3334 = vmul.f32 %v3322, %v3332
          %3336 = vrot.lane.b32.xlu0 %v3334, 32
          %v3337 = vpop.permute.xlu0 %3336
          %v3339 = vadd.f32 %v3329, %v3337
          %v3340 = vtanh.pop %v3339
          %3342 = vrot.lane.b32.xlu0 %v3340, 64
          %v3343 = vpop.permute.xlu0 %3342
          %v3345 = vmul.f32 %v3322, %v3343
          %3347 = vrot.lane.b32.xlu0 %v3339, 96
          %v3348 = vpop.permute.xlu0 %3347
          %3350 = vst.msk [vmem:[#allocation3] sm:$0xff] %vm2035, %v3348
          %3352 = vrot.lane.b32.xlu0 %v3345, 32
          %v3353 = vpop.permute.xlu0 %3352
          %3355 = vst.msk [vmem:[#allocation2] sm:$0xff] %vm2035, %v3353
          %v3356 = vpack.c.bf16 %v3345, %v3345
          %v3358 = vunpack.c.l.b16 %v3356
          %v3359 = vpack.c.b16 %v3358, %v3358
          %3360 = vrot.lane.b32.xlu0 %v3359, 32
          %v3361 = vpop.permute.xlu0 %3360
          %s3363 = scalar_lea.vmem %s324, 12
          %3364 = vst.msk [vmem:[%s3363] sm:$0xf] %vm2127, %v3361
          %s3365 = sadd.s32 %s2011, 2
          %p3366 = scmp.lt.s32.totalorder %s3365, 8
          %s3367 = scalar_select %p3366, 1, 0
          %s3368 = scvt.s32.f32 %s3367
          %s3369 = scalar_lea.vmem %s270, 8 [#allocation4]
          %v3370 = vld [vmem:[%s3369] sm:$0xf]
          %v3371 = vunpack.c.l.bf16 %v3370
          %v3372 = vstv %s3368
          %v3373 = vmul.f32 %v3371, %v3372
          %v3374 = vld [vmem:[#allocation2] sm:$0xff]
          %v3375 = vpack.c.bf16 %v3374, %v3374
          %v3377 = vsel %vm2035, %v3375, 0
          %3379 = vmatprep.subr.bf16.mxu0 0
          %3380 = vmatpush1.bf16.msra.mxu0 %v2031
          %3381 = vmatprep.subr.bf16.mxu0 0
          %3382 = vmatpush1.bf16.msra.mxu0 %v2032
          %3383 = vmatprep.subr.bf16.mxu0 0
          %3384 = vmatpush1.bf16.msra.mxu0 0
          %3385 = vmatprep.subr.bf16.mxu0 0
          %3386 = vmatpush1.bf16.msra.mxu0 0
          %3387 = vmatprep.subr.bf16.mxu0 0
          %3388 = vmatpush1.bf16.msra.mxu0 0
          %3389 = vmatprep.subr.bf16.mxu0 0
          %3390 = vmatpush1.bf16.msra.mxu0 0
          %3391 = vmatprep.subr.bf16.mxu0 0
          %3392 = vmatpush1.bf16.msra.mxu0 0
          %3393 = vmatprep.subr.bf16.mxu0 0
          %3394 = vmatpush1.bf16.msra.mxu0 0
          %3395 = vmatprep.subr.bf16.mxu0 0
          %3396 = vmatpush1.bf16.msra.mxu0 0
          %3397 = vmatprep.subr.bf16.mxu0 0
          %3398 = vmatpush1.bf16.msra.mxu0 0
          %3399 = vmatprep.subr.bf16.mxu0 0
          %3400 = vmatpush1.bf16.msra.mxu0 0
          %3401 = vmatprep.subr.bf16.mxu0 0
          %3402 = vmatpush1.bf16.msra.mxu0 0
          %3403 = vmatprep.subr.bf16.mxu0 0
          %3404 = vmatpush1.bf16.msra.mxu0 0
          %3405 = vmatprep.subr.bf16.mxu0 0
          %3406 = vmatpush1.bf16.msra.mxu0 0
          %3407 = vmatprep.subr.bf16.mxu0 0
          %3408 = vmatpush1.bf16.msra.mxu0 0
          %3409 = vmatprep.subr.bf16.mxu0 0
          %3410 = vmatpush1.bf16.msra.mxu0 0
          %3411 = vmatprep.mubr.bf16.mxu0 0
          %3412 = vmatmul.mubr.bf16.gmra.mrb[0].mxu0 %v3377
          %v3413 = vpop.f32.mrb[0].mxu0
          %v3414 = vadd.f32 0.0, %v3413
          %v3415 = vpop.f32.mrb[0].mxu0
          %v3416 = vpop.f32.mrb[0].mxu0
          %v3417 = vpop.f32.mrb[0].mxu0
          %3418 = vdwg.mxu0
          %v3419 = vadd.f32 %v3373, %v3414
          %v3420 = vxor.u32 %v3419, 2147483648
          %v3421 = vmul.f32 %v3420, 1.442695
          %v3422 = vpow.pop %v3421
          %v3423 = vadd.f32 %v3422, 1.0
          %v3424 = vrcp.pop %v3423
          %v3425 = vmul.f32 1.0, %v3424
          %v3426 = vtanh.pop %v3419
          %v3427 = vld [vmem:[#allocation3] sm:$0xff]
          %3429 = vrot.lane.b32.xlu0 %v3427, 32
          %v3430 = vpop.permute.xlu0 %3429
          %v3432 = vmul.f32 %v3425, %v3430
          %3434 = vrot.lane.b32.xlu0 %v3426, 64
          %v3435 = vpop.permute.xlu0 %3434
          %v3437 = vmul.f32 %v3425, %v3435
          %3439 = vrot.lane.b32.xlu0 %v3437, 32
          %v3440 = vpop.permute.xlu0 %3439
          %v3442 = vadd.f32 %v3432, %v3440
          %v3443 = vtanh.pop %v3442
          %3445 = vrot.lane.b32.xlu0 %v3443, 64
          %v3446 = vpop.permute.xlu0 %3445
          %v3448 = vmul.f32 %v3425, %v3446
          %3450 = vrot.lane.b32.xlu0 %v3442, 96
          %v3451 = vpop.permute.xlu0 %3450
          %3453 = vst.msk [vmem:[#allocation3] sm:$0xff] %vm2035, %v3451
          %3455 = vrot.lane.b32.xlu0 %v3448, 32
          %v3456 = vpop.permute.xlu0 %3455
          %3458 = vst.msk [vmem:[#allocation2] sm:$0xff] %vm2035, %v3456
          %v3459 = vpack.c.bf16 %v3448, %v3448
          %v3461 = vunpack.c.l.b16 %v3459
          %v3462 = vpack.c.b16 %v3461, %v3461
          %3463 = vrot.lane.b32.xlu0 %v3462, 32
          %v3464 = vpop.permute.xlu0 %3463
          %s3466 = scalar_lea.vmem %s324, 8
          %3467 = vst.msk [vmem:[%s3466] sm:$0xf] %vm2127, %v3464
          %s3468 = sadd.s32 %s2011, 1
          %p3469 = scmp.lt.s32.totalorder %s3468, 8
          %s3470 = scalar_select %p3469, 1, 0
          %s3471 = scvt.s32.f32 %s3470
          %s3472 = scalar_lea.vmem %s270, 4 [#allocation4]
          %v3473 = vld [vmem:[%s3472] sm:$0xf]
          %v3474 = vunpack.c.l.bf16 %v3473
          %v3475 = vstv %s3471
          %v3476 = vmul.f32 %v3474, %v3475
          %v3477 = vld [vmem:[#allocation2] sm:$0xff]
          %v3478 = vpack.c.bf16 %v3477, %v3477
          %v3480 = vsel %vm2035, %v3478, 0
          %3482 = vmatprep.subr.bf16.mxu0 0
          %3483 = vmatpush1.bf16.msra.mxu0 %v2031
          %3484 = vmatprep.subr.bf16.mxu0 0
          %3485 = vmatpush1.bf16.msra.mxu0 %v2032
          %3486 = vmatprep.subr.bf16.mxu0 0
          %3487 = vmatpush1.bf16.msra.mxu0 0
          %3488 = vmatprep.subr.bf16.mxu0 0
          %3489 = vmatpush1.bf16.msra.mxu0 0
          %3490 = vmatprep.subr.bf16.mxu0 0
          %3491 = vmatpush1.bf16.msra.mxu0 0
          %3492 = vmatprep.subr.bf16.mxu0 0
          %3493 = vmatpush1.bf16.msra.mxu0 0
          %3494 = vmatprep.subr.bf16.mxu0 0
          %3495 = vmatpush1.bf16.msra.mxu0 0
          %3496 = vmatprep.subr.bf16.mxu0 0
          %3497 = vmatpush1.bf16.msra.mxu0 0
          %3498 = vmatprep.subr.bf16.mxu0 0
          %3499 = vmatpush1.bf16.msra.mxu0 0
          %3500 = vmatprep.subr.bf16.mxu0 0
          %3501 = vmatpush1.bf16.msra.mxu0 0
          %3502 = vmatprep.subr.bf16.mxu0 0
          %3503 = vmatpush1.bf16.msra.mxu0 0
          %3504 = vmatprep.subr.bf16.mxu0 0
          %3505 = vmatpush1.bf16.msra.mxu0 0
          %3506 = vmatprep.subr.bf16.mxu0 0
          %3507 = vmatpush1.bf16.msra.mxu0 0
          %3508 = vmatprep.subr.bf16.mxu0 0
          %3509 = vmatpush1.bf16.msra.mxu0 0
          %3510 = vmatprep.subr.bf16.mxu0 0
          %3511 = vmatpush1.bf16.msra.mxu0 0
          %3512 = vmatprep.subr.bf16.mxu0 0
          %3513 = vmatpush1.bf16.msra.mxu0 0
          %3514 = vmatprep.mubr.bf16.mxu0 0
          %3515 = vmatmul.mubr.bf16.gmra.mrb[0].mxu0 %v3480
          %v3516 = vpop.f32.mrb[0].mxu0
          %v3517 = vadd.f32 0.0, %v3516
          %v3518 = vpop.f32.mrb[0].mxu0
          %v3519 = vpop.f32.mrb[0].mxu0
          %v3520 = vpop.f32.mrb[0].mxu0
          %3521 = vdwg.mxu0
          %v3522 = vadd.f32 %v3476, %v3517
          %v3523 = vxor.u32 %v3522, 2147483648
          %v3524 = vmul.f32 %v3523, 1.442695
          %v3525 = vpow.pop %v3524
          %v3526 = vadd.f32 %v3525, 1.0
          %v3527 = vrcp.pop %v3526
          %v3528 = vmul.f32 1.0, %v3527
          %v3529 = vtanh.pop %v3522
          %v3530 = vld [vmem:[#allocation3] sm:$0xff]
          %3532 = vrot.lane.b32.xlu0 %v3530, 32
          %v3533 = vpop.permute.xlu0 %3532
          %v3535 = vmul.f32 %v3528, %v3533
          %3537 = vrot.lane.b32.xlu0 %v3529, 64
          %v3538 = vpop.permute.xlu0 %3537
          %v3540 = vmul.f32 %v3528, %v3538
          %3542 = vrot.lane.b32.xlu0 %v3540, 32
          %v3543 = vpop.permute.xlu0 %3542
          %v3545 = vadd.f32 %v3535, %v3543
          %v3546 = vtanh.pop %v3545
          %3548 = vrot.lane.b32.xlu0 %v3546, 64
          %v3549 = vpop.permute.xlu0 %3548
          %v3551 = vmul.f32 %v3528, %v3549
          %3553 = vrot.lane.b32.xlu0 %v3545, 96
          %v3554 = vpop.permute.xlu0 %3553
          %3556 = vst.msk [vmem:[#allocation3] sm:$0xff] %vm2035, %v3554
          %3558 = vrot.lane.b32.xlu0 %v3551, 32
          %v3559 = vpop.permute.xlu0 %3558
          %3561 = vst.msk [vmem:[#allocation2] sm:$0xff] %vm2035, %v3559
          %v3562 = vpack.c.bf16 %v3551, %v3551
          %v3564 = vunpack.c.l.b16 %v3562
          %v3565 = vpack.c.b16 %v3564, %v3564
          %3566 = vrot.lane.b32.xlu0 %v3565, 32
          %v3567 = vpop.permute.xlu0 %3566
          %s3569 = scalar_lea.vmem %s324, 4
          %3570 = vst.msk [vmem:[%s3569] sm:$0xf] %vm2127, %v3567
          %p3571 = scmp.lt.s32.totalorder %s2011, 8
          %s3572 = scalar_select %p3571, 1, 0
          %s3573 = scvt.s32.f32 %s3572
          %v3574 = vld [vmem:[%s270] sm:$0xf]
          %v3575 = vunpack.c.l.bf16 %v3574
          %v3576 = vstv %s3573
          %v3577 = vmul.f32 %v3575, %v3576
          %v3578 = vld [vmem:[#allocation2] sm:$0xff]
          %v3579 = vpack.c.bf16 %v3578, %v3578
          %v3581 = vsel %vm2035, %v3579, 0
          %3583 = vmatprep.subr.bf16.mxu0 0
          %3584 = vmatpush1.bf16.msra.mxu0 %v2031
          %3585 = vmatprep.subr.bf16.mxu0 0
          %3586 = vmatpush1.bf16.msra.mxu0 %v2032
          %3587 = vmatprep.subr.bf16.mxu0 0
          %3588 = vmatpush1.bf16.msra.mxu0 0
          %3589 = vmatprep.subr.bf16.mxu0 0
          %3590 = vmatpush1.bf16.msra.mxu0 0
          %3591 = vmatprep.subr.bf16.mxu0 0
          %3592 = vmatpush1.bf16.msra.mxu0 0
          %3593 = vmatprep.subr.bf16.mxu0 0
          %3594 = vmatpush1.bf16.msra.mxu0 0
          %3595 = vmatprep.subr.bf16.mxu0 0
          %3596 = vmatpush1.bf16.msra.mxu0 0
          %3597 = vmatprep.subr.bf16.mxu0 0
          %3598 = vmatpush1.bf16.msra.mxu0 0
          %3599 = vmatprep.subr.bf16.mxu0 0
          %3600 = vmatpush1.bf16.msra.mxu0 0
          %3601 = vmatprep.subr.bf16.mxu0 0
          %3602 = vmatpush1.bf16.msra.mxu0 0
          %3603 = vmatprep.subr.bf16.mxu0 0
          %3604 = vmatpush1.bf16.msra.mxu0 0
          %3605 = vmatprep.subr.bf16.mxu0 0
          %3606 = vmatpush1.bf16.msra.mxu0 0
          %3607 = vmatprep.subr.bf16.mxu0 0
          %3608 = vmatpush1.bf16.msra.mxu0 0
          %3609 = vmatprep.subr.bf16.mxu0 0
          %3610 = vmatpush1.bf16.msra.mxu0 0
          %3611 = vmatprep.subr.bf16.mxu0 0
          %3612 = vmatpush1.bf16.msra.mxu0 0
          %3613 = vmatprep.subr.bf16.mxu0 0
          %3614 = vmatpush1.bf16.msra.mxu0 0
          %3615 = vmatprep.mubr.bf16.mxu0 0
          %3616 = vmatmul.mubr.bf16.gmra.mrb[0].mxu0 %v3581
          %v3617 = vpop.f32.mrb[0].mxu0
          %v3618 = vadd.f32 0.0, %v3617
          %v3619 = vpop.f32.mrb[0].mxu0
          %v3620 = vpop.f32.mrb[0].mxu0
          %v3621 = vpop.f32.mrb[0].mxu0
          %3622 = vdwg.mxu0
          %v3623 = vadd.f32 %v3577, %v3618
          %v3624 = vxor.u32 %v3623, 2147483648
          %v3625 = vmul.f32 %v3624, 1.442695
          %v3626 = vpow.pop %v3625
          %v3627 = vadd.f32 %v3626, 1.0
          %v3628 = vrcp.pop %v3627
          %v3629 = vmul.f32 1.0, %v3628
          %v3630 = vtanh.pop %v3623
          %v3631 = vld [vmem:[#allocation3] sm:$0xff]
          %3633 = vrot.lane.b32.xlu0 %v3631, 32
          %v3634 = vpop.permute.xlu0 %3633
          %v3636 = vmul.f32 %v3629, %v3634
          %3638 = vrot.lane.b32.xlu0 %v3630, 64
          %v3639 = vpop.permute.xlu0 %3638
          %v3641 = vmul.f32 %v3629, %v3639
          %3643 = vrot.lane.b32.xlu0 %v3641, 32
          %v3644 = vpop.permute.xlu0 %3643
          %v3646 = vadd.f32 %v3636, %v3644
          %v3647 = vtanh.pop %v3646
          %3649 = vrot.lane.b32.xlu0 %v3647, 64
          %v3650 = vpop.permute.xlu0 %3649
          %v3652 = vmul.f32 %v3629, %v3650
          %3654 = vrot.lane.b32.xlu0 %v3646, 96
          %v3655 = vpop.permute.xlu0 %3654
          %3657 = vst.msk [vmem:[#allocation3] sm:$0xff] %vm2035, %v3655
          %3659 = vrot.lane.b32.xlu0 %v3652, 32
          %v3660 = vpop.permute.xlu0 %3659
          %3662 = vst.msk [vmem:[#allocation2] sm:$0xff] %vm2035, %v3660
          %v3663 = vpack.c.bf16 %v3652, %v3652
          %v3665 = vunpack.c.l.b16 %v3663
          %v3666 = vpack.c.b16 %v3665, %v3665
          %3667 = vrot.lane.b32.xlu0 %v3666, 32
          %v3668 = vpop.permute.xlu0 %3667
          %3670 = vst.msk [vmem:[%s324] sm:$0xf] %vm2127, %v3668
        $region81: #{bert_country_forward.28} parent=64 // pred_fallthru
          _
        %s3671 = smul.u32 %s18, 2
        %s3672 = ssub.s32 0, %s3671
        %s3673 = smul.u32 %s17, %s3672
        %s3674 = sadd.s32 %s18, %s3673
        %s3675 = smul.u32 16, %s3674
        %p3676 = scmp.lt.s32.totalorder %s17, 1
        %s3677 = scalar_select %p3676, %s17, 1
        %p3678 = scmp.lt.s32.totalorder %s3675, 15
        %s3679 = scalar_select %p3678, %s3675, 15
        %s3680 = smul.addr %s3677, 16
        %s3681 = sadd.s32 %s3679, %s3680
        %s3682 = smul.addr %s3681, 4
        %s3683 = scalar_lea.vmem %s2, %s3682
        // Predicated region
        $region82: #{bert_country_forward.28} parent=64 // pred_check
          %p3684 = pneg %p115
        $region83: #{bert_country_forward.28} parent=64 // pred_check_branch
          %3686 = sbr.rel (%p3684) target = $region85
        $region84: #{bert_country_forward.28} parent=64 // pred_region
          %s3687 = smul.u32 %s18, 2
          %s3688 = ssub.s32 0, %s3687
          %s3689 = smul.u32 %s17, %s3688
          %s3690 = sadd.s32 %s18, %s3689
          %s3691 = smul.u32 16, %s3690
        $region85: #{bert_country_forward.28} parent=64 // pred_fallthru
          _
      $region65: #{bert_country_forward.28} parent=5 // pred_fallthru
        _
      %p3692 = scmp.le.s32.totalorder 2, %s8
      // Predicated region
      $region86: #{bert_country_forward.28} parent=5 // pred_check
        %p3693 = pneg %p3692
      $region87: #{bert_country_forward.28} parent=5 // pred_check_branch
        %3695 = sbr.rel (%p3693) target = $region89
      $region88: #{bert_country_forward.28} parent=5 // pred_region
        %s3696 = ssub.s32 %s8, 2
        // Predicated region
        $region90: #{bert_country_forward.28} parent=88 // pred_check
          %p3697 = pneg %p121
        $region91: #{bert_country_forward.28} parent=88 // pred_check_branch
          %3699 = sbr.rel (%p3697) target = $region93
        $region92: #{bert_country_forward.28} parent=88 // pred_region
          %s3700 = smul.u32 %s20, 2
          %s3701 = ssub.s32 0, %s3700
          %s3702 = smul.u32 %s19, %s3701
          %s3703 = sadd.s32 %s20, %s3702
          %s3704 = smul.u32 16, %s3703
          %p3705 = scmp.lt.s32.totalorder %s19, 1
          %s3706 = scalar_select %p3705, %s19, 1
          %p3707 = scmp.lt.s32.totalorder %s3704, 15
          %s3708 = scalar_select %p3707, %s3704, 15
          %s3709 = smul.addr %s3706, 16
          %s3710 = sadd.s32 %s3708, %s3709
          %s3711 = smul.addr %s3710, 4
          %s3712 = scalar_lea.vmem %s2, %s3711
        $region93: #{bert_country_forward.28} parent=88 // pred_fallthru
          _
      $region89: #{bert_country_forward.28} parent=5 // pred_fallthru
        _
    $region6: #{bert_country_forward.28} parent=1 // loop_footer
      %s12 = sadd.s32 1, %s8
    $region7: #{bert_country_forward.28} parent=1 // loop_footer_branch
      %7 = sbr.rel target = $region3
    $region8: #{bert_country_forward.28} parent=1 // loop_exit
      _

</llo_original>
